<compile_context>
chip_gen: v7x
topology: tpu7x:2x2x1
jax: 0.10.0
libtpu: 0.0.40
codegen_flags: <defaults>
</compile_context>

<pallas_src>
import functools
import math

import jax
import jax.numpy as jnp
from jax import lax
from jax.experimental import pallas as pl
from jax.experimental.pallas import tpu as pltpu

LANE = 128      # last-dim tile (vreg lanes)
SUBLANE = 8     # second-to-last-dim tile (vreg sublanes)


def _round_up(x, m):
    return (x + m - 1) // m * m


# ----------------------------------------------------------------------------------
# Fused bidirectional GRU layer kernel
# ----------------------------------------------------------------------------------
def _bigru_layer_kernel(x_ref, wih_ref, whh_ref, bgi_ref, bhn_ref, wfc_ref,
                        out_ref, proj_ref, h_ref, gi_ref, *, unroll):
    """One grid step = (direction d, time-chunk s) of a bidirectional GRU layer.

    x_ref:    (T, Bp, Ip)      time-major, zero-padded input chunk
    wih_ref:  (1, Ip, 3Hp)     this direction's input->gates weight (transposed)
    whh_ref:  (1, Hp, 3Hp)     this direction's hidden->gates weight (transposed)
    bgi_ref:  (1, 1, 3Hp)      b_ih + [b_hh_r | b_hh_z | 0]  (pre-combined)
    bhn_ref:  (1, 1, Hp)       b_hh_n  (n-gate uses r * (W_hn h + b_hn))
    wfc_ref:  (1, Hp, Hout)    this direction's half of the fc_hidden weight
    out_ref:  (T, Bp, Hp)      this direction's 128-lane slice of (S, Bp, 2Hp)
    proj_ref: (1, Bp, Hout)    partial fc projection of this direction's final h
    h_ref:    VMEM (Bp, Hp)    hidden state carried across time chunks
    gi_ref:   VMEM (T*Bp, 3Hp) hoisted per-chunk input projection
    Gate order matches PyTorch: [r | z | n].
    """
    d = pl.program_id(0)            # 0 = forward, 1 = backward
    s = pl.program_id(1)            # time-chunk (already reversed for bwd)

    T, Bp, Ip = x_ref.shape
    Hp = h_ref.shape[1]

    @pl.when(s == 0)
    def _init():
        h_ref[...] = jnp.zeros_like(h_ref)

    # --- hoisted input projection: one big MXU matmul per chunk -----------------
    x = x_ref[...].reshape(T * Bp, Ip)
    gi_ref[...] = (jnp.dot(x, wih_ref[0], preferred_element_type=jnp.float32)
                   + bgi_ref[0])

    def step(t, carry):
        # forward walks the chunk left->right, backward right->left
        tt = (1 - d) * t + d * (T - 1 - t)
        row = pl.multiple_of(tt * Bp, Bp)
        gi_t = gi_ref[pl.ds(row, Bp), :]                            # (Bp, 3Hp)
        h = h_ref[...]                                              # (Bp, Hp)
        gh = jnp.dot(h, whh_ref[0], preferred_element_type=jnp.float32)
        r = jax.nn.sigmoid(gi_t[:, 0:Hp] + gh[:, 0:Hp])
        z = jax.nn.sigmoid(gi_t[:, Hp:2 * Hp] + gh[:, Hp:2 * Hp])
        n = jnp.tanh(gi_t[:, 2 * Hp:3 * Hp]
                     + r * (gh[:, 2 * Hp:3 * Hp] + bhn_ref[0]))
        h_new = (1.0 - z) * n + z * h
        h_ref[...] = h_new
        out_ref[tt] = h_new.astype(out_ref.dtype)    # dense lane-aligned rows
        return carry

    lax.fori_loop(0, T, step, 0, unroll=unroll)

    # Partial fc_hidden projection of this direction's (running) final hidden.
    # Only the write at the last time chunk lands in HBM; only layer 0's value
    # is consumed by the wrapper (== fc over h_n[0], h_n[1]).
    proj_ref[0] = jnp.dot(h_ref[...], wfc_ref[0],
                          preferred_element_type=jnp.float32
                          ).astype(proj_ref.dtype)


# ----------------------------------------------------------------------------------
# pallas_call wrapper for one layer
# ----------------------------------------------------------------------------------
def _pick_t_chunk(S, Bp, Ip, Hp, budget_bytes=8 * 1024 * 1024):
    """Largest divisor of S whose per-chunk VMEM footprint fits the budget
    (fits v5e's 16 MiB / v7x's 32 MiB default scoped VMEM with headroom)."""
    per_step = 4 * Bp * (2 * Ip + 2 * Hp + 3 * Hp)   # dbl-buffered in/out + gi
    weight_bytes = 2 * 4 * (Ip * 3 * Hp + Hp * 3 * Hp + 4 * Hp + Hp * Hp)
    avail = max(budget_bytes - weight_bytes, per_step)
    best = 1
    for c in range(1, S + 1):
        if S % c == 0 and c * per_step <= avail:
            best = c
    return best


def _bigru_layer(x_tm, w_ih, w_hh, b_gi, b_hn, w_fc):
    """x_tm: (S, Bp, Ip) padded time-major layer input.

    Returns:
      out:  (S, Bp, 2Hp)  fwd states in lanes [0:Hp], bwd in [Hp:2Hp]
      proj: (2, Bp, Hout) per-direction partial fc projections of final hiddens
    """
    S, Bp, Ip = x_tm.shape
    Hp = w_hh.shape[1]
    Hout = w_fc.shape[2]
    t_chunk = _pick_t_chunk(S, Bp, Ip, Hp)
    nc = S // t_chunk

    def tb(d, s):               # reversed chunk order for the backward direction
        return (1 - d) * s + d * (nc - 1 - s)

    kernel = functools.partial(_bigru_layer_kernel, unroll=min(t_chunk, 8))

    out, proj = pl.pallas_call(
        kernel,
        grid=(2, nc),
        in_specs=[
            pl.BlockSpec((t_chunk, Bp, Ip), lambda d, s: (tb(d, s), 0, 0)),
            pl.BlockSpec((1, Ip, 3 * Hp), lambda d, s: (d, 0, 0)),
            pl.BlockSpec((1, Hp, 3 * Hp), lambda d, s: (d, 0, 0)),
            pl.BlockSpec((1, 1, 3 * Hp), lambda d, s: (d, 0, 0)),
            pl.BlockSpec((1, 1, Hp), lambda d, s: (d, 0, 0)),
            pl.BlockSpec((1, Hp, Hout), lambda d, s: (d, 0, 0)),
        ],
        out_specs=(
            pl.BlockSpec((t_chunk, Bp, Hp), lambda d, s: (tb(d, s), 0, d)),
            pl.BlockSpec((1, Bp, Hout), lambda d, s: (d, 0, 0)),
        ),
        out_shape=(
            jax.ShapeDtypeStruct((S, Bp, 2 * Hp), jnp.float32),
            jax.ShapeDtypeStruct((2, Bp, Hout), jnp.float32),
        ),
        scratch_shapes=[
            pltpu.VMEM((Bp, Hp), jnp.float32),
            pltpu.VMEM((t_chunk * Bp, 3 * Hp), jnp.float32),
        ],
        compiler_params=pltpu.CompilerParams(
            dimension_semantics=("parallel", "arbitrary")),
    )(x_tm, w_ih, w_hh, b_gi, b_hn, w_fc)
    return out, proj


# ----------------------------------------------------------------------------------
# Encoder forward
# ----------------------------------------------------------------------------------
def encoder_forward(src, params):
    """src: (B, S, input_dim). Returns (enc_states (B,S,2H), enc_final (1,B,H))."""
    B, S, I = src.shape
    Hp, H = params["fc_w"].shape[1], params["fc_w"].shape[2]
    Ip0 = params["layers"][0]["w_ih"].shape[1]
    Bp = _round_up(B, SUBLANE)

    # batch-first -> time-major once; zero-pad batch / features to HW tiles.
    x = jnp.transpose(src, (1, 0, 2))
    x = jnp.pad(x, ((0, 0), (0, Bp - B), (0, Ip0 - I)))

    proj0 = None
    for li, lp in enumerate(params["layers"]):
        x, proj = _bigru_layer(x, lp["w_ih"], lp["w_hh"], lp["b_gi"],
                               lp["b_hn"], params["fc_w"])
        if li == 0:
            proj0 = proj    # layer-0 directions feed fc_hidden (== h_n[0], h_n[1])

    # enc_states: strip padding, gather real fwd/bwd lanes, back to batch-first.
    enc_states = jnp.concatenate([x[:, :B, 0:H], x[:, :B, Hp:Hp + H]], axis=-1)
    enc_states = jnp.transpose(enc_states, (1, 0, 2))               # (B, S, 2H)

    # fc_hidden(cat(h_n[0], h_n[1])) = h_f @ W[:H] + h_b @ W[H:] + b
    enc_final = (proj0[0, :B] + proj0[1, :B] + params["fc_b"])[None]  # (1, B, H)
    return enc_states, enc_final


# ----------------------------------------------------------------------------------
# Parameter init (PyTorch-style uniform), packed/padded into the kernel layout
# ----------------------------------------------------------------------------------
def init_params(key, input_dim, hid_dim, n_layers, dtype=jnp.float32):
    H = hid_dim
    Hp = _round_up(H, LANE)
    Ip0 = _round_up(input_dim, LANE)
    bound = 1.0 / math.sqrt(H)

    layers, raw_layers = [], []
    for layer in range(n_layers):
        in_dim = input_dim if layer == 0 else 2 * H
        in_pad = Ip0 if layer == 0 else 2 * Hp
        w_ih_d, w_hh_d, b_gi_d, b_hn_d, raw_d = [], [], [], [], []
        for _ in range(2):                                     # fwd, bwd
            key, k1, k2, k3, k4 = jax.random.split(key, 5)
            w_ih = jax.random.uniform(k1, (in_dim, 3 * H), dtype, -bound, bound)
            w_hh = jax.random.uniform(k2, (H, 3 * H), dtype, -bound, bound)
            b_ih = jax.random.uniform(k3, (3 * H,), dtype, -bound, bound)
            b_hh = jax.random.uniform(k4, (3 * H,), dtype, -bound, bound)
            raw_d.append({"w_ih_t": w_ih, "w_hh_t": w_hh,
                          "b_ih": b_ih, "b_hh": b_hh})

            # combined gi bias (r,z pick up b_hh too; n keeps b_hh_n separate)
            b_gi = b_ih + jnp.concatenate([b_hh[:2 * H], jnp.zeros((H,), dtype)])

            w_ih_p = jnp.zeros((in_pad, 3 * Hp), dtype)
            w_hh_p = jnp.zeros((Hp, 3 * Hp), dtype)
            b_gi_p = jnp.zeros((1, 3 * Hp), dtype)
            for g in range(3):
                dst = slice(g * Hp, g * Hp + H)
                srcg = slice(g * H, (g + 1) * H)
                if layer == 0:
                    w_ih_p = w_ih_p.at[:in_dim, dst].set(w_ih[:, srcg])
                else:
                    # previous layer's fwd states live in lanes [0:H],
                    # bwd states in lanes [Hp:Hp+H] of the padded input
                    w_ih_p = w_ih_p.at[0:H, dst].set(w_ih[0:H, srcg])
                    w_ih_p = w_ih_p.at[Hp:Hp + H, dst].set(w_ih[H:2 * H, srcg])
                w_hh_p = w_hh_p.at[0:H, dst].set(w_hh[:, srcg])
                b_gi_p = b_gi_p.at[0, dst].set(b_gi[srcg])
            b_hn_p = jnp.zeros((1, Hp), dtype).at[0, :H].set(b_hh[2 * H:])

            w_ih_d.append(w_ih_p)
            w_hh_d.append(w_hh_p)
            b_gi_d.append(b_gi_p)
            b_hn_d.append(b_hn_p)

        layers.append({"w_ih": jnp.stack(w_ih_d),   # (2, in_pad, 3Hp)
                       "w_hh": jnp.stack(w_hh_d),   # (2, Hp, 3Hp)
                       "b_gi": jnp.stack(b_gi_d),   # (2, 1, 3Hp)
                       "b_hn": jnp.stack(b_hn_d)})  # (2, 1, Hp)
        raw_layers.append(raw_d)

    bound_fc = 1.0 / math.sqrt(2 * H)
    key, k1, k2 = jax.random.split(key, 3)
    w_fc = jax.random.uniform(k1, (2 * H, H), dtype, -bound_fc, bound_fc)
    b_fc = jax.random.uniform(k2, (H,), dtype, -bound_fc, bound_fc)
    w_fc_p = jnp.zeros((2, Hp, H), dtype)
    w_fc_p = w_fc_p.at[0, :H].set(w_fc[:H])
    w_fc_p = w_fc_p.at[1, :H].set(w_fc[H:])

    params = {"layers": layers, "fc_w": w_fc_p, "fc_b": b_fc}
    raw = {"layers": raw_layers, "fc_w_t": w_fc, "fc_b": b_fc}
    return params, raw


# ----------------------------------------------------------------------------------
# Plain-JAX reference (mirrors PyTorch GRU math) for a correctness check
# ----------------------------------------------------------------------------------
def reference_forward(src, raw, hid_dim):
    H = hid_dim
    B, S, _ = src.shape
    hi = jax.lax.Precision.HIGHEST
    x = src
    h0 = [None, None]
    for layer in range(len(raw["layers"])):
        outs = []
        for d in range(2):
            p = raw["layers"][layer][d]
            h = jnp.zeros((B, H), jnp.float32)
            order = range(S) if d == 0 else range(S - 1, -1, -1)
            ys = [None] * S
            for t in order:
                gi = jnp.dot(x[:, t, :], p["w_ih_t"], precision=hi) + p["b_ih"]
                gh = jnp.dot(h, p["w_hh_t"], precision=hi) + p["b_hh"]
                r = jax.nn.sigmoid(gi[:, :H] + gh[:, :H])
                z = jax.nn.sigmoid(gi[:, H:2 * H] + gh[:, H:2 * H])
                n = jnp.tanh(gi[:, 2 * H:] + r * gh[:, 2 * H:])
                h = (1.0 - z) * n + z * h
                ys[t] = h
            outs.append(jnp.stack(ys, axis=1))
            if layer == 0:
                h0[d] = h
        x = jnp.concatenate(outs, axis=-1)
    enc_states = x
    cat = jnp.concatenate([h0[0], h0[1]], axis=-1)
    enc_final = (jnp.dot(cat, raw["fc_w_t"], precision=hi) + raw["fc_b"])[None]
    return enc_states, enc_final


if __name__ == "__main__":
    input_dim, hid_dim, n_layers = 16, 32, 2
    batch, seq = 2, 8

    key = jax.random.PRNGKey(0)
    kp, kx = jax.random.split(key)
    params, raw = init_params(kp, input_dim, hid_dim, n_layers)
    src = jax.random.normal(kx, (batch, seq, input_dim), jnp.float32)

    fwd = jax.jit(encoder_forward)
    enc_states, enc_final = fwd(src, params)
    jax.block_until_ready((enc_states, enc_final))

    assert enc_states.shape == (batch, seq, 2 * hid_dim)
    assert enc_final.shape == (1, batch, hid_dim)

    ref_states, ref_final = reference_forward(src, raw, hid_dim)
    assert jnp.allclose(enc_states, ref_states, atol=2e-2, rtol=2e-2), float(
        jnp.max(jnp.abs(enc_states - ref_states)))
    assert jnp.allclose(enc_final, ref_final, atol=2e-2, rtol=2e-2), float(
        jnp.max(jnp.abs(enc_final - ref_final)))

    print("KERNEL_OK")
</pallas_src>

<mosaic_0001>
module attributes {stable_mosaic.version = 11 : i64} {
  func.func @_bigru_layer_kernel(%arg0: i32, %arg1: i32, %arg2: memref<8x8x128xf32, #tpu.memory_space<vmem>>, %arg3: memref<1x128x384xf32, #tpu.memory_space<vmem>>, %arg4: memref<1x128x384xf32, #tpu.memory_space<vmem>>, %arg5: memref<1x1x384xf32, #tpu.memory_space<vmem>>, %arg6: memref<1x1x128xf32, #tpu.memory_space<vmem>>, %arg7: memref<1x128x32xf32, #tpu.memory_space<vmem>>, %arg8: memref<8x8x128xf32, #tpu.memory_space<vmem>>, %arg9: memref<1x8x32xf32, #tpu.memory_space<vmem>>, %arg10: memref<8x128xf32, #tpu.memory_space<vmem>>, %arg11: memref<64x384xf32, #tpu.memory_space<vmem>>) attributes {dimension_semantics = [#tpu.dimension_semantics<parallel>, #tpu.dimension_semantics<arbitrary>], iteration_bounds = array<i64: 2, 1>, scalar_prefetch = 0 : i64, scratch_operands = 2 : i64, tpu.core_type = #tpu.core_type<tc>, window_params = [{transform_indices = @transform_0, window_bounds = array<i64: 8, 8, 128>}, {transform_indices = @transform_1, window_bounds = array<i64: 1, 128, 384>}, {transform_indices = @transform_2, window_bounds = array<i64: 1, 128, 384>}, {transform_indices = @transform_3, window_bounds = array<i64: 1, 1, 384>}, {transform_indices = @transform_4, window_bounds = array<i64: 1, 1, 128>}, {transform_indices = @transform_5, window_bounds = array<i64: 1, 128, 32>}, {transform_indices = @transform_6, window_bounds = array<i64: 8, 8, 128>}, {transform_indices = @transform_7, window_bounds = array<i64: 1, 8, 32>}]} {
    %c0_i32 = arith.constant 0 : i32
    %0 = arith.cmpi eq, %arg1, %c0_i32 : i32
    %1 = arith.extui %0 : i1 to i32
    %c0_i32_0 = arith.constant 0 : i32
    %2 = arith.cmpi ne, %1, %c0_i32_0 : i32
    scf.if %2 {
      %cst_181 = arith.constant 0.000000e+00 : f32
      %404 = vector.broadcast %cst_181 : f32 to vector<8x128xf32>
      %c0_182 = arith.constant 0 : index
      %c0_183 = arith.constant 0 : index
      %405 = vector.load %arg10[%c0_182, %c0_183] : memref<8x128xf32, #tpu.memory_space<vmem>>, vector<8x128xf32>
      tpu.vector_store %arg10[%c0_182, %c0_183], %404 {strides = array<i32>} : memref<8x128xf32, #tpu.memory_space<vmem>>, vector<8x128xf32>,
    } else {
    }
    %c0 = arith.constant 0 : index
    %c0_1 = arith.constant 0 : index
    %c0_2 = arith.constant 0 : index
    %3 = vector.load %arg2[%c0, %c0_1, %c0_2] : memref<8x8x128xf32, #tpu.memory_space<vmem>>, vector<8x8x128xf32>
    %4 = vector.shape_cast %3 : vector<8x8x128xf32> to vector<64x128xf32>
    %c0_3 = arith.constant 0 : index
    %c0_4 = arith.constant 0 : index
    %c0_5 = arith.constant 0 : index
    %5 = vector.load %arg3[%c0_3, %c0_4, %c0_5] : memref<1x128x384xf32, #tpu.memory_space<vmem>>, vector<1x128x384xf32>
    %6 = vector.shape_cast %5 : vector<1x128x384xf32> to vector<128x384xf32>
    %cst = arith.constant dense<0.000000e+00> : vector<64x384xf32>
    %7 = tpu.matmul %4, %6, %cst {dimension_numbers = #tpu.dot_dimension_numbers<[1], [0], [0], [1], [0, 0, 1, 1], [], []>} : vector<64x128xf32>, vector<128x384xf32>, vector<64x384xf32> -> vector<64x384xf32>
    %c0_6 = arith.constant 0 : index
    %c0_7 = arith.constant 0 : index
    %c0_8 = arith.constant 0 : index
    %8 = vector.load %arg5[%c0_6, %c0_7, %c0_8] : memref<1x1x384xf32, #tpu.memory_space<vmem>>, vector<1x1x384xf32>
    %9 = vector.shape_cast %8 : vector<1x1x384xf32> to vector<1x384xf32>
    %10 = vector.broadcast %9 : vector<1x384xf32> to vector<64x384xf32>
    %11 = arith.addf %7, %10 : vector<64x384xf32>
    %c0_9 = arith.constant 0 : index
    %c0_10 = arith.constant 0 : index
    %12 = vector.load %arg11[%c0_9, %c0_10] : memref<64x384xf32, #tpu.memory_space<vmem>>, vector<64x384xf32>
    tpu.vector_store %arg11[%c0_9, %c0_10], %11 {strides = array<i32>} : memref<64x384xf32, #tpu.memory_space<vmem>>, vector<64x384xf32>,
    %c0_i32_11 = arith.constant 0 : i32
    %c1_i32 = arith.constant 1 : i32
    %13 = arith.subi %c1_i32, %arg0 : i32
    %14 = arith.muli %13, %c0_i32_11 : i32
    %c7_i32 = arith.constant 7 : i32
    %15 = arith.subi %c7_i32, %c0_i32_11 : i32
    %16 = arith.muli %arg0, %15 : i32
    %17 = arith.addi %14, %16 : i32
    %c8_i32 = arith.constant 8 : i32
    %18 = arith.muli %17, %c8_i32 : i32
    %19 = tpu.assume_multiple %18, 8 : i32
    %20 = arith.index_cast %19 : i32 to index
    %c0_12 = arith.constant 0 : index
    %21 = vector.load %arg11[%20, %c0_12] : memref<64x384xf32, #tpu.memory_space<vmem>>, vector<8x384xf32>
    %c0_13 = arith.constant 0 : index
    %c0_14 = arith.constant 0 : index
    %22 = vector.load %arg10[%c0_13, %c0_14] : memref<8x128xf32, #tpu.memory_space<vmem>>, vector<8x128xf32>
    %c0_15 = arith.constant 0 : index
    %c0_16 = arith.constant 0 : index
    %c0_17 = arith.constant 0 : index
    %23 = vector.load %arg4[%c0_15, %c0_16, %c0_17] : memref<1x128x384xf32, #tpu.memory_space<vmem>>, vector<1x128x384xf32>
    %24 = vector.shape_cast %23 : vector<1x128x384xf32> to vector<128x384xf32>
    %cst_18 = arith.constant dense<0.000000e+00> : vector<8x384xf32>
    %25 = tpu.matmul %22, %24, %cst_18 {dimension_numbers = #tpu.dot_dimension_numbers<[1], [0], [0], [1], [0, 0, 1, 1], [], []>} : vector<8x128xf32>, vector<128x384xf32>, vector<8x384xf32> -> vector<8x384xf32>
    %26 = vector.extract_strided_slice %21 {offsets = [0, 0], sizes = [8, 128], strides = [1, 1]} : vector<8x384xf32> to vector<8x128xf32>
    %27 = vector.extract_strided_slice %25 {offsets = [0, 0], sizes = [8, 128], strides = [1, 1]} : vector<8x384xf32> to vector<8x128xf32>
    %28 = arith.addf %26, %27 : vector<8x128xf32>
    %29 = arith.negf %28 : vector<8x128xf32>
    %30 = math.exp %29 : vector<8x128xf32>
    %cst_19 = arith.constant 1.000000e+00 : f32
    %31 = vector.broadcast %cst_19 : f32 to vector<8x128xf32>
    %32 = arith.addf %31, %30 : vector<8x128xf32>
    %33 = arith.divf %31, %32 : vector<8x128xf32>
    %34 = vector.extract_strided_slice %21 {offsets = [0, 128], sizes = [8, 128], strides = [1, 1]} : vector<8x384xf32> to vector<8x128xf32>
    %35 = vector.extract_strided_slice %25 {offsets = [0, 128], sizes = [8, 128], strides = [1, 1]} : vector<8x384xf32> to vector<8x128xf32>
    %36 = arith.addf %34, %35 : vector<8x128xf32>
    %37 = arith.negf %36 : vector<8x128xf32>
    %38 = math.exp %37 : vector<8x128xf32>
    %cst_20 = arith.constant 1.000000e+00 : f32
    %39 = vector.broadcast %cst_20 : f32 to vector<8x128xf32>
    %40 = arith.addf %39, %38 : vector<8x128xf32>
    %41 = arith.divf %39, %40 : vector<8x128xf32>
    %42 = vector.extract_strided_slice %21 {offsets = [0, 256], sizes = [8, 128], strides = [1, 1]} : vector<8x384xf32> to vector<8x128xf32>
    %43 = vector.extract_strided_slice %25 {offsets = [0, 256], sizes = [8, 128], strides = [1, 1]} : vector<8x384xf32> to vector<8x128xf32>
    %c0_21 = arith.constant 0 : index
    %c0_22 = arith.constant 0 : index
    %c0_23 = arith.constant 0 : index
    %44 = vector.load %arg6[%c0_21, %c0_22, %c0_23] : memref<1x1x128xf32, #tpu.memory_space<vmem>>, vector<1x1x128xf32>
    %45 = vector.shape_cast %44 : vector<1x1x128xf32> to vector<1x128xf32>
    %46 = vector.broadcast %45 : vector<1x128xf32> to vector<8x128xf32>
    %47 = arith.addf %43, %46 : vector<8x128xf32>
    %48 = arith.mulf %33, %47 : vector<8x128xf32>
    %49 = arith.addf %42, %48 : vector<8x128xf32>
    %50 = math.tanh %49 : vector<8x128xf32>
    %cst_24 = arith.constant 1.000000e+00 : f32
    %51 = vector.broadcast %cst_24 : f32 to vector<8x128xf32>
    %52 = arith.subf %51, %41 : vector<8x128xf32>
    %53 = arith.mulf %52, %50 : vector<8x128xf32>
    %54 = arith.mulf %41, %22 : vector<8x128xf32>
    %55 = arith.addf %53, %54 : vector<8x128xf32>
    %c0_25 = arith.constant 0 : index
    %c0_26 = arith.constant 0 : index
    %56 = vector.load %arg10[%c0_25, %c0_26] : memref<8x128xf32, #tpu.memory_space<vmem>>, vector<8x128xf32>
    tpu.vector_store %arg10[%c0_25, %c0_26], %55 {strides = array<i32>} : memref<8x128xf32, #tpu.memory_space<vmem>>, vector<8x128xf32>,
    %57 = arith.index_cast %17 : i32 to index
    %c0_27 = arith.constant 0 : index
    %c0_28 = arith.constant 0 : index
    %58 = vector.load %arg8[%57, %c0_27, %c0_28] : memref<8x8x128xf32, #tpu.memory_space<vmem>>, vector<1x8x128xf32>
    %59 = vector.shape_cast %58 : vector<1x8x128xf32> to vector<8x128xf32>
    %60 = vector.shape_cast %55 : vector<8x128xf32> to vector<1x8x128xf32>
    tpu.vector_store %arg8[%57, %c0_27, %c0_28], %60 {strides = array<i32>} : memref<8x8x128xf32, #tpu.memory_space<vmem>>, vector<1x8x128xf32>,
    %c1_i32_29 = arith.constant 1 : i32
    %c1_i32_30 = arith.constant 1 : i32
    %61 = arith.subi %c1_i32_30, %arg0 : i32
    %62 = arith.muli %61, %c1_i32_29 : i32
    %c7_i32_31 = arith.constant 7 : i32
    %63 = arith.subi %c7_i32_31, %c1_i32_29 : i32
    %64 = arith.muli %arg0, %63 : i32
    %65 = arith.addi %62, %64 : i32
    %c8_i32_32 = arith.constant 8 : i32
    %66 = arith.muli %65, %c8_i32_32 : i32
    %67 = tpu.assume_multiple %66, 8 : i32
    %68 = arith.index_cast %67 : i32 to index
    %c0_33 = arith.constant 0 : index
    %69 = vector.load %arg11[%68, %c0_33] : memref<64x384xf32, #tpu.memory_space<vmem>>, vector<8x384xf32>
    %c0_34 = arith.constant 0 : index
    %c0_35 = arith.constant 0 : index
    %70 = vector.load %arg10[%c0_34, %c0_35] : memref<8x128xf32, #tpu.memory_space<vmem>>, vector<8x128xf32>
    %c0_36 = arith.constant 0 : index
    %c0_37 = arith.constant 0 : index
    %c0_38 = arith.constant 0 : index
    %71 = vector.load %arg4[%c0_36, %c0_37, %c0_38] : memref<1x128x384xf32, #tpu.memory_space<vmem>>, vector<1x128x384xf32>
    %72 = vector.shape_cast %71 : vector<1x128x384xf32> to vector<128x384xf32>
    %cst_39 = arith.constant dense<0.000000e+00> : vector<8x384xf32>
    %73 = tpu.matmul %70, %72, %cst_39 {dimension_numbers = #tpu.dot_dimension_numbers<[1], [0], [0], [1], [0, 0, 1, 1], [], []>} : vector<8x128xf32>, vector<128x384xf32>, vector<8x384xf32> -> vector<8x384xf32>
    %74 = vector.extract_strided_slice %69 {offsets = [0, 0], sizes = [8, 128], strides = [1, 1]} : vector<8x384xf32> to vector<8x128xf32>
    %75 = vector.extract_strided_slice %73 {offsets = [0, 0], sizes = [8, 128], strides = [1, 1]} : vector<8x384xf32> to vector<8x128xf32>
    %76 = arith.addf %74, %75 : vector<8x128xf32>
    %77 = arith.negf %76 : vector<8x128xf32>
    %78 = math.exp %77 : vector<8x128xf32>
    %cst_40 = arith.constant 1.000000e+00 : f32
    %79 = vector.broadcast %cst_40 : f32 to vector<8x128xf32>
    %80 = arith.addf %79, %78 : vector<8x128xf32>
    %81 = arith.divf %79, %80 : vector<8x128xf32>
    %82 = vector.extract_strided_slice %69 {offsets = [0, 128], sizes = [8, 128], strides = [1, 1]} : vector<8x384xf32> to vector<8x128xf32>
    %83 = vector.extract_strided_slice %73 {offsets = [0, 128], sizes = [8, 128], strides = [1, 1]} : vector<8x384xf32> to vector<8x128xf32>
    %84 = arith.addf %82, %83 : vector<8x128xf32>
    %85 = arith.negf %84 : vector<8x128xf32>
    %86 = math.exp %85 : vector<8x128xf32>
    %cst_41 = arith.constant 1.000000e+00 : f32
    %87 = vector.broadcast %cst_41 : f32 to vector<8x128xf32>
    %88 = arith.addf %87, %86 : vector<8x128xf32>
    %89 = arith.divf %87, %88 : vector<8x128xf32>
    %90 = vector.extract_strided_slice %69 {offsets = [0, 256], sizes = [8, 128], strides = [1, 1]} : vector<8x384xf32> to vector<8x128xf32>
    %91 = vector.extract_strided_slice %73 {offsets = [0, 256], sizes = [8, 128], strides = [1, 1]} : vector<8x384xf32> to vector<8x128xf32>
    %c0_42 = arith.constant 0 : index
    %c0_43 = arith.constant 0 : index
    %c0_44 = arith.constant 0 : index
    %92 = vector.load %arg6[%c0_42, %c0_43, %c0_44] : memref<1x1x128xf32, #tpu.memory_space<vmem>>, vector<1x1x128xf32>
    %93 = vector.shape_cast %92 : vector<1x1x128xf32> to vector<1x128xf32>
    %94 = vector.broadcast %93 : vector<1x128xf32> to vector<8x128xf32>
    %95 = arith.addf %91, %94 : vector<8x128xf32>
    %96 = arith.mulf %81, %95 : vector<8x128xf32>
    %97 = arith.addf %90, %96 : vector<8x128xf32>
    %98 = math.tanh %97 : vector<8x128xf32>
    %cst_45 = arith.constant 1.000000e+00 : f32
    %99 = vector.broadcast %cst_45 : f32 to vector<8x128xf32>
    %100 = arith.subf %99, %89 : vector<8x128xf32>
    %101 = arith.mulf %100, %98 : vector<8x128xf32>
    %102 = arith.mulf %89, %70 : vector<8x128xf32>
    %103 = arith.addf %101, %102 : vector<8x128xf32>
    %c0_46 = arith.constant 0 : index
    %c0_47 = arith.constant 0 : index
    %104 = vector.load %arg10[%c0_46, %c0_47] : memref<8x128xf32, #tpu.memory_space<vmem>>, vector<8x128xf32>
    tpu.vector_store %arg10[%c0_46, %c0_47], %103 {strides = array<i32>} : memref<8x128xf32, #tpu.memory_space<vmem>>, vector<8x128xf32>,
    %105 = arith.index_cast %65 : i32 to index
    %c0_48 = arith.constant 0 : index
    %c0_49 = arith.constant 0 : index
    %106 = vector.load %arg8[%105, %c0_48, %c0_49] : memref<8x8x128xf32, #tpu.memory_space<vmem>>, vector<1x8x128xf32>
    %107 = vector.shape_cast %106 : vector<1x8x128xf32> to vector<8x128xf32>
    %108 = vector.shape_cast %103 : vector<8x128xf32> to vector<1x8x128xf32>
    tpu.vector_store %arg8[%105, %c0_48, %c0_49], %108 {strides = array<i32>} : memref<8x8x128xf32, #tpu.memory_space<vmem>>, vector<1x8x128xf32>,
    %c2_i32 = arith.constant 2 : i32
    %c1_i32_50 = arith.constant 1 : i32
    %109 = arith.subi %c1_i32_50, %arg0 : i32
    %110 = arith.muli %109, %c2_i32 : i32
    %c7_i32_51 = arith.constant 7 : i32
    %111 = arith.subi %c7_i32_51, %c2_i32 : i32
    %112 = arith.muli %arg0, %111 : i32
    %113 = arith.addi %110, %112 : i32
    %c8_i32_52 = arith.constant 8 : i32
    %114 = arith.muli %113, %c8_i32_52 : i32
    %115 = tpu.assume_multiple %114, 8 : i32
    %116 = arith.index_cast %115 : i32 to index
    %c0_53 = arith.constant 0 : index
    %117 = vector.load %arg11[%116, %c0_53] : memref<64x384xf32, #tpu.memory_space<vmem>>, vector<8x384xf32>
    %c0_54 = arith.constant 0 : index
    %c0_55 = arith.constant 0 : index
    %118 = vector.load %arg10[%c0_54, %c0_55] : memref<8x128xf32, #tpu.memory_space<vmem>>, vector<8x128xf32>
    %c0_56 = arith.constant 0 : index
    %c0_57 = arith.constant 0 : index
    %c0_58 = arith.constant 0 : index
    %119 = vector.load %arg4[%c0_56, %c0_57, %c0_58] : memref<1x128x384xf32, #tpu.memory_space<vmem>>, vector<1x128x384xf32>
    %120 = vector.shape_cast %119 : vector<1x128x384xf32> to vector<128x384xf32>
    %cst_59 = arith.constant dense<0.000000e+00> : vector<8x384xf32>
    %121 = tpu.matmul %118, %120, %cst_59 {dimension_numbers = #tpu.dot_dimension_numbers<[1], [0], [0], [1], [0, 0, 1, 1], [], []>} : vector<8x128xf32>, vector<128x384xf32>, vector<8x384xf32> -> vector<8x384xf32>
    %122 = vector.extract_strided_slice %117 {offsets = [0, 0], sizes = [8, 128], strides = [1, 1]} : vector<8x384xf32> to vector<8x128xf32>
    %123 = vector.extract_strided_slice %121 {offsets = [0, 0], sizes = [8, 128], strides = [1, 1]} : vector<8x384xf32> to vector<8x128xf32>
    %124 = arith.addf %122, %123 : vector<8x128xf32>
    %125 = arith.negf %124 : vector<8x128xf32>
    %126 = math.exp %125 : vector<8x128xf32>
    %cst_60 = arith.constant 1.000000e+00 : f32
    %127 = vector.broadcast %cst_60 : f32 to vector<8x128xf32>
    %128 = arith.addf %127, %126 : vector<8x128xf32>
    %129 = arith.divf %127, %128 : vector<8x128xf32>
    %130 = vector.extract_strided_slice %117 {offsets = [0, 128], sizes = [8, 128], strides = [1, 1]} : vector<8x384xf32> to vector<8x128xf32>
    %131 = vector.extract_strided_slice %121 {offsets = [0, 128], sizes = [8, 128], strides = [1, 1]} : vector<8x384xf32> to vector<8x128xf32>
    %132 = arith.addf %130, %131 : vector<8x128xf32>
    %133 = arith.negf %132 : vector<8x128xf32>
    %134 = math.exp %133 : vector<8x128xf32>
    %cst_61 = arith.constant 1.000000e+00 : f32
    %135 = vector.broadcast %cst_61 : f32 to vector<8x128xf32>
    %136 = arith.addf %135, %134 : vector<8x128xf32>
    %137 = arith.divf %135, %136 : vector<8x128xf32>
    %138 = vector.extract_strided_slice %117 {offsets = [0, 256], sizes = [8, 128], strides = [1, 1]} : vector<8x384xf32> to vector<8x128xf32>
    %139 = vector.extract_strided_slice %121 {offsets = [0, 256], sizes = [8, 128], strides = [1, 1]} : vector<8x384xf32> to vector<8x128xf32>
    %c0_62 = arith.constant 0 : index
    %c0_63 = arith.constant 0 : index
    %c0_64 = arith.constant 0 : index
    %140 = vector.load %arg6[%c0_62, %c0_63, %c0_64] : memref<1x1x128xf32, #tpu.memory_space<vmem>>, vector<1x1x128xf32>
    %141 = vector.shape_cast %140 : vector<1x1x128xf32> to vector<1x128xf32>
    %142 = vector.broadcast %141 : vector<1x128xf32> to vector<8x128xf32>
    %143 = arith.addf %139, %142 : vector<8x128xf32>
    %144 = arith.mulf %129, %143 : vector<8x128xf32>
    %145 = arith.addf %138, %144 : vector<8x128xf32>
    %146 = math.tanh %145 : vector<8x128xf32>
    %cst_65 = arith.constant 1.000000e+00 : f32
    %147 = vector.broadcast %cst_65 : f32 to vector<8x128xf32>
    %148 = arith.subf %147, %137 : vector<8x128xf32>
    %149 = arith.mulf %148, %146 : vector<8x128xf32>
    %150 = arith.mulf %137, %118 : vector<8x128xf32>
    %151 = arith.addf %149, %150 : vector<8x128xf32>
    %c0_66 = arith.constant 0 : index
    %c0_67 = arith.constant 0 : index
    %152 = vector.load %arg10[%c0_66, %c0_67] : memref<8x128xf32, #tpu.memory_space<vmem>>, vector<8x128xf32>
    tpu.vector_store %arg10[%c0_66, %c0_67], %151 {strides = array<i32>} : memref<8x128xf32, #tpu.memory_space<vmem>>, vector<8x128xf32>,
    %153 = arith.index_cast %113 : i32 to index
    %c0_68 = arith.constant 0 : index
    %c0_69 = arith.constant 0 : index
    %154 = vector.load %arg8[%153, %c0_68, %c0_69] : memref<8x8x128xf32, #tpu.memory_space<vmem>>, vector<1x8x128xf32>
    %155 = vector.shape_cast %154 : vector<1x8x128xf32> to vector<8x128xf32>
    %156 = vector.shape_cast %151 : vector<8x128xf32> to vector<1x8x128xf32>
    tpu.vector_store %arg8[%153, %c0_68, %c0_69], %156 {strides = array<i32>} : memref<8x8x128xf32, #tpu.memory_space<vmem>>, vector<1x8x128xf32>,
    %c3_i32 = arith.constant 3 : i32
    %c1_i32_70 = arith.constant 1 : i32
    %157 = arith.subi %c1_i32_70, %arg0 : i32
    %158 = arith.muli %157, %c3_i32 : i32
    %c7_i32_71 = arith.constant 7 : i32
    %159 = arith.subi %c7_i32_71, %c3_i32 : i32
    %160 = arith.muli %arg0, %159 : i32
    %161 = arith.addi %158, %160 : i32
    %c8_i32_72 = arith.constant 8 : i32
    %162 = arith.muli %161, %c8_i32_72 : i32
    %163 = tpu.assume_multiple %162, 8 : i32
    %164 = arith.index_cast %163 : i32 to index
    %c0_73 = arith.constant 0 : index
    %165 = vector.load %arg11[%164, %c0_73] : memref<64x384xf32, #tpu.memory_space<vmem>>, vector<8x384xf32>
    %c0_74 = arith.constant 0 : index
    %c0_75 = arith.constant 0 : index
    %166 = vector.load %arg10[%c0_74, %c0_75] : memref<8x128xf32, #tpu.memory_space<vmem>>, vector<8x128xf32>
    %c0_76 = arith.constant 0 : index
    %c0_77 = arith.constant 0 : index
    %c0_78 = arith.constant 0 : index
    %167 = vector.load %arg4[%c0_76, %c0_77, %c0_78] : memref<1x128x384xf32, #tpu.memory_space<vmem>>, vector<1x128x384xf32>
    %168 = vector.shape_cast %167 : vector<1x128x384xf32> to vector<128x384xf32>
    %cst_79 = arith.constant dense<0.000000e+00> : vector<8x384xf32>
    %169 = tpu.matmul %166, %168, %cst_79 {dimension_numbers = #tpu.dot_dimension_numbers<[1], [0], [0], [1], [0, 0, 1, 1], [], []>} : vector<8x128xf32>, vector<128x384xf32>, vector<8x384xf32> -> vector<8x384xf32>
    %170 = vector.extract_strided_slice %165 {offsets = [0, 0], sizes = [8, 128], strides = [1, 1]} : vector<8x384xf32> to vector<8x128xf32>
    %171 = vector.extract_strided_slice %169 {offsets = [0, 0], sizes = [8, 128], strides = [1, 1]} : vector<8x384xf32> to vector<8x128xf32>
    %172 = arith.addf %170, %171 : vector<8x128xf32>
    %173 = arith.negf %172 : vector<8x128xf32>
    %174 = math.exp %173 : vector<8x128xf32>
    %cst_80 = arith.constant 1.000000e+00 : f32
    %175 = vector.broadcast %cst_80 : f32 to vector<8x128xf32>
    %176 = arith.addf %175, %174 : vector<8x128xf32>
    %177 = arith.divf %175, %176 : vector<8x128xf32>
    %178 = vector.extract_strided_slice %165 {offsets = [0, 128], sizes = [8, 128], strides = [1, 1]} : vector<8x384xf32> to vector<8x128xf32>
    %179 = vector.extract_strided_slice %169 {offsets = [0, 128], sizes = [8, 128], strides = [1, 1]} : vector<8x384xf32> to vector<8x128xf32>
    %180 = arith.addf %178, %179 : vector<8x128xf32>
    %181 = arith.negf %180 : vector<8x128xf32>
    %182 = math.exp %181 : vector<8x128xf32>
    %cst_81 = arith.constant 1.000000e+00 : f32
    %183 = vector.broadcast %cst_81 : f32 to vector<8x128xf32>
    %184 = arith.addf %183, %182 : vector<8x128xf32>
    %185 = arith.divf %183, %184 : vector<8x128xf32>
    %186 = vector.extract_strided_slice %165 {offsets = [0, 256], sizes = [8, 128], strides = [1, 1]} : vector<8x384xf32> to vector<8x128xf32>
    %187 = vector.extract_strided_slice %169 {offsets = [0, 256], sizes = [8, 128], strides = [1, 1]} : vector<8x384xf32> to vector<8x128xf32>
    %c0_82 = arith.constant 0 : index
    %c0_83 = arith.constant 0 : index
    %c0_84 = arith.constant 0 : index
    %188 = vector.load %arg6[%c0_82, %c0_83, %c0_84] : memref<1x1x128xf32, #tpu.memory_space<vmem>>, vector<1x1x128xf32>
    %189 = vector.shape_cast %188 : vector<1x1x128xf32> to vector<1x128xf32>
    %190 = vector.broadcast %189 : vector<1x128xf32> to vector<8x128xf32>
    %191 = arith.addf %187, %190 : vector<8x128xf32>
    %192 = arith.mulf %177, %191 : vector<8x128xf32>
    %193 = arith.addf %186, %192 : vector<8x128xf32>
    %194 = math.tanh %193 : vector<8x128xf32>
    %cst_85 = arith.constant 1.000000e+00 : f32
    %195 = vector.broadcast %cst_85 : f32 to vector<8x128xf32>
    %196 = arith.subf %195, %185 : vector<8x128xf32>
    %197 = arith.mulf %196, %194 : vector<8x128xf32>
    %198 = arith.mulf %185, %166 : vector<8x128xf32>
    %199 = arith.addf %197, %198 : vector<8x128xf32>
    %c0_86 = arith.constant 0 : index
    %c0_87 = arith.constant 0 : index
    %200 = vector.load %arg10[%c0_86, %c0_87] : memref<8x128xf32, #tpu.memory_space<vmem>>, vector<8x128xf32>
    tpu.vector_store %arg10[%c0_86, %c0_87], %199 {strides = array<i32>} : memref<8x128xf32, #tpu.memory_space<vmem>>, vector<8x128xf32>,
    %201 = arith.index_cast %161 : i32 to index
    %c0_88 = arith.constant 0 : index
    %c0_89 = arith.constant 0 : index
    %202 = vector.load %arg8[%201, %c0_88, %c0_89] : memref<8x8x128xf32, #tpu.memory_space<vmem>>, vector<1x8x128xf32>
    %203 = vector.shape_cast %202 : vector<1x8x128xf32> to vector<8x128xf32>
    %204 = vector.shape_cast %199 : vector<8x128xf32> to vector<1x8x128xf32>
    tpu.vector_store %arg8[%201, %c0_88, %c0_89], %204 {strides = array<i32>} : memref<8x8x128xf32, #tpu.memory_space<vmem>>, vector<1x8x128xf32>,
    %c4_i32 = arith.constant 4 : i32
    %c1_i32_90 = arith.constant 1 : i32
    %205 = arith.subi %c1_i32_90, %arg0 : i32
    %206 = arith.muli %205, %c4_i32 : i32
    %c7_i32_91 = arith.constant 7 : i32
    %207 = arith.subi %c7_i32_91, %c4_i32 : i32
    %208 = arith.muli %arg0, %207 : i32
    %209 = arith.addi %206, %208 : i32
    %c8_i32_92 = arith.constant 8 : i32
    %210 = arith.muli %209, %c8_i32_92 : i32
    %211 = tpu.assume_multiple %210, 8 : i32
    %212 = arith.index_cast %211 : i32 to index
    %c0_93 = arith.constant 0 : index
    %213 = vector.load %arg11[%212, %c0_93] : memref<64x384xf32, #tpu.memory_space<vmem>>, vector<8x384xf32>
    %c0_94 = arith.constant 0 : index
    %c0_95 = arith.constant 0 : index
    %214 = vector.load %arg10[%c0_94, %c0_95] : memref<8x128xf32, #tpu.memory_space<vmem>>, vector<8x128xf32>
    %c0_96 = arith.constant 0 : index
    %c0_97 = arith.constant 0 : index
    %c0_98 = arith.constant 0 : index
    %215 = vector.load %arg4[%c0_96, %c0_97, %c0_98] : memref<1x128x384xf32, #tpu.memory_space<vmem>>, vector<1x128x384xf32>
    %216 = vector.shape_cast %215 : vector<1x128x384xf32> to vector<128x384xf32>
    %cst_99 = arith.constant dense<0.000000e+00> : vector<8x384xf32>
    %217 = tpu.matmul %214, %216, %cst_99 {dimension_numbers = #tpu.dot_dimension_numbers<[1], [0], [0], [1], [0, 0, 1, 1], [], []>} : vector<8x128xf32>, vector<128x384xf32>, vector<8x384xf32> -> vector<8x384xf32>
    %218 = vector.extract_strided_slice %213 {offsets = [0, 0], sizes = [8, 128], strides = [1, 1]} : vector<8x384xf32> to vector<8x128xf32>
    %219 = vector.extract_strided_slice %217 {offsets = [0, 0], sizes = [8, 128], strides = [1, 1]} : vector<8x384xf32> to vector<8x128xf32>
    %220 = arith.addf %218, %219 : vector<8x128xf32>
    %221 = arith.negf %220 : vector<8x128xf32>
    %222 = math.exp %221 : vector<8x128xf32>
    %cst_100 = arith.constant 1.000000e+00 : f32
    %223 = vector.broadcast %cst_100 : f32 to vector<8x128xf32>
    %224 = arith.addf %223, %222 : vector<8x128xf32>
    %225 = arith.divf %223, %224 : vector<8x128xf32>
    %226 = vector.extract_strided_slice %213 {offsets = [0, 128], sizes = [8, 128], strides = [1, 1]} : vector<8x384xf32> to vector<8x128xf32>
    %227 = vector.extract_strided_slice %217 {offsets = [0, 128], sizes = [8, 128], strides = [1, 1]} : vector<8x384xf32> to vector<8x128xf32>
    %228 = arith.addf %226, %227 : vector<8x128xf32>
    %229 = arith.negf %228 : vector<8x128xf32>
    %230 = math.exp %229 : vector<8x128xf32>
    %cst_101 = arith.constant 1.000000e+00 : f32
    %231 = vector.broadcast %cst_101 : f32 to vector<8x128xf32>
    %232 = arith.addf %231, %230 : vector<8x128xf32>
    %233 = arith.divf %231, %232 : vector<8x128xf32>
    %234 = vector.extract_strided_slice %213 {offsets = [0, 256], sizes = [8, 128], strides = [1, 1]} : vector<8x384xf32> to vector<8x128xf32>
    %235 = vector.extract_strided_slice %217 {offsets = [0, 256], sizes = [8, 128], strides = [1, 1]} : vector<8x384xf32> to vector<8x128xf32>
    %c0_102 = arith.constant 0 : index
    %c0_103 = arith.constant 0 : index
    %c0_104 = arith.constant 0 : index
    %236 = vector.load %arg6[%c0_102, %c0_103, %c0_104] : memref<1x1x128xf32, #tpu.memory_space<vmem>>, vector<1x1x128xf32>
    %237 = vector.shape_cast %236 : vector<1x1x128xf32> to vector<1x128xf32>
    %238 = vector.broadcast %237 : vector<1x128xf32> to vector<8x128xf32>
    %239 = arith.addf %235, %238 : vector<8x128xf32>
    %240 = arith.mulf %225, %239 : vector<8x128xf32>
    %241 = arith.addf %234, %240 : vector<8x128xf32>
    %242 = math.tanh %241 : vector<8x128xf32>
    %cst_105 = arith.constant 1.000000e+00 : f32
    %243 = vector.broadcast %cst_105 : f32 to vector<8x128xf32>
    %244 = arith.subf %243, %233 : vector<8x128xf32>
    %245 = arith.mulf %244, %242 : vector<8x128xf32>
    %246 = arith.mulf %233, %214 : vector<8x128xf32>
    %247 = arith.addf %245, %246 : vector<8x128xf32>
    %c0_106 = arith.constant 0 : index
    %c0_107 = arith.constant 0 : index
    %248 = vector.load %arg10[%c0_106, %c0_107] : memref<8x128xf32, #tpu.memory_space<vmem>>, vector<8x128xf32>
    tpu.vector_store %arg10[%c0_106, %c0_107], %247 {strides = array<i32>} : memref<8x128xf32, #tpu.memory_space<vmem>>, vector<8x128xf32>,
    %249 = arith.index_cast %209 : i32 to index
    %c0_108 = arith.constant 0 : index
    %c0_109 = arith.constant 0 : index
    %250 = vector.load %arg8[%249, %c0_108, %c0_109] : memref<8x8x128xf32, #tpu.memory_space<vmem>>, vector<1x8x128xf32>
    %251 = vector.shape_cast %250 : vector<1x8x128xf32> to vector<8x128xf32>
    %252 = vector.shape_cast %247 : vector<8x128xf32> to vector<1x8x128xf32>
    tpu.vector_store %arg8[%249, %c0_108, %c0_109], %252 {strides = array<i32>} : memref<8x8x128xf32, #tpu.memory_space<vmem>>, vector<1x8x128xf32>,
    %c5_i32 = arith.constant 5 : i32
    %c1_i32_110 = arith.constant 1 : i32
    %253 = arith.subi %c1_i32_110, %arg0 : i32
    %254 = arith.muli %253, %c5_i32 : i32
    %c7_i32_111 = arith.constant 7 : i32
    %255 = arith.subi %c7_i32_111, %c5_i32 : i32
    %256 = arith.muli %arg0, %255 : i32
    %257 = arith.addi %254, %256 : i32
    %c8_i32_112 = arith.constant 8 : i32
    %258 = arith.muli %257, %c8_i32_112 : i32
    %259 = tpu.assume_multiple %258, 8 : i32
    %260 = arith.index_cast %259 : i32 to index
    %c0_113 = arith.constant 0 : index
    %261 = vector.load %arg11[%260, %c0_113] : memref<64x384xf32, #tpu.memory_space<vmem>>, vector<8x384xf32>
    %c0_114 = arith.constant 0 : index
    %c0_115 = arith.constant 0 : index
    %262 = vector.load %arg10[%c0_114, %c0_115] : memref<8x128xf32, #tpu.memory_space<vmem>>, vector<8x128xf32>
    %c0_116 = arith.constant 0 : index
    %c0_117 = arith.constant 0 : index
    %c0_118 = arith.constant 0 : index
    %263 = vector.load %arg4[%c0_116, %c0_117, %c0_118] : memref<1x128x384xf32, #tpu.memory_space<vmem>>, vector<1x128x384xf32>
    %264 = vector.shape_cast %263 : vector<1x128x384xf32> to vector<128x384xf32>
    %cst_119 = arith.constant dense<0.000000e+00> : vector<8x384xf32>
    %265 = tpu.matmul %262, %264, %cst_119 {dimension_numbers = #tpu.dot_dimension_numbers<[1], [0], [0], [1], [0, 0, 1, 1], [], []>} : vector<8x128xf32>, vector<128x384xf32>, vector<8x384xf32> -> vector<8x384xf32>
    %266 = vector.extract_strided_slice %261 {offsets = [0, 0], sizes = [8, 128], strides = [1, 1]} : vector<8x384xf32> to vector<8x128xf32>
    %267 = vector.extract_strided_slice %265 {offsets = [0, 0], sizes = [8, 128], strides = [1, 1]} : vector<8x384xf32> to vector<8x128xf32>
    %268 = arith.addf %266, %267 : vector<8x128xf32>
    %269 = arith.negf %268 : vector<8x128xf32>
    %270 = math.exp %269 : vector<8x128xf32>
    %cst_120 = arith.constant 1.000000e+00 : f32
    %271 = vector.broadcast %cst_120 : f32 to vector<8x128xf32>
    %272 = arith.addf %271, %270 : vector<8x128xf32>
    %273 = arith.divf %271, %272 : vector<8x128xf32>
    %274 = vector.extract_strided_slice %261 {offsets = [0, 128], sizes = [8, 128], strides = [1, 1]} : vector<8x384xf32> to vector<8x128xf32>
    %275 = vector.extract_strided_slice %265 {offsets = [0, 128], sizes = [8, 128], strides = [1, 1]} : vector<8x384xf32> to vector<8x128xf32>
    %276 = arith.addf %274, %275 : vector<8x128xf32>
    %277 = arith.negf %276 : vector<8x128xf32>
    %278 = math.exp %277 : vector<8x128xf32>
    %cst_121 = arith.constant 1.000000e+00 : f32
    %279 = vector.broadcast %cst_121 : f32 to vector<8x128xf32>
    %280 = arith.addf %279, %278 : vector<8x128xf32>
    %281 = arith.divf %279, %280 : vector<8x128xf32>
    %282 = vector.extract_strided_slice %261 {offsets = [0, 256], sizes = [8, 128], strides = [1, 1]} : vector<8x384xf32> to vector<8x128xf32>
    %283 = vector.extract_strided_slice %265 {offsets = [0, 256], sizes = [8, 128], strides = [1, 1]} : vector<8x384xf32> to vector<8x128xf32>
    %c0_122 = arith.constant 0 : index
    %c0_123 = arith.constant 0 : index
    %c0_124 = arith.constant 0 : index
    %284 = vector.load %arg6[%c0_122, %c0_123, %c0_124] : memref<1x1x128xf32, #tpu.memory_space<vmem>>, vector<1x1x128xf32>
    %285 = vector.shape_cast %284 : vector<1x1x128xf32> to vector<1x128xf32>
    %286 = vector.broadcast %285 : vector<1x128xf32> to vector<8x128xf32>
    %287 = arith.addf %283, %286 : vector<8x128xf32>
    %288 = arith.mulf %273, %287 : vector<8x128xf32>
    %289 = arith.addf %282, %288 : vector<8x128xf32>
    %290 = math.tanh %289 : vector<8x128xf32>
    %cst_125 = arith.constant 1.000000e+00 : f32
    %291 = vector.broadcast %cst_125 : f32 to vector<8x128xf32>
    %292 = arith.subf %291, %281 : vector<8x128xf32>
    %293 = arith.mulf %292, %290 : vector<8x128xf32>
    %294 = arith.mulf %281, %262 : vector<8x128xf32>
    %295 = arith.addf %293, %294 : vector<8x128xf32>
    %c0_126 = arith.constant 0 : index
    %c0_127 = arith.constant 0 : index
    %296 = vector.load %arg10[%c0_126, %c0_127] : memref<8x128xf32, #tpu.memory_space<vmem>>, vector<8x128xf32>
    tpu.vector_store %arg10[%c0_126, %c0_127], %295 {strides = array<i32>} : memref<8x128xf32, #tpu.memory_space<vmem>>, vector<8x128xf32>,
    %297 = arith.index_cast %257 : i32 to index
    %c0_128 = arith.constant 0 : index
    %c0_129 = arith.constant 0 : index
    %298 = vector.load %arg8[%297, %c0_128, %c0_129] : memref<8x8x128xf32, #tpu.memory_space<vmem>>, vector<1x8x128xf32>
    %299 = vector.shape_cast %298 : vector<1x8x128xf32> to vector<8x128xf32>
    %300 = vector.shape_cast %295 : vector<8x128xf32> to vector<1x8x128xf32>
    tpu.vector_store %arg8[%297, %c0_128, %c0_129], %300 {strides = array<i32>} : memref<8x8x128xf32, #tpu.memory_space<vmem>>, vector<1x8x128xf32>,
    %c6_i32 = arith.constant 6 : i32
    %c1_i32_130 = arith.constant 1 : i32
    %301 = arith.subi %c1_i32_130, %arg0 : i32
    %302 = arith.muli %301, %c6_i32 : i32
    %c7_i32_131 = arith.constant 7 : i32
    %303 = arith.subi %c7_i32_131, %c6_i32 : i32
    %304 = arith.muli %arg0, %303 : i32
    %305 = arith.addi %302, %304 : i32
    %c8_i32_132 = arith.constant 8 : i32
    %306 = arith.muli %305, %c8_i32_132 : i32
    %307 = tpu.assume_multiple %306, 8 : i32
    %308 = arith.index_cast %307 : i32 to index
    %c0_133 = arith.constant 0 : index
    %309 = vector.load %arg11[%308, %c0_133] : memref<64x384xf32, #tpu.memory_space<vmem>>, vector<8x384xf32>
    %c0_134 = arith.constant 0 : index
    %c0_135 = arith.constant 0 : index
    %310 = vector.load %arg10[%c0_134, %c0_135] : memref<8x128xf32, #tpu.memory_space<vmem>>, vector<8x128xf32>
    %c0_136 = arith.constant 0 : index
    %c0_137 = arith.constant 0 : index
    %c0_138 = arith.constant 0 : index
    %311 = vector.load %arg4[%c0_136, %c0_137, %c0_138] : memref<1x128x384xf32, #tpu.memory_space<vmem>>, vector<1x128x384xf32>
    %312 = vector.shape_cast %311 : vector<1x128x384xf32> to vector<128x384xf32>
    %cst_139 = arith.constant dense<0.000000e+00> : vector<8x384xf32>
    %313 = tpu.matmul %310, %312, %cst_139 {dimension_numbers = #tpu.dot_dimension_numbers<[1], [0], [0], [1], [0, 0, 1, 1], [], []>} : vector<8x128xf32>, vector<128x384xf32>, vector<8x384xf32> -> vector<8x384xf32>
    %314 = vector.extract_strided_slice %309 {offsets = [0, 0], sizes = [8, 128], strides = [1, 1]} : vector<8x384xf32> to vector<8x128xf32>
    %315 = vector.extract_strided_slice %313 {offsets = [0, 0], sizes = [8, 128], strides = [1, 1]} : vector<8x384xf32> to vector<8x128xf32>
    %316 = arith.addf %314, %315 : vector<8x128xf32>
    %317 = arith.negf %316 : vector<8x128xf32>
    %318 = math.exp %317 : vector<8x128xf32>
    %cst_140 = arith.constant 1.000000e+00 : f32
    %319 = vector.broadcast %cst_140 : f32 to vector<8x128xf32>
    %320 = arith.addf %319, %318 : vector<8x128xf32>
    %321 = arith.divf %319, %320 : vector<8x128xf32>
    %322 = vector.extract_strided_slice %309 {offsets = [0, 128], sizes = [8, 128], strides = [1, 1]} : vector<8x384xf32> to vector<8x128xf32>
    %323 = vector.extract_strided_slice %313 {offsets = [0, 128], sizes = [8, 128], strides = [1, 1]} : vector<8x384xf32> to vector<8x128xf32>
    %324 = arith.addf %322, %323 : vector<8x128xf32>
    %325 = arith.negf %324 : vector<8x128xf32>
    %326 = math.exp %325 : vector<8x128xf32>
    %cst_141 = arith.constant 1.000000e+00 : f32
    %327 = vector.broadcast %cst_141 : f32 to vector<8x128xf32>
    %328 = arith.addf %327, %326 : vector<8x128xf32>
    %329 = arith.divf %327, %328 : vector<8x128xf32>
    %330 = vector.extract_strided_slice %309 {offsets = [0, 256], sizes = [8, 128], strides = [1, 1]} : vector<8x384xf32> to vector<8x128xf32>
    %331 = vector.extract_strided_slice %313 {offsets = [0, 256], sizes = [8, 128], strides = [1, 1]} : vector<8x384xf32> to vector<8x128xf32>
    %c0_142 = arith.constant 0 : index
    %c0_143 = arith.constant 0 : index
    %c0_144 = arith.constant 0 : index
    %332 = vector.load %arg6[%c0_142, %c0_143, %c0_144] : memref<1x1x128xf32, #tpu.memory_space<vmem>>, vector<1x1x128xf32>
    %333 = vector.shape_cast %332 : vector<1x1x128xf32> to vector<1x128xf32>
    %334 = vector.broadcast %333 : vector<1x128xf32> to vector<8x128xf32>
    %335 = arith.addf %331, %334 : vector<8x128xf32>
    %336 = arith.mulf %321, %335 : vector<8x128xf32>
    %337 = arith.addf %330, %336 : vector<8x128xf32>
    %338 = math.tanh %337 : vector<8x128xf32>
    %cst_145 = arith.constant 1.000000e+00 : f32
    %339 = vector.broadcast %cst_145 : f32 to vector<8x128xf32>
    %340 = arith.subf %339, %329 : vector<8x128xf32>
    %341 = arith.mulf %340, %338 : vector<8x128xf32>
    %342 = arith.mulf %329, %310 : vector<8x128xf32>
    %343 = arith.addf %341, %342 : vector<8x128xf32>
    %c0_146 = arith.constant 0 : index
    %c0_147 = arith.constant 0 : index
    %344 = vector.load %arg10[%c0_146, %c0_147] : memref<8x128xf32, #tpu.memory_space<vmem>>, vector<8x128xf32>
    tpu.vector_store %arg10[%c0_146, %c0_147], %343 {strides = array<i32>} : memref<8x128xf32, #tpu.memory_space<vmem>>, vector<8x128xf32>,
    %345 = arith.index_cast %305 : i32 to index
    %c0_148 = arith.constant 0 : index
    %c0_149 = arith.constant 0 : index
    %346 = vector.load %arg8[%345, %c0_148, %c0_149] : memref<8x8x128xf32, #tpu.memory_space<vmem>>, vector<1x8x128xf32>
    %347 = vector.shape_cast %346 : vector<1x8x128xf32> to vector<8x128xf32>
    %348 = vector.shape_cast %343 : vector<8x128xf32> to vector<1x8x128xf32>
    tpu.vector_store %arg8[%345, %c0_148, %c0_149], %348 {strides = array<i32>} : memref<8x8x128xf32, #tpu.memory_space<vmem>>, vector<1x8x128xf32>,
    %c7_i32_150 = arith.constant 7 : i32
    %c1_i32_151 = arith.constant 1 : i32
    %349 = arith.subi %c1_i32_151, %arg0 : i32
    %350 = arith.muli %349, %c7_i32_150 : i32
    %c7_i32_152 = arith.constant 7 : i32
    %351 = arith.subi %c7_i32_152, %c7_i32_150 : i32
    %352 = arith.muli %arg0, %351 : i32
    %353 = arith.addi %350, %352 : i32
    %c8_i32_153 = arith.constant 8 : i32
    %354 = arith.muli %353, %c8_i32_153 : i32
    %355 = tpu.assume_multiple %354, 8 : i32
    %356 = arith.index_cast %355 : i32 to index
    %c0_154 = arith.constant 0 : index
    %357 = vector.load %arg11[%356, %c0_154] : memref<64x384xf32, #tpu.memory_space<vmem>>, vector<8x384xf32>
    %c0_155 = arith.constant 0 : index
    %c0_156 = arith.constant 0 : index
    %358 = vector.load %arg10[%c0_155, %c0_156] : memref<8x128xf32, #tpu.memory_space<vmem>>, vector<8x128xf32>
    %c0_157 = arith.constant 0 : index
    %c0_158 = arith.constant 0 : index
    %c0_159 = arith.constant 0 : index
    %359 = vector.load %arg4[%c0_157, %c0_158, %c0_159] : memref<1x128x384xf32, #tpu.memory_space<vmem>>, vector<1x128x384xf32>
    %360 = vector.shape_cast %359 : vector<1x128x384xf32> to vector<128x384xf32>
    %cst_160 = arith.constant dense<0.000000e+00> : vector<8x384xf32>
    %361 = tpu.matmul %358, %360, %cst_160 {dimension_numbers = #tpu.dot_dimension_numbers<[1], [0], [0], [1], [0, 0, 1, 1], [], []>} : vector<8x128xf32>, vector<128x384xf32>, vector<8x384xf32> -> vector<8x384xf32>
    %362 = vector.extract_strided_slice %357 {offsets = [0, 0], sizes = [8, 128], strides = [1, 1]} : vector<8x384xf32> to vector<8x128xf32>
    %363 = vector.extract_strided_slice %361 {offsets = [0, 0], sizes = [8, 128], strides = [1, 1]} : vector<8x384xf32> to vector<8x128xf32>
    %364 = arith.addf %362, %363 : vector<8x128xf32>
    %365 = arith.negf %364 : vector<8x128xf32>
    %366 = math.exp %365 : vector<8x128xf32>
    %cst_161 = arith.constant 1.000000e+00 : f32
    %367 = vector.broadcast %cst_161 : f32 to vector<8x128xf32>
    %368 = arith.addf %367, %366 : vector<8x128xf32>
    %369 = arith.divf %367, %368 : vector<8x128xf32>
    %370 = vector.extract_strided_slice %357 {offsets = [0, 128], sizes = [8, 128], strides = [1, 1]} : vector<8x384xf32> to vector<8x128xf32>
    %371 = vector.extract_strided_slice %361 {offsets = [0, 128], sizes = [8, 128], strides = [1, 1]} : vector<8x384xf32> to vector<8x128xf32>
    %372 = arith.addf %370, %371 : vector<8x128xf32>
    %373 = arith.negf %372 : vector<8x128xf32>
    %374 = math.exp %373 : vector<8x128xf32>
    %cst_162 = arith.constant 1.000000e+00 : f32
    %375 = vector.broadcast %cst_162 : f32 to vector<8x128xf32>
    %376 = arith.addf %375, %374 : vector<8x128xf32>
    %377 = arith.divf %375, %376 : vector<8x128xf32>
    %378 = vector.extract_strided_slice %357 {offsets = [0, 256], sizes = [8, 128], strides = [1, 1]} : vector<8x384xf32> to vector<8x128xf32>
    %379 = vector.extract_strided_slice %361 {offsets = [0, 256], sizes = [8, 128], strides = [1, 1]} : vector<8x384xf32> to vector<8x128xf32>
    %c0_163 = arith.constant 0 : index
    %c0_164 = arith.constant 0 : index
    %c0_165 = arith.constant 0 : index
    %380 = vector.load %arg6[%c0_163, %c0_164, %c0_165] : memref<1x1x128xf32, #tpu.memory_space<vmem>>, vector<1x1x128xf32>
    %381 = vector.shape_cast %380 : vector<1x1x128xf32> to vector<1x128xf32>
    %382 = vector.broadcast %381 : vector<1x128xf32> to vector<8x128xf32>
    %383 = arith.addf %379, %382 : vector<8x128xf32>
    %384 = arith.mulf %369, %383 : vector<8x128xf32>
    %385 = arith.addf %378, %384 : vector<8x128xf32>
    %386 = math.tanh %385 : vector<8x128xf32>
    %cst_166 = arith.constant 1.000000e+00 : f32
    %387 = vector.broadcast %cst_166 : f32 to vector<8x128xf32>
    %388 = arith.subf %387, %377 : vector<8x128xf32>
    %389 = arith.mulf %388, %386 : vector<8x128xf32>
    %390 = arith.mulf %377, %358 : vector<8x128xf32>
    %391 = arith.addf %389, %390 : vector<8x128xf32>
    %c0_167 = arith.constant 0 : index
    %c0_168 = arith.constant 0 : index
    %392 = vector.load %arg10[%c0_167, %c0_168] : memref<8x128xf32, #tpu.memory_space<vmem>>, vector<8x128xf32>
    tpu.vector_store %arg10[%c0_167, %c0_168], %391 {strides = array<i32>} : memref<8x128xf32, #tpu.memory_space<vmem>>, vector<8x128xf32>,
    %393 = arith.index_cast %353 : i32 to index
    %c0_169 = arith.constant 0 : index
    %c0_170 = arith.constant 0 : index
    %394 = vector.load %arg8[%393, %c0_169, %c0_170] : memref<8x8x128xf32, #tpu.memory_space<vmem>>, vector<1x8x128xf32>
    %395 = vector.shape_cast %394 : vector<1x8x128xf32> to vector<8x128xf32>
    %396 = vector.shape_cast %391 : vector<8x128xf32> to vector<1x8x128xf32>
    tpu.vector_store %arg8[%393, %c0_169, %c0_170], %396 {strides = array<i32>} : memref<8x8x128xf32, #tpu.memory_space<vmem>>, vector<1x8x128xf32>,
    %c8_i32_171 = arith.constant 8 : i32
    %c0_172 = arith.constant 0 : index
    %c0_173 = arith.constant 0 : index
    %397 = vector.load %arg10[%c0_172, %c0_173] : memref<8x128xf32, #tpu.memory_space<vmem>>, vector<8x128xf32>
    %c0_174 = arith.constant 0 : index
    %c0_175 = arith.constant 0 : index
    %c0_176 = arith.constant 0 : index
    %398 = vector.load %arg7[%c0_174, %c0_175, %c0_176] : memref<1x128x32xf32, #tpu.memory_space<vmem>>, vector<1x128x32xf32>
    %399 = vector.shape_cast %398 : vector<1x128x32xf32> to vector<128x32xf32>
    %cst_177 = arith.constant dense<0.000000e+00> : vector<8x32xf32>
    %400 = tpu.matmul %397, %399, %cst_177 {dimension_numbers = #tpu.dot_dimension_numbers<[1], [0], [0], [1], [0, 0, 1, 1], [], []>} : vector<8x128xf32>, vector<128x32xf32>, vector<8x32xf32> -> vector<8x32xf32>
    %c0_178 = arith.constant 0 : index
    %c0_179 = arith.constant 0 : index
    %c0_180 = arith.constant 0 : index
    %401 = vector.load %arg9[%c0_178, %c0_179, %c0_180] : memref<1x8x32xf32, #tpu.memory_space<vmem>>, vector<1x8x32xf32>
    %402 = vector.shape_cast %401 : vector<1x8x32xf32> to vector<8x32xf32>
    %403 = vector.shape_cast %400 : vector<8x32xf32> to vector<1x8x32xf32>
    tpu.vector_store %arg9[%c0_178, %c0_179, %c0_180], %403 {strides = array<i32>} : memref<1x8x32xf32, #tpu.memory_space<vmem>>, vector<1x8x32xf32>,
    return
  }
  func.func @transform_0(%arg0: i32, %arg1: i32) -> (i32, i32, i32) {
    %c1_i32 = arith.constant 1 : i32
    %0 = arith.subi %c1_i32, %arg0 : i32
    %1 = arith.muli %0, %arg1 : i32
    %c0_i32 = arith.constant 0 : i32
    %2 = arith.subi %c0_i32, %arg1 : i32
    %3 = arith.muli %arg0, %2 : i32
    %4 = arith.addi %1, %3 : i32
    %c0_i32_0 = arith.constant 0 : i32
    %c0_i32_1 = arith.constant 0 : i32
    %c0_i32_2 = arith.constant 0 : i32
    return %4, %c0_i32_0, %c0_i32_1 : i32, i32, i32
  }
  func.func @transform_1(%arg0: i32, %arg1: i32) -> (i32, i32, i32) {
    %c0_i32 = arith.constant 0 : i32
    %c0_i32_0 = arith.constant 0 : i32
    %c0_i32_1 = arith.constant 0 : i32
    return %arg0, %c0_i32, %c0_i32_0 : i32, i32, i32
  }
  func.func @transform_2(%arg0: i32, %arg1: i32) -> (i32, i32, i32) {
    %c0_i32 = arith.constant 0 : i32
    %c0_i32_0 = arith.constant 0 : i32
    %c0_i32_1 = arith.constant 0 : i32
    return %arg0, %c0_i32, %c0_i32_0 : i32, i32, i32
  }
  func.func @transform_3(%arg0: i32, %arg1: i32) -> (i32, i32, i32) {
    %c0_i32 = arith.constant 0 : i32
    %c0_i32_0 = arith.constant 0 : i32
    %c0_i32_1 = arith.constant 0 : i32
    return %arg0, %c0_i32, %c0_i32_0 : i32, i32, i32
  }
  func.func @transform_4(%arg0: i32, %arg1: i32) -> (i32, i32, i32) {
    %c0_i32 = arith.constant 0 : i32
    %c0_i32_0 = arith.constant 0 : i32
    %c0_i32_1 = arith.constant 0 : i32
    return %arg0, %c0_i32, %c0_i32_0 : i32, i32, i32
  }
  func.func @transform_5(%arg0: i32, %arg1: i32) -> (i32, i32, i32) {
    %c0_i32 = arith.constant 0 : i32
    %c0_i32_0 = arith.constant 0 : i32
    %c0_i32_1 = arith.constant 0 : i32
    return %arg0, %c0_i32, %c0_i32_0 : i32, i32, i32
  }
  func.func @transform_6(%arg0: i32, %arg1: i32) -> (i32, i32, i32) {
    %c1_i32 = arith.constant 1 : i32
    %0 = arith.subi %c1_i32, %arg0 : i32
    %1 = arith.muli %0, %arg1 : i32
    %c0_i32 = arith.constant 0 : i32
    %2 = arith.subi %c0_i32, %arg1 : i32
    %3 = arith.muli %arg0, %2 : i32
    %4 = arith.addi %1, %3 : i32
    %c0_i32_0 = arith.constant 0 : i32
    %c0_i32_1 = arith.constant 0 : i32
    return %4, %c0_i32_0, %arg0 : i32, i32, i32
  }
  func.func @transform_7(%arg0: i32, %arg1: i32) -> (i32, i32, i32) {
    %c0_i32 = arith.constant 0 : i32
    %c0_i32_0 = arith.constant 0 : i32
    %c0_i32_1 = arith.constant 0 : i32
    return %arg0, %c0_i32, %c0_i32_0 : i32, i32, i32
  }
}

module attributes {stable_mosaic.version = 11 : i64} {
  func.func @_bigru_layer_kernel(%arg0: i32, %arg1: i32, %arg2: memref<8x8x256xf32, #tpu.memory_space<vmem>>, %arg3: memref<1x256x384xf32, #tpu.memory_space<vmem>>, %arg4: memref<1x128x384xf32, #tpu.memory_space<vmem>>, %arg5: memref<1x1x384xf32, #tpu.memory_space<vmem>>, %arg6: memref<1x1x128xf32, #tpu.memory_space<vmem>>, %arg7: memref<1x128x32xf32, #tpu.memory_space<vmem>>, %arg8: memref<8x8x128xf32, #tpu.memory_space<vmem>>, %arg9: memref<1x8x32xf32, #tpu.memory_space<vmem>>, %arg10: memref<8x128xf32, #tpu.memory_space<vmem>>, %arg11: memref<64x384xf32, #tpu.memory_space<vmem>>) attributes {dimension_semantics = [#tpu.dimension_semantics<parallel>, #tpu.dimension_semantics<arbitrary>], iteration_bounds = array<i64: 2, 1>, scalar_prefetch = 0 : i64, scratch_operands = 2 : i64, tpu.core_type = #tpu.core_type<tc>, window_params = [{transform_indices = @transform_0, window_bounds = array<i64: 8, 8, 256>}, {transform_indices = @transform_1, window_bounds = array<i64: 1, 256, 384>}, {transform_indices = @transform_2, window_bounds = array<i64: 1, 128, 384>}, {transform_indices = @transform_3, window_bounds = array<i64: 1, 1, 384>}, {transform_indices = @transform_4, window_bounds = array<i64: 1, 1, 128>}, {transform_indices = @transform_5, window_bounds = array<i64: 1, 128, 32>}, {transform_indices = @transform_6, window_bounds = array<i64: 8, 8, 128>}, {transform_indices = @transform_7, window_bounds = array<i64: 1, 8, 32>}]} {
    %c0_i32 = arith.constant 0 : i32
    %0 = arith.cmpi eq, %arg1, %c0_i32 : i32
    %1 = arith.extui %0 : i1 to i32
    %c0_i32_0 = arith.constant 0 : i32
    %2 = arith.cmpi ne, %1, %c0_i32_0 : i32
    scf.if %2 {
      %cst_181 = arith.constant 0.000000e+00 : f32
      %404 = vector.broadcast %cst_181 : f32 to vector<8x128xf32>
      %c0_182 = arith.constant 0 : index
      %c0_183 = arith.constant 0 : index
      %405 = vector.load %arg10[%c0_182, %c0_183] : memref<8x128xf32, #tpu.memory_space<vmem>>, vector<8x128xf32>
      tpu.vector_store %arg10[%c0_182, %c0_183], %404 {strides = array<i32>} : memref<8x128xf32, #tpu.memory_space<vmem>>, vector<8x128xf32>,
    } else {
    }
    %c0 = arith.constant 0 : index
    %c0_1 = arith.constant 0 : index
    %c0_2 = arith.constant 0 : index
    %3 = vector.load %arg2[%c0, %c0_1, %c0_2] : memref<8x8x256xf32, #tpu.memory_space<vmem>>, vector<8x8x256xf32>
    %4 = vector.shape_cast %3 : vector<8x8x256xf32> to vector<64x256xf32>
    %c0_3 = arith.constant 0 : index
    %c0_4 = arith.constant 0 : index
    %c0_5 = arith.constant 0 : index
    %5 = vector.load %arg3[%c0_3, %c0_4, %c0_5] : memref<1x256x384xf32, #tpu.memory_space<vmem>>, vector<1x256x384xf32>
    %6 = vector.shape_cast %5 : vector<1x256x384xf32> to vector<256x384xf32>
    %cst = arith.constant dense<0.000000e+00> : vector<64x384xf32>
    %7 = tpu.matmul %4, %6, %cst {dimension_numbers = #tpu.dot_dimension_numbers<[1], [0], [0], [1], [0, 0, 1, 1], [], []>} : vector<64x256xf32>, vector<256x384xf32>, vector<64x384xf32> -> vector<64x384xf32>
    %c0_6 = arith.constant 0 : index
    %c0_7 = arith.constant 0 : index
    %c0_8 = arith.constant 0 : index
    %8 = vector.load %arg5[%c0_6, %c0_7, %c0_8] : memref<1x1x384xf32, #tpu.memory_space<vmem>>, vector<1x1x384xf32>
    %9 = vector.shape_cast %8 : vector<1x1x384xf32> to vector<1x384xf32>
    %10 = vector.broadcast %9 : vector<1x384xf32> to vector<64x384xf32>
    %11 = arith.addf %7, %10 : vector<64x384xf32>
    %c0_9 = arith.constant 0 : index
    %c0_10 = arith.constant 0 : index
    %12 = vector.load %arg11[%c0_9, %c0_10] : memref<64x384xf32, #tpu.memory_space<vmem>>, vector<64x384xf32>
    tpu.vector_store %arg11[%c0_9, %c0_10], %11 {strides = array<i32>} : memref<64x384xf32, #tpu.memory_space<vmem>>, vector<64x384xf32>,
    %c0_i32_11 = arith.constant 0 : i32
    %c1_i32 = arith.constant 1 : i32
    %13 = arith.subi %c1_i32, %arg0 : i32
    %14 = arith.muli %13, %c0_i32_11 : i32
    %c7_i32 = arith.constant 7 : i32
    %15 = arith.subi %c7_i32, %c0_i32_11 : i32
    %16 = arith.muli %arg0, %15 : i32
    %17 = arith.addi %14, %16 : i32
    %c8_i32 = arith.constant 8 : i32
    %18 = arith.muli %17, %c8_i32 : i32
    %19 = tpu.assume_multiple %18, 8 : i32
    %20 = arith.index_cast %19 : i32 to index
    %c0_12 = arith.constant 0 : index
    %21 = vector.load %arg11[%20, %c0_12] : memref<64x384xf32, #tpu.memory_space<vmem>>, vector<8x384xf32>
    %c0_13 = arith.constant 0 : index
    %c0_14 = arith.constant 0 : index
    %22 = vector.load %arg10[%c0_13, %c0_14] : memref<8x128xf32, #tpu.memory_space<vmem>>, vector<8x128xf32>
    %c0_15 = arith.constant 0 : index
    %c0_16 = arith.constant 0 : index
    %c0_17 = arith.constant 0 : index
    %23 = vector.load %arg4[%c0_15, %c0_16, %c0_17] : memref<1x128x384xf32, #tpu.memory_space<vmem>>, vector<1x128x384xf32>
    %24 = vector.shape_cast %23 : vector<1x128x384xf32> to vector<128x384xf32>
    %cst_18 = arith.constant dense<0.000000e+00> : vector<8x384xf32>
    %25 = tpu.matmul %22, %24, %cst_18 {dimension_numbers = #tpu.dot_dimension_numbers<[1], [0], [0], [1], [0, 0, 1, 1], [], []>} : vector<8x128xf32>, vector<128x384xf32>, vector<8x384xf32> -> vector<8x384xf32>
    %26 = vector.extract_strided_slice %21 {offsets = [0, 0], sizes = [8, 128], strides = [1, 1]} : vector<8x384xf32> to vector<8x128xf32>
    %27 = vector.extract_strided_slice %25 {offsets = [0, 0], sizes = [8, 128], strides = [1, 1]} : vector<8x384xf32> to vector<8x128xf32>
    %28 = arith.addf %26, %27 : vector<8x128xf32>
    %29 = arith.negf %28 : vector<8x128xf32>
    %30 = math.exp %29 : vector<8x128xf32>
    %cst_19 = arith.constant 1.000000e+00 : f32
    %31 = vector.broadcast %cst_19 : f32 to vector<8x128xf32>
    %32 = arith.addf %31, %30 : vector<8x128xf32>
    %33 = arith.divf %31, %32 : vector<8x128xf32>
    %34 = vector.extract_strided_slice %21 {offsets = [0, 128], sizes = [8, 128], strides = [1, 1]} : vector<8x384xf32> to vector<8x128xf32>
    %35 = vector.extract_strided_slice %25 {offsets = [0, 128], sizes = [8, 128], strides = [1, 1]} : vector<8x384xf32> to vector<8x128xf32>
    %36 = arith.addf %34, %35 : vector<8x128xf32>
    %37 = arith.negf %36 : vector<8x128xf32>
    %38 = math.exp %37 : vector<8x128xf32>
    %cst_20 = arith.constant 1.000000e+00 : f32
    %39 = vector.broadcast %cst_20 : f32 to vector<8x128xf32>
    %40 = arith.addf %39, %38 : vector<8x128xf32>
    %41 = arith.divf %39, %40 : vector<8x128xf32>
    %42 = vector.extract_strided_slice %21 {offsets = [0, 256], sizes = [8, 128], strides = [1, 1]} : vector<8x384xf32> to vector<8x128xf32>
    %43 = vector.extract_strided_slice %25 {offsets = [0, 256], sizes = [8, 128], strides = [1, 1]} : vector<8x384xf32> to vector<8x128xf32>
    %c0_21 = arith.constant 0 : index
    %c0_22 = arith.constant 0 : index
    %c0_23 = arith.constant 0 : index
    %44 = vector.load %arg6[%c0_21, %c0_22, %c0_23] : memref<1x1x128xf32, #tpu.memory_space<vmem>>, vector<1x1x128xf32>
    %45 = vector.shape_cast %44 : vector<1x1x128xf32> to vector<1x128xf32>
    %46 = vector.broadcast %45 : vector<1x128xf32> to vector<8x128xf32>
    %47 = arith.addf %43, %46 : vector<8x128xf32>
    %48 = arith.mulf %33, %47 : vector<8x128xf32>
    %49 = arith.addf %42, %48 : vector<8x128xf32>
    %50 = math.tanh %49 : vector<8x128xf32>
    %cst_24 = arith.constant 1.000000e+00 : f32
    %51 = vector.broadcast %cst_24 : f32 to vector<8x128xf32>
    %52 = arith.subf %51, %41 : vector<8x128xf32>
    %53 = arith.mulf %52, %50 : vector<8x128xf32>
    %54 = arith.mulf %41, %22 : vector<8x128xf32>
    %55 = arith.addf %53, %54 : vector<8x128xf32>
    %c0_25 = arith.constant 0 : index
    %c0_26 = arith.constant 0 : index
    %56 = vector.load %arg10[%c0_25, %c0_26] : memref<8x128xf32, #tpu.memory_space<vmem>>, vector<8x128xf32>
    tpu.vector_store %arg10[%c0_25, %c0_26], %55 {strides = array<i32>} : memref<8x128xf32, #tpu.memory_space<vmem>>, vector<8x128xf32>,
    %57 = arith.index_cast %17 : i32 to index
    %c0_27 = arith.constant 0 : index
    %c0_28 = arith.constant 0 : index
    %58 = vector.load %arg8[%57, %c0_27, %c0_28] : memref<8x8x128xf32, #tpu.memory_space<vmem>>, vector<1x8x128xf32>
    %59 = vector.shape_cast %58 : vector<1x8x128xf32> to vector<8x128xf32>
    %60 = vector.shape_cast %55 : vector<8x128xf32> to vector<1x8x128xf32>
    tpu.vector_store %arg8[%57, %c0_27, %c0_28], %60 {strides = array<i32>} : memref<8x8x128xf32, #tpu.memory_space<vmem>>, vector<1x8x128xf32>,
    %c1_i32_29 = arith.constant 1 : i32
    %c1_i32_30 = arith.constant 1 : i32
    %61 = arith.subi %c1_i32_30, %arg0 : i32
    %62 = arith.muli %61, %c1_i32_29 : i32
    %c7_i32_31 = arith.constant 7 : i32
    %63 = arith.subi %c7_i32_31, %c1_i32_29 : i32
    %64 = arith.muli %arg0, %63 : i32
    %65 = arith.addi %62, %64 : i32
    %c8_i32_32 = arith.constant 8 : i32
    %66 = arith.muli %65, %c8_i32_32 : i32
    %67 = tpu.assume_multiple %66, 8 : i32
    %68 = arith.index_cast %67 : i32 to index
    %c0_33 = arith.constant 0 : index
    %69 = vector.load %arg11[%68, %c0_33] : memref<64x384xf32, #tpu.memory_space<vmem>>, vector<8x384xf32>
    %c0_34 = arith.constant 0 : index
    %c0_35 = arith.constant 0 : index
    %70 = vector.load %arg10[%c0_34, %c0_35] : memref<8x128xf32, #tpu.memory_space<vmem>>, vector<8x128xf32>
    %c0_36 = arith.constant 0 : index
    %c0_37 = arith.constant 0 : index
    %c0_38 = arith.constant 0 : index
    %71 = vector.load %arg4[%c0_36, %c0_37, %c0_38] : memref<1x128x384xf32, #tpu.memory_space<vmem>>, vector<1x128x384xf32>
    %72 = vector.shape_cast %71 : vector<1x128x384xf32> to vector<128x384xf32>
    %cst_39 = arith.constant dense<0.000000e+00> : vector<8x384xf32>
    %73 = tpu.matmul %70, %72, %cst_39 {dimension_numbers = #tpu.dot_dimension_numbers<[1], [0], [0], [1], [0, 0, 1, 1], [], []>} : vector<8x128xf32>, vector<128x384xf32>, vector<8x384xf32> -> vector<8x384xf32>
    %74 = vector.extract_strided_slice %69 {offsets = [0, 0], sizes = [8, 128], strides = [1, 1]} : vector<8x384xf32> to vector<8x128xf32>
    %75 = vector.extract_strided_slice %73 {offsets = [0, 0], sizes = [8, 128], strides = [1, 1]} : vector<8x384xf32> to vector<8x128xf32>
    %76 = arith.addf %74, %75 : vector<8x128xf32>
    %77 = arith.negf %76 : vector<8x128xf32>
    %78 = math.exp %77 : vector<8x128xf32>
    %cst_40 = arith.constant 1.000000e+00 : f32
    %79 = vector.broadcast %cst_40 : f32 to vector<8x128xf32>
    %80 = arith.addf %79, %78 : vector<8x128xf32>
    %81 = arith.divf %79, %80 : vector<8x128xf32>
    %82 = vector.extract_strided_slice %69 {offsets = [0, 128], sizes = [8, 128], strides = [1, 1]} : vector<8x384xf32> to vector<8x128xf32>
    %83 = vector.extract_strided_slice %73 {offsets = [0, 128], sizes = [8, 128], strides = [1, 1]} : vector<8x384xf32> to vector<8x128xf32>
    %84 = arith.addf %82, %83 : vector<8x128xf32>
    %85 = arith.negf %84 : vector<8x128xf32>
    %86 = math.exp %85 : vector<8x128xf32>
    %cst_41 = arith.constant 1.000000e+00 : f32
    %87 = vector.broadcast %cst_41 : f32 to vector<8x128xf32>
    %88 = arith.addf %87, %86 : vector<8x128xf32>
    %89 = arith.divf %87, %88 : vector<8x128xf32>
    %90 = vector.extract_strided_slice %69 {offsets = [0, 256], sizes = [8, 128], strides = [1, 1]} : vector<8x384xf32> to vector<8x128xf32>
    %91 = vector.extract_strided_slice %73 {offsets = [0, 256], sizes = [8, 128], strides = [1, 1]} : vector<8x384xf32> to vector<8x128xf32>
    %c0_42 = arith.constant 0 : index
    %c0_43 = arith.constant 0 : index
    %c0_44 = arith.constant 0 : index
    %92 = vector.load %arg6[%c0_42, %c0_43, %c0_44] : memref<1x1x128xf32, #tpu.memory_space<vmem>>, vector<1x1x128xf32>
    %93 = vector.shape_cast %92 : vector<1x1x128xf32> to vector<1x128xf32>
    %94 = vector.broadcast %93 : vector<1x128xf32> to vector<8x128xf32>
    %95 = arith.addf %91, %94 : vector<8x128xf32>
    %96 = arith.mulf %81, %95 : vector<8x128xf32>
    %97 = arith.addf %90, %96 : vector<8x128xf32>
    %98 = math.tanh %97 : vector<8x128xf32>
    %cst_45 = arith.constant 1.000000e+00 : f32
    %99 = vector.broadcast %cst_45 : f32 to vector<8x128xf32>
    %100 = arith.subf %99, %89 : vector<8x128xf32>
    %101 = arith.mulf %100, %98 : vector<8x128xf32>
    %102 = arith.mulf %89, %70 : vector<8x128xf32>
    %103 = arith.addf %101, %102 : vector<8x128xf32>
    %c0_46 = arith.constant 0 : index
    %c0_47 = arith.constant 0 : index
    %104 = vector.load %arg10[%c0_46, %c0_47] : memref<8x128xf32, #tpu.memory_space<vmem>>, vector<8x128xf32>
    tpu.vector_store %arg10[%c0_46, %c0_47], %103 {strides = array<i32>} : memref<8x128xf32, #tpu.memory_space<vmem>>, vector<8x128xf32>,
    %105 = arith.index_cast %65 : i32 to index
    %c0_48 = arith.constant 0 : index
    %c0_49 = arith.constant 0 : index
    %106 = vector.load %arg8[%105, %c0_48, %c0_49] : memref<8x8x128xf32, #tpu.memory_space<vmem>>, vector<1x8x128xf32>
    %107 = vector.shape_cast %106 : vector<1x8x128xf32> to vector<8x128xf32>
    %108 = vector.shape_cast %103 : vector<8x128xf32> to vector<1x8x128xf32>
    tpu.vector_store %arg8[%105, %c0_48, %c0_49], %108 {strides = array<i32>} : memref<8x8x128xf32, #tpu.memory_space<vmem>>, vector<1x8x128xf32>,
    %c2_i32 = arith.constant 2 : i32
    %c1_i32_50 = arith.constant 1 : i32
    %109 = arith.subi %c1_i32_50, %arg0 : i32
    %110 = arith.muli %109, %c2_i32 : i32
    %c7_i32_51 = arith.constant 7 : i32
    %111 = arith.subi %c7_i32_51, %c2_i32 : i32
    %112 = arith.muli %arg0, %111 : i32
    %113 = arith.addi %110, %112 : i32
    %c8_i32_52 = arith.constant 8 : i32
    %114 = arith.muli %113, %c8_i32_52 : i32
    %115 = tpu.assume_multiple %114, 8 : i32
    %116 = arith.index_cast %115 : i32 to index
    %c0_53 = arith.constant 0 : index
    %117 = vector.load %arg11[%116, %c0_53] : memref<64x384xf32, #tpu.memory_space<vmem>>, vector<8x384xf32>
    %c0_54 = arith.constant 0 : index
    %c0_55 = arith.constant 0 : index
    %118 = vector.load %arg10[%c0_54, %c0_55] : memref<8x128xf32, #tpu.memory_space<vmem>>, vector<8x128xf32>
    %c0_56 = arith.constant 0 : index
    %c0_57 = arith.constant 0 : index
    %c0_58 = arith.constant 0 : index
    %119 = vector.load %arg4[%c0_56, %c0_57, %c0_58] : memref<1x128x384xf32, #tpu.memory_space<vmem>>, vector<1x128x384xf32>
    %120 = vector.shape_cast %119 : vector<1x128x384xf32> to vector<128x384xf32>
    %cst_59 = arith.constant dense<0.000000e+00> : vector<8x384xf32>
    %121 = tpu.matmul %118, %120, %cst_59 {dimension_numbers = #tpu.dot_dimension_numbers<[1], [0], [0], [1], [0, 0, 1, 1], [], []>} : vector<8x128xf32>, vector<128x384xf32>, vector<8x384xf32> -> vector<8x384xf32>
    %122 = vector.extract_strided_slice %117 {offsets = [0, 0], sizes = [8, 128], strides = [1, 1]} : vector<8x384xf32> to vector<8x128xf32>
    %123 = vector.extract_strided_slice %121 {offsets = [0, 0], sizes = [8, 128], strides = [1, 1]} : vector<8x384xf32> to vector<8x128xf32>
    %124 = arith.addf %122, %123 : vector<8x128xf32>
    %125 = arith.negf %124 : vector<8x128xf32>
    %126 = math.exp %125 : vector<8x128xf32>
    %cst_60 = arith.constant 1.000000e+00 : f32
    %127 = vector.broadcast %cst_60 : f32 to vector<8x128xf32>
    %128 = arith.addf %127, %126 : vector<8x128xf32>
    %129 = arith.divf %127, %128 : vector<8x128xf32>
    %130 = vector.extract_strided_slice %117 {offsets = [0, 128], sizes = [8, 128], strides = [1, 1]} : vector<8x384xf32> to vector<8x128xf32>
    %131 = vector.extract_strided_slice %121 {offsets = [0, 128], sizes = [8, 128], strides = [1, 1]} : vector<8x384xf32> to vector<8x128xf32>
    %132 = arith.addf %130, %131 : vector<8x128xf32>
    %133 = arith.negf %132 : vector<8x128xf32>
    %134 = math.exp %133 : vector<8x128xf32>
    %cst_61 = arith.constant 1.000000e+00 : f32
    %135 = vector.broadcast %cst_61 : f32 to vector<8x128xf32>
    %136 = arith.addf %135, %134 : vector<8x128xf32>
    %137 = arith.divf %135, %136 : vector<8x128xf32>
    %138 = vector.extract_strided_slice %117 {offsets = [0, 256], sizes = [8, 128], strides = [1, 1]} : vector<8x384xf32> to vector<8x128xf32>
    %139 = vector.extract_strided_slice %121 {offsets = [0, 256], sizes = [8, 128], strides = [1, 1]} : vector<8x384xf32> to vector<8x128xf32>
    %c0_62 = arith.constant 0 : index
    %c0_63 = arith.constant 0 : index
    %c0_64 = arith.constant 0 : index
    %140 = vector.load %arg6[%c0_62, %c0_63, %c0_64] : memref<1x1x128xf32, #tpu.memory_space<vmem>>, vector<1x1x128xf32>
    %141 = vector.shape_cast %140 : vector<1x1x128xf32> to vector<1x128xf32>
    %142 = vector.broadcast %141 : vector<1x128xf32> to vector<8x128xf32>
    %143 = arith.addf %139, %142 : vector<8x128xf32>
    %144 = arith.mulf %129, %143 : vector<8x128xf32>
    %145 = arith.addf %138, %144 : vector<8x128xf32>
    %146 = math.tanh %145 : vector<8x128xf32>
    %cst_65 = arith.constant 1.000000e+00 : f32
    %147 = vector.broadcast %cst_65 : f32 to vector<8x128xf32>
    %148 = arith.subf %147, %137 : vector<8x128xf32>
    %149 = arith.mulf %148, %146 : vector<8x128xf32>
    %150 = arith.mulf %137, %118 : vector<8x128xf32>
    %151 = arith.addf %149, %150 : vector<8x128xf32>
    %c0_66 = arith.constant 0 : index
    %c0_67 = arith.constant 0 : index
    %152 = vector.load %arg10[%c0_66, %c0_67] : memref<8x128xf32, #tpu.memory_space<vmem>>, vector<8x128xf32>
    tpu.vector_store %arg10[%c0_66, %c0_67], %151 {strides = array<i32>} : memref<8x128xf32, #tpu.memory_space<vmem>>, vector<8x128xf32>,
    %153 = arith.index_cast %113 : i32 to index
    %c0_68 = arith.constant 0 : index
    %c0_69 = arith.constant 0 : index
    %154 = vector.load %arg8[%153, %c0_68, %c0_69] : memref<8x8x128xf32, #tpu.memory_space<vmem>>, vector<1x8x128xf32>
    %155 = vector.shape_cast %154 : vector<1x8x128xf32> to vector<8x128xf32>
    %156 = vector.shape_cast %151 : vector<8x128xf32> to vector<1x8x128xf32>
    tpu.vector_store %arg8[%153, %c0_68, %c0_69], %156 {strides = array<i32>} : memref<8x8x128xf32, #tpu.memory_space<vmem>>, vector<1x8x128xf32>,
    %c3_i32 = arith.constant 3 : i32
    %c1_i32_70 = arith.constant 1 : i32
    %157 = arith.subi %c1_i32_70, %arg0 : i32
    %158 = arith.muli %157, %c3_i32 : i32
    %c7_i32_71 = arith.constant 7 : i32
    %159 = arith.subi %c7_i32_71, %c3_i32 : i32
    %160 = arith.muli %arg0, %159 : i32
    %161 = arith.addi %158, %160 : i32
    %c8_i32_72 = arith.constant 8 : i32
    %162 = arith.muli %161, %c8_i32_72 : i32
    %163 = tpu.assume_multiple %162, 8 : i32
    %164 = arith.index_cast %163 : i32 to index
    %c0_73 = arith.constant 0 : index
    %165 = vector.load %arg11[%164, %c0_73] : memref<64x384xf32, #tpu.memory_space<vmem>>, vector<8x384xf32>
    %c0_74 = arith.constant 0 : index
    %c0_75 = arith.constant 0 : index
    %166 = vector.load %arg10[%c0_74, %c0_75] : memref<8x128xf32, #tpu.memory_space<vmem>>, vector<8x128xf32>
    %c0_76 = arith.constant 0 : index
    %c0_77 = arith.constant 0 : index
    %c0_78 = arith.constant 0 : index
    %167 = vector.load %arg4[%c0_76, %c0_77, %c0_78] : memref<1x128x384xf32, #tpu.memory_space<vmem>>, vector<1x128x384xf32>
    %168 = vector.shape_cast %167 : vector<1x128x384xf32> to vector<128x384xf32>
    %cst_79 = arith.constant dense<0.000000e+00> : vector<8x384xf32>
    %169 = tpu.matmul %166, %168, %cst_79 {dimension_numbers = #tpu.dot_dimension_numbers<[1], [0], [0], [1], [0, 0, 1, 1], [], []>} : vector<8x128xf32>, vector<128x384xf32>, vector<8x384xf32> -> vector<8x384xf32>
    %170 = vector.extract_strided_slice %165 {offsets = [0, 0], sizes = [8, 128], strides = [1, 1]} : vector<8x384xf32> to vector<8x128xf32>
    %171 = vector.extract_strided_slice %169 {offsets = [0, 0], sizes = [8, 128], strides = [1, 1]} : vector<8x384xf32> to vector<8x128xf32>
    %172 = arith.addf %170, %171 : vector<8x128xf32>
    %173 = arith.negf %172 : vector<8x128xf32>
    %174 = math.exp %173 : vector<8x128xf32>
    %cst_80 = arith.constant 1.000000e+00 : f32
    %175 = vector.broadcast %cst_80 : f32 to vector<8x128xf32>
    %176 = arith.addf %175, %174 : vector<8x128xf32>
    %177 = arith.divf %175, %176 : vector<8x128xf32>
    %178 = vector.extract_strided_slice %165 {offsets = [0, 128], sizes = [8, 128], strides = [1, 1]} : vector<8x384xf32> to vector<8x128xf32>
    %179 = vector.extract_strided_slice %169 {offsets = [0, 128], sizes = [8, 128], strides = [1, 1]} : vector<8x384xf32> to vector<8x128xf32>
    %180 = arith.addf %178, %179 : vector<8x128xf32>
    %181 = arith.negf %180 : vector<8x128xf32>
    %182 = math.exp %181 : vector<8x128xf32>
    %cst_81 = arith.constant 1.000000e+00 : f32
    %183 = vector.broadcast %cst_81 : f32 to vector<8x128xf32>
    %184 = arith.addf %183, %182 : vector<8x128xf32>
    %185 = arith.divf %183, %184 : vector<8x128xf32>
    %186 = vector.extract_strided_slice %165 {offsets = [0, 256], sizes = [8, 128], strides = [1, 1]} : vector<8x384xf32> to vector<8x128xf32>
    %187 = vector.extract_strided_slice %169 {offsets = [0, 256], sizes = [8, 128], strides = [1, 1]} : vector<8x384xf32> to vector<8x128xf32>
    %c0_82 = arith.constant 0 : index
    %c0_83 = arith.constant 0 : index
    %c0_84 = arith.constant 0 : index
    %188 = vector.load %arg6[%c0_82, %c0_83, %c0_84] : memref<1x1x128xf32, #tpu.memory_space<vmem>>, vector<1x1x128xf32>
    %189 = vector.shape_cast %188 : vector<1x1x128xf32> to vector<1x128xf32>
    %190 = vector.broadcast %189 : vector<1x128xf32> to vector<8x128xf32>
    %191 = arith.addf %187, %190 : vector<8x128xf32>
    %192 = arith.mulf %177, %191 : vector<8x128xf32>
    %193 = arith.addf %186, %192 : vector<8x128xf32>
    %194 = math.tanh %193 : vector<8x128xf32>
    %cst_85 = arith.constant 1.000000e+00 : f32
    %195 = vector.broadcast %cst_85 : f32 to vector<8x128xf32>
    %196 = arith.subf %195, %185 : vector<8x128xf32>
    %197 = arith.mulf %196, %194 : vector<8x128xf32>
    %198 = arith.mulf %185, %166 : vector<8x128xf32>
    %199 = arith.addf %197, %198 : vector<8x128xf32>
    %c0_86 = arith.constant 0 : index
    %c0_87 = arith.constant 0 : index
    %200 = vector.load %arg10[%c0_86, %c0_87] : memref<8x128xf32, #tpu.memory_space<vmem>>, vector<8x128xf32>
    tpu.vector_store %arg10[%c0_86, %c0_87], %199 {strides = array<i32>} : memref<8x128xf32, #tpu.memory_space<vmem>>, vector<8x128xf32>,
    %201 = arith.index_cast %161 : i32 to index
    %c0_88 = arith.constant 0 : index
    %c0_89 = arith.constant 0 : index
    %202 = vector.load %arg8[%201, %c0_88, %c0_89] : memref<8x8x128xf32, #tpu.memory_space<vmem>>, vector<1x8x128xf32>
    %203 = vector.shape_cast %202 : vector<1x8x128xf32> to vector<8x128xf32>
    %204 = vector.shape_cast %199 : vector<8x128xf32> to vector<1x8x128xf32>
    tpu.vector_store %arg8[%201, %c0_88, %c0_89], %204 {strides = array<i32>} : memref<8x8x128xf32, #tpu.memory_space<vmem>>, vector<1x8x128xf32>,
    %c4_i32 = arith.constant 4 : i32
    %c1_i32_90 = arith.constant 1 : i32
    %205 = arith.subi %c1_i32_90, %arg0 : i32
    %206 = arith.muli %205, %c4_i32 : i32
    %c7_i32_91 = arith.constant 7 : i32
    %207 = arith.subi %c7_i32_91, %c4_i32 : i32
    %208 = arith.muli %arg0, %207 : i32
    %209 = arith.addi %206, %208 : i32
    %c8_i32_92 = arith.constant 8 : i32
    %210 = arith.muli %209, %c8_i32_92 : i32
    %211 = tpu.assume_multiple %210, 8 : i32
    %212 = arith.index_cast %211 : i32 to index
    %c0_93 = arith.constant 0 : index
    %213 = vector.load %arg11[%212, %c0_93] : memref<64x384xf32, #tpu.memory_space<vmem>>, vector<8x384xf32>
    %c0_94 = arith.constant 0 : index
    %c0_95 = arith.constant 0 : index
    %214 = vector.load %arg10[%c0_94, %c0_95] : memref<8x128xf32, #tpu.memory_space<vmem>>, vector<8x128xf32>
    %c0_96 = arith.constant 0 : index
    %c0_97 = arith.constant 0 : index
    %c0_98 = arith.constant 0 : index
    %215 = vector.load %arg4[%c0_96, %c0_97, %c0_98] : memref<1x128x384xf32, #tpu.memory_space<vmem>>, vector<1x128x384xf32>
    %216 = vector.shape_cast %215 : vector<1x128x384xf32> to vector<128x384xf32>
    %cst_99 = arith.constant dense<0.000000e+00> : vector<8x384xf32>
    %217 = tpu.matmul %214, %216, %cst_99 {dimension_numbers = #tpu.dot_dimension_numbers<[1], [0], [0], [1], [0, 0, 1, 1], [], []>} : vector<8x128xf32>, vector<128x384xf32>, vector<8x384xf32> -> vector<8x384xf32>
    %218 = vector.extract_strided_slice %213 {offsets = [0, 0], sizes = [8, 128], strides = [1, 1]} : vector<8x384xf32> to vector<8x128xf32>
    %219 = vector.extract_strided_slice %217 {offsets = [0, 0], sizes = [8, 128], strides = [1, 1]} : vector<8x384xf32> to vector<8x128xf32>
    %220 = arith.addf %218, %219 : vector<8x128xf32>
    %221 = arith.negf %220 : vector<8x128xf32>
    %222 = math.exp %221 : vector<8x128xf32>
    %cst_100 = arith.constant 1.000000e+00 : f32
    %223 = vector.broadcast %cst_100 : f32 to vector<8x128xf32>
    %224 = arith.addf %223, %222 : vector<8x128xf32>
    %225 = arith.divf %223, %224 : vector<8x128xf32>
    %226 = vector.extract_strided_slice %213 {offsets = [0, 128], sizes = [8, 128], strides = [1, 1]} : vector<8x384xf32> to vector<8x128xf32>
    %227 = vector.extract_strided_slice %217 {offsets = [0, 128], sizes = [8, 128], strides = [1, 1]} : vector<8x384xf32> to vector<8x128xf32>
    %228 = arith.addf %226, %227 : vector<8x128xf32>
    %229 = arith.negf %228 : vector<8x128xf32>
    %230 = math.exp %229 : vector<8x128xf32>
    %cst_101 = arith.constant 1.000000e+00 : f32
    %231 = vector.broadcast %cst_101 : f32 to vector<8x128xf32>
    %232 = arith.addf %231, %230 : vector<8x128xf32>
    %233 = arith.divf %231, %232 : vector<8x128xf32>
    %234 = vector.extract_strided_slice %213 {offsets = [0, 256], sizes = [8, 128], strides = [1, 1]} : vector<8x384xf32> to vector<8x128xf32>
    %235 = vector.extract_strided_slice %217 {offsets = [0, 256], sizes = [8, 128], strides = [1, 1]} : vector<8x384xf32> to vector<8x128xf32>
    %c0_102 = arith.constant 0 : index
    %c0_103 = arith.constant 0 : index
    %c0_104 = arith.constant 0 : index
    %236 = vector.load %arg6[%c0_102, %c0_103, %c0_104] : memref<1x1x128xf32, #tpu.memory_space<vmem>>, vector<1x1x128xf32>
    %237 = vector.shape_cast %236 : vector<1x1x128xf32> to vector<1x128xf32>
    %238 = vector.broadcast %237 : vector<1x128xf32> to vector<8x128xf32>
    %239 = arith.addf %235, %238 : vector<8x128xf32>
    %240 = arith.mulf %225, %239 : vector<8x128xf32>
    %241 = arith.addf %234, %240 : vector<8x128xf32>
    %242 = math.tanh %241 : vector<8x128xf32>
    %cst_105 = arith.constant 1.000000e+00 : f32
    %243 = vector.broadcast %cst_105 : f32 to vector<8x128xf32>
    %244 = arith.subf %243, %233 : vector<8x128xf32>
    %245 = arith.mulf %244, %242 : vector<8x128xf32>
    %246 = arith.mulf %233, %214 : vector<8x128xf32>
    %247 = arith.addf %245, %246 : vector<8x128xf32>
    %c0_106 = arith.constant 0 : index
    %c0_107 = arith.constant 0 : index
    %248 = vector.load %arg10[%c0_106, %c0_107] : memref<8x128xf32, #tpu.memory_space<vmem>>, vector<8x128xf32>
    tpu.vector_store %arg10[%c0_106, %c0_107], %247 {strides = array<i32>} : memref<8x128xf32, #tpu.memory_space<vmem>>, vector<8x128xf32>,
    %249 = arith.index_cast %209 : i32 to index
    %c0_108 = arith.constant 0 : index
    %c0_109 = arith.constant 0 : index
    %250 = vector.load %arg8[%249, %c0_108, %c0_109] : memref<8x8x128xf32, #tpu.memory_space<vmem>>, vector<1x8x128xf32>
    %251 = vector.shape_cast %250 : vector<1x8x128xf32> to vector<8x128xf32>
    %252 = vector.shape_cast %247 : vector<8x128xf32> to vector<1x8x128xf32>
    tpu.vector_store %arg8[%249, %c0_108, %c0_109], %252 {strides = array<i32>} : memref<8x8x128xf32, #tpu.memory_space<vmem>>, vector<1x8x128xf32>,
    %c5_i32 = arith.constant 5 : i32
    %c1_i32_110 = arith.constant 1 : i32
    %253 = arith.subi %c1_i32_110, %arg0 : i32
    %254 = arith.muli %253, %c5_i32 : i32
    %c7_i32_111 = arith.constant 7 : i32
    %255 = arith.subi %c7_i32_111, %c5_i32 : i32
    %256 = arith.muli %arg0, %255 : i32
    %257 = arith.addi %254, %256 : i32
    %c8_i32_112 = arith.constant 8 : i32
    %258 = arith.muli %257, %c8_i32_112 : i32
    %259 = tpu.assume_multiple %258, 8 : i32
    %260 = arith.index_cast %259 : i32 to index
    %c0_113 = arith.constant 0 : index
    %261 = vector.load %arg11[%260, %c0_113] : memref<64x384xf32, #tpu.memory_space<vmem>>, vector<8x384xf32>
    %c0_114 = arith.constant 0 : index
    %c0_115 = arith.constant 0 : index
    %262 = vector.load %arg10[%c0_114, %c0_115] : memref<8x128xf32, #tpu.memory_space<vmem>>, vector<8x128xf32>
    %c0_116 = arith.constant 0 : index
    %c0_117 = arith.constant 0 : index
    %c0_118 = arith.constant 0 : index
    %263 = vector.load %arg4[%c0_116, %c0_117, %c0_118] : memref<1x128x384xf32, #tpu.memory_space<vmem>>, vector<1x128x384xf32>
    %264 = vector.shape_cast %263 : vector<1x128x384xf32> to vector<128x384xf32>
    %cst_119 = arith.constant dense<0.000000e+00> : vector<8x384xf32>
    %265 = tpu.matmul %262, %264, %cst_119 {dimension_numbers = #tpu.dot_dimension_numbers<[1], [0], [0], [1], [0, 0, 1, 1], [], []>} : vector<8x128xf32>, vector<128x384xf32>, vector<8x384xf32> -> vector<8x384xf32>
    %266 = vector.extract_strided_slice %261 {offsets = [0, 0], sizes = [8, 128], strides = [1, 1]} : vector<8x384xf32> to vector<8x128xf32>
    %267 = vector.extract_strided_slice %265 {offsets = [0, 0], sizes = [8, 128], strides = [1, 1]} : vector<8x384xf32> to vector<8x128xf32>
    %268 = arith.addf %266, %267 : vector<8x128xf32>
    %269 = arith.negf %268 : vector<8x128xf32>
    %270 = math.exp %269 : vector<8x128xf32>
    %cst_120 = arith.constant 1.000000e+00 : f32
    %271 = vector.broadcast %cst_120 : f32 to vector<8x128xf32>
    %272 = arith.addf %271, %270 : vector<8x128xf32>
    %273 = arith.divf %271, %272 : vector<8x128xf32>
    %274 = vector.extract_strided_slice %261 {offsets = [0, 128], sizes = [8, 128], strides = [1, 1]} : vector<8x384xf32> to vector<8x128xf32>
    %275 = vector.extract_strided_slice %265 {offsets = [0, 128], sizes = [8, 128], strides = [1, 1]} : vector<8x384xf32> to vector<8x128xf32>
    %276 = arith.addf %274, %275 : vector<8x128xf32>
    %277 = arith.negf %276 : vector<8x128xf32>
    %278 = math.exp %277 : vector<8x128xf32>
    %cst_121 = arith.constant 1.000000e+00 : f32
    %279 = vector.broadcast %cst_121 : f32 to vector<8x128xf32>
    %280 = arith.addf %279, %278 : vector<8x128xf32>
    %281 = arith.divf %279, %280 : vector<8x128xf32>
    %282 = vector.extract_strided_slice %261 {offsets = [0, 256], sizes = [8, 128], strides = [1, 1]} : vector<8x384xf32> to vector<8x128xf32>
    %283 = vector.extract_strided_slice %265 {offsets = [0, 256], sizes = [8, 128], strides = [1, 1]} : vector<8x384xf32> to vector<8x128xf32>
    %c0_122 = arith.constant 0 : index
    %c0_123 = arith.constant 0 : index
    %c0_124 = arith.constant 0 : index
    %284 = vector.load %arg6[%c0_122, %c0_123, %c0_124] : memref<1x1x128xf32, #tpu.memory_space<vmem>>, vector<1x1x128xf32>
    %285 = vector.shape_cast %284 : vector<1x1x128xf32> to vector<1x128xf32>
    %286 = vector.broadcast %285 : vector<1x128xf32> to vector<8x128xf32>
    %287 = arith.addf %283, %286 : vector<8x128xf32>
    %288 = arith.mulf %273, %287 : vector<8x128xf32>
    %289 = arith.addf %282, %288 : vector<8x128xf32>
    %290 = math.tanh %289 : vector<8x128xf32>
    %cst_125 = arith.constant 1.000000e+00 : f32
    %291 = vector.broadcast %cst_125 : f32 to vector<8x128xf32>
    %292 = arith.subf %291, %281 : vector<8x128xf32>
    %293 = arith.mulf %292, %290 : vector<8x128xf32>
    %294 = arith.mulf %281, %262 : vector<8x128xf32>
    %295 = arith.addf %293, %294 : vector<8x128xf32>
    %c0_126 = arith.constant 0 : index
    %c0_127 = arith.constant 0 : index
    %296 = vector.load %arg10[%c0_126, %c0_127] : memref<8x128xf32, #tpu.memory_space<vmem>>, vector<8x128xf32>
    tpu.vector_store %arg10[%c0_126, %c0_127], %295 {strides = array<i32>} : memref<8x128xf32, #tpu.memory_space<vmem>>, vector<8x128xf32>,
    %297 = arith.index_cast %257 : i32 to index
    %c0_128 = arith.constant 0 : index
    %c0_129 = arith.constant 0 : index
    %298 = vector.load %arg8[%297, %c0_128, %c0_129] : memref<8x8x128xf32, #tpu.memory_space<vmem>>, vector<1x8x128xf32>
    %299 = vector.shape_cast %298 : vector<1x8x128xf32> to vector<8x128xf32>
    %300 = vector.shape_cast %295 : vector<8x128xf32> to vector<1x8x128xf32>
    tpu.vector_store %arg8[%297, %c0_128, %c0_129], %300 {strides = array<i32>} : memref<8x8x128xf32, #tpu.memory_space<vmem>>, vector<1x8x128xf32>,
    %c6_i32 = arith.constant 6 : i32
    %c1_i32_130 = arith.constant 1 : i32
    %301 = arith.subi %c1_i32_130, %arg0 : i32
    %302 = arith.muli %301, %c6_i32 : i32
    %c7_i32_131 = arith.constant 7 : i32
    %303 = arith.subi %c7_i32_131, %c6_i32 : i32
    %304 = arith.muli %arg0, %303 : i32
    %305 = arith.addi %302, %304 : i32
    %c8_i32_132 = arith.constant 8 : i32
    %306 = arith.muli %305, %c8_i32_132 : i32
    %307 = tpu.assume_multiple %306, 8 : i32
    %308 = arith.index_cast %307 : i32 to index
    %c0_133 = arith.constant 0 : index
    %309 = vector.load %arg11[%308, %c0_133] : memref<64x384xf32, #tpu.memory_space<vmem>>, vector<8x384xf32>
    %c0_134 = arith.constant 0 : index
    %c0_135 = arith.constant 0 : index
    %310 = vector.load %arg10[%c0_134, %c0_135] : memref<8x128xf32, #tpu.memory_space<vmem>>, vector<8x128xf32>
    %c0_136 = arith.constant 0 : index
    %c0_137 = arith.constant 0 : index
    %c0_138 = arith.constant 0 : index
    %311 = vector.load %arg4[%c0_136, %c0_137, %c0_138] : memref<1x128x384xf32, #tpu.memory_space<vmem>>, vector<1x128x384xf32>
    %312 = vector.shape_cast %311 : vector<1x128x384xf32> to vector<128x384xf32>
    %cst_139 = arith.constant dense<0.000000e+00> : vector<8x384xf32>
    %313 = tpu.matmul %310, %312, %cst_139 {dimension_numbers = #tpu.dot_dimension_numbers<[1], [0], [0], [1], [0, 0, 1, 1], [], []>} : vector<8x128xf32>, vector<128x384xf32>, vector<8x384xf32> -> vector<8x384xf32>
    %314 = vector.extract_strided_slice %309 {offsets = [0, 0], sizes = [8, 128], strides = [1, 1]} : vector<8x384xf32> to vector<8x128xf32>
    %315 = vector.extract_strided_slice %313 {offsets = [0, 0], sizes = [8, 128], strides = [1, 1]} : vector<8x384xf32> to vector<8x128xf32>
    %316 = arith.addf %314, %315 : vector<8x128xf32>
    %317 = arith.negf %316 : vector<8x128xf32>
    %318 = math.exp %317 : vector<8x128xf32>
    %cst_140 = arith.constant 1.000000e+00 : f32
    %319 = vector.broadcast %cst_140 : f32 to vector<8x128xf32>
    %320 = arith.addf %319, %318 : vector<8x128xf32>
    %321 = arith.divf %319, %320 : vector<8x128xf32>
    %322 = vector.extract_strided_slice %309 {offsets = [0, 128], sizes = [8, 128], strides = [1, 1]} : vector<8x384xf32> to vector<8x128xf32>
    %323 = vector.extract_strided_slice %313 {offsets = [0, 128], sizes = [8, 128], strides = [1, 1]} : vector<8x384xf32> to vector<8x128xf32>
    %324 = arith.addf %322, %323 : vector<8x128xf32>
    %325 = arith.negf %324 : vector<8x128xf32>
    %326 = math.exp %325 : vector<8x128xf32>
    %cst_141 = arith.constant 1.000000e+00 : f32
    %327 = vector.broadcast %cst_141 : f32 to vector<8x128xf32>
    %328 = arith.addf %327, %326 : vector<8x128xf32>
    %329 = arith.divf %327, %328 : vector<8x128xf32>
    %330 = vector.extract_strided_slice %309 {offsets = [0, 256], sizes = [8, 128], strides = [1, 1]} : vector<8x384xf32> to vector<8x128xf32>
    %331 = vector.extract_strided_slice %313 {offsets = [0, 256], sizes = [8, 128], strides = [1, 1]} : vector<8x384xf32> to vector<8x128xf32>
    %c0_142 = arith.constant 0 : index
    %c0_143 = arith.constant 0 : index
    %c0_144 = arith.constant 0 : index
    %332 = vector.load %arg6[%c0_142, %c0_143, %c0_144] : memref<1x1x128xf32, #tpu.memory_space<vmem>>, vector<1x1x128xf32>
    %333 = vector.shape_cast %332 : vector<1x1x128xf32> to vector<1x128xf32>
    %334 = vector.broadcast %333 : vector<1x128xf32> to vector<8x128xf32>
    %335 = arith.addf %331, %334 : vector<8x128xf32>
    %336 = arith.mulf %321, %335 : vector<8x128xf32>
    %337 = arith.addf %330, %336 : vector<8x128xf32>
    %338 = math.tanh %337 : vector<8x128xf32>
    %cst_145 = arith.constant 1.000000e+00 : f32
    %339 = vector.broadcast %cst_145 : f32 to vector<8x128xf32>
    %340 = arith.subf %339, %329 : vector<8x128xf32>
    %341 = arith.mulf %340, %338 : vector<8x128xf32>
    %342 = arith.mulf %329, %310 : vector<8x128xf32>
    %343 = arith.addf %341, %342 : vector<8x128xf32>
    %c0_146 = arith.constant 0 : index
    %c0_147 = arith.constant 0 : index
    %344 = vector.load %arg10[%c0_146, %c0_147] : memref<8x128xf32, #tpu.memory_space<vmem>>, vector<8x128xf32>
    tpu.vector_store %arg10[%c0_146, %c0_147], %343 {strides = array<i32>} : memref<8x128xf32, #tpu.memory_space<vmem>>, vector<8x128xf32>,
    %345 = arith.index_cast %305 : i32 to index
    %c0_148 = arith.constant 0 : index
    %c0_149 = arith.constant 0 : index
    %346 = vector.load %arg8[%345, %c0_148, %c0_149] : memref<8x8x128xf32, #tpu.memory_space<vmem>>, vector<1x8x128xf32>
    %347 = vector.shape_cast %346 : vector<1x8x128xf32> to vector<8x128xf32>
    %348 = vector.shape_cast %343 : vector<8x128xf32> to vector<1x8x128xf32>
    tpu.vector_store %arg8[%345, %c0_148, %c0_149], %348 {strides = array<i32>} : memref<8x8x128xf32, #tpu.memory_space<vmem>>, vector<1x8x128xf32>,
    %c7_i32_150 = arith.constant 7 : i32
    %c1_i32_151 = arith.constant 1 : i32
    %349 = arith.subi %c1_i32_151, %arg0 : i32
    %350 = arith.muli %349, %c7_i32_150 : i32
    %c7_i32_152 = arith.constant 7 : i32
    %351 = arith.subi %c7_i32_152, %c7_i32_150 : i32
    %352 = arith.muli %arg0, %351 : i32
    %353 = arith.addi %350, %352 : i32
    %c8_i32_153 = arith.constant 8 : i32
    %354 = arith.muli %353, %c8_i32_153 : i32
    %355 = tpu.assume_multiple %354, 8 : i32
    %356 = arith.index_cast %355 : i32 to index
    %c0_154 = arith.constant 0 : index
    %357 = vector.load %arg11[%356, %c0_154] : memref<64x384xf32, #tpu.memory_space<vmem>>, vector<8x384xf32>
    %c0_155 = arith.constant 0 : index
    %c0_156 = arith.constant 0 : index
    %358 = vector.load %arg10[%c0_155, %c0_156] : memref<8x128xf32, #tpu.memory_space<vmem>>, vector<8x128xf32>
    %c0_157 = arith.constant 0 : index
    %c0_158 = arith.constant 0 : index
    %c0_159 = arith.constant 0 : index
    %359 = vector.load %arg4[%c0_157, %c0_158, %c0_159] : memref<1x128x384xf32, #tpu.memory_space<vmem>>, vector<1x128x384xf32>
    %360 = vector.shape_cast %359 : vector<1x128x384xf32> to vector<128x384xf32>
    %cst_160 = arith.constant dense<0.000000e+00> : vector<8x384xf32>
    %361 = tpu.matmul %358, %360, %cst_160 {dimension_numbers = #tpu.dot_dimension_numbers<[1], [0], [0], [1], [0, 0, 1, 1], [], []>} : vector<8x128xf32>, vector<128x384xf32>, vector<8x384xf32> -> vector<8x384xf32>
    %362 = vector.extract_strided_slice %357 {offsets = [0, 0], sizes = [8, 128], strides = [1, 1]} : vector<8x384xf32> to vector<8x128xf32>
    %363 = vector.extract_strided_slice %361 {offsets = [0, 0], sizes = [8, 128], strides = [1, 1]} : vector<8x384xf32> to vector<8x128xf32>
    %364 = arith.addf %362, %363 : vector<8x128xf32>
    %365 = arith.negf %364 : vector<8x128xf32>
    %366 = math.exp %365 : vector<8x128xf32>
    %cst_161 = arith.constant 1.000000e+00 : f32
    %367 = vector.broadcast %cst_161 : f32 to vector<8x128xf32>
    %368 = arith.addf %367, %366 : vector<8x128xf32>
    %369 = arith.divf %367, %368 : vector<8x128xf32>
    %370 = vector.extract_strided_slice %357 {offsets = [0, 128], sizes = [8, 128], strides = [1, 1]} : vector<8x384xf32> to vector<8x128xf32>
    %371 = vector.extract_strided_slice %361 {offsets = [0, 128], sizes = [8, 128], strides = [1, 1]} : vector<8x384xf32> to vector<8x128xf32>
    %372 = arith.addf %370, %371 : vector<8x128xf32>
    %373 = arith.negf %372 : vector<8x128xf32>
    %374 = math.exp %373 : vector<8x128xf32>
    %cst_162 = arith.constant 1.000000e+00 : f32
    %375 = vector.broadcast %cst_162 : f32 to vector<8x128xf32>
    %376 = arith.addf %375, %374 : vector<8x128xf32>
    %377 = arith.divf %375, %376 : vector<8x128xf32>
    %378 = vector.extract_strided_slice %357 {offsets = [0, 256], sizes = [8, 128], strides = [1, 1]} : vector<8x384xf32> to vector<8x128xf32>
    %379 = vector.extract_strided_slice %361 {offsets = [0, 256], sizes = [8, 128], strides = [1, 1]} : vector<8x384xf32> to vector<8x128xf32>
    %c0_163 = arith.constant 0 : index
    %c0_164 = arith.constant 0 : index
    %c0_165 = arith.constant 0 : index
    %380 = vector.load %arg6[%c0_163, %c0_164, %c0_165] : memref<1x1x128xf32, #tpu.memory_space<vmem>>, vector<1x1x128xf32>
    %381 = vector.shape_cast %380 : vector<1x1x128xf32> to vector<1x128xf32>
    %382 = vector.broadcast %381 : vector<1x128xf32> to vector<8x128xf32>
    %383 = arith.addf %379, %382 : vector<8x128xf32>
    %384 = arith.mulf %369, %383 : vector<8x128xf32>
    %385 = arith.addf %378, %384 : vector<8x128xf32>
    %386 = math.tanh %385 : vector<8x128xf32>
    %cst_166 = arith.constant 1.000000e+00 : f32
    %387 = vector.broadcast %cst_166 : f32 to vector<8x128xf32>
    %388 = arith.subf %387, %377 : vector<8x128xf32>
    %389 = arith.mulf %388, %386 : vector<8x128xf32>
    %390 = arith.mulf %377, %358 : vector<8x128xf32>
    %391 = arith.addf %389, %390 : vector<8x128xf32>
    %c0_167 = arith.constant 0 : index
    %c0_168 = arith.constant 0 : index
    %392 = vector.load %arg10[%c0_167, %c0_168] : memref<8x128xf32, #tpu.memory_space<vmem>>, vector<8x128xf32>
    tpu.vector_store %arg10[%c0_167, %c0_168], %391 {strides = array<i32>} : memref<8x128xf32, #tpu.memory_space<vmem>>, vector<8x128xf32>,
    %393 = arith.index_cast %353 : i32 to index
    %c0_169 = arith.constant 0 : index
    %c0_170 = arith.constant 0 : index
    %394 = vector.load %arg8[%393, %c0_169, %c0_170] : memref<8x8x128xf32, #tpu.memory_space<vmem>>, vector<1x8x128xf32>
    %395 = vector.shape_cast %394 : vector<1x8x128xf32> to vector<8x128xf32>
    %396 = vector.shape_cast %391 : vector<8x128xf32> to vector<1x8x128xf32>
    tpu.vector_store %arg8[%393, %c0_169, %c0_170], %396 {strides = array<i32>} : memref<8x8x128xf32, #tpu.memory_space<vmem>>, vector<1x8x128xf32>,
    %c8_i32_171 = arith.constant 8 : i32
    %c0_172 = arith.constant 0 : index
    %c0_173 = arith.constant 0 : index
    %397 = vector.load %arg10[%c0_172, %c0_173] : memref<8x128xf32, #tpu.memory_space<vmem>>, vector<8x128xf32>
    %c0_174 = arith.constant 0 : index
    %c0_175 = arith.constant 0 : index
    %c0_176 = arith.constant 0 : index
    %398 = vector.load %arg7[%c0_174, %c0_175, %c0_176] : memref<1x128x32xf32, #tpu.memory_space<vmem>>, vector<1x128x32xf32>
    %399 = vector.shape_cast %398 : vector<1x128x32xf32> to vector<128x32xf32>
    %cst_177 = arith.constant dense<0.000000e+00> : vector<8x32xf32>
    %400 = tpu.matmul %397, %399, %cst_177 {dimension_numbers = #tpu.dot_dimension_numbers<[1], [0], [0], [1], [0, 0, 1, 1], [], []>} : vector<8x128xf32>, vector<128x32xf32>, vector<8x32xf32> -> vector<8x32xf32>
    %c0_178 = arith.constant 0 : index
    %c0_179 = arith.constant 0 : index
    %c0_180 = arith.constant 0 : index
    %401 = vector.load %arg9[%c0_178, %c0_179, %c0_180] : memref<1x8x32xf32, #tpu.memory_space<vmem>>, vector<1x8x32xf32>
    %402 = vector.shape_cast %401 : vector<1x8x32xf32> to vector<8x32xf32>
    %403 = vector.shape_cast %400 : vector<8x32xf32> to vector<1x8x32xf32>
    tpu.vector_store %arg9[%c0_178, %c0_179, %c0_180], %403 {strides = array<i32>} : memref<1x8x32xf32, #tpu.memory_space<vmem>>, vector<1x8x32xf32>,
    return
  }
  func.func @transform_0(%arg0: i32, %arg1: i32) -> (i32, i32, i32) {
    %c1_i32 = arith.constant 1 : i32
    %0 = arith.subi %c1_i32, %arg0 : i32
    %1 = arith.muli %0, %arg1 : i32
    %c0_i32 = arith.constant 0 : i32
    %2 = arith.subi %c0_i32, %arg1 : i32
    %3 = arith.muli %arg0, %2 : i32
    %4 = arith.addi %1, %3 : i32
    %c0_i32_0 = arith.constant 0 : i32
    %c0_i32_1 = arith.constant 0 : i32
    %c0_i32_2 = arith.constant 0 : i32
    return %4, %c0_i32_0, %c0_i32_1 : i32, i32, i32
  }
  func.func @transform_1(%arg0: i32, %arg1: i32) -> (i32, i32, i32) {
    %c0_i32 = arith.constant 0 : i32
    %c0_i32_0 = arith.constant 0 : i32
    %c0_i32_1 = arith.constant 0 : i32
    return %arg0, %c0_i32, %c0_i32_0 : i32, i32, i32
  }
  func.func @transform_2(%arg0: i32, %arg1: i32) -> (i32, i32, i32) {
    %c0_i32 = arith.constant 0 : i32
    %c0_i32_0 = arith.constant 0 : i32
    %c0_i32_1 = arith.constant 0 : i32
    return %arg0, %c0_i32, %c0_i32_0 : i32, i32, i32
  }
  func.func @transform_3(%arg0: i32, %arg1: i32) -> (i32, i32, i32) {
    %c0_i32 = arith.constant 0 : i32
    %c0_i32_0 = arith.constant 0 : i32
    %c0_i32_1 = arith.constant 0 : i32
    return %arg0, %c0_i32, %c0_i32_0 : i32, i32, i32
  }
  func.func @transform_4(%arg0: i32, %arg1: i32) -> (i32, i32, i32) {
    %c0_i32 = arith.constant 0 : i32
    %c0_i32_0 = arith.constant 0 : i32
    %c0_i32_1 = arith.constant 0 : i32
    return %arg0, %c0_i32, %c0_i32_0 : i32, i32, i32
  }
  func.func @transform_5(%arg0: i32, %arg1: i32) -> (i32, i32, i32) {
    %c0_i32 = arith.constant 0 : i32
    %c0_i32_0 = arith.constant 0 : i32
    %c0_i32_1 = arith.constant 0 : i32
    return %arg0, %c0_i32, %c0_i32_0 : i32, i32, i32
  }
  func.func @transform_6(%arg0: i32, %arg1: i32) -> (i32, i32, i32) {
    %c1_i32 = arith.constant 1 : i32
    %0 = arith.subi %c1_i32, %arg0 : i32
    %1 = arith.muli %0, %arg1 : i32
    %c0_i32 = arith.constant 0 : i32
    %2 = arith.subi %c0_i32, %arg1 : i32
    %3 = arith.muli %arg0, %2 : i32
    %4 = arith.addi %1, %3 : i32
    %c0_i32_0 = arith.constant 0 : i32
    %c0_i32_1 = arith.constant 0 : i32
    return %4, %c0_i32_0, %arg0 : i32, i32, i32
  }
  func.func @transform_7(%arg0: i32, %arg1: i32) -> (i32, i32, i32) {
    %c0_i32 = arith.constant 0 : i32
    %c0_i32_0 = arith.constant 0 : i32
    %c0_i32_1 = arith.constant 0 : i32
    return %arg0, %c0_i32, %c0_i32_0 : i32, i32, i32
  }
}

</mosaic_0001>

<llo_original>
// kernel: encoder_forward.3
$region0: #{encoder_forward.3}
  #allocation0 [shape = 'u32[]', space=smem, size = 0x4, offset = 0x4, fixed_abs, tag = 'smem constant byte address 0x4 - core index']
  #allocation1 [shape = 'u32[144,128]{1,0:T(1,128)}', space=vmem, size = 0x12000, scoped, tag = 'internal scratch']
  #allocation2 [shape = 'f32[8,128]{1,0:T(8,128)}', space=vmem, size = 0x1000, scoped, tag = 'scratch operand']
  #allocation3 [shape = 'f32[64,384]{1,0:T(8,128)}', space=vmem, size = 0x18000, scoped, tag = 'scratch operand']
  %s0 = inlined_call_operand.vmem [shape: f32[8,8,256], index: 0, kind: input, shape index: {}]
  %s1 = inlined_call_operand.vmem [shape: f32[2,256,384], index: 1, kind: input, shape index: {}]
  %s2 = inlined_call_operand.vmem [shape: f32[2,128,384], index: 2, kind: input, shape index: {}]
  %s3 = inlined_call_operand.vmem [shape: f32[2,1,384], index: 3, kind: input, shape index: {}]
  %s4 = inlined_call_operand.vmem [shape: f32[2,1,128], index: 4, kind: input, shape index: {}]
  %s5 = inlined_call_operand.vmem [shape: f32[2,128,32], index: 5, kind: input, shape index: {}]
  %s6 = inlined_call_operand.vmem [shape: f32[8,8,256], index: 6, kind: output, shape index: {0}]
  %s7 = inlined_call_operand.hbm [shape: f32[2,8,32], index: 7, kind: output, shape index: {1}]
  %8 = xla_tuple %s6, %s7
  %s9 = sld [smem:[#allocation0]]
  $region103: #{encoder_forward.3} parent=0
    _
  %s11 = ssub.s32 1, %s9
  %s12 = scalar_select 0, %s11, %s9
  $region1: #{encoder_forward.3} parent=0
    #allocation4 [shape = 'u8[65536]{0}', space=vmem, size = 0x10000, scoped, tag = 'output window, operand 0']
    #allocation5 [shape = 'u8[8192]{0}', space=vmem, size = 0x2000, scoped, tag = 'output window, operand 1']
    #allocation6 [shape = 's32[2]{0}', space=sflag, size = 0x8, scoped, tag = 'scoped memory for encoder_forward.3']
    %13 = vsyncpa [#allocation6], 0
    %s14 = scalar_lea.sflag [#allocation6], 1
    %15 = vsyncpa %s14, 0
    loop: start=0, step=1, limit=4
    $region2: #{encoder_forward.3} parent=1 // loop_pre_header
      _
    $region3: #{encoder_forward.3} parent=1 // loop_header
      %s17 = sphi 0, %s21
      %p18 = scmp.ge.s32.totalorder %s17, 4
      %s24 = sphi 0, %s36
      %s25 = sphi 0, %s32
      %s26 = sphi 0, %s24
      %s27 = sphi 0, %s25
      %s28 = sphi 0, %s26
      %s29 = sphi 0, %s27
      %s49 = sphi 0, %s51
      %s52 = sphi 0, %s49
      %s53 = sphi 0, %s52
      %s69 = sphi 0, %s53
      %s75 = sphi 0, %s77
      %s78 = sphi 0, %s75
      %s79 = sphi 0, %s78
      %s95 = sphi 0, %s79
      %s101 = sphi 0, %s103
      %s104 = sphi 0, %s101
      %s105 = sphi 0, %s104
      %s121 = sphi 0, %s105
      %s127 = sphi 0, %s129
      %s130 = sphi 0, %s127
      %s131 = sphi 0, %s130
      %s147 = sphi 0, %s131
      %s153 = sphi 0, %s155
      %s156 = sphi 0, %s153
      %s157 = sphi 0, %s156
      %s173 = sphi 0, %s157
      %s179 = sphi 0, %s181
      %s182 = sphi 0, %s179
      %s183 = sphi 0, %s182
      %s199 = sphi 0, %s183
      %s217 = sphi 0, %s219
      %s220 = sphi 0, %s217
      %s221 = sphi 0, %s220
      %s237 = sphi 0, %s221
      %s243 = sphi 0, %s245
      %s246 = sphi 0, %s243
      %s247 = sphi 0, %s246
      %s263 = sphi 0, %s247
    $region4: #{encoder_forward.3} parent=1 // loop_header_branch
      %20 = sbr.rel (%p18) target = $region8
    $region5: #{encoder_forward.3} parent=1 // loop_body
      %s22 = ssub.s32 %s17, 1
      %s23 = ssub.s32 %s17, 2
      %s30 = sadd.s32 1, %s25
      %p31 = scmp.ge.s32.totalorder %s30, 1
      %s32 = scalar_select %p31, 0, %s30
      %s33 = sadd.s32 1, %s24
      %s34 = scalar_select %p31, %s33, %s24
      %p35 = scmp.ge.s32.totalorder %s34, 2
      %s36 = scalar_select %p35, 0, %s34
      %s37 = ssub.s32 1, %s24
      %s38 = smul.u32 %s37, %s25
      %s39 = ssub.s32 0, %s25
      %s40 = smul.u32 %s24, %s39
      %s41 = sadd.s32 %s38, %s40
      %s42 = ssub.s32 1, %s36
      %s43 = smul.u32 %s42, %s32
      %s44 = ssub.s32 0, %s32
      %s45 = smul.u32 %s36, %s44
      %s46 = sadd.s32 %s43, %s45
      %s47 = ssub.s32 %s41, %s46
      %p48 = scmp.eq.s32.totalorder %s47, 0
      %s50 = sadd.s32 %s49, 1
      %s51 = scalar_select %p48, %s49, %s50
      %p54 = pneg %p48
      %p55 = scmp.eq.s32.totalorder %s17, 1
      %p56 = por %p54, %p55
      %p57 = scmp.ne.s32.totalorder %s49, %s52
      %p58 = scmp.eq.s32.totalorder %s17, 0
      %p59 = por %p57, %p58
      %p60 = scmp.ne.s32.totalorder %s49, %s52
      %p61 = scmp.eq.s32.totalorder %s22, 1
      %p62 = por %p60, %p61
      %p63 = scmp.ne.s32.totalorder %s52, %s53
      %p64 = scmp.eq.s32.totalorder %s22, 0
      %p65 = por %p63, %p64
      %p66 = scmp.ne.s32.totalorder %s52, %s53
      %p67 = scmp.eq.s32.totalorder %s23, 1
      %p68 = por %p66, %p67
      %p70 = scmp.ne.s32.totalorder %s53, %s69
      %p71 = scmp.eq.s32.totalorder %s23, 0
      %p72 = por %p70, %p71
      %s73 = ssub.s32 %s24, %s36
      %p74 = scmp.eq.s32.totalorder %s73, 0
      %s76 = sadd.s32 %s75, 1
      %s77 = scalar_select %p74, %s75, %s76
      %p80 = pneg %p74
      %p81 = scmp.eq.s32.totalorder %s17, 1
      %p82 = por %p80, %p81
      %p83 = scmp.ne.s32.totalorder %s75, %s78
      %p84 = scmp.eq.s32.totalorder %s17, 0
      %p85 = por %p83, %p84
      %p86 = scmp.ne.s32.totalorder %s75, %s78
      %p87 = scmp.eq.s32.totalorder %s22, 1
      %p88 = por %p86, %p87
      %p89 = scmp.ne.s32.totalorder %s78, %s79
      %p90 = scmp.eq.s32.totalorder %s22, 0
      %p91 = por %p89, %p90
      %p92 = scmp.ne.s32.totalorder %s78, %s79
      %p93 = scmp.eq.s32.totalorder %s23, 1
      %p94 = por %p92, %p93
      %p96 = scmp.ne.s32.totalorder %s79, %s95
      %p97 = scmp.eq.s32.totalorder %s23, 0
      %p98 = por %p96, %p97
      %s99 = ssub.s32 %s24, %s36
      %p100 = scmp.eq.s32.totalorder %s99, 0
      %s102 = sadd.s32 %s101, 1
      %s103 = scalar_select %p100, %s101, %s102
      %p106 = pneg %p100
      %p107 = scmp.eq.s32.totalorder %s17, 1
      %p108 = por %p106, %p107
      %p109 = scmp.ne.s32.totalorder %s101, %s104
      %p110 = scmp.eq.s32.totalorder %s17, 0
      %p111 = por %p109, %p110
      %p112 = scmp.ne.s32.totalorder %s101, %s104
      %p113 = scmp.eq.s32.totalorder %s22, 1
      %p114 = por %p112, %p113
      %p115 = scmp.ne.s32.totalorder %s104, %s105
      %p116 = scmp.eq.s32.totalorder %s22, 0
      %p117 = por %p115, %p116
      %p118 = scmp.ne.s32.totalorder %s104, %s105
      %p119 = scmp.eq.s32.totalorder %s23, 1
      %p120 = por %p118, %p119
      %p122 = scmp.ne.s32.totalorder %s105, %s121
      %p123 = scmp.eq.s32.totalorder %s23, 0
      %p124 = por %p122, %p123
      %s125 = ssub.s32 %s24, %s36
      %p126 = scmp.eq.s32.totalorder %s125, 0
      %s128 = sadd.s32 %s127, 1
      %s129 = scalar_select %p126, %s127, %s128
      %p132 = pneg %p126
      %p133 = scmp.eq.s32.totalorder %s17, 1
      %p134 = por %p132, %p133
      %p135 = scmp.ne.s32.totalorder %s127, %s130
      %p136 = scmp.eq.s32.totalorder %s17, 0
      %p137 = por %p135, %p136
      %p138 = scmp.ne.s32.totalorder %s127, %s130
      %p139 = scmp.eq.s32.totalorder %s22, 1
      %p140 = por %p138, %p139
      %p141 = scmp.ne.s32.totalorder %s130, %s131
      %p142 = scmp.eq.s32.totalorder %s22, 0
      %p143 = por %p141, %p142
      %p144 = scmp.ne.s32.totalorder %s130, %s131
      %p145 = scmp.eq.s32.totalorder %s23, 1
      %p146 = por %p144, %p145
      %p148 = scmp.ne.s32.totalorder %s131, %s147
      %p149 = scmp.eq.s32.totalorder %s23, 0
      %p150 = por %p148, %p149
      %s151 = ssub.s32 %s24, %s36
      %p152 = scmp.eq.s32.totalorder %s151, 0
      %s154 = sadd.s32 %s153, 1
      %s155 = scalar_select %p152, %s153, %s154
      %p158 = pneg %p152
      %p159 = scmp.eq.s32.totalorder %s17, 1
      %p160 = por %p158, %p159
      %p161 = scmp.ne.s32.totalorder %s153, %s156
      %p162 = scmp.eq.s32.totalorder %s17, 0
      %p163 = por %p161, %p162
      %p164 = scmp.ne.s32.totalorder %s153, %s156
      %p165 = scmp.eq.s32.totalorder %s22, 1
      %p166 = por %p164, %p165
      %p167 = scmp.ne.s32.totalorder %s156, %s157
      %p168 = scmp.eq.s32.totalorder %s22, 0
      %p169 = por %p167, %p168
      %p170 = scmp.ne.s32.totalorder %s156, %s157
      %p171 = scmp.eq.s32.totalorder %s23, 1
      %p172 = por %p170, %p171
      %p174 = scmp.ne.s32.totalorder %s157, %s173
      %p175 = scmp.eq.s32.totalorder %s23, 0
      %p176 = por %p174, %p175
      %s177 = ssub.s32 %s24, %s36
      %p178 = scmp.eq.s32.totalorder %s177, 0
      %s180 = sadd.s32 %s179, 1
      %s181 = scalar_select %p178, %s179, %s180
      %p184 = pneg %p178
      %p185 = scmp.eq.s32.totalorder %s17, 1
      %p186 = por %p184, %p185
      %p187 = scmp.ne.s32.totalorder %s179, %s182
      %p188 = scmp.eq.s32.totalorder %s17, 0
      %p189 = por %p187, %p188
      %p190 = scmp.ne.s32.totalorder %s179, %s182
      %p191 = scmp.eq.s32.totalorder %s22, 1
      %p192 = por %p190, %p191
      %p193 = scmp.ne.s32.totalorder %s182, %s183
      %p194 = scmp.eq.s32.totalorder %s22, 0
      %p195 = por %p193, %p194
      %p196 = scmp.ne.s32.totalorder %s182, %s183
      %p197 = scmp.eq.s32.totalorder %s23, 1
      %p198 = por %p196, %p197
      %p200 = scmp.ne.s32.totalorder %s183, %s199
      %p201 = scmp.eq.s32.totalorder %s23, 0
      %p202 = por %p200, %p201
      %s203 = ssub.s32 1, %s24
      %s204 = smul.u32 %s203, %s25
      %s205 = ssub.s32 0, %s25
      %s206 = smul.u32 %s24, %s205
      %s207 = sadd.s32 %s204, %s206
      %s208 = ssub.s32 1, %s36
      %s209 = smul.u32 %s208, %s32
      %s210 = ssub.s32 0, %s32
      %s211 = smul.u32 %s36, %s210
      %s212 = sadd.s32 %s209, %s211
      %s213 = ssub.s32 %s207, %s212
      %s214 = ssub.s32 %s24, %s36
      %s215 = sor.u32 %s213, %s214
      %p216 = scmp.eq.s32.totalorder %s215, 0
      %s218 = sadd.s32 %s217, 1
      %s219 = scalar_select %p216, %s217, %s218
      %p222 = pneg %p216
      %p223 = scmp.eq.s32.totalorder %s17, 1
      %p224 = por %p222, %p223
      %p225 = scmp.ne.s32.totalorder %s217, %s220
      %p226 = scmp.eq.s32.totalorder %s17, 0
      %p227 = por %p225, %p226
      %p228 = scmp.ne.s32.totalorder %s217, %s220
      %p229 = scmp.eq.s32.totalorder %s22, 1
      %p230 = por %p228, %p229
      %p231 = scmp.ne.s32.totalorder %s220, %s221
      %p232 = scmp.eq.s32.totalorder %s22, 0
      %p233 = por %p231, %p232
      %p234 = scmp.ne.s32.totalorder %s220, %s221
      %p235 = scmp.eq.s32.totalorder %s23, 1
      %p236 = por %p234, %p235
      %p238 = scmp.ne.s32.totalorder %s221, %s237
      %p239 = scmp.eq.s32.totalorder %s23, 0
      %p240 = por %p238, %p239
      %s241 = ssub.s32 %s24, %s36
      %p242 = scmp.eq.s32.totalorder %s241, 0
      %s244 = sadd.s32 %s243, 1
      %s245 = scalar_select %p242, %s243, %s244
      %p248 = pneg %p242
      %p249 = scmp.eq.s32.totalorder %s17, 1
      %p250 = por %p248, %p249
      %p251 = scmp.ne.s32.totalorder %s243, %s246
      %p252 = scmp.eq.s32.totalorder %s17, 0
      %p253 = por %p251, %p252
      %p254 = scmp.ne.s32.totalorder %s243, %s246
      %p255 = scmp.eq.s32.totalorder %s22, 1
      %p256 = por %p254, %p255
      %p257 = scmp.ne.s32.totalorder %s246, %s247
      %p258 = scmp.eq.s32.totalorder %s22, 0
      %p259 = por %p257, %p258
      %p260 = scmp.ne.s32.totalorder %s246, %s247
      %p261 = scmp.eq.s32.totalorder %s23, 1
      %p262 = por %p260, %p261
      %p264 = scmp.ne.s32.totalorder %s247, %s263
      %p265 = scmp.eq.s32.totalorder %s23, 0
      %p266 = por %p264, %p265
      %p267 = scmp.le.s32.totalorder 1, %s17
      %p268 = scmp.lt.s32.totalorder %s17, 3
      %p269 = pnand %p267, %p268
      %p270 = pneg %p269
      // Predicated region
      $region9: #{encoder_forward.3} parent=5 // pred_check
        _
      $region10: #{encoder_forward.3} parent=5 // pred_check_branch
        %272 = sbr.rel (%p269) target = $region12
      $region11: #{encoder_forward.3} parent=5 // pred_region
        %s273 = ssub.s32 %s17, 1
      $region12: #{encoder_forward.3} parent=5 // pred_fallthru
        _
      %p274 = scmp.lt.s32.totalorder %s17, 2
      // Predicated region
      $region13: #{encoder_forward.3} parent=5 // pred_check
        %p275 = pneg %p274
      $region14: #{encoder_forward.3} parent=5 // pred_check_branch
        %277 = sbr.rel (%p275) target = $region16
      $region15: #{encoder_forward.3} parent=5 // pred_region
        // Predicated region
        $region17: #{encoder_forward.3} parent=15 // pred_check
          %p278 = pneg %p59
        $region18: #{encoder_forward.3} parent=15 // pred_check_branch
          %280 = sbr.rel (%p278) target = $region20
        $region19: #{encoder_forward.3} parent=15 // pred_region
          %s281 = ssub.s32 1, %s24
          %s282 = smul.u32 %s281, %s25
          %s283 = ssub.s32 0, %s25
          %s284 = smul.u32 %s24, %s283
          %s285 = sadd.s32 %s282, %s284
          %s286 = smul.u32 8, %s285
          %p287 = scmp.lt.s32.totalorder %s286, 7
          %s288 = scalar_select %p287, %s286, 7
          %s289 = smul.addr %s288, 2
          %s290 = smul.addr %s289, 8
          %s291 = scalar_lea.vmem %s0, %s290
          %s292 = ssub.s32 1, %s24
          %s293 = smul.u32 %s292, %s25
          %s294 = ssub.s32 0, %s25
          %s295 = smul.u32 %s24, %s294
          %s296 = sadd.s32 %s293, %s295
          %s297 = smul.u32 8, %s296
        $region20: #{encoder_forward.3} parent=15 // pred_fallthru
          _
        // Predicated region
        $region21: #{encoder_forward.3} parent=15 // pred_check
          %p298 = pneg %p85
        $region22: #{encoder_forward.3} parent=15 // pred_check_branch
          %300 = sbr.rel (%p298) target = $region24
        $region23: #{encoder_forward.3} parent=15 // pred_region
          %p301 = scmp.lt.s32.totalorder %s24, 1
          %s302 = scalar_select %p301, %s24, 1
          %s303 = smul.addr %s302, 96
          %s304 = smul.addr %s303, 8
          %s305 = scalar_lea.vmem %s1, %s304
        $region24: #{encoder_forward.3} parent=15 // pred_fallthru
          _
        // Predicated region
        $region25: #{encoder_forward.3} parent=15 // pred_check
          %p306 = pneg %p111
        $region26: #{encoder_forward.3} parent=15 // pred_check_branch
          %308 = sbr.rel (%p306) target = $region28
        $region27: #{encoder_forward.3} parent=15 // pred_region
          %p309 = scmp.lt.s32.totalorder %s24, 1
          %s310 = scalar_select %p309, %s24, 1
          %s311 = smul.addr %s310, 48
          %s312 = smul.addr %s311, 8
          %s313 = scalar_lea.vmem %s2, %s312
        $region28: #{encoder_forward.3} parent=15 // pred_fallthru
          _
        // Predicated region
        $region29: #{encoder_forward.3} parent=15 // pred_check
          %p314 = pneg %p137
        $region30: #{encoder_forward.3} parent=15 // pred_check_branch
          %316 = sbr.rel (%p314) target = $region32
        $region31: #{encoder_forward.3} parent=15 // pred_region
          %p317 = scmp.lt.s32.totalorder %s24, 1
          %s318 = scalar_select %p317, %s24, 1
          %s319 = smul.addr %s318, 3
          %s320 = scalar_lea.vmem %s3, %s319
        $region32: #{encoder_forward.3} parent=15 // pred_fallthru
          _
        // Predicated region
        $region33: #{encoder_forward.3} parent=15 // pred_check
          %p321 = pneg %p163
        $region34: #{encoder_forward.3} parent=15 // pred_check_branch
          %323 = sbr.rel (%p321) target = $region36
        $region35: #{encoder_forward.3} parent=15 // pred_region
          %p324 = scmp.lt.s32.totalorder %s24, 1
          %s325 = scalar_select %p324, %s24, 1
          %s326 = scalar_lea.vmem %s4, %s325
        $region36: #{encoder_forward.3} parent=15 // pred_fallthru
          _
        // Predicated region
        $region37: #{encoder_forward.3} parent=15 // pred_check
          %p327 = pneg %p189
        $region38: #{encoder_forward.3} parent=15 // pred_check_branch
          %329 = sbr.rel (%p327) target = $region40
        $region39: #{encoder_forward.3} parent=15 // pred_region
          %p330 = scmp.lt.s32.totalorder %s24, 1
          %s331 = scalar_select %p330, %s24, 1
          %s332 = smul.addr %s331, 16
          %s333 = smul.addr %s332, 8
          %s334 = scalar_lea.vmem %s5, %s333
        $region40: #{encoder_forward.3} parent=15 // pred_fallthru
          _
      $region16: #{encoder_forward.3} parent=5 // pred_fallthru
        _
      %p335 = scmp.le.s32.totalorder 1, %s17
      %p336 = scmp.lt.s32.totalorder %s17, 3
      %p337 = pnand %p335, %p336
      %p338 = pneg %p337
      // Predicated region
      $region41: #{encoder_forward.3} parent=5 // pred_check
        _
      $region42: #{encoder_forward.3} parent=5 // pred_check_branch
        %340 = sbr.rel (%p337) target = $region44
      $region43: #{encoder_forward.3} parent=5 // pred_region
        %s341 = ssub.s32 %s17, 1
        %s342 = ssub.s32 1, %s26
        %s343 = smul.u32 %s342, %s27
        %s344 = ssub.s32 0, %s27
        %s345 = smul.u32 %s26, %s344
        %s346 = sadd.s32 %s343, %s345
        %s347 = smul.u32 8, %s346
        %p348 = scmp.lt.s32.totalorder %s347, 7
        %s349 = scalar_select %p348, %s347, 7
        %s350 = smul.addr %s349, 2
        %s351 = smul.addr %s350, 8
        %s352 = scalar_lea.vmem %s0, %s351
        %p353 = pneg %p65
        %p354 = pneg %p62
        %p355 = scmp.lt.s32.totalorder %s26, 1
        %s356 = scalar_select %p355, %s26, 1
        %s357 = smul.addr %s356, 96
        %s358 = smul.addr %s357, 8
        %s359 = scalar_lea.vmem %s1, %s358
        %p360 = pneg %p91
        %p361 = pneg %p88
        %p362 = scmp.lt.s32.totalorder %s26, 1
        %s363 = scalar_select %p362, %s26, 1
        %s364 = smul.addr %s363, 48
        %s365 = smul.addr %s364, 8
        %s366 = scalar_lea.vmem %s2, %s365
        %p367 = pneg %p117
        %p368 = pneg %p114
        %p369 = scmp.lt.s32.totalorder %s26, 1
        %s370 = scalar_select %p369, %s26, 1
        %s371 = smul.addr %s370, 3
        %s372 = scalar_lea.vmem %s3, %s371
        %p373 = pneg %p143
        %p374 = pneg %p140
        %p375 = scmp.lt.s32.totalorder %s26, 1
        %s376 = scalar_select %p375, %s26, 1
        %s377 = scalar_lea.vmem %s4, %s376
        %p378 = pneg %p169
        %p379 = pneg %p166
        %p380 = scmp.lt.s32.totalorder %s26, 1
        %s381 = scalar_select %p380, %s26, 1
        %s382 = smul.addr %s381, 16
        %s383 = smul.addr %s382, 8
        %s384 = scalar_lea.vmem %s5, %s383
        %p385 = pneg %p195
        %p386 = pneg %p192
        %p387 = pneg %p233
        %p388 = pneg %p230
        %s389 = sand.u32 %s220, 1
        %s390 = sand.u32 %s220, 1
        %s391 = smul.addr %s390, 64
        %s392 = scalar_lea.vmem [#allocation4], %s391
        %p393 = pneg %p259
        %p394 = pneg %p256
        %s395 = sand.u32 %s246, 1
        %s396 = scalar_lea.sflag [#allocation6], %s395
        %s397 = sand.u32 %s246, 1
        %s398 = smul.addr %s397, 8
        %s399 = scalar_lea.vmem [#allocation5], %s398
        %s400 = ssub.s32 1, %s26
        %s401 = smul.u32 %s400, %s27
        %s402 = ssub.s32 0, %s27
        %s403 = smul.u32 %s26, %s402
        %s404 = sadd.s32 %s401, %s403
        %s405 = smul.u32 8, %s404
        %p406 = scmp.lt.s32.totalorder %s405, 7
        %s407 = scalar_select %p406, %s405, 7
        %s408 = smul.addr %s407, 2
        %s409 = smul.addr %s408, 8
        %s410 = scalar_lea.vmem %s0, %s409
        %s411 = ssub.s32 1, %s26
        %s412 = smul.u32 %s411, %s27
        %s413 = ssub.s32 0, %s27
        %s414 = smul.u32 %s26, %s413
        %s415 = sadd.s32 %s412, %s414
        %s416 = smul.u32 8, %s415
        %p417 = scmp.lt.s32.totalorder %s26, 1
        %s418 = scalar_select %p417, %s26, 1
        %s419 = smul.addr %s418, 96
        %s420 = smul.addr %s419, 8
        %s421 = scalar_lea.vmem %s1, %s420
        %p422 = scmp.lt.s32.totalorder %s26, 1
        %s423 = scalar_select %p422, %s26, 1
        %s424 = smul.addr %s423, 48
        %s425 = smul.addr %s424, 8
        %s426 = scalar_lea.vmem %s2, %s425
        %p427 = scmp.lt.s32.totalorder %s26, 1
        %s428 = scalar_select %p427, %s26, 1
        %s429 = smul.addr %s428, 3
        %s430 = scalar_lea.vmem %s3, %s429
        %p431 = scmp.lt.s32.totalorder %s26, 1
        %s432 = scalar_select %p431, %s26, 1
        %s433 = scalar_lea.vmem %s4, %s432
        %p434 = scmp.lt.s32.totalorder %s26, 1
        %s435 = scalar_select %p434, %s26, 1
        %s436 = smul.addr %s435, 16
        %s437 = smul.addr %s436, 8
        %s438 = scalar_lea.vmem %s5, %s437
        %s439 = ssub.s32 1, %s26
        %s440 = smul.u32 %s439, %s27
        %s441 = ssub.s32 0, %s27
        %s442 = smul.u32 %s26, %s441
        %s443 = sadd.s32 %s440, %s442
        %s444 = smul.u32 8, %s443
        %p445 = scmp.eq.s32.totalorder %s27, 0
        // Predicated region
        $region45: #{encoder_forward.3} parent=43 // pred_check
          %p446 = pneg %p445
        $region46: #{encoder_forward.3} parent=43 // pred_check_branch
          %448 = sbr.rel (%p446) target = $region48
        $region47: #{encoder_forward.3} parent=43 // pred_region
          %449 = vst [vmem:[#allocation2] sm:$0xff] 0.0
        $region48: #{encoder_forward.3} parent=43 // pred_fallthru
          _
        %v450 = vld [vmem:[%s410] sm:$0xff]
        %v451 = vld [vmem:[%s410 + $0x8] sm:$0xff]
        %v452 = vld [vmem:[%s410 + $0x10] sm:$0xff]
        %v453 = vld [vmem:[%s410 + $0x18] sm:$0xff]
        %v454 = vld [vmem:[%s410 + $0x20] sm:$0xff]
        %v455 = vld [vmem:[%s410 + $0x28] sm:$0xff]
        %v456 = vld [vmem:[%s410 + $0x30] sm:$0xff]
        %v457 = vld [vmem:[%s410 + $0x38] sm:$0xff]
        %v458 = vld [vmem:[%s410 + $0x40] sm:$0xff]
        %v459 = vld [vmem:[%s410 + $0x48] sm:$0xff]
        %v460 = vld [vmem:[%s410 + $0x50] sm:$0xff]
        %v461 = vld [vmem:[%s410 + $0x58] sm:$0xff]
        %v462 = vld [vmem:[%s410 + $0x60] sm:$0xff]
        %v463 = vld [vmem:[%s410 + $0x68] sm:$0xff]
        %v464 = vld [vmem:[%s410 + $0x70] sm:$0xff]
        %v465 = vld [vmem:[%s410 + $0x78] sm:$0xff]
        %v466 = vld [vmem:[%s421] sm:$0xff]
        %v467 = vld [vmem:[%s421 + $0x8] sm:$0xff]
        %v468 = vld [vmem:[%s421 + $0x10] sm:$0xff]
        %v469 = vld [vmem:[%s421 + $0x18] sm:$0xff]
        %v470 = vld [vmem:[%s421 + $0x20] sm:$0xff]
        %v471 = vld [vmem:[%s421 + $0x28] sm:$0xff]
        %v472 = vld [vmem:[%s421 + $0x30] sm:$0xff]
        %v473 = vld [vmem:[%s421 + $0x38] sm:$0xff]
        %v474 = vld [vmem:[%s421 + $0x40] sm:$0xff]
        %v475 = vld [vmem:[%s421 + $0x48] sm:$0xff]
        %v476 = vld [vmem:[%s421 + $0x50] sm:$0xff]
        %v477 = vld [vmem:[%s421 + $0x58] sm:$0xff]
        %v478 = vld [vmem:[%s421 + $0x60] sm:$0xff]
        %v479 = vld [vmem:[%s421 + $0x68] sm:$0xff]
        %v480 = vld [vmem:[%s421 + $0x70] sm:$0xff]
        %v481 = vld [vmem:[%s421 + $0x78] sm:$0xff]
        %v482 = vld [vmem:[%s421 + $0x80] sm:$0xff]
        %v483 = vld [vmem:[%s421 + $0x88] sm:$0xff]
        %v484 = vld [vmem:[%s421 + $0x90] sm:$0xff]
        %v485 = vld [vmem:[%s421 + $0x98] sm:$0xff]
        %v486 = vld [vmem:[%s421 + $0xa0] sm:$0xff]
        %v487 = vld [vmem:[%s421 + $0xa8] sm:$0xff]
        %v488 = vld [vmem:[%s421 + $0xb0] sm:$0xff]
        %v489 = vld [vmem:[%s421 + $0xb8] sm:$0xff]
        %v490 = vld [vmem:[%s421 + $0xc0] sm:$0xff]
        %v491 = vld [vmem:[%s421 + $0xc8] sm:$0xff]
        %v492 = vld [vmem:[%s421 + $0xd0] sm:$0xff]
        %v493 = vld [vmem:[%s421 + $0xd8] sm:$0xff]
        %v494 = vld [vmem:[%s421 + $0xe0] sm:$0xff]
        %v495 = vld [vmem:[%s421 + $0xe8] sm:$0xff]
        %v496 = vld [vmem:[%s421 + $0xf0] sm:$0xff]
        %v497 = vld [vmem:[%s421 + $0xf8] sm:$0xff]
        %v498 = vld [vmem:[%s421 + $0x100] sm:$0xff]
        %v499 = vld [vmem:[%s421 + $0x108] sm:$0xff]
        %v500 = vld [vmem:[%s421 + $0x110] sm:$0xff]
        %v501 = vld [vmem:[%s421 + $0x118] sm:$0xff]
        %v502 = vld [vmem:[%s421 + $0x120] sm:$0xff]
        %v503 = vld [vmem:[%s421 + $0x128] sm:$0xff]
        %v504 = vld [vmem:[%s421 + $0x130] sm:$0xff]
        %v505 = vld [vmem:[%s421 + $0x138] sm:$0xff]
        %v506 = vld [vmem:[%s421 + $0x140] sm:$0xff]
        %v507 = vld [vmem:[%s421 + $0x148] sm:$0xff]
        %v508 = vld [vmem:[%s421 + $0x150] sm:$0xff]
        %v509 = vld [vmem:[%s421 + $0x158] sm:$0xff]
        %v510 = vld [vmem:[%s421 + $0x160] sm:$0xff]
        %v511 = vld [vmem:[%s421 + $0x168] sm:$0xff]
        %v512 = vld [vmem:[%s421 + $0x170] sm:$0xff]
        %v513 = vld [vmem:[%s421 + $0x178] sm:$0xff]
        %v514 = vld [vmem:[%s421 + $0x180] sm:$0xff]
        %v515 = vld [vmem:[%s421 + $0x188] sm:$0xff]
        %v516 = vld [vmem:[%s421 + $0x190] sm:$0xff]
        %v517 = vld [vmem:[%s421 + $0x198] sm:$0xff]
        %v518 = vld [vmem:[%s421 + $0x1a0] sm:$0xff]
        %v519 = vld [vmem:[%s421 + $0x1a8] sm:$0xff]
        %v520 = vld [vmem:[%s421 + $0x1b0] sm:$0xff]
        %v521 = vld [vmem:[%s421 + $0x1b8] sm:$0xff]
        %v522 = vld [vmem:[%s421 + $0x1c0] sm:$0xff]
        %v523 = vld [vmem:[%s421 + $0x1c8] sm:$0xff]
        %v524 = vld [vmem:[%s421 + $0x1d0] sm:$0xff]
        %v525 = vld [vmem:[%s421 + $0x1d8] sm:$0xff]
        %v526 = vld [vmem:[%s421 + $0x1e0] sm:$0xff]
        %v527 = vld [vmem:[%s421 + $0x1e8] sm:$0xff]
        %v528 = vld [vmem:[%s421 + $0x1f0] sm:$0xff]
        %v529 = vld [vmem:[%s421 + $0x1f8] sm:$0xff]
        %v530 = vld [vmem:[%s421 + $0x200] sm:$0xff]
        %v531 = vld [vmem:[%s421 + $0x208] sm:$0xff]
        %v532 = vld [vmem:[%s421 + $0x210] sm:$0xff]
        %v533 = vld [vmem:[%s421 + $0x218] sm:$0xff]
        %v534 = vld [vmem:[%s421 + $0x220] sm:$0xff]
        %v535 = vld [vmem:[%s421 + $0x228] sm:$0xff]
        %v536 = vld [vmem:[%s421 + $0x230] sm:$0xff]
        %v537 = vld [vmem:[%s421 + $0x238] sm:$0xff]
        %v538 = vld [vmem:[%s421 + $0x240] sm:$0xff]
        %v539 = vld [vmem:[%s421 + $0x248] sm:$0xff]
        %v540 = vld [vmem:[%s421 + $0x250] sm:$0xff]
        %v541 = vld [vmem:[%s421 + $0x258] sm:$0xff]
        %v542 = vld [vmem:[%s421 + $0x260] sm:$0xff]
        %v543 = vld [vmem:[%s421 + $0x268] sm:$0xff]
        %v544 = vld [vmem:[%s421 + $0x270] sm:$0xff]
        %v545 = vld [vmem:[%s421 + $0x278] sm:$0xff]
        %v546 = vld [vmem:[%s421 + $0x280] sm:$0xff]
        %v547 = vld [vmem:[%s421 + $0x288] sm:$0xff]
        %v548 = vld [vmem:[%s421 + $0x290] sm:$0xff]
        %v549 = vld [vmem:[%s421 + $0x298] sm:$0xff]
        %v550 = vld [vmem:[%s421 + $0x2a0] sm:$0xff]
        %v551 = vld [vmem:[%s421 + $0x2a8] sm:$0xff]
        %v552 = vld [vmem:[%s421 + $0x2b0] sm:$0xff]
        %v553 = vld [vmem:[%s421 + $0x2b8] sm:$0xff]
        %v554 = vld [vmem:[%s421 + $0x2c0] sm:$0xff]
        %v555 = vld [vmem:[%s421 + $0x2c8] sm:$0xff]
        %v556 = vld [vmem:[%s421 + $0x2d0] sm:$0xff]
        %v557 = vld [vmem:[%s421 + $0x2d8] sm:$0xff]
        %v558 = vld [vmem:[%s421 + $0x2e0] sm:$0xff]
        %v559 = vld [vmem:[%s421 + $0x2e8] sm:$0xff]
        %v560 = vld [vmem:[%s421 + $0x2f0] sm:$0xff]
        %v561 = vld [vmem:[%s421 + $0x2f8] sm:$0xff]
        %v562 = vld [vmem:[%s430] sm:$0x7]
        %v564 = vlaneseq
        %v565 = vshrl.u32 %v564, 7
        %v566 = vsub.s32 0, %v565
        %v567 = vrot.slane %v562, %v566
        %v568 = vlaneseq
        %v569 = vshrl.u32 %v568, 7
        %v570 = vsub.s32 1, %v569
        %v571 = vrot.slane %v562, %v570
        %v572 = vlaneseq
        %v573 = vshrl.u32 %v572, 7
        %v574 = vsub.s32 2, %v573
        %v575 = vrot.slane %v562, %v574
        %579 = vmatprep.subr.mxu0 %v467
        %580 = vmatpush1.msra.mxu0 %v466
        %581 = vmatprep.subr.mxu0 %v470
        %582 = vmatpush1.msra.mxu0 %v469
        %583 = vmatprep.subr.mxu0 %v473
        %584 = vmatpush1.msra.mxu0 %v472
        %585 = vmatprep.subr.mxu0 %v476
        %586 = vmatpush1.msra.mxu0 %v475
        %587 = vmatprep.subr.mxu0 %v479
        %588 = vmatpush1.msra.mxu0 %v478
        %589 = vmatprep.subr.mxu0 %v482
        %590 = vmatpush1.msra.mxu0 %v481
        %591 = vmatprep.subr.mxu0 %v485
        %592 = vmatpush1.msra.mxu0 %v484
        %593 = vmatprep.subr.mxu0 %v488
        %594 = vmatpush1.msra.mxu0 %v487
        %595 = vmatprep.subr.mxu0 %v491
        %596 = vmatpush1.msra.mxu0 %v490
        %597 = vmatprep.subr.mxu0 %v494
        %598 = vmatpush1.msra.mxu0 %v493
        %599 = vmatprep.subr.mxu0 %v497
        %600 = vmatpush1.msra.mxu0 %v496
        %601 = vmatprep.subr.mxu0 %v500
        %602 = vmatpush1.msra.mxu0 %v499
        %603 = vmatprep.subr.mxu0 %v503
        %604 = vmatpush1.msra.mxu0 %v502
        %605 = vmatprep.subr.mxu0 %v506
        %606 = vmatpush1.msra.mxu0 %v505
        %607 = vmatprep.subr.mxu0 %v509
        %608 = vmatpush1.msra.mxu0 %v508
        %609 = vmatprep.subr.mxu0 %v512
        %610 = vmatpush1.msra.mxu0 %v511
        %611 = vmatprep.subr.mxu0 %v515
        %612 = vmatpush1.msra.mxu0 %v514
        %613 = vmatprep.subr.mxu0 %v518
        %614 = vmatpush1.msra.mxu0 %v517
        %615 = vmatprep.subr.mxu0 %v521
        %616 = vmatpush1.msra.mxu0 %v520
        %617 = vmatprep.subr.mxu0 %v524
        %618 = vmatpush1.msra.mxu0 %v523
        %619 = vmatprep.subr.mxu0 %v527
        %620 = vmatpush1.msra.mxu0 %v526
        %621 = vmatprep.subr.mxu0 %v530
        %622 = vmatpush1.msra.mxu0 %v529
        %623 = vmatprep.subr.mxu0 %v533
        %624 = vmatpush1.msra.mxu0 %v532
        %625 = vmatprep.subr.mxu0 %v536
        %626 = vmatpush1.msra.mxu0 %v535
        %627 = vmatprep.subr.mxu0 %v539
        %628 = vmatpush1.msra.mxu0 %v538
        %629 = vmatprep.subr.mxu0 %v542
        %630 = vmatpush1.msra.mxu0 %v541
        %631 = vmatprep.subr.mxu0 %v545
        %632 = vmatpush1.msra.mxu0 %v544
        %633 = vmatprep.subr.mxu0 %v548
        %634 = vmatpush1.msra.mxu0 %v547
        %635 = vmatprep.subr.mxu0 %v551
        %636 = vmatpush1.msra.mxu0 %v550
        %637 = vmatprep.subr.mxu0 %v554
        %638 = vmatpush1.msra.mxu0 %v553
        %639 = vmatprep.subr.mxu0 %v557
        %640 = vmatpush1.msra.mxu0 %v556
        %641 = vmatprep.subr.mxu0 %v560
        %642 = vmatpush1.msra.mxu0 %v559
        %643 = vmatprep.mubr.f32.mxu0 %v451
        %644 = vmatmul.mubr.f32.gmra.mrb[0].mxu0 %v450
        %v645 = vpop.f32.mrb[0].mxu0
        %v646 = vadd.f32 %v567, %v645
        %v647 = vpop.f32.mrb[0].mxu0
        %v648 = vadd.f32 %v571, %v647
        %649 = vmatprep.mubr.f32.mxu0 %v453
        %650 = vmatmul.mubr.f32.gmra.mrb[0].mxu0 %v452
        %v651 = vpop.f32.mrb[0].mxu0
        %v652 = vadd.f32 %v567, %v651
        %v653 = vpop.f32.mrb[0].mxu0
        %v654 = vadd.f32 %v571, %v653
        %655 = vmatprep.mubr.f32.mxu0 %v455
        %656 = vmatmul.mubr.f32.gmra.mrb[0].mxu0 %v454
        %v657 = vpop.f32.mrb[0].mxu0
        %v658 = vadd.f32 %v567, %v657
        %v659 = vpop.f32.mrb[0].mxu0
        %v660 = vadd.f32 %v571, %v659
        %661 = vmatprep.mubr.f32.mxu0 %v457
        %662 = vmatmul.mubr.f32.gmra.mrb[0].mxu0 %v456
        %v663 = vpop.f32.mrb[0].mxu0
        %v664 = vadd.f32 %v567, %v663
        %v665 = vpop.f32.mrb[0].mxu0
        %v666 = vadd.f32 %v571, %v665
        %667 = vmatprep.mubr.f32.mxu0 %v459
        %668 = vmatmul.mubr.f32.gmra.mrb[0].mxu0 %v458
        %v669 = vpop.f32.mrb[0].mxu0
        %v670 = vadd.f32 %v567, %v669
        %v671 = vpop.f32.mrb[0].mxu0
        %v672 = vadd.f32 %v571, %v671
        %673 = vmatprep.mubr.f32.mxu0 %v461
        %674 = vmatmul.mubr.f32.gmra.mrb[0].mxu0 %v460
        %v675 = vpop.f32.mrb[0].mxu0
        %v676 = vadd.f32 %v567, %v675
        %v677 = vpop.f32.mrb[0].mxu0
        %v678 = vadd.f32 %v571, %v677
        %679 = vmatprep.mubr.f32.mxu0 %v463
        %680 = vmatmul.mubr.f32.gmra.mrb[0].mxu0 %v462
        %v681 = vpop.f32.mrb[0].mxu0
        %v682 = vadd.f32 %v567, %v681
        %v683 = vpop.f32.mrb[0].mxu0
        %v684 = vadd.f32 %v571, %v683
        %685 = vmatprep.mubr.f32.mxu0 %v465
        %686 = vmatmul.mubr.f32.gmra.mrb[0].mxu0 %v464
        %v687 = vpop.f32.mrb[0].mxu0
        %v688 = vadd.f32 %v567, %v687
        %v689 = vpop.f32.mrb[0].mxu0
        %v690 = vadd.f32 %v571, %v689
        %691 = vdwg.mxu0
        %692 = vmatprep.subr.mxu0 0.0
        %693 = vmatpush1.msra.mxu0 %v468
        %694 = vmatprep.subr.mxu0 0.0
        %695 = vmatpush1.msra.mxu0 %v471
        %696 = vmatprep.subr.mxu0 0.0
        %697 = vmatpush1.msra.mxu0 %v474
        %698 = vmatprep.subr.mxu0 0.0
        %699 = vmatpush1.msra.mxu0 %v477
        %700 = vmatprep.subr.mxu0 0.0
        %701 = vmatpush1.msra.mxu0 %v480
        %702 = vmatprep.subr.mxu0 0.0
        %703 = vmatpush1.msra.mxu0 %v483
        %704 = vmatprep.subr.mxu0 0.0
        %705 = vmatpush1.msra.mxu0 %v486
        %706 = vmatprep.subr.mxu0 0.0
        %707 = vmatpush1.msra.mxu0 %v489
        %708 = vmatprep.subr.mxu0 0.0
        %709 = vmatpush1.msra.mxu0 %v492
        %710 = vmatprep.subr.mxu0 0.0
        %711 = vmatpush1.msra.mxu0 %v495
        %712 = vmatprep.subr.mxu0 0.0
        %713 = vmatpush1.msra.mxu0 %v498
        %714 = vmatprep.subr.mxu0 0.0
        %715 = vmatpush1.msra.mxu0 %v501
        %716 = vmatprep.subr.mxu0 0.0
        %717 = vmatpush1.msra.mxu0 %v504
        %718 = vmatprep.subr.mxu0 0.0
        %719 = vmatpush1.msra.mxu0 %v507
        %720 = vmatprep.subr.mxu0 0.0
        %721 = vmatpush1.msra.mxu0 %v510
        %722 = vmatprep.subr.mxu0 0.0
        %723 = vmatpush1.msra.mxu0 %v513
        %724 = vmatprep.subr.mxu0 0.0
        %725 = vmatpush1.msra.mxu0 %v516
        %726 = vmatprep.subr.mxu0 0.0
        %727 = vmatpush1.msra.mxu0 %v519
        %728 = vmatprep.subr.mxu0 0.0
        %729 = vmatpush1.msra.mxu0 %v522
        %730 = vmatprep.subr.mxu0 0.0
        %731 = vmatpush1.msra.mxu0 %v525
        %732 = vmatprep.subr.mxu0 0.0
        %733 = vmatpush1.msra.mxu0 %v528
        %734 = vmatprep.subr.mxu0 0.0
        %735 = vmatpush1.msra.mxu0 %v531
        %736 = vmatprep.subr.mxu0 0.0
        %737 = vmatpush1.msra.mxu0 %v534
        %738 = vmatprep.subr.mxu0 0.0
        %739 = vmatpush1.msra.mxu0 %v537
        %740 = vmatprep.subr.mxu0 0.0
        %741 = vmatpush1.msra.mxu0 %v540
        %742 = vmatprep.subr.mxu0 0.0
        %743 = vmatpush1.msra.mxu0 %v543
        %744 = vmatprep.subr.mxu0 0.0
        %745 = vmatpush1.msra.mxu0 %v546
        %746 = vmatprep.subr.mxu0 0.0
        %747 = vmatpush1.msra.mxu0 %v549
        %748 = vmatprep.subr.mxu0 0.0
        %749 = vmatpush1.msra.mxu0 %v552
        %750 = vmatprep.subr.mxu0 0.0
        %751 = vmatpush1.msra.mxu0 %v555
        %752 = vmatprep.subr.mxu0 0.0
        %753 = vmatpush1.msra.mxu0 %v558
        %754 = vmatprep.subr.mxu0 0.0
        %755 = vmatpush1.msra.mxu0 %v561
        %756 = vmatprep.mubr.f32.mxu0 %v451
        %757 = vmatmul.mubr.f32.gmra.mrb[0].mxu0 %v450
        %v758 = vpop.f32.mrb[0].mxu0
        %v759 = vadd.f32 %v575, %v758
        %v760 = vpop.f32.mrb[0].mxu0
        %761 = vmatprep.mubr.f32.mxu0 %v453
        %762 = vmatmul.mubr.f32.gmra.mrb[0].mxu0 %v452
        %v763 = vpop.f32.mrb[0].mxu0
        %v764 = vadd.f32 %v575, %v763
        %v765 = vpop.f32.mrb[0].mxu0
        %766 = vmatprep.mubr.f32.mxu0 %v455
        %767 = vmatmul.mubr.f32.gmra.mrb[0].mxu0 %v454
        %v768 = vpop.f32.mrb[0].mxu0
        %v769 = vadd.f32 %v575, %v768
        %v770 = vpop.f32.mrb[0].mxu0
        %771 = vmatprep.mubr.f32.mxu0 %v457
        %772 = vmatmul.mubr.f32.gmra.mrb[0].mxu0 %v456
        %v773 = vpop.f32.mrb[0].mxu0
        %v774 = vadd.f32 %v575, %v773
        %v775 = vpop.f32.mrb[0].mxu0
        %776 = vmatprep.mubr.f32.mxu0 %v459
        %777 = vmatmul.mubr.f32.gmra.mrb[0].mxu0 %v458
        %v778 = vpop.f32.mrb[0].mxu0
        %v779 = vadd.f32 %v575, %v778
        %v780 = vpop.f32.mrb[0].mxu0
        %781 = vmatprep.mubr.f32.mxu0 %v461
        %782 = vmatmul.mubr.f32.gmra.mrb[0].mxu0 %v460
        %v783 = vpop.f32.mrb[0].mxu0
        %v784 = vadd.f32 %v575, %v783
        %v785 = vpop.f32.mrb[0].mxu0
        %786 = vmatprep.mubr.f32.mxu0 %v463
        %787 = vmatmul.mubr.f32.gmra.mrb[0].mxu0 %v462
        %v788 = vpop.f32.mrb[0].mxu0
        %v789 = vadd.f32 %v575, %v788
        %v790 = vpop.f32.mrb[0].mxu0
        %791 = vmatprep.mubr.f32.mxu0 %v465
        %792 = vmatmul.mubr.f32.gmra.mrb[0].mxu0 %v464
        %v793 = vpop.f32.mrb[0].mxu0
        %v794 = vadd.f32 %v575, %v793
        %v795 = vpop.f32.mrb[0].mxu0
        %796 = vdwg.mxu0
        %797 = vst [vmem:[#allocation3] sm:$0xff] %v646
        %798 = vst [vmem:[#allocation3 + $0x8] sm:$0xff] %v648
        %799 = vst [vmem:[#allocation3 + $0x10] sm:$0xff] %v759
        %800 = vst [vmem:[#allocation3 + $0x18] sm:$0xff] %v652
        %801 = vst [vmem:[#allocation3 + $0x20] sm:$0xff] %v654
        %802 = vst [vmem:[#allocation3 + $0x28] sm:$0xff] %v764
        %803 = vst [vmem:[#allocation3 + $0x30] sm:$0xff] %v658
        %804 = vst [vmem:[#allocation3 + $0x38] sm:$0xff] %v660
        %805 = vst [vmem:[#allocation3 + $0x40] sm:$0xff] %v769
        %806 = vst [vmem:[#allocation3 + $0x48] sm:$0xff] %v664
        %807 = vst [vmem:[#allocation3 + $0x50] sm:$0xff] %v666
        %808 = vst [vmem:[#allocation3 + $0x58] sm:$0xff] %v774
        %809 = vst [vmem:[#allocation3 + $0x60] sm:$0xff] %v670
        %810 = vst [vmem:[#allocation3 + $0x68] sm:$0xff] %v672
        %811 = vst [vmem:[#allocation3 + $0x70] sm:$0xff] %v779
        %812 = vst [vmem:[#allocation3 + $0x78] sm:$0xff] %v676
        %813 = vst [vmem:[#allocation3 + $0x80] sm:$0xff] %v678
        %814 = vst [vmem:[#allocation3 + $0x88] sm:$0xff] %v784
        %815 = vst [vmem:[#allocation3 + $0x90] sm:$0xff] %v682
        %816 = vst [vmem:[#allocation3 + $0x98] sm:$0xff] %v684
        %817 = vst [vmem:[#allocation3 + $0xa0] sm:$0xff] %v789
        %818 = vst [vmem:[#allocation3 + $0xa8] sm:$0xff] %v688
        %819 = vst [vmem:[#allocation3 + $0xb0] sm:$0xff] %v690
        %820 = vst [vmem:[#allocation3 + $0xb8] sm:$0xff] %v794
        %s821 = smul.u32 %s26, 7
        %s822 = smul.u32 %s26, 56
        %s823 = sshra.s32 %s822, 3
        %s824 = sand.u32 %s822, 7
        %s825 = smul.u32 %s823, 3
        %s826 = smul.addr %s825, 8
        %s827 = scalar_lea.vmem [#allocation3], %s826
        %v828 = vld [vmem:[%s827] sm:$0xff]
        %v829 = vld [vmem:[%s827 + $0x8] sm:$0xff]
        %v830 = vld [vmem:[%s827 + $0x10] sm:$0xff]
        %v831 = vld [vmem:[#allocation2] sm:$0xff]
        %v832 = vld [vmem:[%s426] sm:$0xff]
        %v833 = vld [vmem:[%s426 + $0x8] sm:$0xff]
        %v834 = vld [vmem:[%s426 + $0x10] sm:$0xff]
        %v835 = vld [vmem:[%s426 + $0x18] sm:$0xff]
        %v836 = vld [vmem:[%s426 + $0x20] sm:$0xff]
        %v837 = vld [vmem:[%s426 + $0x28] sm:$0xff]
        %v838 = vld [vmem:[%s426 + $0x30] sm:$0xff]
        %v839 = vld [vmem:[%s426 + $0x38] sm:$0xff]
        %v840 = vld [vmem:[%s426 + $0x40] sm:$0xff]
        %v841 = vld [vmem:[%s426 + $0x48] sm:$0xff]
        %v842 = vld [vmem:[%s426 + $0x50] sm:$0xff]
        %v843 = vld [vmem:[%s426 + $0x58] sm:$0xff]
        %v844 = vld [vmem:[%s426 + $0x60] sm:$0xff]
        %v845 = vld [vmem:[%s426 + $0x68] sm:$0xff]
        %v846 = vld [vmem:[%s426 + $0x70] sm:$0xff]
        %v847 = vld [vmem:[%s426 + $0x78] sm:$0xff]
        %v848 = vld [vmem:[%s426 + $0x80] sm:$0xff]
        %v849 = vld [vmem:[%s426 + $0x88] sm:$0xff]
        %v850 = vld [vmem:[%s426 + $0x90] sm:$0xff]
        %v851 = vld [vmem:[%s426 + $0x98] sm:$0xff]
        %v852 = vld [vmem:[%s426 + $0xa0] sm:$0xff]
        %v853 = vld [vmem:[%s426 + $0xa8] sm:$0xff]
        %v854 = vld [vmem:[%s426 + $0xb0] sm:$0xff]
        %v855 = vld [vmem:[%s426 + $0xb8] sm:$0xff]
        %v856 = vld [vmem:[%s426 + $0xc0] sm:$0xff]
        %v857 = vld [vmem:[%s426 + $0xc8] sm:$0xff]
        %v858 = vld [vmem:[%s426 + $0xd0] sm:$0xff]
        %v859 = vld [vmem:[%s426 + $0xd8] sm:$0xff]
        %v860 = vld [vmem:[%s426 + $0xe0] sm:$0xff]
        %v861 = vld [vmem:[%s426 + $0xe8] sm:$0xff]
        %v862 = vld [vmem:[%s426 + $0xf0] sm:$0xff]
        %v863 = vld [vmem:[%s426 + $0xf8] sm:$0xff]
        %v864 = vld [vmem:[%s426 + $0x100] sm:$0xff]
        %v865 = vld [vmem:[%s426 + $0x108] sm:$0xff]
        %v866 = vld [vmem:[%s426 + $0x110] sm:$0xff]
        %v867 = vld [vmem:[%s426 + $0x118] sm:$0xff]
        %v868 = vld [vmem:[%s426 + $0x120] sm:$0xff]
        %v869 = vld [vmem:[%s426 + $0x128] sm:$0xff]
        %v870 = vld [vmem:[%s426 + $0x130] sm:$0xff]
        %v871 = vld [vmem:[%s426 + $0x138] sm:$0xff]
        %v872 = vld [vmem:[%s426 + $0x140] sm:$0xff]
        %v873 = vld [vmem:[%s426 + $0x148] sm:$0xff]
        %v874 = vld [vmem:[%s426 + $0x150] sm:$0xff]
        %v875 = vld [vmem:[%s426 + $0x158] sm:$0xff]
        %v876 = vld [vmem:[%s426 + $0x160] sm:$0xff]
        %v877 = vld [vmem:[%s426 + $0x168] sm:$0xff]
        %v878 = vld [vmem:[%s426 + $0x170] sm:$0xff]
        %v879 = vld [vmem:[%s426 + $0x178] sm:$0xff]
        %880 = vmatprep.subr.mxu0 %v833
        %881 = vmatpush1.msra.mxu0 %v832
        %882 = vmatprep.subr.mxu0 %v836
        %883 = vmatpush1.msra.mxu0 %v835
        %884 = vmatprep.subr.mxu0 %v839
        %885 = vmatpush1.msra.mxu0 %v838
        %886 = vmatprep.subr.mxu0 %v842
        %887 = vmatpush1.msra.mxu0 %v841
        %888 = vmatprep.subr.mxu0 %v845
        %889 = vmatpush1.msra.mxu0 %v844
        %890 = vmatprep.subr.mxu0 %v848
        %891 = vmatpush1.msra.mxu0 %v847
        %892 = vmatprep.subr.mxu0 %v851
        %893 = vmatpush1.msra.mxu0 %v850
        %894 = vmatprep.subr.mxu0 %v854
        %895 = vmatpush1.msra.mxu0 %v853
        %896 = vmatprep.subr.mxu0 %v857
        %897 = vmatpush1.msra.mxu0 %v856
        %898 = vmatprep.subr.mxu0 %v860
        %899 = vmatpush1.msra.mxu0 %v859
        %900 = vmatprep.subr.mxu0 %v863
        %901 = vmatpush1.msra.mxu0 %v862
        %902 = vmatprep.subr.mxu0 %v866
        %903 = vmatpush1.msra.mxu0 %v865
        %904 = vmatprep.subr.mxu0 %v869
        %905 = vmatpush1.msra.mxu0 %v868
        %906 = vmatprep.subr.mxu0 %v872
        %907 = vmatpush1.msra.mxu0 %v871
        %908 = vmatprep.subr.mxu0 %v875
        %909 = vmatpush1.msra.mxu0 %v874
        %910 = vmatprep.subr.mxu0 %v878
        %911 = vmatpush1.msra.mxu0 %v877
        %912 = vmatprep.subr.mxu0 0.0
        %913 = vmatpush1.msra.mxu0 0.0
        %914 = vmatprep.subr.mxu0 0.0
        %915 = vmatpush1.msra.mxu0 0.0
        %916 = vmatprep.subr.mxu0 0.0
        %917 = vmatpush1.msra.mxu0 0.0
        %918 = vmatprep.subr.mxu0 0.0
        %919 = vmatpush1.msra.mxu0 0.0
        %920 = vmatprep.subr.mxu0 0.0
        %921 = vmatpush1.msra.mxu0 0.0
        %922 = vmatprep.subr.mxu0 0.0
        %923 = vmatpush1.msra.mxu0 0.0
        %924 = vmatprep.subr.mxu0 0.0
        %925 = vmatpush1.msra.mxu0 0.0
        %926 = vmatprep.subr.mxu0 0.0
        %927 = vmatpush1.msra.mxu0 0.0
        %928 = vmatprep.subr.mxu0 0.0
        %929 = vmatpush1.msra.mxu0 0.0
        %930 = vmatprep.subr.mxu0 0.0
        %931 = vmatpush1.msra.mxu0 0.0
        %932 = vmatprep.subr.mxu0 0.0
        %933 = vmatpush1.msra.mxu0 0.0
        %934 = vmatprep.subr.mxu0 0.0
        %935 = vmatpush1.msra.mxu0 0.0
        %936 = vmatprep.subr.mxu0 0.0
        %937 = vmatpush1.msra.mxu0 0.0
        %938 = vmatprep.subr.mxu0 0.0
        %939 = vmatpush1.msra.mxu0 0.0
        %940 = vmatprep.subr.mxu0 0.0
        %941 = vmatpush1.msra.mxu0 0.0
        %942 = vmatprep.subr.mxu0 0.0
        %943 = vmatpush1.msra.mxu0 0.0
        %944 = vmatprep.mubr.f32.mxu0 0.0
        %945 = vmatmul.mubr.f32.gmra.mrb[0].mxu0 %v831
        %v946 = vpop.f32.mrb[0].mxu0
        %v947 = vadd.f32 0.0, %v946
        %v948 = vpop.f32.mrb[0].mxu0
        %v949 = vadd.f32 0.0, %v948
        %950 = vdwg.mxu0
        %951 = vmatprep.subr.mxu0 0.0
        %952 = vmatpush1.msra.mxu0 %v834
        %953 = vmatprep.subr.mxu0 0.0
        %954 = vmatpush1.msra.mxu0 %v837
        %955 = vmatprep.subr.mxu0 0.0
        %956 = vmatpush1.msra.mxu0 %v840
        %957 = vmatprep.subr.mxu0 0.0
        %958 = vmatpush1.msra.mxu0 %v843
        %959 = vmatprep.subr.mxu0 0.0
        %960 = vmatpush1.msra.mxu0 %v846
        %961 = vmatprep.subr.mxu0 0.0
        %962 = vmatpush1.msra.mxu0 %v849
        %963 = vmatprep.subr.mxu0 0.0
        %964 = vmatpush1.msra.mxu0 %v852
        %965 = vmatprep.subr.mxu0 0.0
        %966 = vmatpush1.msra.mxu0 %v855
        %967 = vmatprep.subr.mxu0 0.0
        %968 = vmatpush1.msra.mxu0 %v858
        %969 = vmatprep.subr.mxu0 0.0
        %970 = vmatpush1.msra.mxu0 %v861
        %971 = vmatprep.subr.mxu0 0.0
        %972 = vmatpush1.msra.mxu0 %v864
        %973 = vmatprep.subr.mxu0 0.0
        %974 = vmatpush1.msra.mxu0 %v867
        %975 = vmatprep.subr.mxu0 0.0
        %976 = vmatpush1.msra.mxu0 %v870
        %977 = vmatprep.subr.mxu0 0.0
        %978 = vmatpush1.msra.mxu0 %v873
        %979 = vmatprep.subr.mxu0 0.0
        %980 = vmatpush1.msra.mxu0 %v876
        %981 = vmatprep.subr.mxu0 0.0
        %982 = vmatpush1.msra.mxu0 %v879
        %983 = vmatprep.subr.mxu0 0.0
        %984 = vmatpush1.msra.mxu0 0.0
        %985 = vmatprep.subr.mxu0 0.0
        %986 = vmatpush1.msra.mxu0 0.0
        %987 = vmatprep.subr.mxu0 0.0
        %988 = vmatpush1.msra.mxu0 0.0
        %989 = vmatprep.subr.mxu0 0.0
        %990 = vmatpush1.msra.mxu0 0.0
        %991 = vmatprep.subr.mxu0 0.0
        %992 = vmatpush1.msra.mxu0 0.0
        %993 = vmatprep.subr.mxu0 0.0
        %994 = vmatpush1.msra.mxu0 0.0
        %995 = vmatprep.subr.mxu0 0.0
        %996 = vmatpush1.msra.mxu0 0.0
        %997 = vmatprep.subr.mxu0 0.0
        %998 = vmatpush1.msra.mxu0 0.0
        %999 = vmatprep.subr.mxu0 0.0
        %1000 = vmatpush1.msra.mxu0 0.0
        %1001 = vmatprep.subr.mxu0 0.0
        %1002 = vmatpush1.msra.mxu0 0.0
        %1003 = vmatprep.subr.mxu0 0.0
        %1004 = vmatpush1.msra.mxu0 0.0
        %1005 = vmatprep.subr.mxu0 0.0
        %1006 = vmatpush1.msra.mxu0 0.0
        %1007 = vmatprep.subr.mxu0 0.0
        %1008 = vmatpush1.msra.mxu0 0.0
        %1009 = vmatprep.subr.mxu0 0.0
        %1010 = vmatpush1.msra.mxu0 0.0
        %1011 = vmatprep.subr.mxu0 0.0
        %1012 = vmatpush1.msra.mxu0 0.0
        %1013 = vmatprep.subr.mxu0 0.0
        %1014 = vmatpush1.msra.mxu0 0.0
        %1015 = vmatprep.mubr.f32.mxu0 0.0
        %1016 = vmatmul.mubr.f32.gmra.mrb[0].mxu0 %v831
        %v1017 = vpop.f32.mrb[0].mxu0
        %v1018 = vadd.f32 0.0, %v1017
        %v1019 = vpop.f32.mrb[0].mxu0
        %1020 = vdwg.mxu0
        %v1021 = vadd.f32 %v828, %v947
        %v1022 = vxor.u32 %v1021, 2147483648
        %v1023 = vmul.f32 %v1022, 1.442695
        %v1024 = vpow.pop %v1023
        %v1025 = vadd.f32 %v1024, 1.0
        %v1026 = vrcp.pop %v1025
        %v1027 = vmul.f32 1.0, %v1026
        %v1028 = vadd.f32 %v829, %v949
        %v1029 = vxor.u32 %v1028, 2147483648
        %v1030 = vmul.f32 %v1029, 1.442695
        %v1031 = vpow.pop %v1030
        %v1032 = vadd.f32 %v1031, 1.0
        %v1033 = vrcp.pop %v1032
        %v1034 = vmul.f32 1.0, %v1033
        %v1035 = vld [vmem:[%s433] sm:$0x1]
        %v1037 = vlaneseq
        %v1038 = vshrl.u32 %v1037, 7
        %v1039 = vsub.s32 0, %v1038
        %v1040 = vrot.slane %v1035, %v1039
        %v1042 = vadd.f32 %v1018, %v1040
        %v1043 = vmul.f32 %v1027, %v1042
        %v1044 = vadd.f32 %v830, %v1043
        %v1045 = vtanh.pop %v1044
        %v1046 = vsub.f32 1.0, %v1034
        %v1047 = vmul.f32 %v1046, %v1045
        %v1048 = vmul.f32 %v1034, %v831
        %v1049 = vadd.f32 %v1047, %v1048
        %1050 = vst [vmem:[#allocation2] sm:$0xff] %v1049
        %s1051 = smul.u32 %s821, 8
        %s1052 = scalar_lea.vmem %s392, %s1051 [#allocation4]
        %1053 = vst [vmem:[%s1052] sm:$0xff] %v1049
        %s1054 = ssub.s32 1, %s26
        %s1055 = smul.u32 %s26, 6
        %s1056 = sadd.s32 %s1054, %s1055
        %s1057 = smul.u32 %s1056, 8
        %s1058 = sshra.s32 %s1057, 3
        %s1059 = sand.u32 %s1057, 7
        %s1060 = smul.u32 %s1058, 3
        %s1061 = smul.addr %s1060, 8
        %s1062 = scalar_lea.vmem [#allocation3], %s1061
        %v1063 = vld [vmem:[%s1062] sm:$0xff]
        %v1064 = vld [vmem:[%s1062 + $0x8] sm:$0xff]
        %v1065 = vld [vmem:[%s1062 + $0x10] sm:$0xff]
        %v1066 = vld [vmem:[#allocation2] sm:$0xff]
        %v1067 = vld [vmem:[%s426] sm:$0xff]
        %v1068 = vld [vmem:[%s426 + $0x8] sm:$0xff]
        %v1069 = vld [vmem:[%s426 + $0x10] sm:$0xff]
        %v1070 = vld [vmem:[%s426 + $0x18] sm:$0xff]
        %v1071 = vld [vmem:[%s426 + $0x20] sm:$0xff]
        %v1072 = vld [vmem:[%s426 + $0x28] sm:$0xff]
        %v1073 = vld [vmem:[%s426 + $0x30] sm:$0xff]
        %v1074 = vld [vmem:[%s426 + $0x38] sm:$0xff]
        %v1075 = vld [vmem:[%s426 + $0x40] sm:$0xff]
        %v1076 = vld [vmem:[%s426 + $0x48] sm:$0xff]
        %v1077 = vld [vmem:[%s426 + $0x50] sm:$0xff]
        %v1078 = vld [vmem:[%s426 + $0x58] sm:$0xff]
        %v1079 = vld [vmem:[%s426 + $0x60] sm:$0xff]
        %v1080 = vld [vmem:[%s426 + $0x68] sm:$0xff]
        %v1081 = vld [vmem:[%s426 + $0x70] sm:$0xff]
        %v1082 = vld [vmem:[%s426 + $0x78] sm:$0xff]
        %v1083 = vld [vmem:[%s426 + $0x80] sm:$0xff]
        %v1084 = vld [vmem:[%s426 + $0x88] sm:$0xff]
        %v1085 = vld [vmem:[%s426 + $0x90] sm:$0xff]
        %v1086 = vld [vmem:[%s426 + $0x98] sm:$0xff]
        %v1087 = vld [vmem:[%s426 + $0xa0] sm:$0xff]
        %v1088 = vld [vmem:[%s426 + $0xa8] sm:$0xff]
        %v1089 = vld [vmem:[%s426 + $0xb0] sm:$0xff]
        %v1090 = vld [vmem:[%s426 + $0xb8] sm:$0xff]
        %v1091 = vld [vmem:[%s426 + $0xc0] sm:$0xff]
        %v1092 = vld [vmem:[%s426 + $0xc8] sm:$0xff]
        %v1093 = vld [vmem:[%s426 + $0xd0] sm:$0xff]
        %v1094 = vld [vmem:[%s426 + $0xd8] sm:$0xff]
        %v1095 = vld [vmem:[%s426 + $0xe0] sm:$0xff]
        %v1096 = vld [vmem:[%s426 + $0xe8] sm:$0xff]
        %v1097 = vld [vmem:[%s426 + $0xf0] sm:$0xff]
        %v1098 = vld [vmem:[%s426 + $0xf8] sm:$0xff]
        %v1099 = vld [vmem:[%s426 + $0x100] sm:$0xff]
        %v1100 = vld [vmem:[%s426 + $0x108] sm:$0xff]
        %v1101 = vld [vmem:[%s426 + $0x110] sm:$0xff]
        %v1102 = vld [vmem:[%s426 + $0x118] sm:$0xff]
        %v1103 = vld [vmem:[%s426 + $0x120] sm:$0xff]
        %v1104 = vld [vmem:[%s426 + $0x128] sm:$0xff]
        %v1105 = vld [vmem:[%s426 + $0x130] sm:$0xff]
        %v1106 = vld [vmem:[%s426 + $0x138] sm:$0xff]
        %v1107 = vld [vmem:[%s426 + $0x140] sm:$0xff]
        %v1108 = vld [vmem:[%s426 + $0x148] sm:$0xff]
        %v1109 = vld [vmem:[%s426 + $0x150] sm:$0xff]
        %v1110 = vld [vmem:[%s426 + $0x158] sm:$0xff]
        %v1111 = vld [vmem:[%s426 + $0x160] sm:$0xff]
        %v1112 = vld [vmem:[%s426 + $0x168] sm:$0xff]
        %v1113 = vld [vmem:[%s426 + $0x170] sm:$0xff]
        %v1114 = vld [vmem:[%s426 + $0x178] sm:$0xff]
        %1115 = vmatprep.subr.mxu0 %v1068
        %1116 = vmatpush1.msra.mxu0 %v1067
        %1117 = vmatprep.subr.mxu0 %v1071
        %1118 = vmatpush1.msra.mxu0 %v1070
        %1119 = vmatprep.subr.mxu0 %v1074
        %1120 = vmatpush1.msra.mxu0 %v1073
        %1121 = vmatprep.subr.mxu0 %v1077
        %1122 = vmatpush1.msra.mxu0 %v1076
        %1123 = vmatprep.subr.mxu0 %v1080
        %1124 = vmatpush1.msra.mxu0 %v1079
        %1125 = vmatprep.subr.mxu0 %v1083
        %1126 = vmatpush1.msra.mxu0 %v1082
        %1127 = vmatprep.subr.mxu0 %v1086
        %1128 = vmatpush1.msra.mxu0 %v1085
        %1129 = vmatprep.subr.mxu0 %v1089
        %1130 = vmatpush1.msra.mxu0 %v1088
        %1131 = vmatprep.subr.mxu0 %v1092
        %1132 = vmatpush1.msra.mxu0 %v1091
        %1133 = vmatprep.subr.mxu0 %v1095
        %1134 = vmatpush1.msra.mxu0 %v1094
        %1135 = vmatprep.subr.mxu0 %v1098
        %1136 = vmatpush1.msra.mxu0 %v1097
        %1137 = vmatprep.subr.mxu0 %v1101
        %1138 = vmatpush1.msra.mxu0 %v1100
        %1139 = vmatprep.subr.mxu0 %v1104
        %1140 = vmatpush1.msra.mxu0 %v1103
        %1141 = vmatprep.subr.mxu0 %v1107
        %1142 = vmatpush1.msra.mxu0 %v1106
        %1143 = vmatprep.subr.mxu0 %v1110
        %1144 = vmatpush1.msra.mxu0 %v1109
        %1145 = vmatprep.subr.mxu0 %v1113
        %1146 = vmatpush1.msra.mxu0 %v1112
        %1147 = vmatprep.subr.mxu0 0.0
        %1148 = vmatpush1.msra.mxu0 0.0
        %1149 = vmatprep.subr.mxu0 0.0
        %1150 = vmatpush1.msra.mxu0 0.0
        %1151 = vmatprep.subr.mxu0 0.0
        %1152 = vmatpush1.msra.mxu0 0.0
        %1153 = vmatprep.subr.mxu0 0.0
        %1154 = vmatpush1.msra.mxu0 0.0
        %1155 = vmatprep.subr.mxu0 0.0
        %1156 = vmatpush1.msra.mxu0 0.0
        %1157 = vmatprep.subr.mxu0 0.0
        %1158 = vmatpush1.msra.mxu0 0.0
        %1159 = vmatprep.subr.mxu0 0.0
        %1160 = vmatpush1.msra.mxu0 0.0
        %1161 = vmatprep.subr.mxu0 0.0
        %1162 = vmatpush1.msra.mxu0 0.0
        %1163 = vmatprep.subr.mxu0 0.0
        %1164 = vmatpush1.msra.mxu0 0.0
        %1165 = vmatprep.subr.mxu0 0.0
        %1166 = vmatpush1.msra.mxu0 0.0
        %1167 = vmatprep.subr.mxu0 0.0
        %1168 = vmatpush1.msra.mxu0 0.0
        %1169 = vmatprep.subr.mxu0 0.0
        %1170 = vmatpush1.msra.mxu0 0.0
        %1171 = vmatprep.subr.mxu0 0.0
        %1172 = vmatpush1.msra.mxu0 0.0
        %1173 = vmatprep.subr.mxu0 0.0
        %1174 = vmatpush1.msra.mxu0 0.0
        %1175 = vmatprep.subr.mxu0 0.0
        %1176 = vmatpush1.msra.mxu0 0.0
        %1177 = vmatprep.subr.mxu0 0.0
        %1178 = vmatpush1.msra.mxu0 0.0
        %1179 = vmatprep.mubr.f32.mxu0 0.0
        %1180 = vmatmul.mubr.f32.gmra.mrb[0].mxu0 %v1066
        %v1181 = vpop.f32.mrb[0].mxu0
        %v1182 = vadd.f32 0.0, %v1181
        %v1183 = vpop.f32.mrb[0].mxu0
        %v1184 = vadd.f32 0.0, %v1183
        %1185 = vdwg.mxu0
        %1186 = vmatprep.subr.mxu0 0.0
        %1187 = vmatpush1.msra.mxu0 %v1069
        %1188 = vmatprep.subr.mxu0 0.0
        %1189 = vmatpush1.msra.mxu0 %v1072
        %1190 = vmatprep.subr.mxu0 0.0
        %1191 = vmatpush1.msra.mxu0 %v1075
        %1192 = vmatprep.subr.mxu0 0.0
        %1193 = vmatpush1.msra.mxu0 %v1078
        %1194 = vmatprep.subr.mxu0 0.0
        %1195 = vmatpush1.msra.mxu0 %v1081
        %1196 = vmatprep.subr.mxu0 0.0
        %1197 = vmatpush1.msra.mxu0 %v1084
        %1198 = vmatprep.subr.mxu0 0.0
        %1199 = vmatpush1.msra.mxu0 %v1087
        %1200 = vmatprep.subr.mxu0 0.0
        %1201 = vmatpush1.msra.mxu0 %v1090
        %1202 = vmatprep.subr.mxu0 0.0
        %1203 = vmatpush1.msra.mxu0 %v1093
        %1204 = vmatprep.subr.mxu0 0.0
        %1205 = vmatpush1.msra.mxu0 %v1096
        %1206 = vmatprep.subr.mxu0 0.0
        %1207 = vmatpush1.msra.mxu0 %v1099
        %1208 = vmatprep.subr.mxu0 0.0
        %1209 = vmatpush1.msra.mxu0 %v1102
        %1210 = vmatprep.subr.mxu0 0.0
        %1211 = vmatpush1.msra.mxu0 %v1105
        %1212 = vmatprep.subr.mxu0 0.0
        %1213 = vmatpush1.msra.mxu0 %v1108
        %1214 = vmatprep.subr.mxu0 0.0
        %1215 = vmatpush1.msra.mxu0 %v1111
        %1216 = vmatprep.subr.mxu0 0.0
        %1217 = vmatpush1.msra.mxu0 %v1114
        %1218 = vmatprep.subr.mxu0 0.0
        %1219 = vmatpush1.msra.mxu0 0.0
        %1220 = vmatprep.subr.mxu0 0.0
        %1221 = vmatpush1.msra.mxu0 0.0
        %1222 = vmatprep.subr.mxu0 0.0
        %1223 = vmatpush1.msra.mxu0 0.0
        %1224 = vmatprep.subr.mxu0 0.0
        %1225 = vmatpush1.msra.mxu0 0.0
        %1226 = vmatprep.subr.mxu0 0.0
        %1227 = vmatpush1.msra.mxu0 0.0
        %1228 = vmatprep.subr.mxu0 0.0
        %1229 = vmatpush1.msra.mxu0 0.0
        %1230 = vmatprep.subr.mxu0 0.0
        %1231 = vmatpush1.msra.mxu0 0.0
        %1232 = vmatprep.subr.mxu0 0.0
        %1233 = vmatpush1.msra.mxu0 0.0
        %1234 = vmatprep.subr.mxu0 0.0
        %1235 = vmatpush1.msra.mxu0 0.0
        %1236 = vmatprep.subr.mxu0 0.0
        %1237 = vmatpush1.msra.mxu0 0.0
        %1238 = vmatprep.subr.mxu0 0.0
        %1239 = vmatpush1.msra.mxu0 0.0
        %1240 = vmatprep.subr.mxu0 0.0
        %1241 = vmatpush1.msra.mxu0 0.0
        %1242 = vmatprep.subr.mxu0 0.0
        %1243 = vmatpush1.msra.mxu0 0.0
        %1244 = vmatprep.subr.mxu0 0.0
        %1245 = vmatpush1.msra.mxu0 0.0
        %1246 = vmatprep.subr.mxu0 0.0
        %1247 = vmatpush1.msra.mxu0 0.0
        %1248 = vmatprep.subr.mxu0 0.0
        %1249 = vmatpush1.msra.mxu0 0.0
        %1250 = vmatprep.mubr.f32.mxu0 0.0
        %1251 = vmatmul.mubr.f32.gmra.mrb[0].mxu0 %v1066
        %v1252 = vpop.f32.mrb[0].mxu0
        %v1253 = vadd.f32 0.0, %v1252
        %v1254 = vpop.f32.mrb[0].mxu0
        %1255 = vdwg.mxu0
        %v1256 = vadd.f32 %v1063, %v1182
        %v1257 = vxor.u32 %v1256, 2147483648
        %v1258 = vmul.f32 %v1257, 1.442695
        %v1259 = vpow.pop %v1258
        %v1260 = vadd.f32 %v1259, 1.0
        %v1261 = vrcp.pop %v1260
        %v1262 = vmul.f32 1.0, %v1261
        %v1263 = vadd.f32 %v1064, %v1184
        %v1264 = vxor.u32 %v1263, 2147483648
        %v1265 = vmul.f32 %v1264, 1.442695
        %v1266 = vpow.pop %v1265
        %v1267 = vadd.f32 %v1266, 1.0
        %v1268 = vrcp.pop %v1267
        %v1269 = vmul.f32 1.0, %v1268
        %v1270 = vld [vmem:[%s433] sm:$0x1]
        %v1272 = vlaneseq
        %v1273 = vshrl.u32 %v1272, 7
        %v1274 = vsub.s32 0, %v1273
        %v1275 = vrot.slane %v1270, %v1274
        %v1277 = vadd.f32 %v1253, %v1275
        %v1278 = vmul.f32 %v1262, %v1277
        %v1279 = vadd.f32 %v1065, %v1278
        %v1280 = vtanh.pop %v1279
        %v1281 = vsub.f32 1.0, %v1269
        %v1282 = vmul.f32 %v1281, %v1280
        %v1283 = vmul.f32 %v1269, %v1066
        %v1284 = vadd.f32 %v1282, %v1283
        %1285 = vst [vmem:[#allocation2] sm:$0xff] %v1284
        %s1286 = scalar_lea.vmem %s392, %s1057 [#allocation4]
        %1287 = vst [vmem:[%s1286] sm:$0xff] %v1284
        %s1288 = smul.u32 %s1054, 2
        %s1289 = smul.u32 %s26, 5
        %s1290 = sadd.s32 %s1288, %s1289
        %s1291 = smul.u32 %s1290, 8
        %s1292 = sshra.s32 %s1291, 3
        %s1293 = sand.u32 %s1291, 7
        %s1294 = smul.u32 %s1292, 3
        %s1295 = smul.addr %s1294, 8
        %s1296 = scalar_lea.vmem [#allocation3], %s1295
        %v1297 = vld [vmem:[%s1296] sm:$0xff]
        %v1298 = vld [vmem:[%s1296 + $0x8] sm:$0xff]
        %v1299 = vld [vmem:[%s1296 + $0x10] sm:$0xff]
        %v1300 = vld [vmem:[#allocation2] sm:$0xff]
        %v1301 = vld [vmem:[%s426] sm:$0xff]
        %v1302 = vld [vmem:[%s426 + $0x8] sm:$0xff]
        %v1303 = vld [vmem:[%s426 + $0x10] sm:$0xff]
        %v1304 = vld [vmem:[%s426 + $0x18] sm:$0xff]
        %v1305 = vld [vmem:[%s426 + $0x20] sm:$0xff]
        %v1306 = vld [vmem:[%s426 + $0x28] sm:$0xff]
        %v1307 = vld [vmem:[%s426 + $0x30] sm:$0xff]
        %v1308 = vld [vmem:[%s426 + $0x38] sm:$0xff]
        %v1309 = vld [vmem:[%s426 + $0x40] sm:$0xff]
        %v1310 = vld [vmem:[%s426 + $0x48] sm:$0xff]
        %v1311 = vld [vmem:[%s426 + $0x50] sm:$0xff]
        %v1312 = vld [vmem:[%s426 + $0x58] sm:$0xff]
        %v1313 = vld [vmem:[%s426 + $0x60] sm:$0xff]
        %v1314 = vld [vmem:[%s426 + $0x68] sm:$0xff]
        %v1315 = vld [vmem:[%s426 + $0x70] sm:$0xff]
        %v1316 = vld [vmem:[%s426 + $0x78] sm:$0xff]
        %v1317 = vld [vmem:[%s426 + $0x80] sm:$0xff]
        %v1318 = vld [vmem:[%s426 + $0x88] sm:$0xff]
        %v1319 = vld [vmem:[%s426 + $0x90] sm:$0xff]
        %v1320 = vld [vmem:[%s426 + $0x98] sm:$0xff]
        %v1321 = vld [vmem:[%s426 + $0xa0] sm:$0xff]
        %v1322 = vld [vmem:[%s426 + $0xa8] sm:$0xff]
        %v1323 = vld [vmem:[%s426 + $0xb0] sm:$0xff]
        %v1324 = vld [vmem:[%s426 + $0xb8] sm:$0xff]
        %v1325 = vld [vmem:[%s426 + $0xc0] sm:$0xff]
        %v1326 = vld [vmem:[%s426 + $0xc8] sm:$0xff]
        %v1327 = vld [vmem:[%s426 + $0xd0] sm:$0xff]
        %v1328 = vld [vmem:[%s426 + $0xd8] sm:$0xff]
        %v1329 = vld [vmem:[%s426 + $0xe0] sm:$0xff]
        %v1330 = vld [vmem:[%s426 + $0xe8] sm:$0xff]
        %v1331 = vld [vmem:[%s426 + $0xf0] sm:$0xff]
        %v1332 = vld [vmem:[%s426 + $0xf8] sm:$0xff]
        %v1333 = vld [vmem:[%s426 + $0x100] sm:$0xff]
        %v1334 = vld [vmem:[%s426 + $0x108] sm:$0xff]
        %v1335 = vld [vmem:[%s426 + $0x110] sm:$0xff]
        %v1336 = vld [vmem:[%s426 + $0x118] sm:$0xff]
        %v1337 = vld [vmem:[%s426 + $0x120] sm:$0xff]
        %v1338 = vld [vmem:[%s426 + $0x128] sm:$0xff]
        %v1339 = vld [vmem:[%s426 + $0x130] sm:$0xff]
        %v1340 = vld [vmem:[%s426 + $0x138] sm:$0xff]
        %v1341 = vld [vmem:[%s426 + $0x140] sm:$0xff]
        %v1342 = vld [vmem:[%s426 + $0x148] sm:$0xff]
        %v1343 = vld [vmem:[%s426 + $0x150] sm:$0xff]
        %v1344 = vld [vmem:[%s426 + $0x158] sm:$0xff]
        %v1345 = vld [vmem:[%s426 + $0x160] sm:$0xff]
        %v1346 = vld [vmem:[%s426 + $0x168] sm:$0xff]
        %v1347 = vld [vmem:[%s426 + $0x170] sm:$0xff]
        %v1348 = vld [vmem:[%s426 + $0x178] sm:$0xff]
        %1349 = vmatprep.subr.mxu0 %v1302
        %1350 = vmatpush1.msra.mxu0 %v1301
        %1351 = vmatprep.subr.mxu0 %v1305
        %1352 = vmatpush1.msra.mxu0 %v1304
        %1353 = vmatprep.subr.mxu0 %v1308
        %1354 = vmatpush1.msra.mxu0 %v1307
        %1355 = vmatprep.subr.mxu0 %v1311
        %1356 = vmatpush1.msra.mxu0 %v1310
        %1357 = vmatprep.subr.mxu0 %v1314
        %1358 = vmatpush1.msra.mxu0 %v1313
        %1359 = vmatprep.subr.mxu0 %v1317
        %1360 = vmatpush1.msra.mxu0 %v1316
        %1361 = vmatprep.subr.mxu0 %v1320
        %1362 = vmatpush1.msra.mxu0 %v1319
        %1363 = vmatprep.subr.mxu0 %v1323
        %1364 = vmatpush1.msra.mxu0 %v1322
        %1365 = vmatprep.subr.mxu0 %v1326
        %1366 = vmatpush1.msra.mxu0 %v1325
        %1367 = vmatprep.subr.mxu0 %v1329
        %1368 = vmatpush1.msra.mxu0 %v1328
        %1369 = vmatprep.subr.mxu0 %v1332
        %1370 = vmatpush1.msra.mxu0 %v1331
        %1371 = vmatprep.subr.mxu0 %v1335
        %1372 = vmatpush1.msra.mxu0 %v1334
        %1373 = vmatprep.subr.mxu0 %v1338
        %1374 = vmatpush1.msra.mxu0 %v1337
        %1375 = vmatprep.subr.mxu0 %v1341
        %1376 = vmatpush1.msra.mxu0 %v1340
        %1377 = vmatprep.subr.mxu0 %v1344
        %1378 = vmatpush1.msra.mxu0 %v1343
        %1379 = vmatprep.subr.mxu0 %v1347
        %1380 = vmatpush1.msra.mxu0 %v1346
        %1381 = vmatprep.subr.mxu0 0.0
        %1382 = vmatpush1.msra.mxu0 0.0
        %1383 = vmatprep.subr.mxu0 0.0
        %1384 = vmatpush1.msra.mxu0 0.0
        %1385 = vmatprep.subr.mxu0 0.0
        %1386 = vmatpush1.msra.mxu0 0.0
        %1387 = vmatprep.subr.mxu0 0.0
        %1388 = vmatpush1.msra.mxu0 0.0
        %1389 = vmatprep.subr.mxu0 0.0
        %1390 = vmatpush1.msra.mxu0 0.0
        %1391 = vmatprep.subr.mxu0 0.0
        %1392 = vmatpush1.msra.mxu0 0.0
        %1393 = vmatprep.subr.mxu0 0.0
        %1394 = vmatpush1.msra.mxu0 0.0
        %1395 = vmatprep.subr.mxu0 0.0
        %1396 = vmatpush1.msra.mxu0 0.0
        %1397 = vmatprep.subr.mxu0 0.0
        %1398 = vmatpush1.msra.mxu0 0.0
        %1399 = vmatprep.subr.mxu0 0.0
        %1400 = vmatpush1.msra.mxu0 0.0
        %1401 = vmatprep.subr.mxu0 0.0
        %1402 = vmatpush1.msra.mxu0 0.0
        %1403 = vmatprep.subr.mxu0 0.0
        %1404 = vmatpush1.msra.mxu0 0.0
        %1405 = vmatprep.subr.mxu0 0.0
        %1406 = vmatpush1.msra.mxu0 0.0
        %1407 = vmatprep.subr.mxu0 0.0
        %1408 = vmatpush1.msra.mxu0 0.0
        %1409 = vmatprep.subr.mxu0 0.0
        %1410 = vmatpush1.msra.mxu0 0.0
        %1411 = vmatprep.subr.mxu0 0.0
        %1412 = vmatpush1.msra.mxu0 0.0
        %1413 = vmatprep.mubr.f32.mxu0 0.0
        %1414 = vmatmul.mubr.f32.gmra.mrb[0].mxu0 %v1300
        %v1415 = vpop.f32.mrb[0].mxu0
        %v1416 = vadd.f32 0.0, %v1415
        %v1417 = vpop.f32.mrb[0].mxu0
        %v1418 = vadd.f32 0.0, %v1417
        %1419 = vdwg.mxu0
        %1420 = vmatprep.subr.mxu0 0.0
        %1421 = vmatpush1.msra.mxu0 %v1303
        %1422 = vmatprep.subr.mxu0 0.0
        %1423 = vmatpush1.msra.mxu0 %v1306
        %1424 = vmatprep.subr.mxu0 0.0
        %1425 = vmatpush1.msra.mxu0 %v1309
        %1426 = vmatprep.subr.mxu0 0.0
        %1427 = vmatpush1.msra.mxu0 %v1312
        %1428 = vmatprep.subr.mxu0 0.0
        %1429 = vmatpush1.msra.mxu0 %v1315
        %1430 = vmatprep.subr.mxu0 0.0
        %1431 = vmatpush1.msra.mxu0 %v1318
        %1432 = vmatprep.subr.mxu0 0.0
        %1433 = vmatpush1.msra.mxu0 %v1321
        %1434 = vmatprep.subr.mxu0 0.0
        %1435 = vmatpush1.msra.mxu0 %v1324
        %1436 = vmatprep.subr.mxu0 0.0
        %1437 = vmatpush1.msra.mxu0 %v1327
        %1438 = vmatprep.subr.mxu0 0.0
        %1439 = vmatpush1.msra.mxu0 %v1330
        %1440 = vmatprep.subr.mxu0 0.0
        %1441 = vmatpush1.msra.mxu0 %v1333
        %1442 = vmatprep.subr.mxu0 0.0
        %1443 = vmatpush1.msra.mxu0 %v1336
        %1444 = vmatprep.subr.mxu0 0.0
        %1445 = vmatpush1.msra.mxu0 %v1339
        %1446 = vmatprep.subr.mxu0 0.0
        %1447 = vmatpush1.msra.mxu0 %v1342
        %1448 = vmatprep.subr.mxu0 0.0
        %1449 = vmatpush1.msra.mxu0 %v1345
        %1450 = vmatprep.subr.mxu0 0.0
        %1451 = vmatpush1.msra.mxu0 %v1348
        %1452 = vmatprep.subr.mxu0 0.0
        %1453 = vmatpush1.msra.mxu0 0.0
        %1454 = vmatprep.subr.mxu0 0.0
        %1455 = vmatpush1.msra.mxu0 0.0
        %1456 = vmatprep.subr.mxu0 0.0
        %1457 = vmatpush1.msra.mxu0 0.0
        %1458 = vmatprep.subr.mxu0 0.0
        %1459 = vmatpush1.msra.mxu0 0.0
        %1460 = vmatprep.subr.mxu0 0.0
        %1461 = vmatpush1.msra.mxu0 0.0
        %1462 = vmatprep.subr.mxu0 0.0
        %1463 = vmatpush1.msra.mxu0 0.0
        %1464 = vmatprep.subr.mxu0 0.0
        %1465 = vmatpush1.msra.mxu0 0.0
        %1466 = vmatprep.subr.mxu0 0.0
        %1467 = vmatpush1.msra.mxu0 0.0
        %1468 = vmatprep.subr.mxu0 0.0
        %1469 = vmatpush1.msra.mxu0 0.0
        %1470 = vmatprep.subr.mxu0 0.0
        %1471 = vmatpush1.msra.mxu0 0.0
        %1472 = vmatprep.subr.mxu0 0.0
        %1473 = vmatpush1.msra.mxu0 0.0
        %1474 = vmatprep.subr.mxu0 0.0
        %1475 = vmatpush1.msra.mxu0 0.0
        %1476 = vmatprep.subr.mxu0 0.0
        %1477 = vmatpush1.msra.mxu0 0.0
        %1478 = vmatprep.subr.mxu0 0.0
        %1479 = vmatpush1.msra.mxu0 0.0
        %1480 = vmatprep.subr.mxu0 0.0
        %1481 = vmatpush1.msra.mxu0 0.0
        %1482 = vmatprep.subr.mxu0 0.0
        %1483 = vmatpush1.msra.mxu0 0.0
        %1484 = vmatprep.mubr.f32.mxu0 0.0
        %1485 = vmatmul.mubr.f32.gmra.mrb[0].mxu0 %v1300
        %v1486 = vpop.f32.mrb[0].mxu0
        %v1487 = vadd.f32 0.0, %v1486
        %v1488 = vpop.f32.mrb[0].mxu0
        %1489 = vdwg.mxu0
        %v1490 = vadd.f32 %v1297, %v1416
        %v1491 = vxor.u32 %v1490, 2147483648
        %v1492 = vmul.f32 %v1491, 1.442695
        %v1493 = vpow.pop %v1492
        %v1494 = vadd.f32 %v1493, 1.0
        %v1495 = vrcp.pop %v1494
        %v1496 = vmul.f32 1.0, %v1495
        %v1497 = vadd.f32 %v1298, %v1418
        %v1498 = vxor.u32 %v1497, 2147483648
        %v1499 = vmul.f32 %v1498, 1.442695
        %v1500 = vpow.pop %v1499
        %v1501 = vadd.f32 %v1500, 1.0
        %v1502 = vrcp.pop %v1501
        %v1503 = vmul.f32 1.0, %v1502
        %v1504 = vld [vmem:[%s433] sm:$0x1]
        %v1506 = vlaneseq
        %v1507 = vshrl.u32 %v1506, 7
        %v1508 = vsub.s32 0, %v1507
        %v1509 = vrot.slane %v1504, %v1508
        %v1511 = vadd.f32 %v1487, %v1509
        %v1512 = vmul.f32 %v1496, %v1511
        %v1513 = vadd.f32 %v1299, %v1512
        %v1514 = vtanh.pop %v1513
        %v1515 = vsub.f32 1.0, %v1503
        %v1516 = vmul.f32 %v1515, %v1514
        %v1517 = vmul.f32 %v1503, %v1300
        %v1518 = vadd.f32 %v1516, %v1517
        %1519 = vst [vmem:[#allocation2] sm:$0xff] %v1518
        %s1520 = scalar_lea.vmem %s392, %s1291 [#allocation4]
        %1521 = vst [vmem:[%s1520] sm:$0xff] %v1518
        %s1522 = smul.u32 %s1054, 3
        %s1523 = smul.u32 %s26, 4
        %s1524 = sadd.s32 %s1522, %s1523
        %s1525 = smul.u32 %s1524, 8
        %s1526 = sshra.s32 %s1525, 3
        %s1527 = sand.u32 %s1525, 7
        %s1528 = smul.u32 %s1526, 3
        %s1529 = smul.addr %s1528, 8
        %s1530 = scalar_lea.vmem [#allocation3], %s1529
        %v1531 = vld [vmem:[%s1530] sm:$0xff]
        %v1532 = vld [vmem:[%s1530 + $0x8] sm:$0xff]
        %v1533 = vld [vmem:[%s1530 + $0x10] sm:$0xff]
        %v1534 = vld [vmem:[#allocation2] sm:$0xff]
        %v1535 = vld [vmem:[%s426] sm:$0xff]
        %v1536 = vld [vmem:[%s426 + $0x8] sm:$0xff]
        %v1537 = vld [vmem:[%s426 + $0x10] sm:$0xff]
        %v1538 = vld [vmem:[%s426 + $0x18] sm:$0xff]
        %v1539 = vld [vmem:[%s426 + $0x20] sm:$0xff]
        %v1540 = vld [vmem:[%s426 + $0x28] sm:$0xff]
        %v1541 = vld [vmem:[%s426 + $0x30] sm:$0xff]
        %v1542 = vld [vmem:[%s426 + $0x38] sm:$0xff]
        %v1543 = vld [vmem:[%s426 + $0x40] sm:$0xff]
        %v1544 = vld [vmem:[%s426 + $0x48] sm:$0xff]
        %v1545 = vld [vmem:[%s426 + $0x50] sm:$0xff]
        %v1546 = vld [vmem:[%s426 + $0x58] sm:$0xff]
        %v1547 = vld [vmem:[%s426 + $0x60] sm:$0xff]
        %v1548 = vld [vmem:[%s426 + $0x68] sm:$0xff]
        %v1549 = vld [vmem:[%s426 + $0x70] sm:$0xff]
        %v1550 = vld [vmem:[%s426 + $0x78] sm:$0xff]
        %v1551 = vld [vmem:[%s426 + $0x80] sm:$0xff]
        %v1552 = vld [vmem:[%s426 + $0x88] sm:$0xff]
        %v1553 = vld [vmem:[%s426 + $0x90] sm:$0xff]
        %v1554 = vld [vmem:[%s426 + $0x98] sm:$0xff]
        %v1555 = vld [vmem:[%s426 + $0xa0] sm:$0xff]
        %v1556 = vld [vmem:[%s426 + $0xa8] sm:$0xff]
        %v1557 = vld [vmem:[%s426 + $0xb0] sm:$0xff]
        %v1558 = vld [vmem:[%s426 + $0xb8] sm:$0xff]
        %v1559 = vld [vmem:[%s426 + $0xc0] sm:$0xff]
        %v1560 = vld [vmem:[%s426 + $0xc8] sm:$0xff]
        %v1561 = vld [vmem:[%s426 + $0xd0] sm:$0xff]
        %v1562 = vld [vmem:[%s426 + $0xd8] sm:$0xff]
        %v1563 = vld [vmem:[%s426 + $0xe0] sm:$0xff]
        %v1564 = vld [vmem:[%s426 + $0xe8] sm:$0xff]
        %v1565 = vld [vmem:[%s426 + $0xf0] sm:$0xff]
        %v1566 = vld [vmem:[%s426 + $0xf8] sm:$0xff]
        %v1567 = vld [vmem:[%s426 + $0x100] sm:$0xff]
        %v1568 = vld [vmem:[%s426 + $0x108] sm:$0xff]
        %v1569 = vld [vmem:[%s426 + $0x110] sm:$0xff]
        %v1570 = vld [vmem:[%s426 + $0x118] sm:$0xff]
        %v1571 = vld [vmem:[%s426 + $0x120] sm:$0xff]
        %v1572 = vld [vmem:[%s426 + $0x128] sm:$0xff]
        %v1573 = vld [vmem:[%s426 + $0x130] sm:$0xff]
        %v1574 = vld [vmem:[%s426 + $0x138] sm:$0xff]
        %v1575 = vld [vmem:[%s426 + $0x140] sm:$0xff]
        %v1576 = vld [vmem:[%s426 + $0x148] sm:$0xff]
        %v1577 = vld [vmem:[%s426 + $0x150] sm:$0xff]
        %v1578 = vld [vmem:[%s426 + $0x158] sm:$0xff]
        %v1579 = vld [vmem:[%s426 + $0x160] sm:$0xff]
        %v1580 = vld [vmem:[%s426 + $0x168] sm:$0xff]
        %v1581 = vld [vmem:[%s426 + $0x170] sm:$0xff]
        %v1582 = vld [vmem:[%s426 + $0x178] sm:$0xff]
        %1583 = vmatprep.subr.mxu0 %v1536
        %1584 = vmatpush1.msra.mxu0 %v1535
        %1585 = vmatprep.subr.mxu0 %v1539
        %1586 = vmatpush1.msra.mxu0 %v1538
        %1587 = vmatprep.subr.mxu0 %v1542
        %1588 = vmatpush1.msra.mxu0 %v1541
        %1589 = vmatprep.subr.mxu0 %v1545
        %1590 = vmatpush1.msra.mxu0 %v1544
        %1591 = vmatprep.subr.mxu0 %v1548
        %1592 = vmatpush1.msra.mxu0 %v1547
        %1593 = vmatprep.subr.mxu0 %v1551
        %1594 = vmatpush1.msra.mxu0 %v1550
        %1595 = vmatprep.subr.mxu0 %v1554
        %1596 = vmatpush1.msra.mxu0 %v1553
        %1597 = vmatprep.subr.mxu0 %v1557
        %1598 = vmatpush1.msra.mxu0 %v1556
        %1599 = vmatprep.subr.mxu0 %v1560
        %1600 = vmatpush1.msra.mxu0 %v1559
        %1601 = vmatprep.subr.mxu0 %v1563
        %1602 = vmatpush1.msra.mxu0 %v1562
        %1603 = vmatprep.subr.mxu0 %v1566
        %1604 = vmatpush1.msra.mxu0 %v1565
        %1605 = vmatprep.subr.mxu0 %v1569
        %1606 = vmatpush1.msra.mxu0 %v1568
        %1607 = vmatprep.subr.mxu0 %v1572
        %1608 = vmatpush1.msra.mxu0 %v1571
        %1609 = vmatprep.subr.mxu0 %v1575
        %1610 = vmatpush1.msra.mxu0 %v1574
        %1611 = vmatprep.subr.mxu0 %v1578
        %1612 = vmatpush1.msra.mxu0 %v1577
        %1613 = vmatprep.subr.mxu0 %v1581
        %1614 = vmatpush1.msra.mxu0 %v1580
        %1615 = vmatprep.subr.mxu0 0.0
        %1616 = vmatpush1.msra.mxu0 0.0
        %1617 = vmatprep.subr.mxu0 0.0
        %1618 = vmatpush1.msra.mxu0 0.0
        %1619 = vmatprep.subr.mxu0 0.0
        %1620 = vmatpush1.msra.mxu0 0.0
        %1621 = vmatprep.subr.mxu0 0.0
        %1622 = vmatpush1.msra.mxu0 0.0
        %1623 = vmatprep.subr.mxu0 0.0
        %1624 = vmatpush1.msra.mxu0 0.0
        %1625 = vmatprep.subr.mxu0 0.0
        %1626 = vmatpush1.msra.mxu0 0.0
        %1627 = vmatprep.subr.mxu0 0.0
        %1628 = vmatpush1.msra.mxu0 0.0
        %1629 = vmatprep.subr.mxu0 0.0
        %1630 = vmatpush1.msra.mxu0 0.0
        %1631 = vmatprep.subr.mxu0 0.0
        %1632 = vmatpush1.msra.mxu0 0.0
        %1633 = vmatprep.subr.mxu0 0.0
        %1634 = vmatpush1.msra.mxu0 0.0
        %1635 = vmatprep.subr.mxu0 0.0
        %1636 = vmatpush1.msra.mxu0 0.0
        %1637 = vmatprep.subr.mxu0 0.0
        %1638 = vmatpush1.msra.mxu0 0.0
        %1639 = vmatprep.subr.mxu0 0.0
        %1640 = vmatpush1.msra.mxu0 0.0
        %1641 = vmatprep.subr.mxu0 0.0
        %1642 = vmatpush1.msra.mxu0 0.0
        %1643 = vmatprep.subr.mxu0 0.0
        %1644 = vmatpush1.msra.mxu0 0.0
        %1645 = vmatprep.subr.mxu0 0.0
        %1646 = vmatpush1.msra.mxu0 0.0
        %1647 = vmatprep.mubr.f32.mxu0 0.0
        %1648 = vmatmul.mubr.f32.gmra.mrb[0].mxu0 %v1534
        %v1649 = vpop.f32.mrb[0].mxu0
        %v1650 = vadd.f32 0.0, %v1649
        %v1651 = vpop.f32.mrb[0].mxu0
        %v1652 = vadd.f32 0.0, %v1651
        %1653 = vdwg.mxu0
        %1654 = vmatprep.subr.mxu0 0.0
        %1655 = vmatpush1.msra.mxu0 %v1537
        %1656 = vmatprep.subr.mxu0 0.0
        %1657 = vmatpush1.msra.mxu0 %v1540
        %1658 = vmatprep.subr.mxu0 0.0
        %1659 = vmatpush1.msra.mxu0 %v1543
        %1660 = vmatprep.subr.mxu0 0.0
        %1661 = vmatpush1.msra.mxu0 %v1546
        %1662 = vmatprep.subr.mxu0 0.0
        %1663 = vmatpush1.msra.mxu0 %v1549
        %1664 = vmatprep.subr.mxu0 0.0
        %1665 = vmatpush1.msra.mxu0 %v1552
        %1666 = vmatprep.subr.mxu0 0.0
        %1667 = vmatpush1.msra.mxu0 %v1555
        %1668 = vmatprep.subr.mxu0 0.0
        %1669 = vmatpush1.msra.mxu0 %v1558
        %1670 = vmatprep.subr.mxu0 0.0
        %1671 = vmatpush1.msra.mxu0 %v1561
        %1672 = vmatprep.subr.mxu0 0.0
        %1673 = vmatpush1.msra.mxu0 %v1564
        %1674 = vmatprep.subr.mxu0 0.0
        %1675 = vmatpush1.msra.mxu0 %v1567
        %1676 = vmatprep.subr.mxu0 0.0
        %1677 = vmatpush1.msra.mxu0 %v1570
        %1678 = vmatprep.subr.mxu0 0.0
        %1679 = vmatpush1.msra.mxu0 %v1573
        %1680 = vmatprep.subr.mxu0 0.0
        %1681 = vmatpush1.msra.mxu0 %v1576
        %1682 = vmatprep.subr.mxu0 0.0
        %1683 = vmatpush1.msra.mxu0 %v1579
        %1684 = vmatprep.subr.mxu0 0.0
        %1685 = vmatpush1.msra.mxu0 %v1582
        %1686 = vmatprep.subr.mxu0 0.0
        %1687 = vmatpush1.msra.mxu0 0.0
        %1688 = vmatprep.subr.mxu0 0.0
        %1689 = vmatpush1.msra.mxu0 0.0
        %1690 = vmatprep.subr.mxu0 0.0
        %1691 = vmatpush1.msra.mxu0 0.0
        %1692 = vmatprep.subr.mxu0 0.0
        %1693 = vmatpush1.msra.mxu0 0.0
        %1694 = vmatprep.subr.mxu0 0.0
        %1695 = vmatpush1.msra.mxu0 0.0
        %1696 = vmatprep.subr.mxu0 0.0
        %1697 = vmatpush1.msra.mxu0 0.0
        %1698 = vmatprep.subr.mxu0 0.0
        %1699 = vmatpush1.msra.mxu0 0.0
        %1700 = vmatprep.subr.mxu0 0.0
        %1701 = vmatpush1.msra.mxu0 0.0
        %1702 = vmatprep.subr.mxu0 0.0
        %1703 = vmatpush1.msra.mxu0 0.0
        %1704 = vmatprep.subr.mxu0 0.0
        %1705 = vmatpush1.msra.mxu0 0.0
        %1706 = vmatprep.subr.mxu0 0.0
        %1707 = vmatpush1.msra.mxu0 0.0
        %1708 = vmatprep.subr.mxu0 0.0
        %1709 = vmatpush1.msra.mxu0 0.0
        %1710 = vmatprep.subr.mxu0 0.0
        %1711 = vmatpush1.msra.mxu0 0.0
        %1712 = vmatprep.subr.mxu0 0.0
        %1713 = vmatpush1.msra.mxu0 0.0
        %1714 = vmatprep.subr.mxu0 0.0
        %1715 = vmatpush1.msra.mxu0 0.0
        %1716 = vmatprep.subr.mxu0 0.0
        %1717 = vmatpush1.msra.mxu0 0.0
        %1718 = vmatprep.mubr.f32.mxu0 0.0
        %1719 = vmatmul.mubr.f32.gmra.mrb[0].mxu0 %v1534
        %v1720 = vpop.f32.mrb[0].mxu0
        %v1721 = vadd.f32 0.0, %v1720
        %v1722 = vpop.f32.mrb[0].mxu0
        %1723 = vdwg.mxu0
        %v1724 = vadd.f32 %v1531, %v1650
        %v1725 = vxor.u32 %v1724, 2147483648
        %v1726 = vmul.f32 %v1725, 1.442695
        %v1727 = vpow.pop %v1726
        %v1728 = vadd.f32 %v1727, 1.0
        %v1729 = vrcp.pop %v1728
        %v1730 = vmul.f32 1.0, %v1729
        %v1731 = vadd.f32 %v1532, %v1652
        %v1732 = vxor.u32 %v1731, 2147483648
        %v1733 = vmul.f32 %v1732, 1.442695
        %v1734 = vpow.pop %v1733
        %v1735 = vadd.f32 %v1734, 1.0
        %v1736 = vrcp.pop %v1735
        %v1737 = vmul.f32 1.0, %v1736
        %v1738 = vld [vmem:[%s433] sm:$0x1]
        %v1740 = vlaneseq
        %v1741 = vshrl.u32 %v1740, 7
        %v1742 = vsub.s32 0, %v1741
        %v1743 = vrot.slane %v1738, %v1742
        %v1745 = vadd.f32 %v1721, %v1743
        %v1746 = vmul.f32 %v1730, %v1745
        %v1747 = vadd.f32 %v1533, %v1746
        %v1748 = vtanh.pop %v1747
        %v1749 = vsub.f32 1.0, %v1737
        %v1750 = vmul.f32 %v1749, %v1748
        %v1751 = vmul.f32 %v1737, %v1534
        %v1752 = vadd.f32 %v1750, %v1751
        %1753 = vst [vmem:[#allocation2] sm:$0xff] %v1752
        %s1754 = scalar_lea.vmem %s392, %s1525 [#allocation4]
        %1755 = vst [vmem:[%s1754] sm:$0xff] %v1752
        %s1756 = smul.u32 %s1054, 4
        %s1757 = smul.u32 %s26, 3
        %s1758 = sadd.s32 %s1756, %s1757
        %s1759 = smul.u32 %s1758, 8
        %s1760 = sshra.s32 %s1759, 3
        %s1761 = sand.u32 %s1759, 7
        %s1762 = smul.u32 %s1760, 3
        %s1763 = smul.addr %s1762, 8
        %s1764 = scalar_lea.vmem [#allocation3], %s1763
        %v1765 = vld [vmem:[%s1764] sm:$0xff]
        %v1766 = vld [vmem:[%s1764 + $0x8] sm:$0xff]
        %v1767 = vld [vmem:[%s1764 + $0x10] sm:$0xff]
        %v1768 = vld [vmem:[#allocation2] sm:$0xff]
        %v1769 = vld [vmem:[%s426] sm:$0xff]
        %v1770 = vld [vmem:[%s426 + $0x8] sm:$0xff]
        %v1771 = vld [vmem:[%s426 + $0x10] sm:$0xff]
        %v1772 = vld [vmem:[%s426 + $0x18] sm:$0xff]
        %v1773 = vld [vmem:[%s426 + $0x20] sm:$0xff]
        %v1774 = vld [vmem:[%s426 + $0x28] sm:$0xff]
        %v1775 = vld [vmem:[%s426 + $0x30] sm:$0xff]
        %v1776 = vld [vmem:[%s426 + $0x38] sm:$0xff]
        %v1777 = vld [vmem:[%s426 + $0x40] sm:$0xff]
        %v1778 = vld [vmem:[%s426 + $0x48] sm:$0xff]
        %v1779 = vld [vmem:[%s426 + $0x50] sm:$0xff]
        %v1780 = vld [vmem:[%s426 + $0x58] sm:$0xff]
        %v1781 = vld [vmem:[%s426 + $0x60] sm:$0xff]
        %v1782 = vld [vmem:[%s426 + $0x68] sm:$0xff]
        %v1783 = vld [vmem:[%s426 + $0x70] sm:$0xff]
        %v1784 = vld [vmem:[%s426 + $0x78] sm:$0xff]
        %v1785 = vld [vmem:[%s426 + $0x80] sm:$0xff]
        %v1786 = vld [vmem:[%s426 + $0x88] sm:$0xff]
        %v1787 = vld [vmem:[%s426 + $0x90] sm:$0xff]
        %v1788 = vld [vmem:[%s426 + $0x98] sm:$0xff]
        %v1789 = vld [vmem:[%s426 + $0xa0] sm:$0xff]
        %v1790 = vld [vmem:[%s426 + $0xa8] sm:$0xff]
        %v1791 = vld [vmem:[%s426 + $0xb0] sm:$0xff]
        %v1792 = vld [vmem:[%s426 + $0xb8] sm:$0xff]
        %v1793 = vld [vmem:[%s426 + $0xc0] sm:$0xff]
        %v1794 = vld [vmem:[%s426 + $0xc8] sm:$0xff]
        %v1795 = vld [vmem:[%s426 + $0xd0] sm:$0xff]
        %v1796 = vld [vmem:[%s426 + $0xd8] sm:$0xff]
        %v1797 = vld [vmem:[%s426 + $0xe0] sm:$0xff]
        %v1798 = vld [vmem:[%s426 + $0xe8] sm:$0xff]
        %v1799 = vld [vmem:[%s426 + $0xf0] sm:$0xff]
        %v1800 = vld [vmem:[%s426 + $0xf8] sm:$0xff]
        %v1801 = vld [vmem:[%s426 + $0x100] sm:$0xff]
        %v1802 = vld [vmem:[%s426 + $0x108] sm:$0xff]
        %v1803 = vld [vmem:[%s426 + $0x110] sm:$0xff]
        %v1804 = vld [vmem:[%s426 + $0x118] sm:$0xff]
        %v1805 = vld [vmem:[%s426 + $0x120] sm:$0xff]
        %v1806 = vld [vmem:[%s426 + $0x128] sm:$0xff]
        %v1807 = vld [vmem:[%s426 + $0x130] sm:$0xff]
        %v1808 = vld [vmem:[%s426 + $0x138] sm:$0xff]
        %v1809 = vld [vmem:[%s426 + $0x140] sm:$0xff]
        %v1810 = vld [vmem:[%s426 + $0x148] sm:$0xff]
        %v1811 = vld [vmem:[%s426 + $0x150] sm:$0xff]
        %v1812 = vld [vmem:[%s426 + $0x158] sm:$0xff]
        %v1813 = vld [vmem:[%s426 + $0x160] sm:$0xff]
        %v1814 = vld [vmem:[%s426 + $0x168] sm:$0xff]
        %v1815 = vld [vmem:[%s426 + $0x170] sm:$0xff]
        %v1816 = vld [vmem:[%s426 + $0x178] sm:$0xff]
        %1817 = vmatprep.subr.mxu0 %v1770
        %1818 = vmatpush1.msra.mxu0 %v1769
        %1819 = vmatprep.subr.mxu0 %v1773
        %1820 = vmatpush1.msra.mxu0 %v1772
        %1821 = vmatprep.subr.mxu0 %v1776
        %1822 = vmatpush1.msra.mxu0 %v1775
        %1823 = vmatprep.subr.mxu0 %v1779
        %1824 = vmatpush1.msra.mxu0 %v1778
        %1825 = vmatprep.subr.mxu0 %v1782
        %1826 = vmatpush1.msra.mxu0 %v1781
        %1827 = vmatprep.subr.mxu0 %v1785
        %1828 = vmatpush1.msra.mxu0 %v1784
        %1829 = vmatprep.subr.mxu0 %v1788
        %1830 = vmatpush1.msra.mxu0 %v1787
        %1831 = vmatprep.subr.mxu0 %v1791
        %1832 = vmatpush1.msra.mxu0 %v1790
        %1833 = vmatprep.subr.mxu0 %v1794
        %1834 = vmatpush1.msra.mxu0 %v1793
        %1835 = vmatprep.subr.mxu0 %v1797
        %1836 = vmatpush1.msra.mxu0 %v1796
        %1837 = vmatprep.subr.mxu0 %v1800
        %1838 = vmatpush1.msra.mxu0 %v1799
        %1839 = vmatprep.subr.mxu0 %v1803
        %1840 = vmatpush1.msra.mxu0 %v1802
        %1841 = vmatprep.subr.mxu0 %v1806
        %1842 = vmatpush1.msra.mxu0 %v1805
        %1843 = vmatprep.subr.mxu0 %v1809
        %1844 = vmatpush1.msra.mxu0 %v1808
        %1845 = vmatprep.subr.mxu0 %v1812
        %1846 = vmatpush1.msra.mxu0 %v1811
        %1847 = vmatprep.subr.mxu0 %v1815
        %1848 = vmatpush1.msra.mxu0 %v1814
        %1849 = vmatprep.subr.mxu0 0.0
        %1850 = vmatpush1.msra.mxu0 0.0
        %1851 = vmatprep.subr.mxu0 0.0
        %1852 = vmatpush1.msra.mxu0 0.0
        %1853 = vmatprep.subr.mxu0 0.0
        %1854 = vmatpush1.msra.mxu0 0.0
        %1855 = vmatprep.subr.mxu0 0.0
        %1856 = vmatpush1.msra.mxu0 0.0
        %1857 = vmatprep.subr.mxu0 0.0
        %1858 = vmatpush1.msra.mxu0 0.0
        %1859 = vmatprep.subr.mxu0 0.0
        %1860 = vmatpush1.msra.mxu0 0.0
        %1861 = vmatprep.subr.mxu0 0.0
        %1862 = vmatpush1.msra.mxu0 0.0
        %1863 = vmatprep.subr.mxu0 0.0
        %1864 = vmatpush1.msra.mxu0 0.0
        %1865 = vmatprep.subr.mxu0 0.0
        %1866 = vmatpush1.msra.mxu0 0.0
        %1867 = vmatprep.subr.mxu0 0.0
        %1868 = vmatpush1.msra.mxu0 0.0
        %1869 = vmatprep.subr.mxu0 0.0
        %1870 = vmatpush1.msra.mxu0 0.0
        %1871 = vmatprep.subr.mxu0 0.0
        %1872 = vmatpush1.msra.mxu0 0.0
        %1873 = vmatprep.subr.mxu0 0.0
        %1874 = vmatpush1.msra.mxu0 0.0
        %1875 = vmatprep.subr.mxu0 0.0
        %1876 = vmatpush1.msra.mxu0 0.0
        %1877 = vmatprep.subr.mxu0 0.0
        %1878 = vmatpush1.msra.mxu0 0.0
        %1879 = vmatprep.subr.mxu0 0.0
        %1880 = vmatpush1.msra.mxu0 0.0
        %1881 = vmatprep.mubr.f32.mxu0 0.0
        %1882 = vmatmul.mubr.f32.gmra.mrb[0].mxu0 %v1768
        %v1883 = vpop.f32.mrb[0].mxu0
        %v1884 = vadd.f32 0.0, %v1883
        %v1885 = vpop.f32.mrb[0].mxu0
        %v1886 = vadd.f32 0.0, %v1885
        %1887 = vdwg.mxu0
        %1888 = vmatprep.subr.mxu0 0.0
        %1889 = vmatpush1.msra.mxu0 %v1771
        %1890 = vmatprep.subr.mxu0 0.0
        %1891 = vmatpush1.msra.mxu0 %v1774
        %1892 = vmatprep.subr.mxu0 0.0
        %1893 = vmatpush1.msra.mxu0 %v1777
        %1894 = vmatprep.subr.mxu0 0.0
        %1895 = vmatpush1.msra.mxu0 %v1780
        %1896 = vmatprep.subr.mxu0 0.0
        %1897 = vmatpush1.msra.mxu0 %v1783
        %1898 = vmatprep.subr.mxu0 0.0
        %1899 = vmatpush1.msra.mxu0 %v1786
        %1900 = vmatprep.subr.mxu0 0.0
        %1901 = vmatpush1.msra.mxu0 %v1789
        %1902 = vmatprep.subr.mxu0 0.0
        %1903 = vmatpush1.msra.mxu0 %v1792
        %1904 = vmatprep.subr.mxu0 0.0
        %1905 = vmatpush1.msra.mxu0 %v1795
        %1906 = vmatprep.subr.mxu0 0.0
        %1907 = vmatpush1.msra.mxu0 %v1798
        %1908 = vmatprep.subr.mxu0 0.0
        %1909 = vmatpush1.msra.mxu0 %v1801
        %1910 = vmatprep.subr.mxu0 0.0
        %1911 = vmatpush1.msra.mxu0 %v1804
        %1912 = vmatprep.subr.mxu0 0.0
        %1913 = vmatpush1.msra.mxu0 %v1807
        %1914 = vmatprep.subr.mxu0 0.0
        %1915 = vmatpush1.msra.mxu0 %v1810
        %1916 = vmatprep.subr.mxu0 0.0
        %1917 = vmatpush1.msra.mxu0 %v1813
        %1918 = vmatprep.subr.mxu0 0.0
        %1919 = vmatpush1.msra.mxu0 %v1816
        %1920 = vmatprep.subr.mxu0 0.0
        %1921 = vmatpush1.msra.mxu0 0.0
        %1922 = vmatprep.subr.mxu0 0.0
        %1923 = vmatpush1.msra.mxu0 0.0
        %1924 = vmatprep.subr.mxu0 0.0
        %1925 = vmatpush1.msra.mxu0 0.0
        %1926 = vmatprep.subr.mxu0 0.0
        %1927 = vmatpush1.msra.mxu0 0.0
        %1928 = vmatprep.subr.mxu0 0.0
        %1929 = vmatpush1.msra.mxu0 0.0
        %1930 = vmatprep.subr.mxu0 0.0
        %1931 = vmatpush1.msra.mxu0 0.0
        %1932 = vmatprep.subr.mxu0 0.0
        %1933 = vmatpush1.msra.mxu0 0.0
        %1934 = vmatprep.subr.mxu0 0.0
        %1935 = vmatpush1.msra.mxu0 0.0
        %1936 = vmatprep.subr.mxu0 0.0
        %1937 = vmatpush1.msra.mxu0 0.0
        %1938 = vmatprep.subr.mxu0 0.0
        %1939 = vmatpush1.msra.mxu0 0.0
        %1940 = vmatprep.subr.mxu0 0.0
        %1941 = vmatpush1.msra.mxu0 0.0
        %1942 = vmatprep.subr.mxu0 0.0
        %1943 = vmatpush1.msra.mxu0 0.0
        %1944 = vmatprep.subr.mxu0 0.0
        %1945 = vmatpush1.msra.mxu0 0.0
        %1946 = vmatprep.subr.mxu0 0.0
        %1947 = vmatpush1.msra.mxu0 0.0
        %1948 = vmatprep.subr.mxu0 0.0
        %1949 = vmatpush1.msra.mxu0 0.0
        %1950 = vmatprep.subr.mxu0 0.0
        %1951 = vmatpush1.msra.mxu0 0.0
        %1952 = vmatprep.mubr.f32.mxu0 0.0
        %1953 = vmatmul.mubr.f32.gmra.mrb[0].mxu0 %v1768
        %v1954 = vpop.f32.mrb[0].mxu0
        %v1955 = vadd.f32 0.0, %v1954
        %v1956 = vpop.f32.mrb[0].mxu0
        %1957 = vdwg.mxu0
        %v1958 = vadd.f32 %v1765, %v1884
        %v1959 = vxor.u32 %v1958, 2147483648
        %v1960 = vmul.f32 %v1959, 1.442695
        %v1961 = vpow.pop %v1960
        %v1962 = vadd.f32 %v1961, 1.0
        %v1963 = vrcp.pop %v1962
        %v1964 = vmul.f32 1.0, %v1963
        %v1965 = vadd.f32 %v1766, %v1886
        %v1966 = vxor.u32 %v1965, 2147483648
        %v1967 = vmul.f32 %v1966, 1.442695
        %v1968 = vpow.pop %v1967
        %v1969 = vadd.f32 %v1968, 1.0
        %v1970 = vrcp.pop %v1969
        %v1971 = vmul.f32 1.0, %v1970
        %v1972 = vld [vmem:[%s433] sm:$0x1]
        %v1974 = vlaneseq
        %v1975 = vshrl.u32 %v1974, 7
        %v1976 = vsub.s32 0, %v1975
        %v1977 = vrot.slane %v1972, %v1976
        %v1979 = vadd.f32 %v1955, %v1977
        %v1980 = vmul.f32 %v1964, %v1979
        %v1981 = vadd.f32 %v1767, %v1980
        %v1982 = vtanh.pop %v1981
        %v1983 = vsub.f32 1.0, %v1971
        %v1984 = vmul.f32 %v1983, %v1982
        %v1985 = vmul.f32 %v1971, %v1768
        %v1986 = vadd.f32 %v1984, %v1985
        %1987 = vst [vmem:[#allocation2] sm:$0xff] %v1986
        %s1988 = scalar_lea.vmem %s392, %s1759 [#allocation4]
        %1989 = vst [vmem:[%s1988] sm:$0xff] %v1986
        %s1990 = smul.u32 %s1054, 5
        %s1991 = smul.u32 %s26, 2
        %s1992 = sadd.s32 %s1990, %s1991
        %s1993 = smul.u32 %s1992, 8
        %s1994 = sshra.s32 %s1993, 3
        %s1995 = sand.u32 %s1993, 7
        %s1996 = smul.u32 %s1994, 3
        %s1997 = smul.addr %s1996, 8
        %s1998 = scalar_lea.vmem [#allocation3], %s1997
        %v1999 = vld [vmem:[%s1998] sm:$0xff]
        %v2000 = vld [vmem:[%s1998 + $0x8] sm:$0xff]
        %v2001 = vld [vmem:[%s1998 + $0x10] sm:$0xff]
        %v2002 = vld [vmem:[#allocation2] sm:$0xff]
        %v2003 = vld [vmem:[%s426] sm:$0xff]
        %v2004 = vld [vmem:[%s426 + $0x8] sm:$0xff]
        %v2005 = vld [vmem:[%s426 + $0x10] sm:$0xff]
        %v2006 = vld [vmem:[%s426 + $0x18] sm:$0xff]
        %v2007 = vld [vmem:[%s426 + $0x20] sm:$0xff]
        %v2008 = vld [vmem:[%s426 + $0x28] sm:$0xff]
        %v2009 = vld [vmem:[%s426 + $0x30] sm:$0xff]
        %v2010 = vld [vmem:[%s426 + $0x38] sm:$0xff]
        %v2011 = vld [vmem:[%s426 + $0x40] sm:$0xff]
        %v2012 = vld [vmem:[%s426 + $0x48] sm:$0xff]
        %v2013 = vld [vmem:[%s426 + $0x50] sm:$0xff]
        %v2014 = vld [vmem:[%s426 + $0x58] sm:$0xff]
        %v2015 = vld [vmem:[%s426 + $0x60] sm:$0xff]
        %v2016 = vld [vmem:[%s426 + $0x68] sm:$0xff]
        %v2017 = vld [vmem:[%s426 + $0x70] sm:$0xff]
        %v2018 = vld [vmem:[%s426 + $0x78] sm:$0xff]
        %v2019 = vld [vmem:[%s426 + $0x80] sm:$0xff]
        %v2020 = vld [vmem:[%s426 + $0x88] sm:$0xff]
        %v2021 = vld [vmem:[%s426 + $0x90] sm:$0xff]
        %v2022 = vld [vmem:[%s426 + $0x98] sm:$0xff]
        %v2023 = vld [vmem:[%s426 + $0xa0] sm:$0xff]
        %v2024 = vld [vmem:[%s426 + $0xa8] sm:$0xff]
        %v2025 = vld [vmem:[%s426 + $0xb0] sm:$0xff]
        %v2026 = vld [vmem:[%s426 + $0xb8] sm:$0xff]
        %v2027 = vld [vmem:[%s426 + $0xc0] sm:$0xff]
        %v2028 = vld [vmem:[%s426 + $0xc8] sm:$0xff]
        %v2029 = vld [vmem:[%s426 + $0xd0] sm:$0xff]
        %v2030 = vld [vmem:[%s426 + $0xd8] sm:$0xff]
        %v2031 = vld [vmem:[%s426 + $0xe0] sm:$0xff]
        %v2032 = vld [vmem:[%s426 + $0xe8] sm:$0xff]
        %v2033 = vld [vmem:[%s426 + $0xf0] sm:$0xff]
        %v2034 = vld [vmem:[%s426 + $0xf8] sm:$0xff]
        %v2035 = vld [vmem:[%s426 + $0x100] sm:$0xff]
        %v2036 = vld [vmem:[%s426 + $0x108] sm:$0xff]
        %v2037 = vld [vmem:[%s426 + $0x110] sm:$0xff]
        %v2038 = vld [vmem:[%s426 + $0x118] sm:$0xff]
        %v2039 = vld [vmem:[%s426 + $0x120] sm:$0xff]
        %v2040 = vld [vmem:[%s426 + $0x128] sm:$0xff]
        %v2041 = vld [vmem:[%s426 + $0x130] sm:$0xff]
        %v2042 = vld [vmem:[%s426 + $0x138] sm:$0xff]
        %v2043 = vld [vmem:[%s426 + $0x140] sm:$0xff]
        %v2044 = vld [vmem:[%s426 + $0x148] sm:$0xff]
        %v2045 = vld [vmem:[%s426 + $0x150] sm:$0xff]
        %v2046 = vld [vmem:[%s426 + $0x158] sm:$0xff]
        %v2047 = vld [vmem:[%s426 + $0x160] sm:$0xff]
        %v2048 = vld [vmem:[%s426 + $0x168] sm:$0xff]
        %v2049 = vld [vmem:[%s426 + $0x170] sm:$0xff]
        %v2050 = vld [vmem:[%s426 + $0x178] sm:$0xff]
        %2051 = vmatprep.subr.mxu0 %v2004
        %2052 = vmatpush1.msra.mxu0 %v2003
        %2053 = vmatprep.subr.mxu0 %v2007
        %2054 = vmatpush1.msra.mxu0 %v2006
        %2055 = vmatprep.subr.mxu0 %v2010
        %2056 = vmatpush1.msra.mxu0 %v2009
        %2057 = vmatprep.subr.mxu0 %v2013
        %2058 = vmatpush1.msra.mxu0 %v2012
        %2059 = vmatprep.subr.mxu0 %v2016
        %2060 = vmatpush1.msra.mxu0 %v2015
        %2061 = vmatprep.subr.mxu0 %v2019
        %2062 = vmatpush1.msra.mxu0 %v2018
        %2063 = vmatprep.subr.mxu0 %v2022
        %2064 = vmatpush1.msra.mxu0 %v2021
        %2065 = vmatprep.subr.mxu0 %v2025
        %2066 = vmatpush1.msra.mxu0 %v2024
        %2067 = vmatprep.subr.mxu0 %v2028
        %2068 = vmatpush1.msra.mxu0 %v2027
        %2069 = vmatprep.subr.mxu0 %v2031
        %2070 = vmatpush1.msra.mxu0 %v2030
        %2071 = vmatprep.subr.mxu0 %v2034
        %2072 = vmatpush1.msra.mxu0 %v2033
        %2073 = vmatprep.subr.mxu0 %v2037
        %2074 = vmatpush1.msra.mxu0 %v2036
        %2075 = vmatprep.subr.mxu0 %v2040
        %2076 = vmatpush1.msra.mxu0 %v2039
        %2077 = vmatprep.subr.mxu0 %v2043
        %2078 = vmatpush1.msra.mxu0 %v2042
        %2079 = vmatprep.subr.mxu0 %v2046
        %2080 = vmatpush1.msra.mxu0 %v2045
        %2081 = vmatprep.subr.mxu0 %v2049
        %2082 = vmatpush1.msra.mxu0 %v2048
        %2083 = vmatprep.subr.mxu0 0.0
        %2084 = vmatpush1.msra.mxu0 0.0
        %2085 = vmatprep.subr.mxu0 0.0
        %2086 = vmatpush1.msra.mxu0 0.0
        %2087 = vmatprep.subr.mxu0 0.0
        %2088 = vmatpush1.msra.mxu0 0.0
        %2089 = vmatprep.subr.mxu0 0.0
        %2090 = vmatpush1.msra.mxu0 0.0
        %2091 = vmatprep.subr.mxu0 0.0
        %2092 = vmatpush1.msra.mxu0 0.0
        %2093 = vmatprep.subr.mxu0 0.0
        %2094 = vmatpush1.msra.mxu0 0.0
        %2095 = vmatprep.subr.mxu0 0.0
        %2096 = vmatpush1.msra.mxu0 0.0
        %2097 = vmatprep.subr.mxu0 0.0
        %2098 = vmatpush1.msra.mxu0 0.0
        %2099 = vmatprep.subr.mxu0 0.0
        %2100 = vmatpush1.msra.mxu0 0.0
        %2101 = vmatprep.subr.mxu0 0.0
        %2102 = vmatpush1.msra.mxu0 0.0
        %2103 = vmatprep.subr.mxu0 0.0
        %2104 = vmatpush1.msra.mxu0 0.0
        %2105 = vmatprep.subr.mxu0 0.0
        %2106 = vmatpush1.msra.mxu0 0.0
        %2107 = vmatprep.subr.mxu0 0.0
        %2108 = vmatpush1.msra.mxu0 0.0
        %2109 = vmatprep.subr.mxu0 0.0
        %2110 = vmatpush1.msra.mxu0 0.0
        %2111 = vmatprep.subr.mxu0 0.0
        %2112 = vmatpush1.msra.mxu0 0.0
        %2113 = vmatprep.subr.mxu0 0.0
        %2114 = vmatpush1.msra.mxu0 0.0
        %2115 = vmatprep.mubr.f32.mxu0 0.0
        %2116 = vmatmul.mubr.f32.gmra.mrb[0].mxu0 %v2002
        %v2117 = vpop.f32.mrb[0].mxu0
        %v2118 = vadd.f32 0.0, %v2117
        %v2119 = vpop.f32.mrb[0].mxu0
        %v2120 = vadd.f32 0.0, %v2119
        %2121 = vdwg.mxu0
        %2122 = vmatprep.subr.mxu0 0.0
        %2123 = vmatpush1.msra.mxu0 %v2005
        %2124 = vmatprep.subr.mxu0 0.0
        %2125 = vmatpush1.msra.mxu0 %v2008
        %2126 = vmatprep.subr.mxu0 0.0
        %2127 = vmatpush1.msra.mxu0 %v2011
        %2128 = vmatprep.subr.mxu0 0.0
        %2129 = vmatpush1.msra.mxu0 %v2014
        %2130 = vmatprep.subr.mxu0 0.0
        %2131 = vmatpush1.msra.mxu0 %v2017
        %2132 = vmatprep.subr.mxu0 0.0
        %2133 = vmatpush1.msra.mxu0 %v2020
        %2134 = vmatprep.subr.mxu0 0.0
        %2135 = vmatpush1.msra.mxu0 %v2023
        %2136 = vmatprep.subr.mxu0 0.0
        %2137 = vmatpush1.msra.mxu0 %v2026
        %2138 = vmatprep.subr.mxu0 0.0
        %2139 = vmatpush1.msra.mxu0 %v2029
        %2140 = vmatprep.subr.mxu0 0.0
        %2141 = vmatpush1.msra.mxu0 %v2032
        %2142 = vmatprep.subr.mxu0 0.0
        %2143 = vmatpush1.msra.mxu0 %v2035
        %2144 = vmatprep.subr.mxu0 0.0
        %2145 = vmatpush1.msra.mxu0 %v2038
        %2146 = vmatprep.subr.mxu0 0.0
        %2147 = vmatpush1.msra.mxu0 %v2041
        %2148 = vmatprep.subr.mxu0 0.0
        %2149 = vmatpush1.msra.mxu0 %v2044
        %2150 = vmatprep.subr.mxu0 0.0
        %2151 = vmatpush1.msra.mxu0 %v2047
        %2152 = vmatprep.subr.mxu0 0.0
        %2153 = vmatpush1.msra.mxu0 %v2050
        %2154 = vmatprep.subr.mxu0 0.0
        %2155 = vmatpush1.msra.mxu0 0.0
        %2156 = vmatprep.subr.mxu0 0.0
        %2157 = vmatpush1.msra.mxu0 0.0
        %2158 = vmatprep.subr.mxu0 0.0
        %2159 = vmatpush1.msra.mxu0 0.0
        %2160 = vmatprep.subr.mxu0 0.0
        %2161 = vmatpush1.msra.mxu0 0.0
        %2162 = vmatprep.subr.mxu0 0.0
        %2163 = vmatpush1.msra.mxu0 0.0
        %2164 = vmatprep.subr.mxu0 0.0
        %2165 = vmatpush1.msra.mxu0 0.0
        %2166 = vmatprep.subr.mxu0 0.0
        %2167 = vmatpush1.msra.mxu0 0.0
        %2168 = vmatprep.subr.mxu0 0.0
        %2169 = vmatpush1.msra.mxu0 0.0
        %2170 = vmatprep.subr.mxu0 0.0
        %2171 = vmatpush1.msra.mxu0 0.0
        %2172 = vmatprep.subr.mxu0 0.0
        %2173 = vmatpush1.msra.mxu0 0.0
        %2174 = vmatprep.subr.mxu0 0.0
        %2175 = vmatpush1.msra.mxu0 0.0
        %2176 = vmatprep.subr.mxu0 0.0
        %2177 = vmatpush1.msra.mxu0 0.0
        %2178 = vmatprep.subr.mxu0 0.0
        %2179 = vmatpush1.msra.mxu0 0.0
        %2180 = vmatprep.subr.mxu0 0.0
        %2181 = vmatpush1.msra.mxu0 0.0
        %2182 = vmatprep.subr.mxu0 0.0
        %2183 = vmatpush1.msra.mxu0 0.0
        %2184 = vmatprep.subr.mxu0 0.0
        %2185 = vmatpush1.msra.mxu0 0.0
        %2186 = vmatprep.mubr.f32.mxu0 0.0
        %2187 = vmatmul.mubr.f32.gmra.mrb[0].mxu0 %v2002
        %v2188 = vpop.f32.mrb[0].mxu0
        %v2189 = vadd.f32 0.0, %v2188
        %v2190 = vpop.f32.mrb[0].mxu0
        %2191 = vdwg.mxu0
        %v2192 = vadd.f32 %v1999, %v2118
        %v2193 = vxor.u32 %v2192, 2147483648
        %v2194 = vmul.f32 %v2193, 1.442695
        %v2195 = vpow.pop %v2194
        %v2196 = vadd.f32 %v2195, 1.0
        %v2197 = vrcp.pop %v2196
        %v2198 = vmul.f32 1.0, %v2197
        %v2199 = vadd.f32 %v2000, %v2120
        %v2200 = vxor.u32 %v2199, 2147483648
        %v2201 = vmul.f32 %v2200, 1.442695
        %v2202 = vpow.pop %v2201
        %v2203 = vadd.f32 %v2202, 1.0
        %v2204 = vrcp.pop %v2203
        %v2205 = vmul.f32 1.0, %v2204
        %v2206 = vld [vmem:[%s433] sm:$0x1]
        %v2208 = vlaneseq
        %v2209 = vshrl.u32 %v2208, 7
        %v2210 = vsub.s32 0, %v2209
        %v2211 = vrot.slane %v2206, %v2210
        %v2213 = vadd.f32 %v2189, %v2211
        %v2214 = vmul.f32 %v2198, %v2213
        %v2215 = vadd.f32 %v2001, %v2214
        %v2216 = vtanh.pop %v2215
        %v2217 = vsub.f32 1.0, %v2205
        %v2218 = vmul.f32 %v2217, %v2216
        %v2219 = vmul.f32 %v2205, %v2002
        %v2220 = vadd.f32 %v2218, %v2219
        %2221 = vst [vmem:[#allocation2] sm:$0xff] %v2220
        %s2222 = scalar_lea.vmem %s392, %s1993 [#allocation4]
        %2223 = vst [vmem:[%s2222] sm:$0xff] %v2220
        %s2224 = smul.u32 %s1054, 6
        %s2225 = sadd.s32 %s2224, %s26
        %s2226 = smul.u32 %s2225, 8
        %s2227 = sshra.s32 %s2226, 3
        %s2228 = sand.u32 %s2226, 7
        %s2229 = smul.u32 %s2227, 3
        %s2230 = smul.addr %s2229, 8
        %s2231 = scalar_lea.vmem [#allocation3], %s2230
        %v2232 = vld [vmem:[%s2231] sm:$0xff]
        %v2233 = vld [vmem:[%s2231 + $0x8] sm:$0xff]
        %v2234 = vld [vmem:[%s2231 + $0x10] sm:$0xff]
        %v2235 = vld [vmem:[#allocation2] sm:$0xff]
        %v2236 = vld [vmem:[%s426] sm:$0xff]
        %v2237 = vld [vmem:[%s426 + $0x8] sm:$0xff]
        %v2238 = vld [vmem:[%s426 + $0x10] sm:$0xff]
        %v2239 = vld [vmem:[%s426 + $0x18] sm:$0xff]
        %v2240 = vld [vmem:[%s426 + $0x20] sm:$0xff]
        %v2241 = vld [vmem:[%s426 + $0x28] sm:$0xff]
        %v2242 = vld [vmem:[%s426 + $0x30] sm:$0xff]
        %v2243 = vld [vmem:[%s426 + $0x38] sm:$0xff]
        %v2244 = vld [vmem:[%s426 + $0x40] sm:$0xff]
        %v2245 = vld [vmem:[%s426 + $0x48] sm:$0xff]
        %v2246 = vld [vmem:[%s426 + $0x50] sm:$0xff]
        %v2247 = vld [vmem:[%s426 + $0x58] sm:$0xff]
        %v2248 = vld [vmem:[%s426 + $0x60] sm:$0xff]
        %v2249 = vld [vmem:[%s426 + $0x68] sm:$0xff]
        %v2250 = vld [vmem:[%s426 + $0x70] sm:$0xff]
        %v2251 = vld [vmem:[%s426 + $0x78] sm:$0xff]
        %v2252 = vld [vmem:[%s426 + $0x80] sm:$0xff]
        %v2253 = vld [vmem:[%s426 + $0x88] sm:$0xff]
        %v2254 = vld [vmem:[%s426 + $0x90] sm:$0xff]
        %v2255 = vld [vmem:[%s426 + $0x98] sm:$0xff]
        %v2256 = vld [vmem:[%s426 + $0xa0] sm:$0xff]
        %v2257 = vld [vmem:[%s426 + $0xa8] sm:$0xff]
        %v2258 = vld [vmem:[%s426 + $0xb0] sm:$0xff]
        %v2259 = vld [vmem:[%s426 + $0xb8] sm:$0xff]
        %v2260 = vld [vmem:[%s426 + $0xc0] sm:$0xff]
        %v2261 = vld [vmem:[%s426 + $0xc8] sm:$0xff]
        %v2262 = vld [vmem:[%s426 + $0xd0] sm:$0xff]
        %v2263 = vld [vmem:[%s426 + $0xd8] sm:$0xff]
        %v2264 = vld [vmem:[%s426 + $0xe0] sm:$0xff]
        %v2265 = vld [vmem:[%s426 + $0xe8] sm:$0xff]
        %v2266 = vld [vmem:[%s426 + $0xf0] sm:$0xff]
        %v2267 = vld [vmem:[%s426 + $0xf8] sm:$0xff]
        %v2268 = vld [vmem:[%s426 + $0x100] sm:$0xff]
        %v2269 = vld [vmem:[%s426 + $0x108] sm:$0xff]
        %v2270 = vld [vmem:[%s426 + $0x110] sm:$0xff]
        %v2271 = vld [vmem:[%s426 + $0x118] sm:$0xff]
        %v2272 = vld [vmem:[%s426 + $0x120] sm:$0xff]
        %v2273 = vld [vmem:[%s426 + $0x128] sm:$0xff]
        %v2274 = vld [vmem:[%s426 + $0x130] sm:$0xff]
        %v2275 = vld [vmem:[%s426 + $0x138] sm:$0xff]
        %v2276 = vld [vmem:[%s426 + $0x140] sm:$0xff]
        %v2277 = vld [vmem:[%s426 + $0x148] sm:$0xff]
        %v2278 = vld [vmem:[%s426 + $0x150] sm:$0xff]
        %v2279 = vld [vmem:[%s426 + $0x158] sm:$0xff]
        %v2280 = vld [vmem:[%s426 + $0x160] sm:$0xff]
        %v2281 = vld [vmem:[%s426 + $0x168] sm:$0xff]
        %v2282 = vld [vmem:[%s426 + $0x170] sm:$0xff]
        %v2283 = vld [vmem:[%s426 + $0x178] sm:$0xff]
        %2284 = vmatprep.subr.mxu0 %v2237
        %2285 = vmatpush1.msra.mxu0 %v2236
        %2286 = vmatprep.subr.mxu0 %v2240
        %2287 = vmatpush1.msra.mxu0 %v2239
        %2288 = vmatprep.subr.mxu0 %v2243
        %2289 = vmatpush1.msra.mxu0 %v2242
        %2290 = vmatprep.subr.mxu0 %v2246
        %2291 = vmatpush1.msra.mxu0 %v2245
        %2292 = vmatprep.subr.mxu0 %v2249
        %2293 = vmatpush1.msra.mxu0 %v2248
        %2294 = vmatprep.subr.mxu0 %v2252
        %2295 = vmatpush1.msra.mxu0 %v2251
        %2296 = vmatprep.subr.mxu0 %v2255
        %2297 = vmatpush1.msra.mxu0 %v2254
        %2298 = vmatprep.subr.mxu0 %v2258
        %2299 = vmatpush1.msra.mxu0 %v2257
        %2300 = vmatprep.subr.mxu0 %v2261
        %2301 = vmatpush1.msra.mxu0 %v2260
        %2302 = vmatprep.subr.mxu0 %v2264
        %2303 = vmatpush1.msra.mxu0 %v2263
        %2304 = vmatprep.subr.mxu0 %v2267
        %2305 = vmatpush1.msra.mxu0 %v2266
        %2306 = vmatprep.subr.mxu0 %v2270
        %2307 = vmatpush1.msra.mxu0 %v2269
        %2308 = vmatprep.subr.mxu0 %v2273
        %2309 = vmatpush1.msra.mxu0 %v2272
        %2310 = vmatprep.subr.mxu0 %v2276
        %2311 = vmatpush1.msra.mxu0 %v2275
        %2312 = vmatprep.subr.mxu0 %v2279
        %2313 = vmatpush1.msra.mxu0 %v2278
        %2314 = vmatprep.subr.mxu0 %v2282
        %2315 = vmatpush1.msra.mxu0 %v2281
        %2316 = vmatprep.subr.mxu0 0.0
        %2317 = vmatpush1.msra.mxu0 0.0
        %2318 = vmatprep.subr.mxu0 0.0
        %2319 = vmatpush1.msra.mxu0 0.0
        %2320 = vmatprep.subr.mxu0 0.0
        %2321 = vmatpush1.msra.mxu0 0.0
        %2322 = vmatprep.subr.mxu0 0.0
        %2323 = vmatpush1.msra.mxu0 0.0
        %2324 = vmatprep.subr.mxu0 0.0
        %2325 = vmatpush1.msra.mxu0 0.0
        %2326 = vmatprep.subr.mxu0 0.0
        %2327 = vmatpush1.msra.mxu0 0.0
        %2328 = vmatprep.subr.mxu0 0.0
        %2329 = vmatpush1.msra.mxu0 0.0
        %2330 = vmatprep.subr.mxu0 0.0
        %2331 = vmatpush1.msra.mxu0 0.0
        %2332 = vmatprep.subr.mxu0 0.0
        %2333 = vmatpush1.msra.mxu0 0.0
        %2334 = vmatprep.subr.mxu0 0.0
        %2335 = vmatpush1.msra.mxu0 0.0
        %2336 = vmatprep.subr.mxu0 0.0
        %2337 = vmatpush1.msra.mxu0 0.0
        %2338 = vmatprep.subr.mxu0 0.0
        %2339 = vmatpush1.msra.mxu0 0.0
        %2340 = vmatprep.subr.mxu0 0.0
        %2341 = vmatpush1.msra.mxu0 0.0
        %2342 = vmatprep.subr.mxu0 0.0
        %2343 = vmatpush1.msra.mxu0 0.0
        %2344 = vmatprep.subr.mxu0 0.0
        %2345 = vmatpush1.msra.mxu0 0.0
        %2346 = vmatprep.subr.mxu0 0.0
        %2347 = vmatpush1.msra.mxu0 0.0
        %2348 = vmatprep.mubr.f32.mxu0 0.0
        %2349 = vmatmul.mubr.f32.gmra.mrb[0].mxu0 %v2235
        %v2350 = vpop.f32.mrb[0].mxu0
        %v2351 = vadd.f32 0.0, %v2350
        %v2352 = vpop.f32.mrb[0].mxu0
        %v2353 = vadd.f32 0.0, %v2352
        %2354 = vdwg.mxu0
        %2355 = vmatprep.subr.mxu0 0.0
        %2356 = vmatpush1.msra.mxu0 %v2238
        %2357 = vmatprep.subr.mxu0 0.0
        %2358 = vmatpush1.msra.mxu0 %v2241
        %2359 = vmatprep.subr.mxu0 0.0
        %2360 = vmatpush1.msra.mxu0 %v2244
        %2361 = vmatprep.subr.mxu0 0.0
        %2362 = vmatpush1.msra.mxu0 %v2247
        %2363 = vmatprep.subr.mxu0 0.0
        %2364 = vmatpush1.msra.mxu0 %v2250
        %2365 = vmatprep.subr.mxu0 0.0
        %2366 = vmatpush1.msra.mxu0 %v2253
        %2367 = vmatprep.subr.mxu0 0.0
        %2368 = vmatpush1.msra.mxu0 %v2256
        %2369 = vmatprep.subr.mxu0 0.0
        %2370 = vmatpush1.msra.mxu0 %v2259
        %2371 = vmatprep.subr.mxu0 0.0
        %2372 = vmatpush1.msra.mxu0 %v2262
        %2373 = vmatprep.subr.mxu0 0.0
        %2374 = vmatpush1.msra.mxu0 %v2265
        %2375 = vmatprep.subr.mxu0 0.0
        %2376 = vmatpush1.msra.mxu0 %v2268
        %2377 = vmatprep.subr.mxu0 0.0
        %2378 = vmatpush1.msra.mxu0 %v2271
        %2379 = vmatprep.subr.mxu0 0.0
        %2380 = vmatpush1.msra.mxu0 %v2274
        %2381 = vmatprep.subr.mxu0 0.0
        %2382 = vmatpush1.msra.mxu0 %v2277
        %2383 = vmatprep.subr.mxu0 0.0
        %2384 = vmatpush1.msra.mxu0 %v2280
        %2385 = vmatprep.subr.mxu0 0.0
        %2386 = vmatpush1.msra.mxu0 %v2283
        %2387 = vmatprep.subr.mxu0 0.0
        %2388 = vmatpush1.msra.mxu0 0.0
        %2389 = vmatprep.subr.mxu0 0.0
        %2390 = vmatpush1.msra.mxu0 0.0
        %2391 = vmatprep.subr.mxu0 0.0
        %2392 = vmatpush1.msra.mxu0 0.0
        %2393 = vmatprep.subr.mxu0 0.0
        %2394 = vmatpush1.msra.mxu0 0.0
        %2395 = vmatprep.subr.mxu0 0.0
        %2396 = vmatpush1.msra.mxu0 0.0
        %2397 = vmatprep.subr.mxu0 0.0
        %2398 = vmatpush1.msra.mxu0 0.0
        %2399 = vmatprep.subr.mxu0 0.0
        %2400 = vmatpush1.msra.mxu0 0.0
        %2401 = vmatprep.subr.mxu0 0.0
        %2402 = vmatpush1.msra.mxu0 0.0
        %2403 = vmatprep.subr.mxu0 0.0
        %2404 = vmatpush1.msra.mxu0 0.0
        %2405 = vmatprep.subr.mxu0 0.0
        %2406 = vmatpush1.msra.mxu0 0.0
        %2407 = vmatprep.subr.mxu0 0.0
        %2408 = vmatpush1.msra.mxu0 0.0
        %2409 = vmatprep.subr.mxu0 0.0
        %2410 = vmatpush1.msra.mxu0 0.0
        %2411 = vmatprep.subr.mxu0 0.0
        %2412 = vmatpush1.msra.mxu0 0.0
        %2413 = vmatprep.subr.mxu0 0.0
        %2414 = vmatpush1.msra.mxu0 0.0
        %2415 = vmatprep.subr.mxu0 0.0
        %2416 = vmatpush1.msra.mxu0 0.0
        %2417 = vmatprep.subr.mxu0 0.0
        %2418 = vmatpush1.msra.mxu0 0.0
        %2419 = vmatprep.mubr.f32.mxu0 0.0
        %2420 = vmatmul.mubr.f32.gmra.mrb[0].mxu0 %v2235
        %v2421 = vpop.f32.mrb[0].mxu0
        %v2422 = vadd.f32 0.0, %v2421
        %v2423 = vpop.f32.mrb[0].mxu0
        %2424 = vdwg.mxu0
        %v2425 = vadd.f32 %v2232, %v2351
        %v2426 = vxor.u32 %v2425, 2147483648
        %v2427 = vmul.f32 %v2426, 1.442695
        %v2428 = vpow.pop %v2427
        %v2429 = vadd.f32 %v2428, 1.0
        %v2430 = vrcp.pop %v2429
        %v2431 = vmul.f32 1.0, %v2430
        %v2432 = vadd.f32 %v2233, %v2353
        %v2433 = vxor.u32 %v2432, 2147483648
        %v2434 = vmul.f32 %v2433, 1.442695
        %v2435 = vpow.pop %v2434
        %v2436 = vadd.f32 %v2435, 1.0
        %v2437 = vrcp.pop %v2436
        %v2438 = vmul.f32 1.0, %v2437
        %v2439 = vld [vmem:[%s433] sm:$0x1]
        %v2441 = vlaneseq
        %v2442 = vshrl.u32 %v2441, 7
        %v2443 = vsub.s32 0, %v2442
        %v2444 = vrot.slane %v2439, %v2443
        %v2446 = vadd.f32 %v2422, %v2444
        %v2447 = vmul.f32 %v2431, %v2446
        %v2448 = vadd.f32 %v2234, %v2447
        %v2449 = vtanh.pop %v2448
        %v2450 = vsub.f32 1.0, %v2438
        %v2451 = vmul.f32 %v2450, %v2449
        %v2452 = vmul.f32 %v2438, %v2235
        %v2453 = vadd.f32 %v2451, %v2452
        %2454 = vst [vmem:[#allocation2] sm:$0xff] %v2453
        %s2455 = scalar_lea.vmem %s392, %s2226 [#allocation4]
        %2456 = vst [vmem:[%s2455] sm:$0xff] %v2453
        %s2457 = smul.u32 %s1054, 7
        %s2458 = smul.u32 %s1054, 56
        %s2459 = sshra.s32 %s2458, 3
        %s2460 = sand.u32 %s2458, 7
        %s2461 = smul.u32 %s2459, 3
        %s2462 = smul.addr %s2461, 8
        %s2463 = scalar_lea.vmem [#allocation3], %s2462
        %v2464 = vld [vmem:[%s2463] sm:$0xff]
        %v2465 = vld [vmem:[%s2463 + $0x8] sm:$0xff]
        %v2466 = vld [vmem:[%s2463 + $0x10] sm:$0xff]
        %v2467 = vld [vmem:[#allocation2] sm:$0xff]
        %v2468 = vld [vmem:[%s426] sm:$0xff]
        %v2469 = vld [vmem:[%s426 + $0x8] sm:$0xff]
        %v2470 = vld [vmem:[%s426 + $0x10] sm:$0xff]
        %v2471 = vld [vmem:[%s426 + $0x18] sm:$0xff]
        %v2472 = vld [vmem:[%s426 + $0x20] sm:$0xff]
        %v2473 = vld [vmem:[%s426 + $0x28] sm:$0xff]
        %v2474 = vld [vmem:[%s426 + $0x30] sm:$0xff]
        %v2475 = vld [vmem:[%s426 + $0x38] sm:$0xff]
        %v2476 = vld [vmem:[%s426 + $0x40] sm:$0xff]
        %v2477 = vld [vmem:[%s426 + $0x48] sm:$0xff]
        %v2478 = vld [vmem:[%s426 + $0x50] sm:$0xff]
        %v2479 = vld [vmem:[%s426 + $0x58] sm:$0xff]
        %v2480 = vld [vmem:[%s426 + $0x60] sm:$0xff]
        %v2481 = vld [vmem:[%s426 + $0x68] sm:$0xff]
        %v2482 = vld [vmem:[%s426 + $0x70] sm:$0xff]
        %v2483 = vld [vmem:[%s426 + $0x78] sm:$0xff]
        %v2484 = vld [vmem:[%s426 + $0x80] sm:$0xff]
        %v2485 = vld [vmem:[%s426 + $0x88] sm:$0xff]
        %v2486 = vld [vmem:[%s426 + $0x90] sm:$0xff]
        %v2487 = vld [vmem:[%s426 + $0x98] sm:$0xff]
        %v2488 = vld [vmem:[%s426 + $0xa0] sm:$0xff]
        %v2489 = vld [vmem:[%s426 + $0xa8] sm:$0xff]
        %v2490 = vld [vmem:[%s426 + $0xb0] sm:$0xff]
        %v2491 = vld [vmem:[%s426 + $0xb8] sm:$0xff]
        %v2492 = vld [vmem:[%s426 + $0xc0] sm:$0xff]
        %v2493 = vld [vmem:[%s426 + $0xc8] sm:$0xff]
        %v2494 = vld [vmem:[%s426 + $0xd0] sm:$0xff]
        %v2495 = vld [vmem:[%s426 + $0xd8] sm:$0xff]
        %v2496 = vld [vmem:[%s426 + $0xe0] sm:$0xff]
        %v2497 = vld [vmem:[%s426 + $0xe8] sm:$0xff]
        %v2498 = vld [vmem:[%s426 + $0xf0] sm:$0xff]
        %v2499 = vld [vmem:[%s426 + $0xf8] sm:$0xff]
        %v2500 = vld [vmem:[%s426 + $0x100] sm:$0xff]
        %v2501 = vld [vmem:[%s426 + $0x108] sm:$0xff]
        %v2502 = vld [vmem:[%s426 + $0x110] sm:$0xff]
        %v2503 = vld [vmem:[%s426 + $0x118] sm:$0xff]
        %v2504 = vld [vmem:[%s426 + $0x120] sm:$0xff]
        %v2505 = vld [vmem:[%s426 + $0x128] sm:$0xff]
        %v2506 = vld [vmem:[%s426 + $0x130] sm:$0xff]
        %v2507 = vld [vmem:[%s426 + $0x138] sm:$0xff]
        %v2508 = vld [vmem:[%s426 + $0x140] sm:$0xff]
        %v2509 = vld [vmem:[%s426 + $0x148] sm:$0xff]
        %v2510 = vld [vmem:[%s426 + $0x150] sm:$0xff]
        %v2511 = vld [vmem:[%s426 + $0x158] sm:$0xff]
        %v2512 = vld [vmem:[%s426 + $0x160] sm:$0xff]
        %v2513 = vld [vmem:[%s426 + $0x168] sm:$0xff]
        %v2514 = vld [vmem:[%s426 + $0x170] sm:$0xff]
        %v2515 = vld [vmem:[%s426 + $0x178] sm:$0xff]
        %2516 = vmatprep.subr.mxu0 %v2469
        %2517 = vmatpush1.msra.mxu0 %v2468
        %2518 = vmatprep.subr.mxu0 %v2472
        %2519 = vmatpush1.msra.mxu0 %v2471
        %2520 = vmatprep.subr.mxu0 %v2475
        %2521 = vmatpush1.msra.mxu0 %v2474
        %2522 = vmatprep.subr.mxu0 %v2478
        %2523 = vmatpush1.msra.mxu0 %v2477
        %2524 = vmatprep.subr.mxu0 %v2481
        %2525 = vmatpush1.msra.mxu0 %v2480
        %2526 = vmatprep.subr.mxu0 %v2484
        %2527 = vmatpush1.msra.mxu0 %v2483
        %2528 = vmatprep.subr.mxu0 %v2487
        %2529 = vmatpush1.msra.mxu0 %v2486
        %2530 = vmatprep.subr.mxu0 %v2490
        %2531 = vmatpush1.msra.mxu0 %v2489
        %2532 = vmatprep.subr.mxu0 %v2493
        %2533 = vmatpush1.msra.mxu0 %v2492
        %2534 = vmatprep.subr.mxu0 %v2496
        %2535 = vmatpush1.msra.mxu0 %v2495
        %2536 = vmatprep.subr.mxu0 %v2499
        %2537 = vmatpush1.msra.mxu0 %v2498
        %2538 = vmatprep.subr.mxu0 %v2502
        %2539 = vmatpush1.msra.mxu0 %v2501
        %2540 = vmatprep.subr.mxu0 %v2505
        %2541 = vmatpush1.msra.mxu0 %v2504
        %2542 = vmatprep.subr.mxu0 %v2508
        %2543 = vmatpush1.msra.mxu0 %v2507
        %2544 = vmatprep.subr.mxu0 %v2511
        %2545 = vmatpush1.msra.mxu0 %v2510
        %2546 = vmatprep.subr.mxu0 %v2514
        %2547 = vmatpush1.msra.mxu0 %v2513
        %2548 = vmatprep.subr.mxu0 0.0
        %2549 = vmatpush1.msra.mxu0 0.0
        %2550 = vmatprep.subr.mxu0 0.0
        %2551 = vmatpush1.msra.mxu0 0.0
        %2552 = vmatprep.subr.mxu0 0.0
        %2553 = vmatpush1.msra.mxu0 0.0
        %2554 = vmatprep.subr.mxu0 0.0
        %2555 = vmatpush1.msra.mxu0 0.0
        %2556 = vmatprep.subr.mxu0 0.0
        %2557 = vmatpush1.msra.mxu0 0.0
        %2558 = vmatprep.subr.mxu0 0.0
        %2559 = vmatpush1.msra.mxu0 0.0
        %2560 = vmatprep.subr.mxu0 0.0
        %2561 = vmatpush1.msra.mxu0 0.0
        %2562 = vmatprep.subr.mxu0 0.0
        %2563 = vmatpush1.msra.mxu0 0.0
        %2564 = vmatprep.subr.mxu0 0.0
        %2565 = vmatpush1.msra.mxu0 0.0
        %2566 = vmatprep.subr.mxu0 0.0
        %2567 = vmatpush1.msra.mxu0 0.0
        %2568 = vmatprep.subr.mxu0 0.0
        %2569 = vmatpush1.msra.mxu0 0.0
        %2570 = vmatprep.subr.mxu0 0.0
        %2571 = vmatpush1.msra.mxu0 0.0
        %2572 = vmatprep.subr.mxu0 0.0
        %2573 = vmatpush1.msra.mxu0 0.0
        %2574 = vmatprep.subr.mxu0 0.0
        %2575 = vmatpush1.msra.mxu0 0.0
        %2576 = vmatprep.subr.mxu0 0.0
        %2577 = vmatpush1.msra.mxu0 0.0
        %2578 = vmatprep.subr.mxu0 0.0
        %2579 = vmatpush1.msra.mxu0 0.0
        %2580 = vmatprep.mubr.f32.mxu0 0.0
        %2581 = vmatmul.mubr.f32.gmra.mrb[0].mxu0 %v2467
        %v2582 = vpop.f32.mrb[0].mxu0
        %v2583 = vadd.f32 0.0, %v2582
        %v2584 = vpop.f32.mrb[0].mxu0
        %v2585 = vadd.f32 0.0, %v2584
        %2586 = vdwg.mxu0
        %2587 = vmatprep.subr.mxu0 0.0
        %2588 = vmatpush1.msra.mxu0 %v2470
        %2589 = vmatprep.subr.mxu0 0.0
        %2590 = vmatpush1.msra.mxu0 %v2473
        %2591 = vmatprep.subr.mxu0 0.0
        %2592 = vmatpush1.msra.mxu0 %v2476
        %2593 = vmatprep.subr.mxu0 0.0
        %2594 = vmatpush1.msra.mxu0 %v2479
        %2595 = vmatprep.subr.mxu0 0.0
        %2596 = vmatpush1.msra.mxu0 %v2482
        %2597 = vmatprep.subr.mxu0 0.0
        %2598 = vmatpush1.msra.mxu0 %v2485
        %2599 = vmatprep.subr.mxu0 0.0
        %2600 = vmatpush1.msra.mxu0 %v2488
        %2601 = vmatprep.subr.mxu0 0.0
        %2602 = vmatpush1.msra.mxu0 %v2491
        %2603 = vmatprep.subr.mxu0 0.0
        %2604 = vmatpush1.msra.mxu0 %v2494
        %2605 = vmatprep.subr.mxu0 0.0
        %2606 = vmatpush1.msra.mxu0 %v2497
        %2607 = vmatprep.subr.mxu0 0.0
        %2608 = vmatpush1.msra.mxu0 %v2500
        %2609 = vmatprep.subr.mxu0 0.0
        %2610 = vmatpush1.msra.mxu0 %v2503
        %2611 = vmatprep.subr.mxu0 0.0
        %2612 = vmatpush1.msra.mxu0 %v2506
        %2613 = vmatprep.subr.mxu0 0.0
        %2614 = vmatpush1.msra.mxu0 %v2509
        %2615 = vmatprep.subr.mxu0 0.0
        %2616 = vmatpush1.msra.mxu0 %v2512
        %2617 = vmatprep.subr.mxu0 0.0
        %2618 = vmatpush1.msra.mxu0 %v2515
        %2619 = vmatprep.subr.mxu0 0.0
        %2620 = vmatpush1.msra.mxu0 0.0
        %2621 = vmatprep.subr.mxu0 0.0
        %2622 = vmatpush1.msra.mxu0 0.0
        %2623 = vmatprep.subr.mxu0 0.0
        %2624 = vmatpush1.msra.mxu0 0.0
        %2625 = vmatprep.subr.mxu0 0.0
        %2626 = vmatpush1.msra.mxu0 0.0
        %2627 = vmatprep.subr.mxu0 0.0
        %2628 = vmatpush1.msra.mxu0 0.0
        %2629 = vmatprep.subr.mxu0 0.0
        %2630 = vmatpush1.msra.mxu0 0.0
        %2631 = vmatprep.subr.mxu0 0.0
        %2632 = vmatpush1.msra.mxu0 0.0
        %2633 = vmatprep.subr.mxu0 0.0
        %2634 = vmatpush1.msra.mxu0 0.0
        %2635 = vmatprep.subr.mxu0 0.0
        %2636 = vmatpush1.msra.mxu0 0.0
        %2637 = vmatprep.subr.mxu0 0.0
        %2638 = vmatpush1.msra.mxu0 0.0
        %2639 = vmatprep.subr.mxu0 0.0
        %2640 = vmatpush1.msra.mxu0 0.0
        %2641 = vmatprep.subr.mxu0 0.0
        %2642 = vmatpush1.msra.mxu0 0.0
        %2643 = vmatprep.subr.mxu0 0.0
        %2644 = vmatpush1.msra.mxu0 0.0
        %2645 = vmatprep.subr.mxu0 0.0
        %2646 = vmatpush1.msra.mxu0 0.0
        %2647 = vmatprep.subr.mxu0 0.0
        %2648 = vmatpush1.msra.mxu0 0.0
        %2649 = vmatprep.subr.mxu0 0.0
        %2650 = vmatpush1.msra.mxu0 0.0
        %2651 = vmatprep.mubr.f32.mxu0 0.0
        %2652 = vmatmul.mubr.f32.gmra.mrb[0].mxu0 %v2467
        %v2653 = vpop.f32.mrb[0].mxu0
        %v2654 = vadd.f32 0.0, %v2653
        %v2655 = vpop.f32.mrb[0].mxu0
        %2656 = vdwg.mxu0
        %v2657 = vadd.f32 %v2464, %v2583
        %v2658 = vxor.u32 %v2657, 2147483648
        %v2659 = vmul.f32 %v2658, 1.442695
        %v2660 = vpow.pop %v2659
        %v2661 = vadd.f32 %v2660, 1.0
        %v2662 = vrcp.pop %v2661
        %v2663 = vmul.f32 1.0, %v2662
        %v2664 = vadd.f32 %v2465, %v2585
        %v2665 = vxor.u32 %v2664, 2147483648
        %v2666 = vmul.f32 %v2665, 1.442695
        %v2667 = vpow.pop %v2666
        %v2668 = vadd.f32 %v2667, 1.0
        %v2669 = vrcp.pop %v2668
        %v2670 = vmul.f32 1.0, %v2669
        %v2671 = vld [vmem:[%s433] sm:$0x1]
        %v2673 = vlaneseq
        %v2674 = vshrl.u32 %v2673, 7
        %v2675 = vsub.s32 0, %v2674
        %v2676 = vrot.slane %v2671, %v2675
        %v2678 = vadd.f32 %v2654, %v2676
        %v2679 = vmul.f32 %v2663, %v2678
        %v2680 = vadd.f32 %v2466, %v2679
        %v2681 = vtanh.pop %v2680
        %v2682 = vsub.f32 1.0, %v2670
        %v2683 = vmul.f32 %v2682, %v2681
        %v2684 = vmul.f32 %v2670, %v2467
        %v2685 = vadd.f32 %v2683, %v2684
        %2686 = vst [vmem:[#allocation2] sm:$0xff] %v2685
        %s2687 = smul.u32 %s2457, 8
        %s2688 = scalar_lea.vmem %s392, %s2687 [#allocation4]
        %2689 = vst [vmem:[%s2688] sm:$0xff] %v2685
        %v2690 = vld [vmem:[#allocation2] sm:$0xff]
        %v2691 = vld [vmem:[%s438] sm:$0xff]
        %v2692 = vld [vmem:[%s438 + $0x8] sm:$0xff]
        %v2693 = vld [vmem:[%s438 + $0x10] sm:$0xff]
        %v2694 = vld [vmem:[%s438 + $0x18] sm:$0xff]
        %v2695 = vld [vmem:[%s438 + $0x20] sm:$0xff]
        %v2696 = vld [vmem:[%s438 + $0x28] sm:$0xff]
        %v2697 = vld [vmem:[%s438 + $0x30] sm:$0xff]
        %v2698 = vld [vmem:[%s438 + $0x38] sm:$0xff]
        %v2699 = vld [vmem:[%s438 + $0x40] sm:$0xff]
        %v2700 = vld [vmem:[%s438 + $0x48] sm:$0xff]
        %v2701 = vld [vmem:[%s438 + $0x50] sm:$0xff]
        %v2702 = vld [vmem:[%s438 + $0x58] sm:$0xff]
        %v2703 = vld [vmem:[%s438 + $0x60] sm:$0xff]
        %v2704 = vld [vmem:[%s438 + $0x68] sm:$0xff]
        %v2705 = vld [vmem:[%s438 + $0x70] sm:$0xff]
        %v2706 = vld [vmem:[%s438 + $0x78] sm:$0xff]
        %2707 = vmatprep.subr.mxu0 0.0
        %2708 = vmatpush1.msra.mxu0 %v2691
        %2709 = vmatprep.subr.mxu0 0.0
        %2710 = vmatpush1.msra.mxu0 %v2692
        %2711 = vmatprep.subr.mxu0 0.0
        %2712 = vmatpush1.msra.mxu0 %v2693
        %2713 = vmatprep.subr.mxu0 0.0
        %2714 = vmatpush1.msra.mxu0 %v2694
        %2715 = vmatprep.subr.mxu0 0.0
        %2716 = vmatpush1.msra.mxu0 %v2695
        %2717 = vmatprep.subr.mxu0 0.0
        %2718 = vmatpush1.msra.mxu0 %v2696
        %2719 = vmatprep.subr.mxu0 0.0
        %2720 = vmatpush1.msra.mxu0 %v2697
        %2721 = vmatprep.subr.mxu0 0.0
        %2722 = vmatpush1.msra.mxu0 %v2698
        %2723 = vmatprep.subr.mxu0 0.0
        %2724 = vmatpush1.msra.mxu0 %v2699
        %2725 = vmatprep.subr.mxu0 0.0
        %2726 = vmatpush1.msra.mxu0 %v2700
        %2727 = vmatprep.subr.mxu0 0.0
        %2728 = vmatpush1.msra.mxu0 %v2701
        %2729 = vmatprep.subr.mxu0 0.0
        %2730 = vmatpush1.msra.mxu0 %v2702
        %2731 = vmatprep.subr.mxu0 0.0
        %2732 = vmatpush1.msra.mxu0 %v2703
        %2733 = vmatprep.subr.mxu0 0.0
        %2734 = vmatpush1.msra.mxu0 %v2704
        %2735 = vmatprep.subr.mxu0 0.0
        %2736 = vmatpush1.msra.mxu0 %v2705
        %2737 = vmatprep.subr.mxu0 0.0
        %2738 = vmatpush1.msra.mxu0 %v2706
        %2739 = vmatprep.subr.mxu0 0.0
        %2740 = vmatpush1.msra.mxu0 0.0
        %2741 = vmatprep.subr.mxu0 0.0
        %2742 = vmatpush1.msra.mxu0 0.0
        %2743 = vmatprep.subr.mxu0 0.0
        %2744 = vmatpush1.msra.mxu0 0.0
        %2745 = vmatprep.subr.mxu0 0.0
        %2746 = vmatpush1.msra.mxu0 0.0
        %2747 = vmatprep.subr.mxu0 0.0
        %2748 = vmatpush1.msra.mxu0 0.0
        %2749 = vmatprep.subr.mxu0 0.0
        %2750 = vmatpush1.msra.mxu0 0.0
        %2751 = vmatprep.subr.mxu0 0.0
        %2752 = vmatpush1.msra.mxu0 0.0
        %2753 = vmatprep.subr.mxu0 0.0
        %2754 = vmatpush1.msra.mxu0 0.0
        %2755 = vmatprep.subr.mxu0 0.0
        %2756 = vmatpush1.msra.mxu0 0.0
        %2757 = vmatprep.subr.mxu0 0.0
        %2758 = vmatpush1.msra.mxu0 0.0
        %2759 = vmatprep.subr.mxu0 0.0
        %2760 = vmatpush1.msra.mxu0 0.0
        %2761 = vmatprep.subr.mxu0 0.0
        %2762 = vmatpush1.msra.mxu0 0.0
        %2763 = vmatprep.subr.mxu0 0.0
        %2764 = vmatpush1.msra.mxu0 0.0
        %2765 = vmatprep.subr.mxu0 0.0
        %2766 = vmatpush1.msra.mxu0 0.0
        %2767 = vmatprep.subr.mxu0 0.0
        %2768 = vmatpush1.msra.mxu0 0.0
        %2769 = vmatprep.subr.mxu0 0.0
        %2770 = vmatpush1.msra.mxu0 0.0
        %2771 = vmatprep.mubr.f32.mxu0 0.0
        %2772 = vmatmul.mubr.f32.gmra.mrb[0].mxu0 %v2690
        %v2773 = vpop.f32.mrb[0].mxu0
        %v2774 = vadd.f32 0.0, %v2773
        %v2775 = vpop.f32.mrb[0].mxu0
        %2776 = vdwg.mxu0
        %vm2777 = vcmask 261120
        %2778 = vst.msk [vmem:[%s399] sm:$0xff] %vm2777, %v2774
        %s2779 = sand.u32 %s220, 1
        %s2780 = sand.u32 %s220, 1
        %s2781 = smul.addr %s2780, 64
        %s2782 = scalar_lea.vmem [#allocation4], %s2781
        %s2783 = sand.u32 %s246, 1
        %s2784 = scalar_lea.sflag [#allocation6], %s2783
        %s2785 = sand.u32 %s246, 1
        %s2786 = smul.addr %s2785, 8
        %s2787 = scalar_lea.vmem [#allocation5], %s2786
        // Predicated region
        $region49: #{encoder_forward.3} parent=43 // pred_check
          %p2788 = pneg %p230
        $region50: #{encoder_forward.3} parent=43 // pred_check_branch
          %2790 = sbr.rel (%p2788) target = $region52
        $region51: #{encoder_forward.3} parent=43 // pred_region
          %s2791 = ssub.s32 1, %s26
          %s2792 = smul.u32 %s2791, %s27
          %s2793 = ssub.s32 0, %s27
          %s2794 = smul.u32 %s26, %s2793
          %s2795 = sadd.s32 %s2792, %s2794
          %s2796 = smul.u32 8, %s2795
          %s2797 = smul.addr %s2796, 2
          %s2798 = sadd.s32 %s26, %s2797
          %s2799 = smul.addr %s2798, 8
          %s2800 = scalar_lea.vmem %s6, %s2799
          // Predicated region
          $region53: #{encoder_forward.3} parent=51 // pred_check
            _
          $region54: #{encoder_forward.3} parent=51 // pred_check_branch
            %2802 = sbr.rel (0) target = $region56
          $region55: #{encoder_forward.3} parent=51 // pred_region
            // Predicated region
            $region57: #{encoder_forward.3} parent=55 // pred_check
              _
            $region58: #{encoder_forward.3} parent=55 // pred_check_branch
              %2804 = sbr.rel (0) target = $region60
            $region59: #{encoder_forward.3} parent=55 // pred_region
              // Predicated region
              $region72: #{encoder_forward.3} parent=59 // pred_check
                _
              $region73: #{encoder_forward.3} parent=59 // pred_check_branch
                %2833 = sbr.rel (0) target = $region75
              $region74: #{encoder_forward.3} parent=59 // pred_region
                loop: start=0, step=1, limit=1
                $region76: #{encoder_forward.3} parent=74 // loop_pre_header
                  _
                $region77: #{encoder_forward.3} parent=74 // loop_header
                  %s2835 = sphi 0, %s2839
                  %p2836 = scmp.ge.s32.totalorder %s2835, 1
                  %s2840 = sphi %s2782, %s2782
                  %s2841 = sphi %s2800, %s2800
                $region78: #{encoder_forward.3} parent=74 // loop_header_branch
                  %2838 = sbr.rel (%p2836) target = $region82
                $region79: #{encoder_forward.3} parent=74 // loop_body
                  %v2842 = vld [vmem:[%s2840] sm:$0xff]
                  %2843 = vst [vmem:[%s2841] sm:$0xff] %v2842
                  %v2844 = vld [vmem:[%s2840 + $0x8] sm:$0xff]
                  %2845 = vst [vmem:[%s2841 + $0x10] sm:$0xff] %v2844
                  %v2846 = vld [vmem:[%s2840 + $0x10] sm:$0xff]
                  %2847 = vst [vmem:[%s2841 + $0x20] sm:$0xff] %v2846
                  %v2848 = vld [vmem:[%s2840 + $0x18] sm:$0xff]
                  %2849 = vst [vmem:[%s2841 + $0x30] sm:$0xff] %v2848
                  %v2850 = vld [vmem:[%s2840 + $0x20] sm:$0xff]
                  %2851 = vst [vmem:[%s2841 + $0x40] sm:$0xff] %v2850
                  %v2852 = vld [vmem:[%s2840 + $0x28] sm:$0xff]
                  %2853 = vst [vmem:[%s2841 + $0x50] sm:$0xff] %v2852
                  %v2854 = vld [vmem:[%s2840 + $0x30] sm:$0xff]
                  %2855 = vst [vmem:[%s2841 + $0x60] sm:$0xff] %v2854
                  %v2856 = vld [vmem:[%s2840 + $0x38] sm:$0xff]
                  %2857 = vst [vmem:[%s2841 + $0x70] sm:$0xff] %v2856
                $region80: #{encoder_forward.3} parent=74 // loop_footer
                  %s2839 = sadd.s32 1, %s2835
                $region81: #{encoder_forward.3} parent=74 // loop_footer_branch
                  %2834 = sbr.rel target = $region77
                $region82: #{encoder_forward.3} parent=74 // loop_exit
                  _
              $region75: #{encoder_forward.3} parent=59 // pred_fallthru
                _
              // Predicated region
              $region83: #{encoder_forward.3} parent=59 // pred_check
                _
              $region84: #{encoder_forward.3} parent=59 // pred_check_branch
                %2859 = sbr.rel target = $region86
              $region85: #{encoder_forward.3} parent=59 // pred_region
                _
              $region86: #{encoder_forward.3} parent=59 // pred_fallthru
                _
            $region60: #{encoder_forward.3} parent=55 // pred_fallthru
              _
            // Predicated region
            $region61: #{encoder_forward.3} parent=55 // pred_check
              _
            $region62: #{encoder_forward.3} parent=55 // pred_check_branch
              %2806 = sbr.rel target = $region64
            $region63: #{encoder_forward.3} parent=55 // pred_region
              loop: start=0, step=1, limit=1
              $region65: #{encoder_forward.3} parent=63 // loop_pre_header
                _
              $region66: #{encoder_forward.3} parent=63 // loop_header
                %s2809 = sphi 0, %s2813
                %p2810 = scmp.ge.s32.totalorder %s2809, 1
                %s2814 = sphi %s2782, %s2782
                %s2815 = sphi %s2800, %s2800
              $region67: #{encoder_forward.3} parent=63 // loop_header_branch
                %2812 = sbr.rel (%p2810) target = $region71
              $region68: #{encoder_forward.3} parent=63 // loop_body
                %v2816 = vld [vmem:[%s2814] sm:$0xff]
                %2817 = vst [vmem:[%s2815] sm:$0xff] %v2816
                %v2818 = vld [vmem:[%s2814 + $0x8] sm:$0xff]
                %2819 = vst [vmem:[%s2815 + $0x10] sm:$0xff] %v2818
                %v2820 = vld [vmem:[%s2814 + $0x10] sm:$0xff]
                %2821 = vst [vmem:[%s2815 + $0x20] sm:$0xff] %v2820
                %v2822 = vld [vmem:[%s2814 + $0x18] sm:$0xff]
                %2823 = vst [vmem:[%s2815 + $0x30] sm:$0xff] %v2822
                %v2824 = vld [vmem:[%s2814 + $0x20] sm:$0xff]
                %2825 = vst [vmem:[%s2815 + $0x40] sm:$0xff] %v2824
                %v2826 = vld [vmem:[%s2814 + $0x28] sm:$0xff]
                %2827 = vst [vmem:[%s2815 + $0x50] sm:$0xff] %v2826
                %v2828 = vld [vmem:[%s2814 + $0x30] sm:$0xff]
                %2829 = vst [vmem:[%s2815 + $0x60] sm:$0xff] %v2828
                %v2830 = vld [vmem:[%s2814 + $0x38] sm:$0xff]
                %2831 = vst [vmem:[%s2815 + $0x70] sm:$0xff] %v2830
              $region69: #{encoder_forward.3} parent=63 // loop_footer
                %s2813 = sadd.s32 1, %s2809
              $region70: #{encoder_forward.3} parent=63 // loop_footer_branch
                %2808 = sbr.rel target = $region66
              $region71: #{encoder_forward.3} parent=63 // loop_exit
                _
            $region64: #{encoder_forward.3} parent=55 // pred_fallthru
              _
          $region56: #{encoder_forward.3} parent=51 // pred_fallthru
            _
          %2860 = vnop
        $region52: #{encoder_forward.3} parent=43 // pred_fallthru
          _
        // Predicated region
        $region87: #{encoder_forward.3} parent=43 // pred_check
          %p2861 = pneg %p256
        $region88: #{encoder_forward.3} parent=43 // pred_check_branch
          %2863 = sbr.rel (%p2861) target = $region90
        $region89: #{encoder_forward.3} parent=43 // pred_region
          %s2865 = ssub.s32 128, 128
          %2866 = vsyncadd %s2784, %s2865
          %s2867 = smul.addr %s26, 128
          %s2868 = scalar_lea.hbm %s7, %s2867
          %s2870 = sshll.u32 %s2787, 4
          %s2871 = int_to_ptr.vmem [resolvable:$true] %s2870
          %2873 = dma.vmem_to_hbm [thread:$0]  %s2871, 128, %s2868, %s2784
        $region90: #{encoder_forward.3} parent=43 // pred_fallthru
          _
      $region44: #{encoder_forward.3} parent=5 // pred_fallthru
        _
      %p2874 = scmp.le.s32.totalorder 2, %s17
      // Predicated region
      $region91: #{encoder_forward.3} parent=5 // pred_check
        %p2875 = pneg %p2874
      $region92: #{encoder_forward.3} parent=5 // pred_check_branch
        %2877 = sbr.rel (%p2875) target = $region94
      $region93: #{encoder_forward.3} parent=5 // pred_region
        %s2878 = ssub.s32 %s17, 2
        // Predicated region
        $region95: #{encoder_forward.3} parent=93 // pred_check
          %p2879 = pneg %p236
        $region96: #{encoder_forward.3} parent=93 // pred_check_branch
          %2881 = sbr.rel (%p2879) target = $region98
        $region97: #{encoder_forward.3} parent=93 // pred_region
          %s2882 = sand.u32 %s221, 1
          %s2883 = sand.u32 %s221, 1
          %s2884 = smul.addr %s2883, 64
          %s2885 = scalar_lea.vmem [#allocation4], %s2884
        $region98: #{encoder_forward.3} parent=93 // pred_fallthru
          _
        // Predicated region
        $region99: #{encoder_forward.3} parent=93 // pred_check
          %p2886 = pneg %p262
        $region100: #{encoder_forward.3} parent=93 // pred_check_branch
          %2888 = sbr.rel (%p2886) target = $region102
        $region101: #{encoder_forward.3} parent=93 // pred_region
          %s2889 = sand.u32 %s247, 1
          %s2890 = scalar_lea.sflag [#allocation6], %s2889
          %s2891 = sand.u32 %s247, 1
          %s2892 = smul.addr %s2891, 8
          %s2893 = scalar_lea.vmem [#allocation5], %s2892
          %2894 = dma.done %s2890, 128
        $region102: #{encoder_forward.3} parent=93 // pred_fallthru
          _
      $region94: #{encoder_forward.3} parent=5 // pred_fallthru
        _
    $region6: #{encoder_forward.3} parent=1 // loop_footer
      %s21 = sadd.s32 1, %s17
    $region7: #{encoder_forward.3} parent=1 // loop_footer_branch
      %16 = sbr.rel target = $region3
    $region8: #{encoder_forward.3} parent=1 // loop_exit
      _
    %2895 = vsyncpa [#allocation6], 1
    %s2896 = scalar_lea.sflag [#allocation6], 1
    %2897 = vsyncpa %s2896, 1

// kernel: encoder_forward.2
$region0: #{encoder_forward.2}
  #allocation0 [shape = 'u32[]', space=smem, size = 0x4, offset = 0x4, fixed_abs, tag = 'smem constant byte address 0x4 - core index']
  #allocation1 [shape = 'u32[144,128]{1,0:T(1,128)}', space=vmem, size = 0x12000, scoped, tag = 'internal scratch']
  #allocation2 [shape = 'f32[8,128]{1,0:T(8,128)}', space=vmem, size = 0x1000, scoped, tag = 'scratch operand']
  #allocation3 [shape = 'f32[64,384]{1,0:T(8,128)}', space=vmem, size = 0x18000, scoped, tag = 'scratch operand']
  %s0 = inlined_call_operand.vmem [shape: f32[8,8,128], index: 0, kind: input, shape index: {}]
  %s1 = inlined_call_operand.hbm [shape: f32[2,128,384], index: 1, kind: input, shape index: {}]
  %s2 = inlined_call_operand.hbm [shape: f32[2,128,384], index: 2, kind: input, shape index: {}]
  %s3 = inlined_call_operand.hbm [shape: f32[2,1,384], index: 3, kind: input, shape index: {}]
  %s4 = inlined_call_operand.hbm [shape: f32[2,1,128], index: 4, kind: input, shape index: {}]
  %s5 = inlined_call_operand.vmem [shape: f32[2,128,32], index: 5, kind: input, shape index: {}]
  %s6 = inlined_call_operand.vmem [shape: f32[8,8,256], index: 6, kind: output, shape index: {0}]
  %s7 = inlined_call_operand.vmem [shape: f32[2,8,32], index: 7, kind: output, shape index: {1}]
  %8 = xla_tuple %s6, %s7
  %s9 = sld [smem:[#allocation0]]
  $region119: #{encoder_forward.2} parent=0
    _
  %s11 = ssub.s32 1, %s9
  %s12 = scalar_select 0, %s11, %s9
  $region1: #{encoder_forward.2} parent=0
    #allocation4 [shape = 'u8[393216]{0}', space=vmem, size = 0x60000, scoped, tag = 'input window, operand 1']
    #allocation5 [shape = 's32[2]{0}', space=sflag, size = 0x8, scoped, tag = 'scoped memory for encoder_forward.2']
    #allocation6 [shape = 'u8[393216]{0}', space=vmem, size = 0x60000, scoped, tag = 'input window, operand 2']
    #allocation7 [shape = 's32[2]{0}', space=sflag, size = 0x8, scoped, tag = 'scoped memory for encoder_forward.2']
    #allocation8 [shape = 'u8[3072]{0}', space=vmem, size = 0xc00, scoped, tag = 'input window, operand 3']
    #allocation9 [shape = 'u8[1024]{0}', space=vmem, size = 0x400, scoped, tag = 'input window, operand 4']
    #allocation10 [shape = 's32[2]{0}', space=sflag, size = 0x8, scoped, tag = 'scoped memory for encoder_forward.2']
    #allocation11 [shape = 'u8[65536]{0}', space=vmem, size = 0x10000, scoped, tag = 'output window, operand 0']
    %13 = vsyncpa [#allocation5], 0
    %s14 = scalar_lea.sflag [#allocation5], 1
    %15 = vsyncpa %s14, 0
    %16 = vsyncpa [#allocation7], 0
    %s17 = scalar_lea.sflag [#allocation7], 1
    %18 = vsyncpa %s17, 0
    %19 = vsyncpa [#allocation10], 0
    %s20 = scalar_lea.sflag [#allocation10], 1
    %21 = vsyncpa %s20, 0
    loop: start=0, step=1, limit=4
    $region2: #{encoder_forward.2} parent=1 // loop_pre_header
      _
    $region3: #{encoder_forward.2} parent=1 // loop_header
      %s23 = sphi 0, %s27
      %p24 = scmp.ge.s32.totalorder %s23, 4
      %s30 = sphi 0, %s42
      %s31 = sphi 0, %s38
      %s32 = sphi 0, %s30
      %s33 = sphi 0, %s31
      %s34 = sphi 0, %s32
      %s35 = sphi 0, %s33
      %s55 = sphi 0, %s57
      %s58 = sphi 0, %s55
      %s59 = sphi 0, %s58
      %s75 = sphi 0, %s59
      %s81 = sphi 0, %s83
      %s84 = sphi 0, %s81
      %s85 = sphi 0, %s84
      %s101 = sphi 0, %s85
      %s107 = sphi 0, %s109
      %s110 = sphi 0, %s107
      %s111 = sphi 0, %s110
      %s127 = sphi 0, %s111
      %s133 = sphi 0, %s135
      %s136 = sphi 0, %s133
      %s137 = sphi 0, %s136
      %s153 = sphi 0, %s137
      %s159 = sphi 0, %s161
      %s162 = sphi 0, %s159
      %s163 = sphi 0, %s162
      %s179 = sphi 0, %s163
      %s185 = sphi 0, %s187
      %s188 = sphi 0, %s185
      %s189 = sphi 0, %s188
      %s205 = sphi 0, %s189
      %s223 = sphi 0, %s225
      %s226 = sphi 0, %s223
      %s227 = sphi 0, %s226
      %s243 = sphi 0, %s227
      %s249 = sphi 0, %s251
      %s252 = sphi 0, %s249
      %s253 = sphi 0, %s252
      %s269 = sphi 0, %s253
    $region4: #{encoder_forward.2} parent=1 // loop_header_branch
      %26 = sbr.rel (%p24) target = $region8
    $region5: #{encoder_forward.2} parent=1 // loop_body
      %s28 = ssub.s32 %s23, 1
      %s29 = ssub.s32 %s23, 2
      %s36 = sadd.s32 1, %s31
      %p37 = scmp.ge.s32.totalorder %s36, 1
      %s38 = scalar_select %p37, 0, %s36
      %s39 = sadd.s32 1, %s30
      %s40 = scalar_select %p37, %s39, %s30
      %p41 = scmp.ge.s32.totalorder %s40, 2
      %s42 = scalar_select %p41, 0, %s40
      %s43 = ssub.s32 1, %s30
      %s44 = smul.u32 %s43, %s31
      %s45 = ssub.s32 0, %s31
      %s46 = smul.u32 %s30, %s45
      %s47 = sadd.s32 %s44, %s46
      %s48 = ssub.s32 1, %s42
      %s49 = smul.u32 %s48, %s38
      %s50 = ssub.s32 0, %s38
      %s51 = smul.u32 %s42, %s50
      %s52 = sadd.s32 %s49, %s51
      %s53 = ssub.s32 %s47, %s52
      %p54 = scmp.eq.s32.totalorder %s53, 0
      %s56 = sadd.s32 %s55, 1
      %s57 = scalar_select %p54, %s55, %s56
      %p60 = pneg %p54
      %p61 = scmp.eq.s32.totalorder %s23, 1
      %p62 = por %p60, %p61
      %p63 = scmp.ne.s32.totalorder %s55, %s58
      %p64 = scmp.eq.s32.totalorder %s23, 0
      %p65 = por %p63, %p64
      %p66 = scmp.ne.s32.totalorder %s55, %s58
      %p67 = scmp.eq.s32.totalorder %s28, 1
      %p68 = por %p66, %p67
      %p69 = scmp.ne.s32.totalorder %s58, %s59
      %p70 = scmp.eq.s32.totalorder %s28, 0
      %p71 = por %p69, %p70
      %p72 = scmp.ne.s32.totalorder %s58, %s59
      %p73 = scmp.eq.s32.totalorder %s29, 1
      %p74 = por %p72, %p73
      %p76 = scmp.ne.s32.totalorder %s59, %s75
      %p77 = scmp.eq.s32.totalorder %s29, 0
      %p78 = por %p76, %p77
      %s79 = ssub.s32 %s30, %s42
      %p80 = scmp.eq.s32.totalorder %s79, 0
      %s82 = sadd.s32 %s81, 1
      %s83 = scalar_select %p80, %s81, %s82
      %p86 = pneg %p80
      %p87 = scmp.eq.s32.totalorder %s23, 1
      %p88 = por %p86, %p87
      %p89 = scmp.ne.s32.totalorder %s81, %s84
      %p90 = scmp.eq.s32.totalorder %s23, 0
      %p91 = por %p89, %p90
      %p92 = scmp.ne.s32.totalorder %s81, %s84
      %p93 = scmp.eq.s32.totalorder %s28, 1
      %p94 = por %p92, %p93
      %p95 = scmp.ne.s32.totalorder %s84, %s85
      %p96 = scmp.eq.s32.totalorder %s28, 0
      %p97 = por %p95, %p96
      %p98 = scmp.ne.s32.totalorder %s84, %s85
      %p99 = scmp.eq.s32.totalorder %s29, 1
      %p100 = por %p98, %p99
      %p102 = scmp.ne.s32.totalorder %s85, %s101
      %p103 = scmp.eq.s32.totalorder %s29, 0
      %p104 = por %p102, %p103
      %s105 = ssub.s32 %s30, %s42
      %p106 = scmp.eq.s32.totalorder %s105, 0
      %s108 = sadd.s32 %s107, 1
      %s109 = scalar_select %p106, %s107, %s108
      %p112 = pneg %p106
      %p113 = scmp.eq.s32.totalorder %s23, 1
      %p114 = por %p112, %p113
      %p115 = scmp.ne.s32.totalorder %s107, %s110
      %p116 = scmp.eq.s32.totalorder %s23, 0
      %p117 = por %p115, %p116
      %p118 = scmp.ne.s32.totalorder %s107, %s110
      %p119 = scmp.eq.s32.totalorder %s28, 1
      %p120 = por %p118, %p119
      %p121 = scmp.ne.s32.totalorder %s110, %s111
      %p122 = scmp.eq.s32.totalorder %s28, 0
      %p123 = por %p121, %p122
      %p124 = scmp.ne.s32.totalorder %s110, %s111
      %p125 = scmp.eq.s32.totalorder %s29, 1
      %p126 = por %p124, %p125
      %p128 = scmp.ne.s32.totalorder %s111, %s127
      %p129 = scmp.eq.s32.totalorder %s29, 0
      %p130 = por %p128, %p129
      %s131 = ssub.s32 %s30, %s42
      %p132 = scmp.eq.s32.totalorder %s131, 0
      %s134 = sadd.s32 %s133, 1
      %s135 = scalar_select %p132, %s133, %s134
      %p138 = pneg %p132
      %p139 = scmp.eq.s32.totalorder %s23, 1
      %p140 = por %p138, %p139
      %p141 = scmp.ne.s32.totalorder %s133, %s136
      %p142 = scmp.eq.s32.totalorder %s23, 0
      %p143 = por %p141, %p142
      %p144 = scmp.ne.s32.totalorder %s133, %s136
      %p145 = scmp.eq.s32.totalorder %s28, 1
      %p146 = por %p144, %p145
      %p147 = scmp.ne.s32.totalorder %s136, %s137
      %p148 = scmp.eq.s32.totalorder %s28, 0
      %p149 = por %p147, %p148
      %p150 = scmp.ne.s32.totalorder %s136, %s137
      %p151 = scmp.eq.s32.totalorder %s29, 1
      %p152 = por %p150, %p151
      %p154 = scmp.ne.s32.totalorder %s137, %s153
      %p155 = scmp.eq.s32.totalorder %s29, 0
      %p156 = por %p154, %p155
      %s157 = ssub.s32 %s30, %s42
      %p158 = scmp.eq.s32.totalorder %s157, 0
      %s160 = sadd.s32 %s159, 1
      %s161 = scalar_select %p158, %s159, %s160
      %p164 = pneg %p158
      %p165 = scmp.eq.s32.totalorder %s23, 1
      %p166 = por %p164, %p165
      %p167 = scmp.ne.s32.totalorder %s159, %s162
      %p168 = scmp.eq.s32.totalorder %s23, 0
      %p169 = por %p167, %p168
      %p170 = scmp.ne.s32.totalorder %s159, %s162
      %p171 = scmp.eq.s32.totalorder %s28, 1
      %p172 = por %p170, %p171
      %p173 = scmp.ne.s32.totalorder %s162, %s163
      %p174 = scmp.eq.s32.totalorder %s28, 0
      %p175 = por %p173, %p174
      %p176 = scmp.ne.s32.totalorder %s162, %s163
      %p177 = scmp.eq.s32.totalorder %s29, 1
      %p178 = por %p176, %p177
      %p180 = scmp.ne.s32.totalorder %s163, %s179
      %p181 = scmp.eq.s32.totalorder %s29, 0
      %p182 = por %p180, %p181
      %s183 = ssub.s32 %s30, %s42
      %p184 = scmp.eq.s32.totalorder %s183, 0
      %s186 = sadd.s32 %s185, 1
      %s187 = scalar_select %p184, %s185, %s186
      %p190 = pneg %p184
      %p191 = scmp.eq.s32.totalorder %s23, 1
      %p192 = por %p190, %p191
      %p193 = scmp.ne.s32.totalorder %s185, %s188
      %p194 = scmp.eq.s32.totalorder %s23, 0
      %p195 = por %p193, %p194
      %p196 = scmp.ne.s32.totalorder %s185, %s188
      %p197 = scmp.eq.s32.totalorder %s28, 1
      %p198 = por %p196, %p197
      %p199 = scmp.ne.s32.totalorder %s188, %s189
      %p200 = scmp.eq.s32.totalorder %s28, 0
      %p201 = por %p199, %p200
      %p202 = scmp.ne.s32.totalorder %s188, %s189
      %p203 = scmp.eq.s32.totalorder %s29, 1
      %p204 = por %p202, %p203
      %p206 = scmp.ne.s32.totalorder %s189, %s205
      %p207 = scmp.eq.s32.totalorder %s29, 0
      %p208 = por %p206, %p207
      %s209 = ssub.s32 1, %s30
      %s210 = smul.u32 %s209, %s31
      %s211 = ssub.s32 0, %s31
      %s212 = smul.u32 %s30, %s211
      %s213 = sadd.s32 %s210, %s212
      %s214 = ssub.s32 1, %s42
      %s215 = smul.u32 %s214, %s38
      %s216 = ssub.s32 0, %s38
      %s217 = smul.u32 %s42, %s216
      %s218 = sadd.s32 %s215, %s217
      %s219 = ssub.s32 %s213, %s218
      %s220 = ssub.s32 %s30, %s42
      %s221 = sor.u32 %s219, %s220
      %p222 = scmp.eq.s32.totalorder %s221, 0
      %s224 = sadd.s32 %s223, 1
      %s225 = scalar_select %p222, %s223, %s224
      %p228 = pneg %p222
      %p229 = scmp.eq.s32.totalorder %s23, 1
      %p230 = por %p228, %p229
      %p231 = scmp.ne.s32.totalorder %s223, %s226
      %p232 = scmp.eq.s32.totalorder %s23, 0
      %p233 = por %p231, %p232
      %p234 = scmp.ne.s32.totalorder %s223, %s226
      %p235 = scmp.eq.s32.totalorder %s28, 1
      %p236 = por %p234, %p235
      %p237 = scmp.ne.s32.totalorder %s226, %s227
      %p238 = scmp.eq.s32.totalorder %s28, 0
      %p239 = por %p237, %p238
      %p240 = scmp.ne.s32.totalorder %s226, %s227
      %p241 = scmp.eq.s32.totalorder %s29, 1
      %p242 = por %p240, %p241
      %p244 = scmp.ne.s32.totalorder %s227, %s243
      %p245 = scmp.eq.s32.totalorder %s29, 0
      %p246 = por %p244, %p245
      %s247 = ssub.s32 %s30, %s42
      %p248 = scmp.eq.s32.totalorder %s247, 0
      %s250 = sadd.s32 %s249, 1
      %s251 = scalar_select %p248, %s249, %s250
      %p254 = pneg %p248
      %p255 = scmp.eq.s32.totalorder %s23, 1
      %p256 = por %p254, %p255
      %p257 = scmp.ne.s32.totalorder %s249, %s252
      %p258 = scmp.eq.s32.totalorder %s23, 0
      %p259 = por %p257, %p258
      %p260 = scmp.ne.s32.totalorder %s249, %s252
      %p261 = scmp.eq.s32.totalorder %s28, 1
      %p262 = por %p260, %p261
      %p263 = scmp.ne.s32.totalorder %s252, %s253
      %p264 = scmp.eq.s32.totalorder %s28, 0
      %p265 = por %p263, %p264
      %p266 = scmp.ne.s32.totalorder %s252, %s253
      %p267 = scmp.eq.s32.totalorder %s29, 1
      %p268 = por %p266, %p267
      %p270 = scmp.ne.s32.totalorder %s253, %s269
      %p271 = scmp.eq.s32.totalorder %s29, 0
      %p272 = por %p270, %p271
      %p273 = scmp.le.s32.totalorder 1, %s23
      %p274 = scmp.lt.s32.totalorder %s23, 3
      %p275 = pnand %p273, %p274
      %p276 = pneg %p275
      // Predicated region
      $region9: #{encoder_forward.2} parent=5 // pred_check
        _
      $region10: #{encoder_forward.2} parent=5 // pred_check_branch
        %278 = sbr.rel (%p275) target = $region12
      $region11: #{encoder_forward.2} parent=5 // pred_region
        %s279 = ssub.s32 %s23, 1
      $region12: #{encoder_forward.2} parent=5 // pred_fallthru
        _
      %p280 = scmp.lt.s32.totalorder %s23, 2
      // Predicated region
      $region13: #{encoder_forward.2} parent=5 // pred_check
        %p281 = pneg %p280
      $region14: #{encoder_forward.2} parent=5 // pred_check_branch
        %283 = sbr.rel (%p281) target = $region16
      $region15: #{encoder_forward.2} parent=5 // pred_region
        // Predicated region
        $region17: #{encoder_forward.2} parent=15 // pred_check
          %p284 = pneg %p65
        $region18: #{encoder_forward.2} parent=15 // pred_check_branch
          %286 = sbr.rel (%p284) target = $region20
        $region19: #{encoder_forward.2} parent=15 // pred_region
          %s287 = ssub.s32 1, %s30
          %s288 = smul.u32 %s287, %s31
          %s289 = ssub.s32 0, %s31
          %s290 = smul.u32 %s30, %s289
          %s291 = sadd.s32 %s288, %s290
          %s292 = smul.u32 8, %s291
          %p293 = scmp.lt.s32.totalorder %s292, 7
          %s294 = scalar_select %p293, %s292, 7
          %s295 = smul.addr %s294, 8
          %s296 = scalar_lea.vmem %s0, %s295
          %s297 = ssub.s32 1, %s30
          %s298 = smul.u32 %s297, %s31
          %s299 = ssub.s32 0, %s31
          %s300 = smul.u32 %s30, %s299
          %s301 = sadd.s32 %s298, %s300
          %s302 = smul.u32 8, %s301
        $region20: #{encoder_forward.2} parent=15 // pred_fallthru
          _
        // Predicated region
        $region21: #{encoder_forward.2} parent=15 // pred_check
          %p303 = pneg %p91
        $region22: #{encoder_forward.2} parent=15 // pred_check_branch
          %305 = sbr.rel (%p303) target = $region24
        $region23: #{encoder_forward.2} parent=15 // pred_region
          %s306 = sand.u32 %s81, 1
          %s307 = scalar_lea.sflag [#allocation5], %s306
          %s308 = sand.u32 %s81, 1
          %s309 = smul.addr %s308, 384
          %s310 = scalar_lea.vmem [#allocation4], %s309
          %s312 = ssub.s32 6144, 6144
          %313 = vsyncadd %s307, %s312
          %s314 = smul.addr %s30, 48
          %s315 = smul.addr %s314, 128
          %s316 = scalar_lea.hbm %s1, %s315
          %s317 = sshll.u32 %s310, 4
          %s318 = int_to_ptr.vmem [resolvable:$true] %s317
          %323 = dma.hbm_to_vmem [thread:$0]  %s316, 6144, %s318, %s307, 384, 384, 24
        $region24: #{encoder_forward.2} parent=15 // pred_fallthru
          _
        // Predicated region
        $region25: #{encoder_forward.2} parent=15 // pred_check
          %p324 = pneg %p117
        $region26: #{encoder_forward.2} parent=15 // pred_check_branch
          %326 = sbr.rel (%p324) target = $region28
        $region27: #{encoder_forward.2} parent=15 // pred_region
          %s327 = sand.u32 %s23, 1
          %s328 = scalar_lea.sflag [#allocation7], %s327
          %s329 = sand.u32 %s107, 1
          %s330 = smul.addr %s329, 384
          %s331 = scalar_lea.vmem [#allocation6], %s330
          %s333 = ssub.s32 6144, 6144
          %334 = vsyncadd %s328, %s333
          %s335 = smul.addr %s30, 48
          %s336 = smul.addr %s335, 128
          %s337 = scalar_lea.hbm %s2, %s336
          %s338 = sshll.u32 %s331, 4
          %s339 = int_to_ptr.vmem [resolvable:$true] %s338
          %344 = dma.hbm_to_vmem [thread:$0]  %s337, 6144, %s339, %s328, 384, 384, 24
        $region28: #{encoder_forward.2} parent=15 // pred_fallthru
          _
        // Predicated region
        $region29: #{encoder_forward.2} parent=15 // pred_check
          %p345 = pneg %p143
        $region30: #{encoder_forward.2} parent=15 // pred_check_branch
          %347 = sbr.rel (%p345) target = $region32
        $region31: #{encoder_forward.2} parent=15 // pred_region
          %s348 = sand.u32 %s23, 1
          %s349 = scalar_lea.sflag [#allocation7], %s348
          %s350 = sand.u32 %s133, 1
          %s351 = smul.addr %s350, 3
          %s352 = scalar_lea.vmem [#allocation8], %s351
          %s354 = ssub.s32 48, 48
          %355 = vsyncadd %s349, %s354
          %s356 = smul.addr %s30, 3
          %s357 = smul.addr %s356, 16
          %s358 = scalar_lea.hbm %s3, %s357
          %s360 = sshll.u32 %s352, 4
          %s361 = int_to_ptr.vmem [resolvable:$true] %s360
          %363 = dma.hbm_to_vmem [thread:$0]  %s358, 48, %s361, %s349
        $region32: #{encoder_forward.2} parent=15 // pred_fallthru
          _
        // Predicated region
        $region33: #{encoder_forward.2} parent=15 // pred_check
          %p364 = pneg %p169
        $region34: #{encoder_forward.2} parent=15 // pred_check_branch
          %366 = sbr.rel (%p364) target = $region36
        $region35: #{encoder_forward.2} parent=15 // pred_region
          %s367 = sand.u32 %s159, 1
          %s368 = scalar_lea.sflag [#allocation10], %s367
          %s369 = sand.u32 %s159, 1
          %s370 = scalar_lea.vmem [#allocation9], %s369
          %s372 = ssub.s32 16, 16
          %373 = vsyncadd %s368, %s372
          %s374 = smul.addr %s30, 16
          %s375 = scalar_lea.hbm %s4, %s374
          %s377 = sshll.u32 %s370, 4
          %s378 = int_to_ptr.vmem [resolvable:$true] %s377
          %380 = dma.hbm_to_vmem [thread:$0]  %s375, 16, %s378, %s368
        $region36: #{encoder_forward.2} parent=15 // pred_fallthru
          _
        // Predicated region
        $region37: #{encoder_forward.2} parent=15 // pred_check
          %p381 = pneg %p195
        $region38: #{encoder_forward.2} parent=15 // pred_check_branch
          %383 = sbr.rel (%p381) target = $region40
        $region39: #{encoder_forward.2} parent=15 // pred_region
          %p384 = scmp.lt.s32.totalorder %s30, 1
          %s385 = scalar_select %p384, %s30, 1
          %s386 = smul.addr %s385, 16
          %s387 = smul.addr %s386, 8
          %s388 = scalar_lea.vmem %s5, %s387
        $region40: #{encoder_forward.2} parent=15 // pred_fallthru
          _
      $region16: #{encoder_forward.2} parent=5 // pred_fallthru
        _
      %p389 = scmp.le.s32.totalorder 1, %s23
      %p390 = scmp.lt.s32.totalorder %s23, 3
      %p391 = pnand %p389, %p390
      %p392 = pneg %p391
      // Predicated region
      $region41: #{encoder_forward.2} parent=5 // pred_check
        _
      $region42: #{encoder_forward.2} parent=5 // pred_check_branch
        %394 = sbr.rel (%p391) target = $region44
      $region43: #{encoder_forward.2} parent=5 // pred_region
        %s395 = ssub.s32 %s23, 1
        %s396 = sand.u32 %s84, 1
        %s397 = scalar_lea.sflag [#allocation5], %s396
        %s398 = sand.u32 %s84, 1
        %s399 = smul.addr %s398, 384
        %s400 = scalar_lea.vmem [#allocation4], %s399
        // Predicated region
        $region45: #{encoder_forward.2} parent=43 // pred_check
          %p401 = pneg %p97
        $region46: #{encoder_forward.2} parent=43 // pred_check_branch
          %403 = sbr.rel (%p401) target = $region48
        $region47: #{encoder_forward.2} parent=43 // pred_region
          %404 = dma.done %s397, 6144
        $region48: #{encoder_forward.2} parent=43 // pred_fallthru
          _
        %s405 = sand.u32 %s28, 1
        %s406 = scalar_lea.sflag [#allocation7], %s405
        %s407 = sand.u32 %s110, 1
        %s408 = smul.addr %s407, 384
        %s409 = scalar_lea.vmem [#allocation6], %s408
        // Predicated region
        $region49: #{encoder_forward.2} parent=43 // pred_check
          %p410 = pneg %p123
        $region50: #{encoder_forward.2} parent=43 // pred_check_branch
          %412 = sbr.rel (%p410) target = $region52
        $region51: #{encoder_forward.2} parent=43 // pred_region
          %413 = dma.done %s406, 6144
        $region52: #{encoder_forward.2} parent=43 // pred_fallthru
          _
        %s414 = sand.u32 %s28, 1
        %s415 = scalar_lea.sflag [#allocation7], %s414
        %s416 = sand.u32 %s136, 1
        %s417 = smul.addr %s416, 3
        %s418 = scalar_lea.vmem [#allocation8], %s417
        // Predicated region
        $region53: #{encoder_forward.2} parent=43 // pred_check
          %p419 = pneg %p149
        $region54: #{encoder_forward.2} parent=43 // pred_check_branch
          %421 = sbr.rel (%p419) target = $region56
        $region55: #{encoder_forward.2} parent=43 // pred_region
          %422 = dma.done %s415, 48
        $region56: #{encoder_forward.2} parent=43 // pred_fallthru
          _
        %s423 = sand.u32 %s162, 1
        %s424 = scalar_lea.sflag [#allocation10], %s423
        %s425 = sand.u32 %s162, 1
        %s426 = scalar_lea.vmem [#allocation9], %s425
        // Predicated region
        $region57: #{encoder_forward.2} parent=43 // pred_check
          %p427 = pneg %p175
        $region58: #{encoder_forward.2} parent=43 // pred_check_branch
          %429 = sbr.rel (%p427) target = $region60
        $region59: #{encoder_forward.2} parent=43 // pred_region
          %430 = dma.done %s424, 16
        $region60: #{encoder_forward.2} parent=43 // pred_fallthru
          _
        %s431 = ssub.s32 1, %s32
        %s432 = smul.u32 %s431, %s33
        %s433 = ssub.s32 0, %s33
        %s434 = smul.u32 %s32, %s433
        %s435 = sadd.s32 %s432, %s434
        %s436 = smul.u32 8, %s435
        %p437 = scmp.lt.s32.totalorder %s436, 7
        %s438 = scalar_select %p437, %s436, 7
        %s439 = smul.addr %s438, 8
        %s440 = scalar_lea.vmem %s0, %s439
        %p441 = pneg %p71
        %p442 = pneg %p68
        %s443 = sand.u32 %s84, 1
        %s444 = scalar_lea.sflag [#allocation5], %s443
        %s445 = sand.u32 %s84, 1
        %s446 = smul.addr %s445, 384
        %s447 = scalar_lea.vmem [#allocation4], %s446
        %p448 = pneg %p97
        %p449 = pneg %p94
        %s450 = sand.u32 %s28, 1
        %s451 = scalar_lea.sflag [#allocation7], %s450
        %s452 = sand.u32 %s110, 1
        %s453 = smul.addr %s452, 384
        %s454 = scalar_lea.vmem [#allocation6], %s453
        %p455 = pneg %p123
        %p456 = pneg %p120
        %s457 = sand.u32 %s28, 1
        %s458 = scalar_lea.sflag [#allocation7], %s457
        %s459 = sand.u32 %s136, 1
        %s460 = smul.addr %s459, 3
        %s461 = scalar_lea.vmem [#allocation8], %s460
        %p462 = pneg %p149
        %p463 = pneg %p146
        %s464 = sand.u32 %s162, 1
        %s465 = scalar_lea.sflag [#allocation10], %s464
        %s466 = sand.u32 %s162, 1
        %s467 = scalar_lea.vmem [#allocation9], %s466
        %p468 = pneg %p175
        %p469 = pneg %p172
        %p470 = scmp.lt.s32.totalorder %s32, 1
        %s471 = scalar_select %p470, %s32, 1
        %s472 = smul.addr %s471, 16
        %s473 = smul.addr %s472, 8
        %s474 = scalar_lea.vmem %s5, %s473
        %p475 = pneg %p201
        %p476 = pneg %p198
        %p477 = pneg %p239
        %p478 = pneg %p236
        %s479 = sand.u32 %s226, 1
        %s480 = sand.u32 %s226, 1
        %s481 = smul.addr %s480, 64
        %s482 = scalar_lea.vmem [#allocation11], %s481
        %p483 = pneg %p265
        %p484 = pneg %p262
        %p485 = scmp.lt.s32.totalorder %s32, 1
        %s486 = scalar_select %p485, %s32, 1
        %s487 = smul.addr %s486, 8
        %s488 = scalar_lea.vmem %s7, %s487
        %s489 = ssub.s32 1, %s32
        %s490 = smul.u32 %s489, %s33
        %s491 = ssub.s32 0, %s33
        %s492 = smul.u32 %s32, %s491
        %s493 = sadd.s32 %s490, %s492
        %s494 = smul.u32 8, %s493
        %p495 = scmp.lt.s32.totalorder %s494, 7
        %s496 = scalar_select %p495, %s494, 7
        %s497 = smul.addr %s496, 8
        %s498 = scalar_lea.vmem %s0, %s497
        %s499 = ssub.s32 1, %s32
        %s500 = smul.u32 %s499, %s33
        %s501 = ssub.s32 0, %s33
        %s502 = smul.u32 %s32, %s501
        %s503 = sadd.s32 %s500, %s502
        %s504 = smul.u32 8, %s503
        %p505 = scmp.lt.s32.totalorder %s32, 1
        %s506 = scalar_select %p505, %s32, 1
        %s507 = smul.addr %s506, 16
        %s508 = smul.addr %s507, 8
        %s509 = scalar_lea.vmem %s5, %s508
        %s510 = ssub.s32 1, %s32
        %s511 = smul.u32 %s510, %s33
        %s512 = ssub.s32 0, %s33
        %s513 = smul.u32 %s32, %s512
        %s514 = sadd.s32 %s511, %s513
        %s515 = smul.u32 8, %s514
        %p516 = scmp.lt.s32.totalorder %s32, 1
        %s517 = scalar_select %p516, %s32, 1
        %s518 = smul.addr %s517, 8
        %s519 = scalar_lea.vmem %s7, %s518
        %p520 = scmp.eq.s32.totalorder %s33, 0
        // Predicated region
        $region61: #{encoder_forward.2} parent=43 // pred_check
          %p521 = pneg %p520
        $region62: #{encoder_forward.2} parent=43 // pred_check_branch
          %523 = sbr.rel (%p521) target = $region64
        $region63: #{encoder_forward.2} parent=43 // pred_region
          %524 = vst [vmem:[#allocation2] sm:$0xff] 0.0
        $region64: #{encoder_forward.2} parent=43 // pred_fallthru
          _
        %v525 = vld [vmem:[%s498] sm:$0xff]
        %v526 = vld [vmem:[%s498 + $0x8] sm:$0xff]
        %v527 = vld [vmem:[%s498 + $0x10] sm:$0xff]
        %v528 = vld [vmem:[%s498 + $0x18] sm:$0xff]
        %v529 = vld [vmem:[%s498 + $0x20] sm:$0xff]
        %v530 = vld [vmem:[%s498 + $0x28] sm:$0xff]
        %v531 = vld [vmem:[%s498 + $0x30] sm:$0xff]
        %v532 = vld [vmem:[%s498 + $0x38] sm:$0xff]
        %v533 = vld [vmem:[%s400] sm:$0xff]
        %v534 = vld [vmem:[%s400 + $0x8] sm:$0xff]
        %v535 = vld [vmem:[%s400 + $0x10] sm:$0xff]
        %v536 = vld [vmem:[%s400 + $0x18] sm:$0xff]
        %v537 = vld [vmem:[%s400 + $0x20] sm:$0xff]
        %v538 = vld [vmem:[%s400 + $0x28] sm:$0xff]
        %v539 = vld [vmem:[%s400 + $0x30] sm:$0xff]
        %v540 = vld [vmem:[%s400 + $0x38] sm:$0xff]
        %v541 = vld [vmem:[%s400 + $0x40] sm:$0xff]
        %v542 = vld [vmem:[%s400 + $0x48] sm:$0xff]
        %v543 = vld [vmem:[%s400 + $0x50] sm:$0xff]
        %v544 = vld [vmem:[%s400 + $0x58] sm:$0xff]
        %v545 = vld [vmem:[%s400 + $0x60] sm:$0xff]
        %v546 = vld [vmem:[%s400 + $0x68] sm:$0xff]
        %v547 = vld [vmem:[%s400 + $0x70] sm:$0xff]
        %v548 = vld [vmem:[%s400 + $0x78] sm:$0xff]
        %v549 = vld [vmem:[%s400 + $0x80] sm:$0xff]
        %v550 = vld [vmem:[%s400 + $0x88] sm:$0xff]
        %v551 = vld [vmem:[%s400 + $0x90] sm:$0xff]
        %v552 = vld [vmem:[%s400 + $0x98] sm:$0xff]
        %v553 = vld [vmem:[%s400 + $0xa0] sm:$0xff]
        %v554 = vld [vmem:[%s400 + $0xa8] sm:$0xff]
        %v555 = vld [vmem:[%s400 + $0xb0] sm:$0xff]
        %v556 = vld [vmem:[%s400 + $0xb8] sm:$0xff]
        %v557 = vld [vmem:[%s400 + $0xc0] sm:$0xff]
        %v558 = vld [vmem:[%s400 + $0xc8] sm:$0xff]
        %v559 = vld [vmem:[%s400 + $0xd0] sm:$0xff]
        %v560 = vld [vmem:[%s400 + $0xd8] sm:$0xff]
        %v561 = vld [vmem:[%s400 + $0xe0] sm:$0xff]
        %v562 = vld [vmem:[%s400 + $0xe8] sm:$0xff]
        %v563 = vld [vmem:[%s400 + $0xf0] sm:$0xff]
        %v564 = vld [vmem:[%s400 + $0xf8] sm:$0xff]
        %v565 = vld [vmem:[%s400 + $0x100] sm:$0xff]
        %v566 = vld [vmem:[%s400 + $0x108] sm:$0xff]
        %v567 = vld [vmem:[%s400 + $0x110] sm:$0xff]
        %v568 = vld [vmem:[%s400 + $0x118] sm:$0xff]
        %v569 = vld [vmem:[%s400 + $0x120] sm:$0xff]
        %v570 = vld [vmem:[%s400 + $0x128] sm:$0xff]
        %v571 = vld [vmem:[%s400 + $0x130] sm:$0xff]
        %v572 = vld [vmem:[%s400 + $0x138] sm:$0xff]
        %v573 = vld [vmem:[%s400 + $0x140] sm:$0xff]
        %v574 = vld [vmem:[%s400 + $0x148] sm:$0xff]
        %v575 = vld [vmem:[%s400 + $0x150] sm:$0xff]
        %v576 = vld [vmem:[%s400 + $0x158] sm:$0xff]
        %v577 = vld [vmem:[%s400 + $0x160] sm:$0xff]
        %v578 = vld [vmem:[%s400 + $0x168] sm:$0xff]
        %v579 = vld [vmem:[%s400 + $0x170] sm:$0xff]
        %v580 = vld [vmem:[%s400 + $0x178] sm:$0xff]
        %v581 = vld [vmem:[%s418] sm:$0x7]
        %v583 = vlaneseq
        %v584 = vshrl.u32 %v583, 7
        %v585 = vsub.s32 0, %v584
        %v586 = vrot.slane %v581, %v585
        %v587 = vlaneseq
        %v588 = vshrl.u32 %v587, 7
        %v589 = vsub.s32 1, %v588
        %v590 = vrot.slane %v581, %v589
        %v591 = vlaneseq
        %v592 = vshrl.u32 %v591, 7
        %v593 = vsub.s32 2, %v592
        %v594 = vrot.slane %v581, %v593
        %598 = vmatprep.subr.mxu0 %v534
        %599 = vmatpush1.msra.mxu0 %v533
        %600 = vmatprep.subr.mxu0 %v537
        %601 = vmatpush1.msra.mxu0 %v536
        %602 = vmatprep.subr.mxu0 %v540
        %603 = vmatpush1.msra.mxu0 %v539
        %604 = vmatprep.subr.mxu0 %v543
        %605 = vmatpush1.msra.mxu0 %v542
        %606 = vmatprep.subr.mxu0 %v546
        %607 = vmatpush1.msra.mxu0 %v545
        %608 = vmatprep.subr.mxu0 %v549
        %609 = vmatpush1.msra.mxu0 %v548
        %610 = vmatprep.subr.mxu0 %v552
        %611 = vmatpush1.msra.mxu0 %v551
        %612 = vmatprep.subr.mxu0 %v555
        %613 = vmatpush1.msra.mxu0 %v554
        %614 = vmatprep.subr.mxu0 %v558
        %615 = vmatpush1.msra.mxu0 %v557
        %616 = vmatprep.subr.mxu0 %v561
        %617 = vmatpush1.msra.mxu0 %v560
        %618 = vmatprep.subr.mxu0 %v564
        %619 = vmatpush1.msra.mxu0 %v563
        %620 = vmatprep.subr.mxu0 %v567
        %621 = vmatpush1.msra.mxu0 %v566
        %622 = vmatprep.subr.mxu0 %v570
        %623 = vmatpush1.msra.mxu0 %v569
        %624 = vmatprep.subr.mxu0 %v573
        %625 = vmatpush1.msra.mxu0 %v572
        %626 = vmatprep.subr.mxu0 %v576
        %627 = vmatpush1.msra.mxu0 %v575
        %628 = vmatprep.subr.mxu0 %v579
        %629 = vmatpush1.msra.mxu0 %v578
        %630 = vmatprep.subr.mxu0 0.0
        %631 = vmatpush1.msra.mxu0 0.0
        %632 = vmatprep.subr.mxu0 0.0
        %633 = vmatpush1.msra.mxu0 0.0
        %634 = vmatprep.subr.mxu0 0.0
        %635 = vmatpush1.msra.mxu0 0.0
        %636 = vmatprep.subr.mxu0 0.0
        %637 = vmatpush1.msra.mxu0 0.0
        %638 = vmatprep.subr.mxu0 0.0
        %639 = vmatpush1.msra.mxu0 0.0
        %640 = vmatprep.subr.mxu0 0.0
        %641 = vmatpush1.msra.mxu0 0.0
        %642 = vmatprep.subr.mxu0 0.0
        %643 = vmatpush1.msra.mxu0 0.0
        %644 = vmatprep.subr.mxu0 0.0
        %645 = vmatpush1.msra.mxu0 0.0
        %646 = vmatprep.subr.mxu0 0.0
        %647 = vmatpush1.msra.mxu0 0.0
        %648 = vmatprep.subr.mxu0 0.0
        %649 = vmatpush1.msra.mxu0 0.0
        %650 = vmatprep.subr.mxu0 0.0
        %651 = vmatpush1.msra.mxu0 0.0
        %652 = vmatprep.subr.mxu0 0.0
        %653 = vmatpush1.msra.mxu0 0.0
        %654 = vmatprep.subr.mxu0 0.0
        %655 = vmatpush1.msra.mxu0 0.0
        %656 = vmatprep.subr.mxu0 0.0
        %657 = vmatpush1.msra.mxu0 0.0
        %658 = vmatprep.subr.mxu0 0.0
        %659 = vmatpush1.msra.mxu0 0.0
        %660 = vmatprep.subr.mxu0 0.0
        %661 = vmatpush1.msra.mxu0 0.0
        %662 = vmatprep.mubr.f32.mxu0 0.0
        %663 = vmatmul.mubr.f32.gmra.mrb[0].mxu0 %v525
        %v664 = vpop.f32.mrb[0].mxu0
        %v665 = vadd.f32 %v586, %v664
        %v666 = vpop.f32.mrb[0].mxu0
        %v667 = vadd.f32 %v590, %v666
        %668 = vmatprep.mubr.f32.mxu0 0.0
        %669 = vmatmul.mubr.f32.gmra.mrb[0].mxu0 %v526
        %v670 = vpop.f32.mrb[0].mxu0
        %v671 = vadd.f32 %v586, %v670
        %v672 = vpop.f32.mrb[0].mxu0
        %v673 = vadd.f32 %v590, %v672
        %674 = vmatprep.mubr.f32.mxu0 0.0
        %675 = vmatmul.mubr.f32.gmra.mrb[0].mxu0 %v527
        %v676 = vpop.f32.mrb[0].mxu0
        %v677 = vadd.f32 %v586, %v676
        %v678 = vpop.f32.mrb[0].mxu0
        %v679 = vadd.f32 %v590, %v678
        %680 = vmatprep.mubr.f32.mxu0 0.0
        %681 = vmatmul.mubr.f32.gmra.mrb[0].mxu0 %v528
        %v682 = vpop.f32.mrb[0].mxu0
        %v683 = vadd.f32 %v586, %v682
        %v684 = vpop.f32.mrb[0].mxu0
        %v685 = vadd.f32 %v590, %v684
        %686 = vmatprep.mubr.f32.mxu0 0.0
        %687 = vmatmul.mubr.f32.gmra.mrb[0].mxu0 %v529
        %v688 = vpop.f32.mrb[0].mxu0
        %v689 = vadd.f32 %v586, %v688
        %v690 = vpop.f32.mrb[0].mxu0
        %v691 = vadd.f32 %v590, %v690
        %692 = vmatprep.mubr.f32.mxu0 0.0
        %693 = vmatmul.mubr.f32.gmra.mrb[0].mxu0 %v530
        %v694 = vpop.f32.mrb[0].mxu0
        %v695 = vadd.f32 %v586, %v694
        %v696 = vpop.f32.mrb[0].mxu0
        %v697 = vadd.f32 %v590, %v696
        %698 = vmatprep.mubr.f32.mxu0 0.0
        %699 = vmatmul.mubr.f32.gmra.mrb[0].mxu0 %v531
        %v700 = vpop.f32.mrb[0].mxu0
        %v701 = vadd.f32 %v586, %v700
        %v702 = vpop.f32.mrb[0].mxu0
        %v703 = vadd.f32 %v590, %v702
        %704 = vmatprep.mubr.f32.mxu0 0.0
        %705 = vmatmul.mubr.f32.gmra.mrb[0].mxu0 %v532
        %v706 = vpop.f32.mrb[0].mxu0
        %v707 = vadd.f32 %v586, %v706
        %v708 = vpop.f32.mrb[0].mxu0
        %v709 = vadd.f32 %v590, %v708
        %710 = vdwg.mxu0
        %711 = vmatprep.subr.mxu0 0.0
        %712 = vmatpush1.msra.mxu0 %v535
        %713 = vmatprep.subr.mxu0 0.0
        %714 = vmatpush1.msra.mxu0 %v538
        %715 = vmatprep.subr.mxu0 0.0
        %716 = vmatpush1.msra.mxu0 %v541
        %717 = vmatprep.subr.mxu0 0.0
        %718 = vmatpush1.msra.mxu0 %v544
        %719 = vmatprep.subr.mxu0 0.0
        %720 = vmatpush1.msra.mxu0 %v547
        %721 = vmatprep.subr.mxu0 0.0
        %722 = vmatpush1.msra.mxu0 %v550
        %723 = vmatprep.subr.mxu0 0.0
        %724 = vmatpush1.msra.mxu0 %v553
        %725 = vmatprep.subr.mxu0 0.0
        %726 = vmatpush1.msra.mxu0 %v556
        %727 = vmatprep.subr.mxu0 0.0
        %728 = vmatpush1.msra.mxu0 %v559
        %729 = vmatprep.subr.mxu0 0.0
        %730 = vmatpush1.msra.mxu0 %v562
        %731 = vmatprep.subr.mxu0 0.0
        %732 = vmatpush1.msra.mxu0 %v565
        %733 = vmatprep.subr.mxu0 0.0
        %734 = vmatpush1.msra.mxu0 %v568
        %735 = vmatprep.subr.mxu0 0.0
        %736 = vmatpush1.msra.mxu0 %v571
        %737 = vmatprep.subr.mxu0 0.0
        %738 = vmatpush1.msra.mxu0 %v574
        %739 = vmatprep.subr.mxu0 0.0
        %740 = vmatpush1.msra.mxu0 %v577
        %741 = vmatprep.subr.mxu0 0.0
        %742 = vmatpush1.msra.mxu0 %v580
        %743 = vmatprep.subr.mxu0 0.0
        %744 = vmatpush1.msra.mxu0 0.0
        %745 = vmatprep.subr.mxu0 0.0
        %746 = vmatpush1.msra.mxu0 0.0
        %747 = vmatprep.subr.mxu0 0.0
        %748 = vmatpush1.msra.mxu0 0.0
        %749 = vmatprep.subr.mxu0 0.0
        %750 = vmatpush1.msra.mxu0 0.0
        %751 = vmatprep.subr.mxu0 0.0
        %752 = vmatpush1.msra.mxu0 0.0
        %753 = vmatprep.subr.mxu0 0.0
        %754 = vmatpush1.msra.mxu0 0.0
        %755 = vmatprep.subr.mxu0 0.0
        %756 = vmatpush1.msra.mxu0 0.0
        %757 = vmatprep.subr.mxu0 0.0
        %758 = vmatpush1.msra.mxu0 0.0
        %759 = vmatprep.subr.mxu0 0.0
        %760 = vmatpush1.msra.mxu0 0.0
        %761 = vmatprep.subr.mxu0 0.0
        %762 = vmatpush1.msra.mxu0 0.0
        %763 = vmatprep.subr.mxu0 0.0
        %764 = vmatpush1.msra.mxu0 0.0
        %765 = vmatprep.subr.mxu0 0.0
        %766 = vmatpush1.msra.mxu0 0.0
        %767 = vmatprep.subr.mxu0 0.0
        %768 = vmatpush1.msra.mxu0 0.0
        %769 = vmatprep.subr.mxu0 0.0
        %770 = vmatpush1.msra.mxu0 0.0
        %771 = vmatprep.subr.mxu0 0.0
        %772 = vmatpush1.msra.mxu0 0.0
        %773 = vmatprep.subr.mxu0 0.0
        %774 = vmatpush1.msra.mxu0 0.0
        %775 = vmatprep.mubr.f32.mxu0 0.0
        %776 = vmatmul.mubr.f32.gmra.mrb[0].mxu0 %v525
        %v777 = vpop.f32.mrb[0].mxu0
        %v778 = vadd.f32 %v594, %v777
        %v779 = vpop.f32.mrb[0].mxu0
        %780 = vmatprep.mubr.f32.mxu0 0.0
        %781 = vmatmul.mubr.f32.gmra.mrb[0].mxu0 %v526
        %v782 = vpop.f32.mrb[0].mxu0
        %v783 = vadd.f32 %v594, %v782
        %v784 = vpop.f32.mrb[0].mxu0
        %785 = vmatprep.mubr.f32.mxu0 0.0
        %786 = vmatmul.mubr.f32.gmra.mrb[0].mxu0 %v527
        %v787 = vpop.f32.mrb[0].mxu0
        %v788 = vadd.f32 %v594, %v787
        %v789 = vpop.f32.mrb[0].mxu0
        %790 = vmatprep.mubr.f32.mxu0 0.0
        %791 = vmatmul.mubr.f32.gmra.mrb[0].mxu0 %v528
        %v792 = vpop.f32.mrb[0].mxu0
        %v793 = vadd.f32 %v594, %v792
        %v794 = vpop.f32.mrb[0].mxu0
        %795 = vmatprep.mubr.f32.mxu0 0.0
        %796 = vmatmul.mubr.f32.gmra.mrb[0].mxu0 %v529
        %v797 = vpop.f32.mrb[0].mxu0
        %v798 = vadd.f32 %v594, %v797
        %v799 = vpop.f32.mrb[0].mxu0
        %800 = vmatprep.mubr.f32.mxu0 0.0
        %801 = vmatmul.mubr.f32.gmra.mrb[0].mxu0 %v530
        %v802 = vpop.f32.mrb[0].mxu0
        %v803 = vadd.f32 %v594, %v802
        %v804 = vpop.f32.mrb[0].mxu0
        %805 = vmatprep.mubr.f32.mxu0 0.0
        %806 = vmatmul.mubr.f32.gmra.mrb[0].mxu0 %v531
        %v807 = vpop.f32.mrb[0].mxu0
        %v808 = vadd.f32 %v594, %v807
        %v809 = vpop.f32.mrb[0].mxu0
        %810 = vmatprep.mubr.f32.mxu0 0.0
        %811 = vmatmul.mubr.f32.gmra.mrb[0].mxu0 %v532
        %v812 = vpop.f32.mrb[0].mxu0
        %v813 = vadd.f32 %v594, %v812
        %v814 = vpop.f32.mrb[0].mxu0
        %815 = vdwg.mxu0
        %816 = vst [vmem:[#allocation3] sm:$0xff] %v665
        %817 = vst [vmem:[#allocation3 + $0x8] sm:$0xff] %v667
        %818 = vst [vmem:[#allocation3 + $0x10] sm:$0xff] %v778
        %819 = vst [vmem:[#allocation3 + $0x18] sm:$0xff] %v671
        %820 = vst [vmem:[#allocation3 + $0x20] sm:$0xff] %v673
        %821 = vst [vmem:[#allocation3 + $0x28] sm:$0xff] %v783
        %822 = vst [vmem:[#allocation3 + $0x30] sm:$0xff] %v677
        %823 = vst [vmem:[#allocation3 + $0x38] sm:$0xff] %v679
        %824 = vst [vmem:[#allocation3 + $0x40] sm:$0xff] %v788
        %825 = vst [vmem:[#allocation3 + $0x48] sm:$0xff] %v683
        %826 = vst [vmem:[#allocation3 + $0x50] sm:$0xff] %v685
        %827 = vst [vmem:[#allocation3 + $0x58] sm:$0xff] %v793
        %828 = vst [vmem:[#allocation3 + $0x60] sm:$0xff] %v689
        %829 = vst [vmem:[#allocation3 + $0x68] sm:$0xff] %v691
        %830 = vst [vmem:[#allocation3 + $0x70] sm:$0xff] %v798
        %831 = vst [vmem:[#allocation3 + $0x78] sm:$0xff] %v695
        %832 = vst [vmem:[#allocation3 + $0x80] sm:$0xff] %v697
        %833 = vst [vmem:[#allocation3 + $0x88] sm:$0xff] %v803
        %834 = vst [vmem:[#allocation3 + $0x90] sm:$0xff] %v701
        %835 = vst [vmem:[#allocation3 + $0x98] sm:$0xff] %v703
        %836 = vst [vmem:[#allocation3 + $0xa0] sm:$0xff] %v808
        %837 = vst [vmem:[#allocation3 + $0xa8] sm:$0xff] %v707
        %838 = vst [vmem:[#allocation3 + $0xb0] sm:$0xff] %v709
        %839 = vst [vmem:[#allocation3 + $0xb8] sm:$0xff] %v813
        %s840 = smul.u32 %s32, 7
        %s841 = smul.u32 %s32, 56
        %s842 = sshra.s32 %s841, 3
        %s843 = sand.u32 %s841, 7
        %s844 = smul.u32 %s842, 3
        %s845 = smul.addr %s844, 8
        %s846 = scalar_lea.vmem [#allocation3], %s845
        %v847 = vld [vmem:[%s846] sm:$0xff]
        %v848 = vld [vmem:[%s846 + $0x8] sm:$0xff]
        %v849 = vld [vmem:[%s846 + $0x10] sm:$0xff]
        %v850 = vld [vmem:[#allocation2] sm:$0xff]
        %v851 = vld [vmem:[%s409] sm:$0xff]
        %v852 = vld [vmem:[%s409 + $0x8] sm:$0xff]
        %v853 = vld [vmem:[%s409 + $0x10] sm:$0xff]
        %v854 = vld [vmem:[%s409 + $0x18] sm:$0xff]
        %v855 = vld [vmem:[%s409 + $0x20] sm:$0xff]
        %v856 = vld [vmem:[%s409 + $0x28] sm:$0xff]
        %v857 = vld [vmem:[%s409 + $0x30] sm:$0xff]
        %v858 = vld [vmem:[%s409 + $0x38] sm:$0xff]
        %v859 = vld [vmem:[%s409 + $0x40] sm:$0xff]
        %v860 = vld [vmem:[%s409 + $0x48] sm:$0xff]
        %v861 = vld [vmem:[%s409 + $0x50] sm:$0xff]
        %v862 = vld [vmem:[%s409 + $0x58] sm:$0xff]
        %v863 = vld [vmem:[%s409 + $0x60] sm:$0xff]
        %v864 = vld [vmem:[%s409 + $0x68] sm:$0xff]
        %v865 = vld [vmem:[%s409 + $0x70] sm:$0xff]
        %v866 = vld [vmem:[%s409 + $0x78] sm:$0xff]
        %v867 = vld [vmem:[%s409 + $0x80] sm:$0xff]
        %v868 = vld [vmem:[%s409 + $0x88] sm:$0xff]
        %v869 = vld [vmem:[%s409 + $0x90] sm:$0xff]
        %v870 = vld [vmem:[%s409 + $0x98] sm:$0xff]
        %v871 = vld [vmem:[%s409 + $0xa0] sm:$0xff]
        %v872 = vld [vmem:[%s409 + $0xa8] sm:$0xff]
        %v873 = vld [vmem:[%s409 + $0xb0] sm:$0xff]
        %v874 = vld [vmem:[%s409 + $0xb8] sm:$0xff]
        %v875 = vld [vmem:[%s409 + $0xc0] sm:$0xff]
        %v876 = vld [vmem:[%s409 + $0xc8] sm:$0xff]
        %v877 = vld [vmem:[%s409 + $0xd0] sm:$0xff]
        %v878 = vld [vmem:[%s409 + $0xd8] sm:$0xff]
        %v879 = vld [vmem:[%s409 + $0xe0] sm:$0xff]
        %v880 = vld [vmem:[%s409 + $0xe8] sm:$0xff]
        %v881 = vld [vmem:[%s409 + $0xf0] sm:$0xff]
        %v882 = vld [vmem:[%s409 + $0xf8] sm:$0xff]
        %v883 = vld [vmem:[%s409 + $0x100] sm:$0xff]
        %v884 = vld [vmem:[%s409 + $0x108] sm:$0xff]
        %v885 = vld [vmem:[%s409 + $0x110] sm:$0xff]
        %v886 = vld [vmem:[%s409 + $0x118] sm:$0xff]
        %v887 = vld [vmem:[%s409 + $0x120] sm:$0xff]
        %v888 = vld [vmem:[%s409 + $0x128] sm:$0xff]
        %v889 = vld [vmem:[%s409 + $0x130] sm:$0xff]
        %v890 = vld [vmem:[%s409 + $0x138] sm:$0xff]
        %v891 = vld [vmem:[%s409 + $0x140] sm:$0xff]
        %v892 = vld [vmem:[%s409 + $0x148] sm:$0xff]
        %v893 = vld [vmem:[%s409 + $0x150] sm:$0xff]
        %v894 = vld [vmem:[%s409 + $0x158] sm:$0xff]
        %v895 = vld [vmem:[%s409 + $0x160] sm:$0xff]
        %v896 = vld [vmem:[%s409 + $0x168] sm:$0xff]
        %v897 = vld [vmem:[%s409 + $0x170] sm:$0xff]
        %v898 = vld [vmem:[%s409 + $0x178] sm:$0xff]
        %899 = vmatprep.subr.mxu0 %v852
        %900 = vmatpush1.msra.mxu0 %v851
        %901 = vmatprep.subr.mxu0 %v855
        %902 = vmatpush1.msra.mxu0 %v854
        %903 = vmatprep.subr.mxu0 %v858
        %904 = vmatpush1.msra.mxu0 %v857
        %905 = vmatprep.subr.mxu0 %v861
        %906 = vmatpush1.msra.mxu0 %v860
        %907 = vmatprep.subr.mxu0 %v864
        %908 = vmatpush1.msra.mxu0 %v863
        %909 = vmatprep.subr.mxu0 %v867
        %910 = vmatpush1.msra.mxu0 %v866
        %911 = vmatprep.subr.mxu0 %v870
        %912 = vmatpush1.msra.mxu0 %v869
        %913 = vmatprep.subr.mxu0 %v873
        %914 = vmatpush1.msra.mxu0 %v872
        %915 = vmatprep.subr.mxu0 %v876
        %916 = vmatpush1.msra.mxu0 %v875
        %917 = vmatprep.subr.mxu0 %v879
        %918 = vmatpush1.msra.mxu0 %v878
        %919 = vmatprep.subr.mxu0 %v882
        %920 = vmatpush1.msra.mxu0 %v881
        %921 = vmatprep.subr.mxu0 %v885
        %922 = vmatpush1.msra.mxu0 %v884
        %923 = vmatprep.subr.mxu0 %v888
        %924 = vmatpush1.msra.mxu0 %v887
        %925 = vmatprep.subr.mxu0 %v891
        %926 = vmatpush1.msra.mxu0 %v890
        %927 = vmatprep.subr.mxu0 %v894
        %928 = vmatpush1.msra.mxu0 %v893
        %929 = vmatprep.subr.mxu0 %v897
        %930 = vmatpush1.msra.mxu0 %v896
        %931 = vmatprep.subr.mxu0 0.0
        %932 = vmatpush1.msra.mxu0 0.0
        %933 = vmatprep.subr.mxu0 0.0
        %934 = vmatpush1.msra.mxu0 0.0
        %935 = vmatprep.subr.mxu0 0.0
        %936 = vmatpush1.msra.mxu0 0.0
        %937 = vmatprep.subr.mxu0 0.0
        %938 = vmatpush1.msra.mxu0 0.0
        %939 = vmatprep.subr.mxu0 0.0
        %940 = vmatpush1.msra.mxu0 0.0
        %941 = vmatprep.subr.mxu0 0.0
        %942 = vmatpush1.msra.mxu0 0.0
        %943 = vmatprep.subr.mxu0 0.0
        %944 = vmatpush1.msra.mxu0 0.0
        %945 = vmatprep.subr.mxu0 0.0
        %946 = vmatpush1.msra.mxu0 0.0
        %947 = vmatprep.subr.mxu0 0.0
        %948 = vmatpush1.msra.mxu0 0.0
        %949 = vmatprep.subr.mxu0 0.0
        %950 = vmatpush1.msra.mxu0 0.0
        %951 = vmatprep.subr.mxu0 0.0
        %952 = vmatpush1.msra.mxu0 0.0
        %953 = vmatprep.subr.mxu0 0.0
        %954 = vmatpush1.msra.mxu0 0.0
        %955 = vmatprep.subr.mxu0 0.0
        %956 = vmatpush1.msra.mxu0 0.0
        %957 = vmatprep.subr.mxu0 0.0
        %958 = vmatpush1.msra.mxu0 0.0
        %959 = vmatprep.subr.mxu0 0.0
        %960 = vmatpush1.msra.mxu0 0.0
        %961 = vmatprep.subr.mxu0 0.0
        %962 = vmatpush1.msra.mxu0 0.0
        %963 = vmatprep.mubr.f32.mxu0 0.0
        %964 = vmatmul.mubr.f32.gmra.mrb[0].mxu0 %v850
        %v965 = vpop.f32.mrb[0].mxu0
        %v966 = vadd.f32 0.0, %v965
        %v967 = vpop.f32.mrb[0].mxu0
        %v968 = vadd.f32 0.0, %v967
        %969 = vdwg.mxu0
        %970 = vmatprep.subr.mxu0 0.0
        %971 = vmatpush1.msra.mxu0 %v853
        %972 = vmatprep.subr.mxu0 0.0
        %973 = vmatpush1.msra.mxu0 %v856
        %974 = vmatprep.subr.mxu0 0.0
        %975 = vmatpush1.msra.mxu0 %v859
        %976 = vmatprep.subr.mxu0 0.0
        %977 = vmatpush1.msra.mxu0 %v862
        %978 = vmatprep.subr.mxu0 0.0
        %979 = vmatpush1.msra.mxu0 %v865
        %980 = vmatprep.subr.mxu0 0.0
        %981 = vmatpush1.msra.mxu0 %v868
        %982 = vmatprep.subr.mxu0 0.0
        %983 = vmatpush1.msra.mxu0 %v871
        %984 = vmatprep.subr.mxu0 0.0
        %985 = vmatpush1.msra.mxu0 %v874
        %986 = vmatprep.subr.mxu0 0.0
        %987 = vmatpush1.msra.mxu0 %v877
        %988 = vmatprep.subr.mxu0 0.0
        %989 = vmatpush1.msra.mxu0 %v880
        %990 = vmatprep.subr.mxu0 0.0
        %991 = vmatpush1.msra.mxu0 %v883
        %992 = vmatprep.subr.mxu0 0.0
        %993 = vmatpush1.msra.mxu0 %v886
        %994 = vmatprep.subr.mxu0 0.0
        %995 = vmatpush1.msra.mxu0 %v889
        %996 = vmatprep.subr.mxu0 0.0
        %997 = vmatpush1.msra.mxu0 %v892
        %998 = vmatprep.subr.mxu0 0.0
        %999 = vmatpush1.msra.mxu0 %v895
        %1000 = vmatprep.subr.mxu0 0.0
        %1001 = vmatpush1.msra.mxu0 %v898
        %1002 = vmatprep.subr.mxu0 0.0
        %1003 = vmatpush1.msra.mxu0 0.0
        %1004 = vmatprep.subr.mxu0 0.0
        %1005 = vmatpush1.msra.mxu0 0.0
        %1006 = vmatprep.subr.mxu0 0.0
        %1007 = vmatpush1.msra.mxu0 0.0
        %1008 = vmatprep.subr.mxu0 0.0
        %1009 = vmatpush1.msra.mxu0 0.0
        %1010 = vmatprep.subr.mxu0 0.0
        %1011 = vmatpush1.msra.mxu0 0.0
        %1012 = vmatprep.subr.mxu0 0.0
        %1013 = vmatpush1.msra.mxu0 0.0
        %1014 = vmatprep.subr.mxu0 0.0
        %1015 = vmatpush1.msra.mxu0 0.0
        %1016 = vmatprep.subr.mxu0 0.0
        %1017 = vmatpush1.msra.mxu0 0.0
        %1018 = vmatprep.subr.mxu0 0.0
        %1019 = vmatpush1.msra.mxu0 0.0
        %1020 = vmatprep.subr.mxu0 0.0
        %1021 = vmatpush1.msra.mxu0 0.0
        %1022 = vmatprep.subr.mxu0 0.0
        %1023 = vmatpush1.msra.mxu0 0.0
        %1024 = vmatprep.subr.mxu0 0.0
        %1025 = vmatpush1.msra.mxu0 0.0
        %1026 = vmatprep.subr.mxu0 0.0
        %1027 = vmatpush1.msra.mxu0 0.0
        %1028 = vmatprep.subr.mxu0 0.0
        %1029 = vmatpush1.msra.mxu0 0.0
        %1030 = vmatprep.subr.mxu0 0.0
        %1031 = vmatpush1.msra.mxu0 0.0
        %1032 = vmatprep.subr.mxu0 0.0
        %1033 = vmatpush1.msra.mxu0 0.0
        %1034 = vmatprep.mubr.f32.mxu0 0.0
        %1035 = vmatmul.mubr.f32.gmra.mrb[0].mxu0 %v850
        %v1036 = vpop.f32.mrb[0].mxu0
        %v1037 = vadd.f32 0.0, %v1036
        %v1038 = vpop.f32.mrb[0].mxu0
        %1039 = vdwg.mxu0
        %v1040 = vadd.f32 %v847, %v966
        %v1041 = vxor.u32 %v1040, 2147483648
        %v1042 = vmul.f32 %v1041, 1.442695
        %v1043 = vpow.pop %v1042
        %v1044 = vadd.f32 %v1043, 1.0
        %v1045 = vrcp.pop %v1044
        %v1046 = vmul.f32 1.0, %v1045
        %v1047 = vadd.f32 %v848, %v968
        %v1048 = vxor.u32 %v1047, 2147483648
        %v1049 = vmul.f32 %v1048, 1.442695
        %v1050 = vpow.pop %v1049
        %v1051 = vadd.f32 %v1050, 1.0
        %v1052 = vrcp.pop %v1051
        %v1053 = vmul.f32 1.0, %v1052
        %v1054 = vld [vmem:[%s426] sm:$0x1]
        %v1056 = vlaneseq
        %v1057 = vshrl.u32 %v1056, 7
        %v1058 = vsub.s32 0, %v1057
        %v1059 = vrot.slane %v1054, %v1058
        %v1061 = vadd.f32 %v1037, %v1059
        %v1062 = vmul.f32 %v1046, %v1061
        %v1063 = vadd.f32 %v849, %v1062
        %v1064 = vtanh.pop %v1063
        %v1065 = vsub.f32 1.0, %v1053
        %v1066 = vmul.f32 %v1065, %v1064
        %v1067 = vmul.f32 %v1053, %v850
        %v1068 = vadd.f32 %v1066, %v1067
        %1069 = vst [vmem:[#allocation2] sm:$0xff] %v1068
        %s1070 = smul.u32 %s840, 8
        %s1071 = scalar_lea.vmem %s482, %s1070 [#allocation11]
        %1072 = vst [vmem:[%s1071] sm:$0xff] %v1068
        %s1073 = ssub.s32 1, %s32
        %s1074 = smul.u32 %s32, 6
        %s1075 = sadd.s32 %s1073, %s1074
        %s1076 = smul.u32 %s1075, 8
        %s1077 = sshra.s32 %s1076, 3
        %s1078 = sand.u32 %s1076, 7
        %s1079 = smul.u32 %s1077, 3
        %s1080 = smul.addr %s1079, 8
        %s1081 = scalar_lea.vmem [#allocation3], %s1080
        %v1082 = vld [vmem:[%s1081] sm:$0xff]
        %v1083 = vld [vmem:[%s1081 + $0x8] sm:$0xff]
        %v1084 = vld [vmem:[%s1081 + $0x10] sm:$0xff]
        %v1085 = vld [vmem:[#allocation2] sm:$0xff]
        %v1086 = vld [vmem:[%s409] sm:$0xff]
        %v1087 = vld [vmem:[%s409 + $0x8] sm:$0xff]
        %v1088 = vld [vmem:[%s409 + $0x10] sm:$0xff]
        %v1089 = vld [vmem:[%s409 + $0x18] sm:$0xff]
        %v1090 = vld [vmem:[%s409 + $0x20] sm:$0xff]
        %v1091 = vld [vmem:[%s409 + $0x28] sm:$0xff]
        %v1092 = vld [vmem:[%s409 + $0x30] sm:$0xff]
        %v1093 = vld [vmem:[%s409 + $0x38] sm:$0xff]
        %v1094 = vld [vmem:[%s409 + $0x40] sm:$0xff]
        %v1095 = vld [vmem:[%s409 + $0x48] sm:$0xff]
        %v1096 = vld [vmem:[%s409 + $0x50] sm:$0xff]
        %v1097 = vld [vmem:[%s409 + $0x58] sm:$0xff]
        %v1098 = vld [vmem:[%s409 + $0x60] sm:$0xff]
        %v1099 = vld [vmem:[%s409 + $0x68] sm:$0xff]
        %v1100 = vld [vmem:[%s409 + $0x70] sm:$0xff]
        %v1101 = vld [vmem:[%s409 + $0x78] sm:$0xff]
        %v1102 = vld [vmem:[%s409 + $0x80] sm:$0xff]
        %v1103 = vld [vmem:[%s409 + $0x88] sm:$0xff]
        %v1104 = vld [vmem:[%s409 + $0x90] sm:$0xff]
        %v1105 = vld [vmem:[%s409 + $0x98] sm:$0xff]
        %v1106 = vld [vmem:[%s409 + $0xa0] sm:$0xff]
        %v1107 = vld [vmem:[%s409 + $0xa8] sm:$0xff]
        %v1108 = vld [vmem:[%s409 + $0xb0] sm:$0xff]
        %v1109 = vld [vmem:[%s409 + $0xb8] sm:$0xff]
        %v1110 = vld [vmem:[%s409 + $0xc0] sm:$0xff]
        %v1111 = vld [vmem:[%s409 + $0xc8] sm:$0xff]
        %v1112 = vld [vmem:[%s409 + $0xd0] sm:$0xff]
        %v1113 = vld [vmem:[%s409 + $0xd8] sm:$0xff]
        %v1114 = vld [vmem:[%s409 + $0xe0] sm:$0xff]
        %v1115 = vld [vmem:[%s409 + $0xe8] sm:$0xff]
        %v1116 = vld [vmem:[%s409 + $0xf0] sm:$0xff]
        %v1117 = vld [vmem:[%s409 + $0xf8] sm:$0xff]
        %v1118 = vld [vmem:[%s409 + $0x100] sm:$0xff]
        %v1119 = vld [vmem:[%s409 + $0x108] sm:$0xff]
        %v1120 = vld [vmem:[%s409 + $0x110] sm:$0xff]
        %v1121 = vld [vmem:[%s409 + $0x118] sm:$0xff]
        %v1122 = vld [vmem:[%s409 + $0x120] sm:$0xff]
        %v1123 = vld [vmem:[%s409 + $0x128] sm:$0xff]
        %v1124 = vld [vmem:[%s409 + $0x130] sm:$0xff]
        %v1125 = vld [vmem:[%s409 + $0x138] sm:$0xff]
        %v1126 = vld [vmem:[%s409 + $0x140] sm:$0xff]
        %v1127 = vld [vmem:[%s409 + $0x148] sm:$0xff]
        %v1128 = vld [vmem:[%s409 + $0x150] sm:$0xff]
        %v1129 = vld [vmem:[%s409 + $0x158] sm:$0xff]
        %v1130 = vld [vmem:[%s409 + $0x160] sm:$0xff]
        %v1131 = vld [vmem:[%s409 + $0x168] sm:$0xff]
        %v1132 = vld [vmem:[%s409 + $0x170] sm:$0xff]
        %v1133 = vld [vmem:[%s409 + $0x178] sm:$0xff]
        %1134 = vmatprep.subr.mxu0 %v1087
        %1135 = vmatpush1.msra.mxu0 %v1086
        %1136 = vmatprep.subr.mxu0 %v1090
        %1137 = vmatpush1.msra.mxu0 %v1089
        %1138 = vmatprep.subr.mxu0 %v1093
        %1139 = vmatpush1.msra.mxu0 %v1092
        %1140 = vmatprep.subr.mxu0 %v1096
        %1141 = vmatpush1.msra.mxu0 %v1095
        %1142 = vmatprep.subr.mxu0 %v1099
        %1143 = vmatpush1.msra.mxu0 %v1098
        %1144 = vmatprep.subr.mxu0 %v1102
        %1145 = vmatpush1.msra.mxu0 %v1101
        %1146 = vmatprep.subr.mxu0 %v1105
        %1147 = vmatpush1.msra.mxu0 %v1104
        %1148 = vmatprep.subr.mxu0 %v1108
        %1149 = vmatpush1.msra.mxu0 %v1107
        %1150 = vmatprep.subr.mxu0 %v1111
        %1151 = vmatpush1.msra.mxu0 %v1110
        %1152 = vmatprep.subr.mxu0 %v1114
        %1153 = vmatpush1.msra.mxu0 %v1113
        %1154 = vmatprep.subr.mxu0 %v1117
        %1155 = vmatpush1.msra.mxu0 %v1116
        %1156 = vmatprep.subr.mxu0 %v1120
        %1157 = vmatpush1.msra.mxu0 %v1119
        %1158 = vmatprep.subr.mxu0 %v1123
        %1159 = vmatpush1.msra.mxu0 %v1122
        %1160 = vmatprep.subr.mxu0 %v1126
        %1161 = vmatpush1.msra.mxu0 %v1125
        %1162 = vmatprep.subr.mxu0 %v1129
        %1163 = vmatpush1.msra.mxu0 %v1128
        %1164 = vmatprep.subr.mxu0 %v1132
        %1165 = vmatpush1.msra.mxu0 %v1131
        %1166 = vmatprep.subr.mxu0 0.0
        %1167 = vmatpush1.msra.mxu0 0.0
        %1168 = vmatprep.subr.mxu0 0.0
        %1169 = vmatpush1.msra.mxu0 0.0
        %1170 = vmatprep.subr.mxu0 0.0
        %1171 = vmatpush1.msra.mxu0 0.0
        %1172 = vmatprep.subr.mxu0 0.0
        %1173 = vmatpush1.msra.mxu0 0.0
        %1174 = vmatprep.subr.mxu0 0.0
        %1175 = vmatpush1.msra.mxu0 0.0
        %1176 = vmatprep.subr.mxu0 0.0
        %1177 = vmatpush1.msra.mxu0 0.0
        %1178 = vmatprep.subr.mxu0 0.0
        %1179 = vmatpush1.msra.mxu0 0.0
        %1180 = vmatprep.subr.mxu0 0.0
        %1181 = vmatpush1.msra.mxu0 0.0
        %1182 = vmatprep.subr.mxu0 0.0
        %1183 = vmatpush1.msra.mxu0 0.0
        %1184 = vmatprep.subr.mxu0 0.0
        %1185 = vmatpush1.msra.mxu0 0.0
        %1186 = vmatprep.subr.mxu0 0.0
        %1187 = vmatpush1.msra.mxu0 0.0
        %1188 = vmatprep.subr.mxu0 0.0
        %1189 = vmatpush1.msra.mxu0 0.0
        %1190 = vmatprep.subr.mxu0 0.0
        %1191 = vmatpush1.msra.mxu0 0.0
        %1192 = vmatprep.subr.mxu0 0.0
        %1193 = vmatpush1.msra.mxu0 0.0
        %1194 = vmatprep.subr.mxu0 0.0
        %1195 = vmatpush1.msra.mxu0 0.0
        %1196 = vmatprep.subr.mxu0 0.0
        %1197 = vmatpush1.msra.mxu0 0.0
        %1198 = vmatprep.mubr.f32.mxu0 0.0
        %1199 = vmatmul.mubr.f32.gmra.mrb[0].mxu0 %v1085
        %v1200 = vpop.f32.mrb[0].mxu0
        %v1201 = vadd.f32 0.0, %v1200
        %v1202 = vpop.f32.mrb[0].mxu0
        %v1203 = vadd.f32 0.0, %v1202
        %1204 = vdwg.mxu0
        %1205 = vmatprep.subr.mxu0 0.0
        %1206 = vmatpush1.msra.mxu0 %v1088
        %1207 = vmatprep.subr.mxu0 0.0
        %1208 = vmatpush1.msra.mxu0 %v1091
        %1209 = vmatprep.subr.mxu0 0.0
        %1210 = vmatpush1.msra.mxu0 %v1094
        %1211 = vmatprep.subr.mxu0 0.0
        %1212 = vmatpush1.msra.mxu0 %v1097
        %1213 = vmatprep.subr.mxu0 0.0
        %1214 = vmatpush1.msra.mxu0 %v1100
        %1215 = vmatprep.subr.mxu0 0.0
        %1216 = vmatpush1.msra.mxu0 %v1103
        %1217 = vmatprep.subr.mxu0 0.0
        %1218 = vmatpush1.msra.mxu0 %v1106
        %1219 = vmatprep.subr.mxu0 0.0
        %1220 = vmatpush1.msra.mxu0 %v1109
        %1221 = vmatprep.subr.mxu0 0.0
        %1222 = vmatpush1.msra.mxu0 %v1112
        %1223 = vmatprep.subr.mxu0 0.0
        %1224 = vmatpush1.msra.mxu0 %v1115
        %1225 = vmatprep.subr.mxu0 0.0
        %1226 = vmatpush1.msra.mxu0 %v1118
        %1227 = vmatprep.subr.mxu0 0.0
        %1228 = vmatpush1.msra.mxu0 %v1121
        %1229 = vmatprep.subr.mxu0 0.0
        %1230 = vmatpush1.msra.mxu0 %v1124
        %1231 = vmatprep.subr.mxu0 0.0
        %1232 = vmatpush1.msra.mxu0 %v1127
        %1233 = vmatprep.subr.mxu0 0.0
        %1234 = vmatpush1.msra.mxu0 %v1130
        %1235 = vmatprep.subr.mxu0 0.0
        %1236 = vmatpush1.msra.mxu0 %v1133
        %1237 = vmatprep.subr.mxu0 0.0
        %1238 = vmatpush1.msra.mxu0 0.0
        %1239 = vmatprep.subr.mxu0 0.0
        %1240 = vmatpush1.msra.mxu0 0.0
        %1241 = vmatprep.subr.mxu0 0.0
        %1242 = vmatpush1.msra.mxu0 0.0
        %1243 = vmatprep.subr.mxu0 0.0
        %1244 = vmatpush1.msra.mxu0 0.0
        %1245 = vmatprep.subr.mxu0 0.0
        %1246 = vmatpush1.msra.mxu0 0.0
        %1247 = vmatprep.subr.mxu0 0.0
        %1248 = vmatpush1.msra.mxu0 0.0
        %1249 = vmatprep.subr.mxu0 0.0
        %1250 = vmatpush1.msra.mxu0 0.0
        %1251 = vmatprep.subr.mxu0 0.0
        %1252 = vmatpush1.msra.mxu0 0.0
        %1253 = vmatprep.subr.mxu0 0.0
        %1254 = vmatpush1.msra.mxu0 0.0
        %1255 = vmatprep.subr.mxu0 0.0
        %1256 = vmatpush1.msra.mxu0 0.0
        %1257 = vmatprep.subr.mxu0 0.0
        %1258 = vmatpush1.msra.mxu0 0.0
        %1259 = vmatprep.subr.mxu0 0.0
        %1260 = vmatpush1.msra.mxu0 0.0
        %1261 = vmatprep.subr.mxu0 0.0
        %1262 = vmatpush1.msra.mxu0 0.0
        %1263 = vmatprep.subr.mxu0 0.0
        %1264 = vmatpush1.msra.mxu0 0.0
        %1265 = vmatprep.subr.mxu0 0.0
        %1266 = vmatpush1.msra.mxu0 0.0
        %1267 = vmatprep.subr.mxu0 0.0
        %1268 = vmatpush1.msra.mxu0 0.0
        %1269 = vmatprep.mubr.f32.mxu0 0.0
        %1270 = vmatmul.mubr.f32.gmra.mrb[0].mxu0 %v1085
        %v1271 = vpop.f32.mrb[0].mxu0
        %v1272 = vadd.f32 0.0, %v1271
        %v1273 = vpop.f32.mrb[0].mxu0
        %1274 = vdwg.mxu0
        %v1275 = vadd.f32 %v1082, %v1201
        %v1276 = vxor.u32 %v1275, 2147483648
        %v1277 = vmul.f32 %v1276, 1.442695
        %v1278 = vpow.pop %v1277
        %v1279 = vadd.f32 %v1278, 1.0
        %v1280 = vrcp.pop %v1279
        %v1281 = vmul.f32 1.0, %v1280
        %v1282 = vadd.f32 %v1083, %v1203
        %v1283 = vxor.u32 %v1282, 2147483648
        %v1284 = vmul.f32 %v1283, 1.442695
        %v1285 = vpow.pop %v1284
        %v1286 = vadd.f32 %v1285, 1.0
        %v1287 = vrcp.pop %v1286
        %v1288 = vmul.f32 1.0, %v1287
        %v1289 = vld [vmem:[%s426] sm:$0x1]
        %v1291 = vlaneseq
        %v1292 = vshrl.u32 %v1291, 7
        %v1293 = vsub.s32 0, %v1292
        %v1294 = vrot.slane %v1289, %v1293
        %v1296 = vadd.f32 %v1272, %v1294
        %v1297 = vmul.f32 %v1281, %v1296
        %v1298 = vadd.f32 %v1084, %v1297
        %v1299 = vtanh.pop %v1298
        %v1300 = vsub.f32 1.0, %v1288
        %v1301 = vmul.f32 %v1300, %v1299
        %v1302 = vmul.f32 %v1288, %v1085
        %v1303 = vadd.f32 %v1301, %v1302
        %1304 = vst [vmem:[#allocation2] sm:$0xff] %v1303
        %s1305 = scalar_lea.vmem %s482, %s1076 [#allocation11]
        %1306 = vst [vmem:[%s1305] sm:$0xff] %v1303
        %s1307 = smul.u32 %s1073, 2
        %s1308 = smul.u32 %s32, 5
        %s1309 = sadd.s32 %s1307, %s1308
        %s1310 = smul.u32 %s1309, 8
        %s1311 = sshra.s32 %s1310, 3
        %s1312 = sand.u32 %s1310, 7
        %s1313 = smul.u32 %s1311, 3
        %s1314 = smul.addr %s1313, 8
        %s1315 = scalar_lea.vmem [#allocation3], %s1314
        %v1316 = vld [vmem:[%s1315] sm:$0xff]
        %v1317 = vld [vmem:[%s1315 + $0x8] sm:$0xff]
        %v1318 = vld [vmem:[%s1315 + $0x10] sm:$0xff]
        %v1319 = vld [vmem:[#allocation2] sm:$0xff]
        %v1320 = vld [vmem:[%s409] sm:$0xff]
        %v1321 = vld [vmem:[%s409 + $0x8] sm:$0xff]
        %v1322 = vld [vmem:[%s409 + $0x10] sm:$0xff]
        %v1323 = vld [vmem:[%s409 + $0x18] sm:$0xff]
        %v1324 = vld [vmem:[%s409 + $0x20] sm:$0xff]
        %v1325 = vld [vmem:[%s409 + $0x28] sm:$0xff]
        %v1326 = vld [vmem:[%s409 + $0x30] sm:$0xff]
        %v1327 = vld [vmem:[%s409 + $0x38] sm:$0xff]
        %v1328 = vld [vmem:[%s409 + $0x40] sm:$0xff]
        %v1329 = vld [vmem:[%s409 + $0x48] sm:$0xff]
        %v1330 = vld [vmem:[%s409 + $0x50] sm:$0xff]
        %v1331 = vld [vmem:[%s409 + $0x58] sm:$0xff]
        %v1332 = vld [vmem:[%s409 + $0x60] sm:$0xff]
        %v1333 = vld [vmem:[%s409 + $0x68] sm:$0xff]
        %v1334 = vld [vmem:[%s409 + $0x70] sm:$0xff]
        %v1335 = vld [vmem:[%s409 + $0x78] sm:$0xff]
        %v1336 = vld [vmem:[%s409 + $0x80] sm:$0xff]
        %v1337 = vld [vmem:[%s409 + $0x88] sm:$0xff]
        %v1338 = vld [vmem:[%s409 + $0x90] sm:$0xff]
        %v1339 = vld [vmem:[%s409 + $0x98] sm:$0xff]
        %v1340 = vld [vmem:[%s409 + $0xa0] sm:$0xff]
        %v1341 = vld [vmem:[%s409 + $0xa8] sm:$0xff]
        %v1342 = vld [vmem:[%s409 + $0xb0] sm:$0xff]
        %v1343 = vld [vmem:[%s409 + $0xb8] sm:$0xff]
        %v1344 = vld [vmem:[%s409 + $0xc0] sm:$0xff]
        %v1345 = vld [vmem:[%s409 + $0xc8] sm:$0xff]
        %v1346 = vld [vmem:[%s409 + $0xd0] sm:$0xff]
        %v1347 = vld [vmem:[%s409 + $0xd8] sm:$0xff]
        %v1348 = vld [vmem:[%s409 + $0xe0] sm:$0xff]
        %v1349 = vld [vmem:[%s409 + $0xe8] sm:$0xff]
        %v1350 = vld [vmem:[%s409 + $0xf0] sm:$0xff]
        %v1351 = vld [vmem:[%s409 + $0xf8] sm:$0xff]
        %v1352 = vld [vmem:[%s409 + $0x100] sm:$0xff]
        %v1353 = vld [vmem:[%s409 + $0x108] sm:$0xff]
        %v1354 = vld [vmem:[%s409 + $0x110] sm:$0xff]
        %v1355 = vld [vmem:[%s409 + $0x118] sm:$0xff]
        %v1356 = vld [vmem:[%s409 + $0x120] sm:$0xff]
        %v1357 = vld [vmem:[%s409 + $0x128] sm:$0xff]
        %v1358 = vld [vmem:[%s409 + $0x130] sm:$0xff]
        %v1359 = vld [vmem:[%s409 + $0x138] sm:$0xff]
        %v1360 = vld [vmem:[%s409 + $0x140] sm:$0xff]
        %v1361 = vld [vmem:[%s409 + $0x148] sm:$0xff]
        %v1362 = vld [vmem:[%s409 + $0x150] sm:$0xff]
        %v1363 = vld [vmem:[%s409 + $0x158] sm:$0xff]
        %v1364 = vld [vmem:[%s409 + $0x160] sm:$0xff]
        %v1365 = vld [vmem:[%s409 + $0x168] sm:$0xff]
        %v1366 = vld [vmem:[%s409 + $0x170] sm:$0xff]
        %v1367 = vld [vmem:[%s409 + $0x178] sm:$0xff]
        %1368 = vmatprep.subr.mxu0 %v1321
        %1369 = vmatpush1.msra.mxu0 %v1320
        %1370 = vmatprep.subr.mxu0 %v1324
        %1371 = vmatpush1.msra.mxu0 %v1323
        %1372 = vmatprep.subr.mxu0 %v1327
        %1373 = vmatpush1.msra.mxu0 %v1326
        %1374 = vmatprep.subr.mxu0 %v1330
        %1375 = vmatpush1.msra.mxu0 %v1329
        %1376 = vmatprep.subr.mxu0 %v1333
        %1377 = vmatpush1.msra.mxu0 %v1332
        %1378 = vmatprep.subr.mxu0 %v1336
        %1379 = vmatpush1.msra.mxu0 %v1335
        %1380 = vmatprep.subr.mxu0 %v1339
        %1381 = vmatpush1.msra.mxu0 %v1338
        %1382 = vmatprep.subr.mxu0 %v1342
        %1383 = vmatpush1.msra.mxu0 %v1341
        %1384 = vmatprep.subr.mxu0 %v1345
        %1385 = vmatpush1.msra.mxu0 %v1344
        %1386 = vmatprep.subr.mxu0 %v1348
        %1387 = vmatpush1.msra.mxu0 %v1347
        %1388 = vmatprep.subr.mxu0 %v1351
        %1389 = vmatpush1.msra.mxu0 %v1350
        %1390 = vmatprep.subr.mxu0 %v1354
        %1391 = vmatpush1.msra.mxu0 %v1353
        %1392 = vmatprep.subr.mxu0 %v1357
        %1393 = vmatpush1.msra.mxu0 %v1356
        %1394 = vmatprep.subr.mxu0 %v1360
        %1395 = vmatpush1.msra.mxu0 %v1359
        %1396 = vmatprep.subr.mxu0 %v1363
        %1397 = vmatpush1.msra.mxu0 %v1362
        %1398 = vmatprep.subr.mxu0 %v1366
        %1399 = vmatpush1.msra.mxu0 %v1365
        %1400 = vmatprep.subr.mxu0 0.0
        %1401 = vmatpush1.msra.mxu0 0.0
        %1402 = vmatprep.subr.mxu0 0.0
        %1403 = vmatpush1.msra.mxu0 0.0
        %1404 = vmatprep.subr.mxu0 0.0
        %1405 = vmatpush1.msra.mxu0 0.0
        %1406 = vmatprep.subr.mxu0 0.0
        %1407 = vmatpush1.msra.mxu0 0.0
        %1408 = vmatprep.subr.mxu0 0.0
        %1409 = vmatpush1.msra.mxu0 0.0
        %1410 = vmatprep.subr.mxu0 0.0
        %1411 = vmatpush1.msra.mxu0 0.0
        %1412 = vmatprep.subr.mxu0 0.0
        %1413 = vmatpush1.msra.mxu0 0.0
        %1414 = vmatprep.subr.mxu0 0.0
        %1415 = vmatpush1.msra.mxu0 0.0
        %1416 = vmatprep.subr.mxu0 0.0
        %1417 = vmatpush1.msra.mxu0 0.0
        %1418 = vmatprep.subr.mxu0 0.0
        %1419 = vmatpush1.msra.mxu0 0.0
        %1420 = vmatprep.subr.mxu0 0.0
        %1421 = vmatpush1.msra.mxu0 0.0
        %1422 = vmatprep.subr.mxu0 0.0
        %1423 = vmatpush1.msra.mxu0 0.0
        %1424 = vmatprep.subr.mxu0 0.0
        %1425 = vmatpush1.msra.mxu0 0.0
        %1426 = vmatprep.subr.mxu0 0.0
        %1427 = vmatpush1.msra.mxu0 0.0
        %1428 = vmatprep.subr.mxu0 0.0
        %1429 = vmatpush1.msra.mxu0 0.0
        %1430 = vmatprep.subr.mxu0 0.0
        %1431 = vmatpush1.msra.mxu0 0.0
        %1432 = vmatprep.mubr.f32.mxu0 0.0
        %1433 = vmatmul.mubr.f32.gmra.mrb[0].mxu0 %v1319
        %v1434 = vpop.f32.mrb[0].mxu0
        %v1435 = vadd.f32 0.0, %v1434
        %v1436 = vpop.f32.mrb[0].mxu0
        %v1437 = vadd.f32 0.0, %v1436
        %1438 = vdwg.mxu0
        %1439 = vmatprep.subr.mxu0 0.0
        %1440 = vmatpush1.msra.mxu0 %v1322
        %1441 = vmatprep.subr.mxu0 0.0
        %1442 = vmatpush1.msra.mxu0 %v1325
        %1443 = vmatprep.subr.mxu0 0.0
        %1444 = vmatpush1.msra.mxu0 %v1328
        %1445 = vmatprep.subr.mxu0 0.0
        %1446 = vmatpush1.msra.mxu0 %v1331
        %1447 = vmatprep.subr.mxu0 0.0
        %1448 = vmatpush1.msra.mxu0 %v1334
        %1449 = vmatprep.subr.mxu0 0.0
        %1450 = vmatpush1.msra.mxu0 %v1337
        %1451 = vmatprep.subr.mxu0 0.0
        %1452 = vmatpush1.msra.mxu0 %v1340
        %1453 = vmatprep.subr.mxu0 0.0
        %1454 = vmatpush1.msra.mxu0 %v1343
        %1455 = vmatprep.subr.mxu0 0.0
        %1456 = vmatpush1.msra.mxu0 %v1346
        %1457 = vmatprep.subr.mxu0 0.0
        %1458 = vmatpush1.msra.mxu0 %v1349
        %1459 = vmatprep.subr.mxu0 0.0
        %1460 = vmatpush1.msra.mxu0 %v1352
        %1461 = vmatprep.subr.mxu0 0.0
        %1462 = vmatpush1.msra.mxu0 %v1355
        %1463 = vmatprep.subr.mxu0 0.0
        %1464 = vmatpush1.msra.mxu0 %v1358
        %1465 = vmatprep.subr.mxu0 0.0
        %1466 = vmatpush1.msra.mxu0 %v1361
        %1467 = vmatprep.subr.mxu0 0.0
        %1468 = vmatpush1.msra.mxu0 %v1364
        %1469 = vmatprep.subr.mxu0 0.0
        %1470 = vmatpush1.msra.mxu0 %v1367
        %1471 = vmatprep.subr.mxu0 0.0
        %1472 = vmatpush1.msra.mxu0 0.0
        %1473 = vmatprep.subr.mxu0 0.0
        %1474 = vmatpush1.msra.mxu0 0.0
        %1475 = vmatprep.subr.mxu0 0.0
        %1476 = vmatpush1.msra.mxu0 0.0
        %1477 = vmatprep.subr.mxu0 0.0
        %1478 = vmatpush1.msra.mxu0 0.0
        %1479 = vmatprep.subr.mxu0 0.0
        %1480 = vmatpush1.msra.mxu0 0.0
        %1481 = vmatprep.subr.mxu0 0.0
        %1482 = vmatpush1.msra.mxu0 0.0
        %1483 = vmatprep.subr.mxu0 0.0
        %1484 = vmatpush1.msra.mxu0 0.0
        %1485 = vmatprep.subr.mxu0 0.0
        %1486 = vmatpush1.msra.mxu0 0.0
        %1487 = vmatprep.subr.mxu0 0.0
        %1488 = vmatpush1.msra.mxu0 0.0
        %1489 = vmatprep.subr.mxu0 0.0
        %1490 = vmatpush1.msra.mxu0 0.0
        %1491 = vmatprep.subr.mxu0 0.0
        %1492 = vmatpush1.msra.mxu0 0.0
        %1493 = vmatprep.subr.mxu0 0.0
        %1494 = vmatpush1.msra.mxu0 0.0
        %1495 = vmatprep.subr.mxu0 0.0
        %1496 = vmatpush1.msra.mxu0 0.0
        %1497 = vmatprep.subr.mxu0 0.0
        %1498 = vmatpush1.msra.mxu0 0.0
        %1499 = vmatprep.subr.mxu0 0.0
        %1500 = vmatpush1.msra.mxu0 0.0
        %1501 = vmatprep.subr.mxu0 0.0
        %1502 = vmatpush1.msra.mxu0 0.0
        %1503 = vmatprep.mubr.f32.mxu0 0.0
        %1504 = vmatmul.mubr.f32.gmra.mrb[0].mxu0 %v1319
        %v1505 = vpop.f32.mrb[0].mxu0
        %v1506 = vadd.f32 0.0, %v1505
        %v1507 = vpop.f32.mrb[0].mxu0
        %1508 = vdwg.mxu0
        %v1509 = vadd.f32 %v1316, %v1435
        %v1510 = vxor.u32 %v1509, 2147483648
        %v1511 = vmul.f32 %v1510, 1.442695
        %v1512 = vpow.pop %v1511
        %v1513 = vadd.f32 %v1512, 1.0
        %v1514 = vrcp.pop %v1513
        %v1515 = vmul.f32 1.0, %v1514
        %v1516 = vadd.f32 %v1317, %v1437
        %v1517 = vxor.u32 %v1516, 2147483648
        %v1518 = vmul.f32 %v1517, 1.442695
        %v1519 = vpow.pop %v1518
        %v1520 = vadd.f32 %v1519, 1.0
        %v1521 = vrcp.pop %v1520
        %v1522 = vmul.f32 1.0, %v1521
        %v1523 = vld [vmem:[%s426] sm:$0x1]
        %v1525 = vlaneseq
        %v1526 = vshrl.u32 %v1525, 7
        %v1527 = vsub.s32 0, %v1526
        %v1528 = vrot.slane %v1523, %v1527
        %v1530 = vadd.f32 %v1506, %v1528
        %v1531 = vmul.f32 %v1515, %v1530
        %v1532 = vadd.f32 %v1318, %v1531
        %v1533 = vtanh.pop %v1532
        %v1534 = vsub.f32 1.0, %v1522
        %v1535 = vmul.f32 %v1534, %v1533
        %v1536 = vmul.f32 %v1522, %v1319
        %v1537 = vadd.f32 %v1535, %v1536
        %1538 = vst [vmem:[#allocation2] sm:$0xff] %v1537
        %s1539 = scalar_lea.vmem %s482, %s1310 [#allocation11]
        %1540 = vst [vmem:[%s1539] sm:$0xff] %v1537
        %s1541 = smul.u32 %s1073, 3
        %s1542 = smul.u32 %s32, 4
        %s1543 = sadd.s32 %s1541, %s1542
        %s1544 = smul.u32 %s1543, 8
        %s1545 = sshra.s32 %s1544, 3
        %s1546 = sand.u32 %s1544, 7
        %s1547 = smul.u32 %s1545, 3
        %s1548 = smul.addr %s1547, 8
        %s1549 = scalar_lea.vmem [#allocation3], %s1548
        %v1550 = vld [vmem:[%s1549] sm:$0xff]
        %v1551 = vld [vmem:[%s1549 + $0x8] sm:$0xff]
        %v1552 = vld [vmem:[%s1549 + $0x10] sm:$0xff]
        %v1553 = vld [vmem:[#allocation2] sm:$0xff]
        %v1554 = vld [vmem:[%s409] sm:$0xff]
        %v1555 = vld [vmem:[%s409 + $0x8] sm:$0xff]
        %v1556 = vld [vmem:[%s409 + $0x10] sm:$0xff]
        %v1557 = vld [vmem:[%s409 + $0x18] sm:$0xff]
        %v1558 = vld [vmem:[%s409 + $0x20] sm:$0xff]
        %v1559 = vld [vmem:[%s409 + $0x28] sm:$0xff]
        %v1560 = vld [vmem:[%s409 + $0x30] sm:$0xff]
        %v1561 = vld [vmem:[%s409 + $0x38] sm:$0xff]
        %v1562 = vld [vmem:[%s409 + $0x40] sm:$0xff]
        %v1563 = vld [vmem:[%s409 + $0x48] sm:$0xff]
        %v1564 = vld [vmem:[%s409 + $0x50] sm:$0xff]
        %v1565 = vld [vmem:[%s409 + $0x58] sm:$0xff]
        %v1566 = vld [vmem:[%s409 + $0x60] sm:$0xff]
        %v1567 = vld [vmem:[%s409 + $0x68] sm:$0xff]
        %v1568 = vld [vmem:[%s409 + $0x70] sm:$0xff]
        %v1569 = vld [vmem:[%s409 + $0x78] sm:$0xff]
        %v1570 = vld [vmem:[%s409 + $0x80] sm:$0xff]
        %v1571 = vld [vmem:[%s409 + $0x88] sm:$0xff]
        %v1572 = vld [vmem:[%s409 + $0x90] sm:$0xff]
        %v1573 = vld [vmem:[%s409 + $0x98] sm:$0xff]
        %v1574 = vld [vmem:[%s409 + $0xa0] sm:$0xff]
        %v1575 = vld [vmem:[%s409 + $0xa8] sm:$0xff]
        %v1576 = vld [vmem:[%s409 + $0xb0] sm:$0xff]
        %v1577 = vld [vmem:[%s409 + $0xb8] sm:$0xff]
        %v1578 = vld [vmem:[%s409 + $0xc0] sm:$0xff]
        %v1579 = vld [vmem:[%s409 + $0xc8] sm:$0xff]
        %v1580 = vld [vmem:[%s409 + $0xd0] sm:$0xff]
        %v1581 = vld [vmem:[%s409 + $0xd8] sm:$0xff]
        %v1582 = vld [vmem:[%s409 + $0xe0] sm:$0xff]
        %v1583 = vld [vmem:[%s409 + $0xe8] sm:$0xff]
        %v1584 = vld [vmem:[%s409 + $0xf0] sm:$0xff]
        %v1585 = vld [vmem:[%s409 + $0xf8] sm:$0xff]
        %v1586 = vld [vmem:[%s409 + $0x100] sm:$0xff]
        %v1587 = vld [vmem:[%s409 + $0x108] sm:$0xff]
        %v1588 = vld [vmem:[%s409 + $0x110] sm:$0xff]
        %v1589 = vld [vmem:[%s409 + $0x118] sm:$0xff]
        %v1590 = vld [vmem:[%s409 + $0x120] sm:$0xff]
        %v1591 = vld [vmem:[%s409 + $0x128] sm:$0xff]
        %v1592 = vld [vmem:[%s409 + $0x130] sm:$0xff]
        %v1593 = vld [vmem:[%s409 + $0x138] sm:$0xff]
        %v1594 = vld [vmem:[%s409 + $0x140] sm:$0xff]
        %v1595 = vld [vmem:[%s409 + $0x148] sm:$0xff]
        %v1596 = vld [vmem:[%s409 + $0x150] sm:$0xff]
        %v1597 = vld [vmem:[%s409 + $0x158] sm:$0xff]
        %v1598 = vld [vmem:[%s409 + $0x160] sm:$0xff]
        %v1599 = vld [vmem:[%s409 + $0x168] sm:$0xff]
        %v1600 = vld [vmem:[%s409 + $0x170] sm:$0xff]
        %v1601 = vld [vmem:[%s409 + $0x178] sm:$0xff]
        %1602 = vmatprep.subr.mxu0 %v1555
        %1603 = vmatpush1.msra.mxu0 %v1554
        %1604 = vmatprep.subr.mxu0 %v1558
        %1605 = vmatpush1.msra.mxu0 %v1557
        %1606 = vmatprep.subr.mxu0 %v1561
        %1607 = vmatpush1.msra.mxu0 %v1560
        %1608 = vmatprep.subr.mxu0 %v1564
        %1609 = vmatpush1.msra.mxu0 %v1563
        %1610 = vmatprep.subr.mxu0 %v1567
        %1611 = vmatpush1.msra.mxu0 %v1566
        %1612 = vmatprep.subr.mxu0 %v1570
        %1613 = vmatpush1.msra.mxu0 %v1569
        %1614 = vmatprep.subr.mxu0 %v1573
        %1615 = vmatpush1.msra.mxu0 %v1572
        %1616 = vmatprep.subr.mxu0 %v1576
        %1617 = vmatpush1.msra.mxu0 %v1575
        %1618 = vmatprep.subr.mxu0 %v1579
        %1619 = vmatpush1.msra.mxu0 %v1578
        %1620 = vmatprep.subr.mxu0 %v1582
        %1621 = vmatpush1.msra.mxu0 %v1581
        %1622 = vmatprep.subr.mxu0 %v1585
        %1623 = vmatpush1.msra.mxu0 %v1584
        %1624 = vmatprep.subr.mxu0 %v1588
        %1625 = vmatpush1.msra.mxu0 %v1587
        %1626 = vmatprep.subr.mxu0 %v1591
        %1627 = vmatpush1.msra.mxu0 %v1590
        %1628 = vmatprep.subr.mxu0 %v1594
        %1629 = vmatpush1.msra.mxu0 %v1593
        %1630 = vmatprep.subr.mxu0 %v1597
        %1631 = vmatpush1.msra.mxu0 %v1596
        %1632 = vmatprep.subr.mxu0 %v1600
        %1633 = vmatpush1.msra.mxu0 %v1599
        %1634 = vmatprep.subr.mxu0 0.0
        %1635 = vmatpush1.msra.mxu0 0.0
        %1636 = vmatprep.subr.mxu0 0.0
        %1637 = vmatpush1.msra.mxu0 0.0
        %1638 = vmatprep.subr.mxu0 0.0
        %1639 = vmatpush1.msra.mxu0 0.0
        %1640 = vmatprep.subr.mxu0 0.0
        %1641 = vmatpush1.msra.mxu0 0.0
        %1642 = vmatprep.subr.mxu0 0.0
        %1643 = vmatpush1.msra.mxu0 0.0
        %1644 = vmatprep.subr.mxu0 0.0
        %1645 = vmatpush1.msra.mxu0 0.0
        %1646 = vmatprep.subr.mxu0 0.0
        %1647 = vmatpush1.msra.mxu0 0.0
        %1648 = vmatprep.subr.mxu0 0.0
        %1649 = vmatpush1.msra.mxu0 0.0
        %1650 = vmatprep.subr.mxu0 0.0
        %1651 = vmatpush1.msra.mxu0 0.0
        %1652 = vmatprep.subr.mxu0 0.0
        %1653 = vmatpush1.msra.mxu0 0.0
        %1654 = vmatprep.subr.mxu0 0.0
        %1655 = vmatpush1.msra.mxu0 0.0
        %1656 = vmatprep.subr.mxu0 0.0
        %1657 = vmatpush1.msra.mxu0 0.0
        %1658 = vmatprep.subr.mxu0 0.0
        %1659 = vmatpush1.msra.mxu0 0.0
        %1660 = vmatprep.subr.mxu0 0.0
        %1661 = vmatpush1.msra.mxu0 0.0
        %1662 = vmatprep.subr.mxu0 0.0
        %1663 = vmatpush1.msra.mxu0 0.0
        %1664 = vmatprep.subr.mxu0 0.0
        %1665 = vmatpush1.msra.mxu0 0.0
        %1666 = vmatprep.mubr.f32.mxu0 0.0
        %1667 = vmatmul.mubr.f32.gmra.mrb[0].mxu0 %v1553
        %v1668 = vpop.f32.mrb[0].mxu0
        %v1669 = vadd.f32 0.0, %v1668
        %v1670 = vpop.f32.mrb[0].mxu0
        %v1671 = vadd.f32 0.0, %v1670
        %1672 = vdwg.mxu0
        %1673 = vmatprep.subr.mxu0 0.0
        %1674 = vmatpush1.msra.mxu0 %v1556
        %1675 = vmatprep.subr.mxu0 0.0
        %1676 = vmatpush1.msra.mxu0 %v1559
        %1677 = vmatprep.subr.mxu0 0.0
        %1678 = vmatpush1.msra.mxu0 %v1562
        %1679 = vmatprep.subr.mxu0 0.0
        %1680 = vmatpush1.msra.mxu0 %v1565
        %1681 = vmatprep.subr.mxu0 0.0
        %1682 = vmatpush1.msra.mxu0 %v1568
        %1683 = vmatprep.subr.mxu0 0.0
        %1684 = vmatpush1.msra.mxu0 %v1571
        %1685 = vmatprep.subr.mxu0 0.0
        %1686 = vmatpush1.msra.mxu0 %v1574
        %1687 = vmatprep.subr.mxu0 0.0
        %1688 = vmatpush1.msra.mxu0 %v1577
        %1689 = vmatprep.subr.mxu0 0.0
        %1690 = vmatpush1.msra.mxu0 %v1580
        %1691 = vmatprep.subr.mxu0 0.0
        %1692 = vmatpush1.msra.mxu0 %v1583
        %1693 = vmatprep.subr.mxu0 0.0
        %1694 = vmatpush1.msra.mxu0 %v1586
        %1695 = vmatprep.subr.mxu0 0.0
        %1696 = vmatpush1.msra.mxu0 %v1589
        %1697 = vmatprep.subr.mxu0 0.0
        %1698 = vmatpush1.msra.mxu0 %v1592
        %1699 = vmatprep.subr.mxu0 0.0
        %1700 = vmatpush1.msra.mxu0 %v1595
        %1701 = vmatprep.subr.mxu0 0.0
        %1702 = vmatpush1.msra.mxu0 %v1598
        %1703 = vmatprep.subr.mxu0 0.0
        %1704 = vmatpush1.msra.mxu0 %v1601
        %1705 = vmatprep.subr.mxu0 0.0
        %1706 = vmatpush1.msra.mxu0 0.0
        %1707 = vmatprep.subr.mxu0 0.0
        %1708 = vmatpush1.msra.mxu0 0.0
        %1709 = vmatprep.subr.mxu0 0.0
        %1710 = vmatpush1.msra.mxu0 0.0
        %1711 = vmatprep.subr.mxu0 0.0
        %1712 = vmatpush1.msra.mxu0 0.0
        %1713 = vmatprep.subr.mxu0 0.0
        %1714 = vmatpush1.msra.mxu0 0.0
        %1715 = vmatprep.subr.mxu0 0.0
        %1716 = vmatpush1.msra.mxu0 0.0
        %1717 = vmatprep.subr.mxu0 0.0
        %1718 = vmatpush1.msra.mxu0 0.0
        %1719 = vmatprep.subr.mxu0 0.0
        %1720 = vmatpush1.msra.mxu0 0.0
        %1721 = vmatprep.subr.mxu0 0.0
        %1722 = vmatpush1.msra.mxu0 0.0
        %1723 = vmatprep.subr.mxu0 0.0
        %1724 = vmatpush1.msra.mxu0 0.0
        %1725 = vmatprep.subr.mxu0 0.0
        %1726 = vmatpush1.msra.mxu0 0.0
        %1727 = vmatprep.subr.mxu0 0.0
        %1728 = vmatpush1.msra.mxu0 0.0
        %1729 = vmatprep.subr.mxu0 0.0
        %1730 = vmatpush1.msra.mxu0 0.0
        %1731 = vmatprep.subr.mxu0 0.0
        %1732 = vmatpush1.msra.mxu0 0.0
        %1733 = vmatprep.subr.mxu0 0.0
        %1734 = vmatpush1.msra.mxu0 0.0
        %1735 = vmatprep.subr.mxu0 0.0
        %1736 = vmatpush1.msra.mxu0 0.0
        %1737 = vmatprep.mubr.f32.mxu0 0.0
        %1738 = vmatmul.mubr.f32.gmra.mrb[0].mxu0 %v1553
        %v1739 = vpop.f32.mrb[0].mxu0
        %v1740 = vadd.f32 0.0, %v1739
        %v1741 = vpop.f32.mrb[0].mxu0
        %1742 = vdwg.mxu0
        %v1743 = vadd.f32 %v1550, %v1669
        %v1744 = vxor.u32 %v1743, 2147483648
        %v1745 = vmul.f32 %v1744, 1.442695
        %v1746 = vpow.pop %v1745
        %v1747 = vadd.f32 %v1746, 1.0
        %v1748 = vrcp.pop %v1747
        %v1749 = vmul.f32 1.0, %v1748
        %v1750 = vadd.f32 %v1551, %v1671
        %v1751 = vxor.u32 %v1750, 2147483648
        %v1752 = vmul.f32 %v1751, 1.442695
        %v1753 = vpow.pop %v1752
        %v1754 = vadd.f32 %v1753, 1.0
        %v1755 = vrcp.pop %v1754
        %v1756 = vmul.f32 1.0, %v1755
        %v1757 = vld [vmem:[%s426] sm:$0x1]
        %v1759 = vlaneseq
        %v1760 = vshrl.u32 %v1759, 7
        %v1761 = vsub.s32 0, %v1760
        %v1762 = vrot.slane %v1757, %v1761
        %v1764 = vadd.f32 %v1740, %v1762
        %v1765 = vmul.f32 %v1749, %v1764
        %v1766 = vadd.f32 %v1552, %v1765
        %v1767 = vtanh.pop %v1766
        %v1768 = vsub.f32 1.0, %v1756
        %v1769 = vmul.f32 %v1768, %v1767
        %v1770 = vmul.f32 %v1756, %v1553
        %v1771 = vadd.f32 %v1769, %v1770
        %1772 = vst [vmem:[#allocation2] sm:$0xff] %v1771
        %s1773 = scalar_lea.vmem %s482, %s1544 [#allocation11]
        %1774 = vst [vmem:[%s1773] sm:$0xff] %v1771
        %s1775 = smul.u32 %s1073, 4
        %s1776 = smul.u32 %s32, 3
        %s1777 = sadd.s32 %s1775, %s1776
        %s1778 = smul.u32 %s1777, 8
        %s1779 = sshra.s32 %s1778, 3
        %s1780 = sand.u32 %s1778, 7
        %s1781 = smul.u32 %s1779, 3
        %s1782 = smul.addr %s1781, 8
        %s1783 = scalar_lea.vmem [#allocation3], %s1782
        %v1784 = vld [vmem:[%s1783] sm:$0xff]
        %v1785 = vld [vmem:[%s1783 + $0x8] sm:$0xff]
        %v1786 = vld [vmem:[%s1783 + $0x10] sm:$0xff]
        %v1787 = vld [vmem:[#allocation2] sm:$0xff]
        %v1788 = vld [vmem:[%s409] sm:$0xff]
        %v1789 = vld [vmem:[%s409 + $0x8] sm:$0xff]
        %v1790 = vld [vmem:[%s409 + $0x10] sm:$0xff]
        %v1791 = vld [vmem:[%s409 + $0x18] sm:$0xff]
        %v1792 = vld [vmem:[%s409 + $0x20] sm:$0xff]
        %v1793 = vld [vmem:[%s409 + $0x28] sm:$0xff]
        %v1794 = vld [vmem:[%s409 + $0x30] sm:$0xff]
        %v1795 = vld [vmem:[%s409 + $0x38] sm:$0xff]
        %v1796 = vld [vmem:[%s409 + $0x40] sm:$0xff]
        %v1797 = vld [vmem:[%s409 + $0x48] sm:$0xff]
        %v1798 = vld [vmem:[%s409 + $0x50] sm:$0xff]
        %v1799 = vld [vmem:[%s409 + $0x58] sm:$0xff]
        %v1800 = vld [vmem:[%s409 + $0x60] sm:$0xff]
        %v1801 = vld [vmem:[%s409 + $0x68] sm:$0xff]
        %v1802 = vld [vmem:[%s409 + $0x70] sm:$0xff]
        %v1803 = vld [vmem:[%s409 + $0x78] sm:$0xff]
        %v1804 = vld [vmem:[%s409 + $0x80] sm:$0xff]
        %v1805 = vld [vmem:[%s409 + $0x88] sm:$0xff]
        %v1806 = vld [vmem:[%s409 + $0x90] sm:$0xff]
        %v1807 = vld [vmem:[%s409 + $0x98] sm:$0xff]
        %v1808 = vld [vmem:[%s409 + $0xa0] sm:$0xff]
        %v1809 = vld [vmem:[%s409 + $0xa8] sm:$0xff]
        %v1810 = vld [vmem:[%s409 + $0xb0] sm:$0xff]
        %v1811 = vld [vmem:[%s409 + $0xb8] sm:$0xff]
        %v1812 = vld [vmem:[%s409 + $0xc0] sm:$0xff]
        %v1813 = vld [vmem:[%s409 + $0xc8] sm:$0xff]
        %v1814 = vld [vmem:[%s409 + $0xd0] sm:$0xff]
        %v1815 = vld [vmem:[%s409 + $0xd8] sm:$0xff]
        %v1816 = vld [vmem:[%s409 + $0xe0] sm:$0xff]
        %v1817 = vld [vmem:[%s409 + $0xe8] sm:$0xff]
        %v1818 = vld [vmem:[%s409 + $0xf0] sm:$0xff]
        %v1819 = vld [vmem:[%s409 + $0xf8] sm:$0xff]
        %v1820 = vld [vmem:[%s409 + $0x100] sm:$0xff]
        %v1821 = vld [vmem:[%s409 + $0x108] sm:$0xff]
        %v1822 = vld [vmem:[%s409 + $0x110] sm:$0xff]
        %v1823 = vld [vmem:[%s409 + $0x118] sm:$0xff]
        %v1824 = vld [vmem:[%s409 + $0x120] sm:$0xff]
        %v1825 = vld [vmem:[%s409 + $0x128] sm:$0xff]
        %v1826 = vld [vmem:[%s409 + $0x130] sm:$0xff]
        %v1827 = vld [vmem:[%s409 + $0x138] sm:$0xff]
        %v1828 = vld [vmem:[%s409 + $0x140] sm:$0xff]
        %v1829 = vld [vmem:[%s409 + $0x148] sm:$0xff]
        %v1830 = vld [vmem:[%s409 + $0x150] sm:$0xff]
        %v1831 = vld [vmem:[%s409 + $0x158] sm:$0xff]
        %v1832 = vld [vmem:[%s409 + $0x160] sm:$0xff]
        %v1833 = vld [vmem:[%s409 + $0x168] sm:$0xff]
        %v1834 = vld [vmem:[%s409 + $0x170] sm:$0xff]
        %v1835 = vld [vmem:[%s409 + $0x178] sm:$0xff]
        %1836 = vmatprep.subr.mxu0 %v1789
        %1837 = vmatpush1.msra.mxu0 %v1788
        %1838 = vmatprep.subr.mxu0 %v1792
        %1839 = vmatpush1.msra.mxu0 %v1791
        %1840 = vmatprep.subr.mxu0 %v1795
        %1841 = vmatpush1.msra.mxu0 %v1794
        %1842 = vmatprep.subr.mxu0 %v1798
        %1843 = vmatpush1.msra.mxu0 %v1797
        %1844 = vmatprep.subr.mxu0 %v1801
        %1845 = vmatpush1.msra.mxu0 %v1800
        %1846 = vmatprep.subr.mxu0 %v1804
        %1847 = vmatpush1.msra.mxu0 %v1803
        %1848 = vmatprep.subr.mxu0 %v1807
        %1849 = vmatpush1.msra.mxu0 %v1806
        %1850 = vmatprep.subr.mxu0 %v1810
        %1851 = vmatpush1.msra.mxu0 %v1809
        %1852 = vmatprep.subr.mxu0 %v1813
        %1853 = vmatpush1.msra.mxu0 %v1812
        %1854 = vmatprep.subr.mxu0 %v1816
        %1855 = vmatpush1.msra.mxu0 %v1815
        %1856 = vmatprep.subr.mxu0 %v1819
        %1857 = vmatpush1.msra.mxu0 %v1818
        %1858 = vmatprep.subr.mxu0 %v1822
        %1859 = vmatpush1.msra.mxu0 %v1821
        %1860 = vmatprep.subr.mxu0 %v1825
        %1861 = vmatpush1.msra.mxu0 %v1824
        %1862 = vmatprep.subr.mxu0 %v1828
        %1863 = vmatpush1.msra.mxu0 %v1827
        %1864 = vmatprep.subr.mxu0 %v1831
        %1865 = vmatpush1.msra.mxu0 %v1830
        %1866 = vmatprep.subr.mxu0 %v1834
        %1867 = vmatpush1.msra.mxu0 %v1833
        %1868 = vmatprep.subr.mxu0 0.0
        %1869 = vmatpush1.msra.mxu0 0.0
        %1870 = vmatprep.subr.mxu0 0.0
        %1871 = vmatpush1.msra.mxu0 0.0
        %1872 = vmatprep.subr.mxu0 0.0
        %1873 = vmatpush1.msra.mxu0 0.0
        %1874 = vmatprep.subr.mxu0 0.0
        %1875 = vmatpush1.msra.mxu0 0.0
        %1876 = vmatprep.subr.mxu0 0.0
        %1877 = vmatpush1.msra.mxu0 0.0
        %1878 = vmatprep.subr.mxu0 0.0
        %1879 = vmatpush1.msra.mxu0 0.0
        %1880 = vmatprep.subr.mxu0 0.0
        %1881 = vmatpush1.msra.mxu0 0.0
        %1882 = vmatprep.subr.mxu0 0.0
        %1883 = vmatpush1.msra.mxu0 0.0
        %1884 = vmatprep.subr.mxu0 0.0
        %1885 = vmatpush1.msra.mxu0 0.0
        %1886 = vmatprep.subr.mxu0 0.0
        %1887 = vmatpush1.msra.mxu0 0.0
        %1888 = vmatprep.subr.mxu0 0.0
        %1889 = vmatpush1.msra.mxu0 0.0
        %1890 = vmatprep.subr.mxu0 0.0
        %1891 = vmatpush1.msra.mxu0 0.0
        %1892 = vmatprep.subr.mxu0 0.0
        %1893 = vmatpush1.msra.mxu0 0.0
        %1894 = vmatprep.subr.mxu0 0.0
        %1895 = vmatpush1.msra.mxu0 0.0
        %1896 = vmatprep.subr.mxu0 0.0
        %1897 = vmatpush1.msra.mxu0 0.0
        %1898 = vmatprep.subr.mxu0 0.0
        %1899 = vmatpush1.msra.mxu0 0.0
        %1900 = vmatprep.mubr.f32.mxu0 0.0
        %1901 = vmatmul.mubr.f32.gmra.mrb[0].mxu0 %v1787
        %v1902 = vpop.f32.mrb[0].mxu0
        %v1903 = vadd.f32 0.0, %v1902
        %v1904 = vpop.f32.mrb[0].mxu0
        %v1905 = vadd.f32 0.0, %v1904
        %1906 = vdwg.mxu0
        %1907 = vmatprep.subr.mxu0 0.0
        %1908 = vmatpush1.msra.mxu0 %v1790
        %1909 = vmatprep.subr.mxu0 0.0
        %1910 = vmatpush1.msra.mxu0 %v1793
        %1911 = vmatprep.subr.mxu0 0.0
        %1912 = vmatpush1.msra.mxu0 %v1796
        %1913 = vmatprep.subr.mxu0 0.0
        %1914 = vmatpush1.msra.mxu0 %v1799
        %1915 = vmatprep.subr.mxu0 0.0
        %1916 = vmatpush1.msra.mxu0 %v1802
        %1917 = vmatprep.subr.mxu0 0.0
        %1918 = vmatpush1.msra.mxu0 %v1805
        %1919 = vmatprep.subr.mxu0 0.0
        %1920 = vmatpush1.msra.mxu0 %v1808
        %1921 = vmatprep.subr.mxu0 0.0
        %1922 = vmatpush1.msra.mxu0 %v1811
        %1923 = vmatprep.subr.mxu0 0.0
        %1924 = vmatpush1.msra.mxu0 %v1814
        %1925 = vmatprep.subr.mxu0 0.0
        %1926 = vmatpush1.msra.mxu0 %v1817
        %1927 = vmatprep.subr.mxu0 0.0
        %1928 = vmatpush1.msra.mxu0 %v1820
        %1929 = vmatprep.subr.mxu0 0.0
        %1930 = vmatpush1.msra.mxu0 %v1823
        %1931 = vmatprep.subr.mxu0 0.0
        %1932 = vmatpush1.msra.mxu0 %v1826
        %1933 = vmatprep.subr.mxu0 0.0
        %1934 = vmatpush1.msra.mxu0 %v1829
        %1935 = vmatprep.subr.mxu0 0.0
        %1936 = vmatpush1.msra.mxu0 %v1832
        %1937 = vmatprep.subr.mxu0 0.0
        %1938 = vmatpush1.msra.mxu0 %v1835
        %1939 = vmatprep.subr.mxu0 0.0
        %1940 = vmatpush1.msra.mxu0 0.0
        %1941 = vmatprep.subr.mxu0 0.0
        %1942 = vmatpush1.msra.mxu0 0.0
        %1943 = vmatprep.subr.mxu0 0.0
        %1944 = vmatpush1.msra.mxu0 0.0
        %1945 = vmatprep.subr.mxu0 0.0
        %1946 = vmatpush1.msra.mxu0 0.0
        %1947 = vmatprep.subr.mxu0 0.0
        %1948 = vmatpush1.msra.mxu0 0.0
        %1949 = vmatprep.subr.mxu0 0.0
        %1950 = vmatpush1.msra.mxu0 0.0
        %1951 = vmatprep.subr.mxu0 0.0
        %1952 = vmatpush1.msra.mxu0 0.0
        %1953 = vmatprep.subr.mxu0 0.0
        %1954 = vmatpush1.msra.mxu0 0.0
        %1955 = vmatprep.subr.mxu0 0.0
        %1956 = vmatpush1.msra.mxu0 0.0
        %1957 = vmatprep.subr.mxu0 0.0
        %1958 = vmatpush1.msra.mxu0 0.0
        %1959 = vmatprep.subr.mxu0 0.0
        %1960 = vmatpush1.msra.mxu0 0.0
        %1961 = vmatprep.subr.mxu0 0.0
        %1962 = vmatpush1.msra.mxu0 0.0
        %1963 = vmatprep.subr.mxu0 0.0
        %1964 = vmatpush1.msra.mxu0 0.0
        %1965 = vmatprep.subr.mxu0 0.0
        %1966 = vmatpush1.msra.mxu0 0.0
        %1967 = vmatprep.subr.mxu0 0.0
        %1968 = vmatpush1.msra.mxu0 0.0
        %1969 = vmatprep.subr.mxu0 0.0
        %1970 = vmatpush1.msra.mxu0 0.0
        %1971 = vmatprep.mubr.f32.mxu0 0.0
        %1972 = vmatmul.mubr.f32.gmra.mrb[0].mxu0 %v1787
        %v1973 = vpop.f32.mrb[0].mxu0
        %v1974 = vadd.f32 0.0, %v1973
        %v1975 = vpop.f32.mrb[0].mxu0
        %1976 = vdwg.mxu0
        %v1977 = vadd.f32 %v1784, %v1903
        %v1978 = vxor.u32 %v1977, 2147483648
        %v1979 = vmul.f32 %v1978, 1.442695
        %v1980 = vpow.pop %v1979
        %v1981 = vadd.f32 %v1980, 1.0
        %v1982 = vrcp.pop %v1981
        %v1983 = vmul.f32 1.0, %v1982
        %v1984 = vadd.f32 %v1785, %v1905
        %v1985 = vxor.u32 %v1984, 2147483648
        %v1986 = vmul.f32 %v1985, 1.442695
        %v1987 = vpow.pop %v1986
        %v1988 = vadd.f32 %v1987, 1.0
        %v1989 = vrcp.pop %v1988
        %v1990 = vmul.f32 1.0, %v1989
        %v1991 = vld [vmem:[%s426] sm:$0x1]
        %v1993 = vlaneseq
        %v1994 = vshrl.u32 %v1993, 7
        %v1995 = vsub.s32 0, %v1994
        %v1996 = vrot.slane %v1991, %v1995
        %v1998 = vadd.f32 %v1974, %v1996
        %v1999 = vmul.f32 %v1983, %v1998
        %v2000 = vadd.f32 %v1786, %v1999
        %v2001 = vtanh.pop %v2000
        %v2002 = vsub.f32 1.0, %v1990
        %v2003 = vmul.f32 %v2002, %v2001
        %v2004 = vmul.f32 %v1990, %v1787
        %v2005 = vadd.f32 %v2003, %v2004
        %2006 = vst [vmem:[#allocation2] sm:$0xff] %v2005
        %s2007 = scalar_lea.vmem %s482, %s1778 [#allocation11]
        %2008 = vst [vmem:[%s2007] sm:$0xff] %v2005
        %s2009 = smul.u32 %s1073, 5
        %s2010 = smul.u32 %s32, 2
        %s2011 = sadd.s32 %s2009, %s2010
        %s2012 = smul.u32 %s2011, 8
        %s2013 = sshra.s32 %s2012, 3
        %s2014 = sand.u32 %s2012, 7
        %s2015 = smul.u32 %s2013, 3
        %s2016 = smul.addr %s2015, 8
        %s2017 = scalar_lea.vmem [#allocation3], %s2016
        %v2018 = vld [vmem:[%s2017] sm:$0xff]
        %v2019 = vld [vmem:[%s2017 + $0x8] sm:$0xff]
        %v2020 = vld [vmem:[%s2017 + $0x10] sm:$0xff]
        %v2021 = vld [vmem:[#allocation2] sm:$0xff]
        %v2022 = vld [vmem:[%s409] sm:$0xff]
        %v2023 = vld [vmem:[%s409 + $0x8] sm:$0xff]
        %v2024 = vld [vmem:[%s409 + $0x10] sm:$0xff]
        %v2025 = vld [vmem:[%s409 + $0x18] sm:$0xff]
        %v2026 = vld [vmem:[%s409 + $0x20] sm:$0xff]
        %v2027 = vld [vmem:[%s409 + $0x28] sm:$0xff]
        %v2028 = vld [vmem:[%s409 + $0x30] sm:$0xff]
        %v2029 = vld [vmem:[%s409 + $0x38] sm:$0xff]
        %v2030 = vld [vmem:[%s409 + $0x40] sm:$0xff]
        %v2031 = vld [vmem:[%s409 + $0x48] sm:$0xff]
        %v2032 = vld [vmem:[%s409 + $0x50] sm:$0xff]
        %v2033 = vld [vmem:[%s409 + $0x58] sm:$0xff]
        %v2034 = vld [vmem:[%s409 + $0x60] sm:$0xff]
        %v2035 = vld [vmem:[%s409 + $0x68] sm:$0xff]
        %v2036 = vld [vmem:[%s409 + $0x70] sm:$0xff]
        %v2037 = vld [vmem:[%s409 + $0x78] sm:$0xff]
        %v2038 = vld [vmem:[%s409 + $0x80] sm:$0xff]
        %v2039 = vld [vmem:[%s409 + $0x88] sm:$0xff]
        %v2040 = vld [vmem:[%s409 + $0x90] sm:$0xff]
        %v2041 = vld [vmem:[%s409 + $0x98] sm:$0xff]
        %v2042 = vld [vmem:[%s409 + $0xa0] sm:$0xff]
        %v2043 = vld [vmem:[%s409 + $0xa8] sm:$0xff]
        %v2044 = vld [vmem:[%s409 + $0xb0] sm:$0xff]
        %v2045 = vld [vmem:[%s409 + $0xb8] sm:$0xff]
        %v2046 = vld [vmem:[%s409 + $0xc0] sm:$0xff]
        %v2047 = vld [vmem:[%s409 + $0xc8] sm:$0xff]
        %v2048 = vld [vmem:[%s409 + $0xd0] sm:$0xff]
        %v2049 = vld [vmem:[%s409 + $0xd8] sm:$0xff]
        %v2050 = vld [vmem:[%s409 + $0xe0] sm:$0xff]
        %v2051 = vld [vmem:[%s409 + $0xe8] sm:$0xff]
        %v2052 = vld [vmem:[%s409 + $0xf0] sm:$0xff]
        %v2053 = vld [vmem:[%s409 + $0xf8] sm:$0xff]
        %v2054 = vld [vmem:[%s409 + $0x100] sm:$0xff]
        %v2055 = vld [vmem:[%s409 + $0x108] sm:$0xff]
        %v2056 = vld [vmem:[%s409 + $0x110] sm:$0xff]
        %v2057 = vld [vmem:[%s409 + $0x118] sm:$0xff]
        %v2058 = vld [vmem:[%s409 + $0x120] sm:$0xff]
        %v2059 = vld [vmem:[%s409 + $0x128] sm:$0xff]
        %v2060 = vld [vmem:[%s409 + $0x130] sm:$0xff]
        %v2061 = vld [vmem:[%s409 + $0x138] sm:$0xff]
        %v2062 = vld [vmem:[%s409 + $0x140] sm:$0xff]
        %v2063 = vld [vmem:[%s409 + $0x148] sm:$0xff]
        %v2064 = vld [vmem:[%s409 + $0x150] sm:$0xff]
        %v2065 = vld [vmem:[%s409 + $0x158] sm:$0xff]
        %v2066 = vld [vmem:[%s409 + $0x160] sm:$0xff]
        %v2067 = vld [vmem:[%s409 + $0x168] sm:$0xff]
        %v2068 = vld [vmem:[%s409 + $0x170] sm:$0xff]
        %v2069 = vld [vmem:[%s409 + $0x178] sm:$0xff]
        %2070 = vmatprep.subr.mxu0 %v2023
        %2071 = vmatpush1.msra.mxu0 %v2022
        %2072 = vmatprep.subr.mxu0 %v2026
        %2073 = vmatpush1.msra.mxu0 %v2025
        %2074 = vmatprep.subr.mxu0 %v2029
        %2075 = vmatpush1.msra.mxu0 %v2028
        %2076 = vmatprep.subr.mxu0 %v2032
        %2077 = vmatpush1.msra.mxu0 %v2031
        %2078 = vmatprep.subr.mxu0 %v2035
        %2079 = vmatpush1.msra.mxu0 %v2034
        %2080 = vmatprep.subr.mxu0 %v2038
        %2081 = vmatpush1.msra.mxu0 %v2037
        %2082 = vmatprep.subr.mxu0 %v2041
        %2083 = vmatpush1.msra.mxu0 %v2040
        %2084 = vmatprep.subr.mxu0 %v2044
        %2085 = vmatpush1.msra.mxu0 %v2043
        %2086 = vmatprep.subr.mxu0 %v2047
        %2087 = vmatpush1.msra.mxu0 %v2046
        %2088 = vmatprep.subr.mxu0 %v2050
        %2089 = vmatpush1.msra.mxu0 %v2049
        %2090 = vmatprep.subr.mxu0 %v2053
        %2091 = vmatpush1.msra.mxu0 %v2052
        %2092 = vmatprep.subr.mxu0 %v2056
        %2093 = vmatpush1.msra.mxu0 %v2055
        %2094 = vmatprep.subr.mxu0 %v2059
        %2095 = vmatpush1.msra.mxu0 %v2058
        %2096 = vmatprep.subr.mxu0 %v2062
        %2097 = vmatpush1.msra.mxu0 %v2061
        %2098 = vmatprep.subr.mxu0 %v2065
        %2099 = vmatpush1.msra.mxu0 %v2064
        %2100 = vmatprep.subr.mxu0 %v2068
        %2101 = vmatpush1.msra.mxu0 %v2067
        %2102 = vmatprep.subr.mxu0 0.0
        %2103 = vmatpush1.msra.mxu0 0.0
        %2104 = vmatprep.subr.mxu0 0.0
        %2105 = vmatpush1.msra.mxu0 0.0
        %2106 = vmatprep.subr.mxu0 0.0
        %2107 = vmatpush1.msra.mxu0 0.0
        %2108 = vmatprep.subr.mxu0 0.0
        %2109 = vmatpush1.msra.mxu0 0.0
        %2110 = vmatprep.subr.mxu0 0.0
        %2111 = vmatpush1.msra.mxu0 0.0
        %2112 = vmatprep.subr.mxu0 0.0
        %2113 = vmatpush1.msra.mxu0 0.0
        %2114 = vmatprep.subr.mxu0 0.0
        %2115 = vmatpush1.msra.mxu0 0.0
        %2116 = vmatprep.subr.mxu0 0.0
        %2117 = vmatpush1.msra.mxu0 0.0
        %2118 = vmatprep.subr.mxu0 0.0
        %2119 = vmatpush1.msra.mxu0 0.0
        %2120 = vmatprep.subr.mxu0 0.0
        %2121 = vmatpush1.msra.mxu0 0.0
        %2122 = vmatprep.subr.mxu0 0.0
        %2123 = vmatpush1.msra.mxu0 0.0
        %2124 = vmatprep.subr.mxu0 0.0
        %2125 = vmatpush1.msra.mxu0 0.0
        %2126 = vmatprep.subr.mxu0 0.0
        %2127 = vmatpush1.msra.mxu0 0.0
        %2128 = vmatprep.subr.mxu0 0.0
        %2129 = vmatpush1.msra.mxu0 0.0
        %2130 = vmatprep.subr.mxu0 0.0
        %2131 = vmatpush1.msra.mxu0 0.0
        %2132 = vmatprep.subr.mxu0 0.0
        %2133 = vmatpush1.msra.mxu0 0.0
        %2134 = vmatprep.mubr.f32.mxu0 0.0
        %2135 = vmatmul.mubr.f32.gmra.mrb[0].mxu0 %v2021
        %v2136 = vpop.f32.mrb[0].mxu0
        %v2137 = vadd.f32 0.0, %v2136
        %v2138 = vpop.f32.mrb[0].mxu0
        %v2139 = vadd.f32 0.0, %v2138
        %2140 = vdwg.mxu0
        %2141 = vmatprep.subr.mxu0 0.0
        %2142 = vmatpush1.msra.mxu0 %v2024
        %2143 = vmatprep.subr.mxu0 0.0
        %2144 = vmatpush1.msra.mxu0 %v2027
        %2145 = vmatprep.subr.mxu0 0.0
        %2146 = vmatpush1.msra.mxu0 %v2030
        %2147 = vmatprep.subr.mxu0 0.0
        %2148 = vmatpush1.msra.mxu0 %v2033
        %2149 = vmatprep.subr.mxu0 0.0
        %2150 = vmatpush1.msra.mxu0 %v2036
        %2151 = vmatprep.subr.mxu0 0.0
        %2152 = vmatpush1.msra.mxu0 %v2039
        %2153 = vmatprep.subr.mxu0 0.0
        %2154 = vmatpush1.msra.mxu0 %v2042
        %2155 = vmatprep.subr.mxu0 0.0
        %2156 = vmatpush1.msra.mxu0 %v2045
        %2157 = vmatprep.subr.mxu0 0.0
        %2158 = vmatpush1.msra.mxu0 %v2048
        %2159 = vmatprep.subr.mxu0 0.0
        %2160 = vmatpush1.msra.mxu0 %v2051
        %2161 = vmatprep.subr.mxu0 0.0
        %2162 = vmatpush1.msra.mxu0 %v2054
        %2163 = vmatprep.subr.mxu0 0.0
        %2164 = vmatpush1.msra.mxu0 %v2057
        %2165 = vmatprep.subr.mxu0 0.0
        %2166 = vmatpush1.msra.mxu0 %v2060
        %2167 = vmatprep.subr.mxu0 0.0
        %2168 = vmatpush1.msra.mxu0 %v2063
        %2169 = vmatprep.subr.mxu0 0.0
        %2170 = vmatpush1.msra.mxu0 %v2066
        %2171 = vmatprep.subr.mxu0 0.0
        %2172 = vmatpush1.msra.mxu0 %v2069
        %2173 = vmatprep.subr.mxu0 0.0
        %2174 = vmatpush1.msra.mxu0 0.0
        %2175 = vmatprep.subr.mxu0 0.0
        %2176 = vmatpush1.msra.mxu0 0.0
        %2177 = vmatprep.subr.mxu0 0.0
        %2178 = vmatpush1.msra.mxu0 0.0
        %2179 = vmatprep.subr.mxu0 0.0
        %2180 = vmatpush1.msra.mxu0 0.0
        %2181 = vmatprep.subr.mxu0 0.0
        %2182 = vmatpush1.msra.mxu0 0.0
        %2183 = vmatprep.subr.mxu0 0.0
        %2184 = vmatpush1.msra.mxu0 0.0
        %2185 = vmatprep.subr.mxu0 0.0
        %2186 = vmatpush1.msra.mxu0 0.0
        %2187 = vmatprep.subr.mxu0 0.0
        %2188 = vmatpush1.msra.mxu0 0.0
        %2189 = vmatprep.subr.mxu0 0.0
        %2190 = vmatpush1.msra.mxu0 0.0
        %2191 = vmatprep.subr.mxu0 0.0
        %2192 = vmatpush1.msra.mxu0 0.0
        %2193 = vmatprep.subr.mxu0 0.0
        %2194 = vmatpush1.msra.mxu0 0.0
        %2195 = vmatprep.subr.mxu0 0.0
        %2196 = vmatpush1.msra.mxu0 0.0
        %2197 = vmatprep.subr.mxu0 0.0
        %2198 = vmatpush1.msra.mxu0 0.0
        %2199 = vmatprep.subr.mxu0 0.0
        %2200 = vmatpush1.msra.mxu0 0.0
        %2201 = vmatprep.subr.mxu0 0.0
        %2202 = vmatpush1.msra.mxu0 0.0
        %2203 = vmatprep.subr.mxu0 0.0
        %2204 = vmatpush1.msra.mxu0 0.0
        %2205 = vmatprep.mubr.f32.mxu0 0.0
        %2206 = vmatmul.mubr.f32.gmra.mrb[0].mxu0 %v2021
        %v2207 = vpop.f32.mrb[0].mxu0
        %v2208 = vadd.f32 0.0, %v2207
        %v2209 = vpop.f32.mrb[0].mxu0
        %2210 = vdwg.mxu0
        %v2211 = vadd.f32 %v2018, %v2137
        %v2212 = vxor.u32 %v2211, 2147483648
        %v2213 = vmul.f32 %v2212, 1.442695
        %v2214 = vpow.pop %v2213
        %v2215 = vadd.f32 %v2214, 1.0
        %v2216 = vrcp.pop %v2215
        %v2217 = vmul.f32 1.0, %v2216
        %v2218 = vadd.f32 %v2019, %v2139
        %v2219 = vxor.u32 %v2218, 2147483648
        %v2220 = vmul.f32 %v2219, 1.442695
        %v2221 = vpow.pop %v2220
        %v2222 = vadd.f32 %v2221, 1.0
        %v2223 = vrcp.pop %v2222
        %v2224 = vmul.f32 1.0, %v2223
        %v2225 = vld [vmem:[%s426] sm:$0x1]
        %v2227 = vlaneseq
        %v2228 = vshrl.u32 %v2227, 7
        %v2229 = vsub.s32 0, %v2228
        %v2230 = vrot.slane %v2225, %v2229
        %v2232 = vadd.f32 %v2208, %v2230
        %v2233 = vmul.f32 %v2217, %v2232
        %v2234 = vadd.f32 %v2020, %v2233
        %v2235 = vtanh.pop %v2234
        %v2236 = vsub.f32 1.0, %v2224
        %v2237 = vmul.f32 %v2236, %v2235
        %v2238 = vmul.f32 %v2224, %v2021
        %v2239 = vadd.f32 %v2237, %v2238
        %2240 = vst [vmem:[#allocation2] sm:$0xff] %v2239
        %s2241 = scalar_lea.vmem %s482, %s2012 [#allocation11]
        %2242 = vst [vmem:[%s2241] sm:$0xff] %v2239
        %s2243 = smul.u32 %s1073, 6
        %s2244 = sadd.s32 %s2243, %s32
        %s2245 = smul.u32 %s2244, 8
        %s2246 = sshra.s32 %s2245, 3
        %s2247 = sand.u32 %s2245, 7
        %s2248 = smul.u32 %s2246, 3
        %s2249 = smul.addr %s2248, 8
        %s2250 = scalar_lea.vmem [#allocation3], %s2249
        %v2251 = vld [vmem:[%s2250] sm:$0xff]
        %v2252 = vld [vmem:[%s2250 + $0x8] sm:$0xff]
        %v2253 = vld [vmem:[%s2250 + $0x10] sm:$0xff]
        %v2254 = vld [vmem:[#allocation2] sm:$0xff]
        %v2255 = vld [vmem:[%s409] sm:$0xff]
        %v2256 = vld [vmem:[%s409 + $0x8] sm:$0xff]
        %v2257 = vld [vmem:[%s409 + $0x10] sm:$0xff]
        %v2258 = vld [vmem:[%s409 + $0x18] sm:$0xff]
        %v2259 = vld [vmem:[%s409 + $0x20] sm:$0xff]
        %v2260 = vld [vmem:[%s409 + $0x28] sm:$0xff]
        %v2261 = vld [vmem:[%s409 + $0x30] sm:$0xff]
        %v2262 = vld [vmem:[%s409 + $0x38] sm:$0xff]
        %v2263 = vld [vmem:[%s409 + $0x40] sm:$0xff]
        %v2264 = vld [vmem:[%s409 + $0x48] sm:$0xff]
        %v2265 = vld [vmem:[%s409 + $0x50] sm:$0xff]
        %v2266 = vld [vmem:[%s409 + $0x58] sm:$0xff]
        %v2267 = vld [vmem:[%s409 + $0x60] sm:$0xff]
        %v2268 = vld [vmem:[%s409 + $0x68] sm:$0xff]
        %v2269 = vld [vmem:[%s409 + $0x70] sm:$0xff]
        %v2270 = vld [vmem:[%s409 + $0x78] sm:$0xff]
        %v2271 = vld [vmem:[%s409 + $0x80] sm:$0xff]
        %v2272 = vld [vmem:[%s409 + $0x88] sm:$0xff]
        %v2273 = vld [vmem:[%s409 + $0x90] sm:$0xff]
        %v2274 = vld [vmem:[%s409 + $0x98] sm:$0xff]
        %v2275 = vld [vmem:[%s409 + $0xa0] sm:$0xff]
        %v2276 = vld [vmem:[%s409 + $0xa8] sm:$0xff]
        %v2277 = vld [vmem:[%s409 + $0xb0] sm:$0xff]
        %v2278 = vld [vmem:[%s409 + $0xb8] sm:$0xff]
        %v2279 = vld [vmem:[%s409 + $0xc0] sm:$0xff]
        %v2280 = vld [vmem:[%s409 + $0xc8] sm:$0xff]
        %v2281 = vld [vmem:[%s409 + $0xd0] sm:$0xff]
        %v2282 = vld [vmem:[%s409 + $0xd8] sm:$0xff]
        %v2283 = vld [vmem:[%s409 + $0xe0] sm:$0xff]
        %v2284 = vld [vmem:[%s409 + $0xe8] sm:$0xff]
        %v2285 = vld [vmem:[%s409 + $0xf0] sm:$0xff]
        %v2286 = vld [vmem:[%s409 + $0xf8] sm:$0xff]
        %v2287 = vld [vmem:[%s409 + $0x100] sm:$0xff]
        %v2288 = vld [vmem:[%s409 + $0x108] sm:$0xff]
        %v2289 = vld [vmem:[%s409 + $0x110] sm:$0xff]
        %v2290 = vld [vmem:[%s409 + $0x118] sm:$0xff]
        %v2291 = vld [vmem:[%s409 + $0x120] sm:$0xff]
        %v2292 = vld [vmem:[%s409 + $0x128] sm:$0xff]
        %v2293 = vld [vmem:[%s409 + $0x130] sm:$0xff]
        %v2294 = vld [vmem:[%s409 + $0x138] sm:$0xff]
        %v2295 = vld [vmem:[%s409 + $0x140] sm:$0xff]
        %v2296 = vld [vmem:[%s409 + $0x148] sm:$0xff]
        %v2297 = vld [vmem:[%s409 + $0x150] sm:$0xff]
        %v2298 = vld [vmem:[%s409 + $0x158] sm:$0xff]
        %v2299 = vld [vmem:[%s409 + $0x160] sm:$0xff]
        %v2300 = vld [vmem:[%s409 + $0x168] sm:$0xff]
        %v2301 = vld [vmem:[%s409 + $0x170] sm:$0xff]
        %v2302 = vld [vmem:[%s409 + $0x178] sm:$0xff]
        %2303 = vmatprep.subr.mxu0 %v2256
        %2304 = vmatpush1.msra.mxu0 %v2255
        %2305 = vmatprep.subr.mxu0 %v2259
        %2306 = vmatpush1.msra.mxu0 %v2258
        %2307 = vmatprep.subr.mxu0 %v2262
        %2308 = vmatpush1.msra.mxu0 %v2261
        %2309 = vmatprep.subr.mxu0 %v2265
        %2310 = vmatpush1.msra.mxu0 %v2264
        %2311 = vmatprep.subr.mxu0 %v2268
        %2312 = vmatpush1.msra.mxu0 %v2267
        %2313 = vmatprep.subr.mxu0 %v2271
        %2314 = vmatpush1.msra.mxu0 %v2270
        %2315 = vmatprep.subr.mxu0 %v2274
        %2316 = vmatpush1.msra.mxu0 %v2273
        %2317 = vmatprep.subr.mxu0 %v2277
        %2318 = vmatpush1.msra.mxu0 %v2276
        %2319 = vmatprep.subr.mxu0 %v2280
        %2320 = vmatpush1.msra.mxu0 %v2279
        %2321 = vmatprep.subr.mxu0 %v2283
        %2322 = vmatpush1.msra.mxu0 %v2282
        %2323 = vmatprep.subr.mxu0 %v2286
        %2324 = vmatpush1.msra.mxu0 %v2285
        %2325 = vmatprep.subr.mxu0 %v2289
        %2326 = vmatpush1.msra.mxu0 %v2288
        %2327 = vmatprep.subr.mxu0 %v2292
        %2328 = vmatpush1.msra.mxu0 %v2291
        %2329 = vmatprep.subr.mxu0 %v2295
        %2330 = vmatpush1.msra.mxu0 %v2294
        %2331 = vmatprep.subr.mxu0 %v2298
        %2332 = vmatpush1.msra.mxu0 %v2297
        %2333 = vmatprep.subr.mxu0 %v2301
        %2334 = vmatpush1.msra.mxu0 %v2300
        %2335 = vmatprep.subr.mxu0 0.0
        %2336 = vmatpush1.msra.mxu0 0.0
        %2337 = vmatprep.subr.mxu0 0.0
        %2338 = vmatpush1.msra.mxu0 0.0
        %2339 = vmatprep.subr.mxu0 0.0
        %2340 = vmatpush1.msra.mxu0 0.0
        %2341 = vmatprep.subr.mxu0 0.0
        %2342 = vmatpush1.msra.mxu0 0.0
        %2343 = vmatprep.subr.mxu0 0.0
        %2344 = vmatpush1.msra.mxu0 0.0
        %2345 = vmatprep.subr.mxu0 0.0
        %2346 = vmatpush1.msra.mxu0 0.0
        %2347 = vmatprep.subr.mxu0 0.0
        %2348 = vmatpush1.msra.mxu0 0.0
        %2349 = vmatprep.subr.mxu0 0.0
        %2350 = vmatpush1.msra.mxu0 0.0
        %2351 = vmatprep.subr.mxu0 0.0
        %2352 = vmatpush1.msra.mxu0 0.0
        %2353 = vmatprep.subr.mxu0 0.0
        %2354 = vmatpush1.msra.mxu0 0.0
        %2355 = vmatprep.subr.mxu0 0.0
        %2356 = vmatpush1.msra.mxu0 0.0
        %2357 = vmatprep.subr.mxu0 0.0
        %2358 = vmatpush1.msra.mxu0 0.0
        %2359 = vmatprep.subr.mxu0 0.0
        %2360 = vmatpush1.msra.mxu0 0.0
        %2361 = vmatprep.subr.mxu0 0.0
        %2362 = vmatpush1.msra.mxu0 0.0
        %2363 = vmatprep.subr.mxu0 0.0
        %2364 = vmatpush1.msra.mxu0 0.0
        %2365 = vmatprep.subr.mxu0 0.0
        %2366 = vmatpush1.msra.mxu0 0.0
        %2367 = vmatprep.mubr.f32.mxu0 0.0
        %2368 = vmatmul.mubr.f32.gmra.mrb[0].mxu0 %v2254
        %v2369 = vpop.f32.mrb[0].mxu0
        %v2370 = vadd.f32 0.0, %v2369
        %v2371 = vpop.f32.mrb[0].mxu0
        %v2372 = vadd.f32 0.0, %v2371
        %2373 = vdwg.mxu0
        %2374 = vmatprep.subr.mxu0 0.0
        %2375 = vmatpush1.msra.mxu0 %v2257
        %2376 = vmatprep.subr.mxu0 0.0
        %2377 = vmatpush1.msra.mxu0 %v2260
        %2378 = vmatprep.subr.mxu0 0.0
        %2379 = vmatpush1.msra.mxu0 %v2263
        %2380 = vmatprep.subr.mxu0 0.0
        %2381 = vmatpush1.msra.mxu0 %v2266
        %2382 = vmatprep.subr.mxu0 0.0
        %2383 = vmatpush1.msra.mxu0 %v2269
        %2384 = vmatprep.subr.mxu0 0.0
        %2385 = vmatpush1.msra.mxu0 %v2272
        %2386 = vmatprep.subr.mxu0 0.0
        %2387 = vmatpush1.msra.mxu0 %v2275
        %2388 = vmatprep.subr.mxu0 0.0
        %2389 = vmatpush1.msra.mxu0 %v2278
        %2390 = vmatprep.subr.mxu0 0.0
        %2391 = vmatpush1.msra.mxu0 %v2281
        %2392 = vmatprep.subr.mxu0 0.0
        %2393 = vmatpush1.msra.mxu0 %v2284
        %2394 = vmatprep.subr.mxu0 0.0
        %2395 = vmatpush1.msra.mxu0 %v2287
        %2396 = vmatprep.subr.mxu0 0.0
        %2397 = vmatpush1.msra.mxu0 %v2290
        %2398 = vmatprep.subr.mxu0 0.0
        %2399 = vmatpush1.msra.mxu0 %v2293
        %2400 = vmatprep.subr.mxu0 0.0
        %2401 = vmatpush1.msra.mxu0 %v2296
        %2402 = vmatprep.subr.mxu0 0.0
        %2403 = vmatpush1.msra.mxu0 %v2299
        %2404 = vmatprep.subr.mxu0 0.0
        %2405 = vmatpush1.msra.mxu0 %v2302
        %2406 = vmatprep.subr.mxu0 0.0
        %2407 = vmatpush1.msra.mxu0 0.0
        %2408 = vmatprep.subr.mxu0 0.0
        %2409 = vmatpush1.msra.mxu0 0.0
        %2410 = vmatprep.subr.mxu0 0.0
        %2411 = vmatpush1.msra.mxu0 0.0
        %2412 = vmatprep.subr.mxu0 0.0
        %2413 = vmatpush1.msra.mxu0 0.0
        %2414 = vmatprep.subr.mxu0 0.0
        %2415 = vmatpush1.msra.mxu0 0.0
        %2416 = vmatprep.subr.mxu0 0.0
        %2417 = vmatpush1.msra.mxu0 0.0
        %2418 = vmatprep.subr.mxu0 0.0
        %2419 = vmatpush1.msra.mxu0 0.0
        %2420 = vmatprep.subr.mxu0 0.0
        %2421 = vmatpush1.msra.mxu0 0.0
        %2422 = vmatprep.subr.mxu0 0.0
        %2423 = vmatpush1.msra.mxu0 0.0
        %2424 = vmatprep.subr.mxu0 0.0
        %2425 = vmatpush1.msra.mxu0 0.0
        %2426 = vmatprep.subr.mxu0 0.0
        %2427 = vmatpush1.msra.mxu0 0.0
        %2428 = vmatprep.subr.mxu0 0.0
        %2429 = vmatpush1.msra.mxu0 0.0
        %2430 = vmatprep.subr.mxu0 0.0
        %2431 = vmatpush1.msra.mxu0 0.0
        %2432 = vmatprep.subr.mxu0 0.0
        %2433 = vmatpush1.msra.mxu0 0.0
        %2434 = vmatprep.subr.mxu0 0.0
        %2435 = vmatpush1.msra.mxu0 0.0
        %2436 = vmatprep.subr.mxu0 0.0
        %2437 = vmatpush1.msra.mxu0 0.0
        %2438 = vmatprep.mubr.f32.mxu0 0.0
        %2439 = vmatmul.mubr.f32.gmra.mrb[0].mxu0 %v2254
        %v2440 = vpop.f32.mrb[0].mxu0
        %v2441 = vadd.f32 0.0, %v2440
        %v2442 = vpop.f32.mrb[0].mxu0
        %2443 = vdwg.mxu0
        %v2444 = vadd.f32 %v2251, %v2370
        %v2445 = vxor.u32 %v2444, 2147483648
        %v2446 = vmul.f32 %v2445, 1.442695
        %v2447 = vpow.pop %v2446
        %v2448 = vadd.f32 %v2447, 1.0
        %v2449 = vrcp.pop %v2448
        %v2450 = vmul.f32 1.0, %v2449
        %v2451 = vadd.f32 %v2252, %v2372
        %v2452 = vxor.u32 %v2451, 2147483648
        %v2453 = vmul.f32 %v2452, 1.442695
        %v2454 = vpow.pop %v2453
        %v2455 = vadd.f32 %v2454, 1.0
        %v2456 = vrcp.pop %v2455
        %v2457 = vmul.f32 1.0, %v2456
        %v2458 = vld [vmem:[%s426] sm:$0x1]
        %v2460 = vlaneseq
        %v2461 = vshrl.u32 %v2460, 7
        %v2462 = vsub.s32 0, %v2461
        %v2463 = vrot.slane %v2458, %v2462
        %v2465 = vadd.f32 %v2441, %v2463
        %v2466 = vmul.f32 %v2450, %v2465
        %v2467 = vadd.f32 %v2253, %v2466
        %v2468 = vtanh.pop %v2467
        %v2469 = vsub.f32 1.0, %v2457
        %v2470 = vmul.f32 %v2469, %v2468
        %v2471 = vmul.f32 %v2457, %v2254
        %v2472 = vadd.f32 %v2470, %v2471
        %2473 = vst [vmem:[#allocation2] sm:$0xff] %v2472
        %s2474 = scalar_lea.vmem %s482, %s2245 [#allocation11]
        %2475 = vst [vmem:[%s2474] sm:$0xff] %v2472
        %s2476 = smul.u32 %s1073, 7
        %s2477 = smul.u32 %s1073, 56
        %s2478 = sshra.s32 %s2477, 3
        %s2479 = sand.u32 %s2477, 7
        %s2480 = smul.u32 %s2478, 3
        %s2481 = smul.addr %s2480, 8
        %s2482 = scalar_lea.vmem [#allocation3], %s2481
        %v2483 = vld [vmem:[%s2482] sm:$0xff]
        %v2484 = vld [vmem:[%s2482 + $0x8] sm:$0xff]
        %v2485 = vld [vmem:[%s2482 + $0x10] sm:$0xff]
        %v2486 = vld [vmem:[#allocation2] sm:$0xff]
        %v2487 = vld [vmem:[%s409] sm:$0xff]
        %v2488 = vld [vmem:[%s409 + $0x8] sm:$0xff]
        %v2489 = vld [vmem:[%s409 + $0x10] sm:$0xff]
        %v2490 = vld [vmem:[%s409 + $0x18] sm:$0xff]
        %v2491 = vld [vmem:[%s409 + $0x20] sm:$0xff]
        %v2492 = vld [vmem:[%s409 + $0x28] sm:$0xff]
        %v2493 = vld [vmem:[%s409 + $0x30] sm:$0xff]
        %v2494 = vld [vmem:[%s409 + $0x38] sm:$0xff]
        %v2495 = vld [vmem:[%s409 + $0x40] sm:$0xff]
        %v2496 = vld [vmem:[%s409 + $0x48] sm:$0xff]
        %v2497 = vld [vmem:[%s409 + $0x50] sm:$0xff]
        %v2498 = vld [vmem:[%s409 + $0x58] sm:$0xff]
        %v2499 = vld [vmem:[%s409 + $0x60] sm:$0xff]
        %v2500 = vld [vmem:[%s409 + $0x68] sm:$0xff]
        %v2501 = vld [vmem:[%s409 + $0x70] sm:$0xff]
        %v2502 = vld [vmem:[%s409 + $0x78] sm:$0xff]
        %v2503 = vld [vmem:[%s409 + $0x80] sm:$0xff]
        %v2504 = vld [vmem:[%s409 + $0x88] sm:$0xff]
        %v2505 = vld [vmem:[%s409 + $0x90] sm:$0xff]
        %v2506 = vld [vmem:[%s409 + $0x98] sm:$0xff]
        %v2507 = vld [vmem:[%s409 + $0xa0] sm:$0xff]
        %v2508 = vld [vmem:[%s409 + $0xa8] sm:$0xff]
        %v2509 = vld [vmem:[%s409 + $0xb0] sm:$0xff]
        %v2510 = vld [vmem:[%s409 + $0xb8] sm:$0xff]
        %v2511 = vld [vmem:[%s409 + $0xc0] sm:$0xff]
        %v2512 = vld [vmem:[%s409 + $0xc8] sm:$0xff]
        %v2513 = vld [vmem:[%s409 + $0xd0] sm:$0xff]
        %v2514 = vld [vmem:[%s409 + $0xd8] sm:$0xff]
        %v2515 = vld [vmem:[%s409 + $0xe0] sm:$0xff]
        %v2516 = vld [vmem:[%s409 + $0xe8] sm:$0xff]
        %v2517 = vld [vmem:[%s409 + $0xf0] sm:$0xff]
        %v2518 = vld [vmem:[%s409 + $0xf8] sm:$0xff]
        %v2519 = vld [vmem:[%s409 + $0x100] sm:$0xff]
        %v2520 = vld [vmem:[%s409 + $0x108] sm:$0xff]
        %v2521 = vld [vmem:[%s409 + $0x110] sm:$0xff]
        %v2522 = vld [vmem:[%s409 + $0x118] sm:$0xff]
        %v2523 = vld [vmem:[%s409 + $0x120] sm:$0xff]
        %v2524 = vld [vmem:[%s409 + $0x128] sm:$0xff]
        %v2525 = vld [vmem:[%s409 + $0x130] sm:$0xff]
        %v2526 = vld [vmem:[%s409 + $0x138] sm:$0xff]
        %v2527 = vld [vmem:[%s409 + $0x140] sm:$0xff]
        %v2528 = vld [vmem:[%s409 + $0x148] sm:$0xff]
        %v2529 = vld [vmem:[%s409 + $0x150] sm:$0xff]
        %v2530 = vld [vmem:[%s409 + $0x158] sm:$0xff]
        %v2531 = vld [vmem:[%s409 + $0x160] sm:$0xff]
        %v2532 = vld [vmem:[%s409 + $0x168] sm:$0xff]
        %v2533 = vld [vmem:[%s409 + $0x170] sm:$0xff]
        %v2534 = vld [vmem:[%s409 + $0x178] sm:$0xff]
        %2535 = vmatprep.subr.mxu0 %v2488
        %2536 = vmatpush1.msra.mxu0 %v2487
        %2537 = vmatprep.subr.mxu0 %v2491
        %2538 = vmatpush1.msra.mxu0 %v2490
        %2539 = vmatprep.subr.mxu0 %v2494
        %2540 = vmatpush1.msra.mxu0 %v2493
        %2541 = vmatprep.subr.mxu0 %v2497
        %2542 = vmatpush1.msra.mxu0 %v2496
        %2543 = vmatprep.subr.mxu0 %v2500
        %2544 = vmatpush1.msra.mxu0 %v2499
        %2545 = vmatprep.subr.mxu0 %v2503
        %2546 = vmatpush1.msra.mxu0 %v2502
        %2547 = vmatprep.subr.mxu0 %v2506
        %2548 = vmatpush1.msra.mxu0 %v2505
        %2549 = vmatprep.subr.mxu0 %v2509
        %2550 = vmatpush1.msra.mxu0 %v2508
        %2551 = vmatprep.subr.mxu0 %v2512
        %2552 = vmatpush1.msra.mxu0 %v2511
        %2553 = vmatprep.subr.mxu0 %v2515
        %2554 = vmatpush1.msra.mxu0 %v2514
        %2555 = vmatprep.subr.mxu0 %v2518
        %2556 = vmatpush1.msra.mxu0 %v2517
        %2557 = vmatprep.subr.mxu0 %v2521
        %2558 = vmatpush1.msra.mxu0 %v2520
        %2559 = vmatprep.subr.mxu0 %v2524
        %2560 = vmatpush1.msra.mxu0 %v2523
        %2561 = vmatprep.subr.mxu0 %v2527
        %2562 = vmatpush1.msra.mxu0 %v2526
        %2563 = vmatprep.subr.mxu0 %v2530
        %2564 = vmatpush1.msra.mxu0 %v2529
        %2565 = vmatprep.subr.mxu0 %v2533
        %2566 = vmatpush1.msra.mxu0 %v2532
        %2567 = vmatprep.subr.mxu0 0.0
        %2568 = vmatpush1.msra.mxu0 0.0
        %2569 = vmatprep.subr.mxu0 0.0
        %2570 = vmatpush1.msra.mxu0 0.0
        %2571 = vmatprep.subr.mxu0 0.0
        %2572 = vmatpush1.msra.mxu0 0.0
        %2573 = vmatprep.subr.mxu0 0.0
        %2574 = vmatpush1.msra.mxu0 0.0
        %2575 = vmatprep.subr.mxu0 0.0
        %2576 = vmatpush1.msra.mxu0 0.0
        %2577 = vmatprep.subr.mxu0 0.0
        %2578 = vmatpush1.msra.mxu0 0.0
        %2579 = vmatprep.subr.mxu0 0.0
        %2580 = vmatpush1.msra.mxu0 0.0
        %2581 = vmatprep.subr.mxu0 0.0
        %2582 = vmatpush1.msra.mxu0 0.0
        %2583 = vmatprep.subr.mxu0 0.0
        %2584 = vmatpush1.msra.mxu0 0.0
        %2585 = vmatprep.subr.mxu0 0.0
        %2586 = vmatpush1.msra.mxu0 0.0
        %2587 = vmatprep.subr.mxu0 0.0
        %2588 = vmatpush1.msra.mxu0 0.0
        %2589 = vmatprep.subr.mxu0 0.0
        %2590 = vmatpush1.msra.mxu0 0.0
        %2591 = vmatprep.subr.mxu0 0.0
        %2592 = vmatpush1.msra.mxu0 0.0
        %2593 = vmatprep.subr.mxu0 0.0
        %2594 = vmatpush1.msra.mxu0 0.0
        %2595 = vmatprep.subr.mxu0 0.0
        %2596 = vmatpush1.msra.mxu0 0.0
        %2597 = vmatprep.subr.mxu0 0.0
        %2598 = vmatpush1.msra.mxu0 0.0
        %2599 = vmatprep.mubr.f32.mxu0 0.0
        %2600 = vmatmul.mubr.f32.gmra.mrb[0].mxu0 %v2486
        %v2601 = vpop.f32.mrb[0].mxu0
        %v2602 = vadd.f32 0.0, %v2601
        %v2603 = vpop.f32.mrb[0].mxu0
        %v2604 = vadd.f32 0.0, %v2603
        %2605 = vdwg.mxu0
        %2606 = vmatprep.subr.mxu0 0.0
        %2607 = vmatpush1.msra.mxu0 %v2489
        %2608 = vmatprep.subr.mxu0 0.0
        %2609 = vmatpush1.msra.mxu0 %v2492
        %2610 = vmatprep.subr.mxu0 0.0
        %2611 = vmatpush1.msra.mxu0 %v2495
        %2612 = vmatprep.subr.mxu0 0.0
        %2613 = vmatpush1.msra.mxu0 %v2498
        %2614 = vmatprep.subr.mxu0 0.0
        %2615 = vmatpush1.msra.mxu0 %v2501
        %2616 = vmatprep.subr.mxu0 0.0
        %2617 = vmatpush1.msra.mxu0 %v2504
        %2618 = vmatprep.subr.mxu0 0.0
        %2619 = vmatpush1.msra.mxu0 %v2507
        %2620 = vmatprep.subr.mxu0 0.0
        %2621 = vmatpush1.msra.mxu0 %v2510
        %2622 = vmatprep.subr.mxu0 0.0
        %2623 = vmatpush1.msra.mxu0 %v2513
        %2624 = vmatprep.subr.mxu0 0.0
        %2625 = vmatpush1.msra.mxu0 %v2516
        %2626 = vmatprep.subr.mxu0 0.0
        %2627 = vmatpush1.msra.mxu0 %v2519
        %2628 = vmatprep.subr.mxu0 0.0
        %2629 = vmatpush1.msra.mxu0 %v2522
        %2630 = vmatprep.subr.mxu0 0.0
        %2631 = vmatpush1.msra.mxu0 %v2525
        %2632 = vmatprep.subr.mxu0 0.0
        %2633 = vmatpush1.msra.mxu0 %v2528
        %2634 = vmatprep.subr.mxu0 0.0
        %2635 = vmatpush1.msra.mxu0 %v2531
        %2636 = vmatprep.subr.mxu0 0.0
        %2637 = vmatpush1.msra.mxu0 %v2534
        %2638 = vmatprep.subr.mxu0 0.0
        %2639 = vmatpush1.msra.mxu0 0.0
        %2640 = vmatprep.subr.mxu0 0.0
        %2641 = vmatpush1.msra.mxu0 0.0
        %2642 = vmatprep.subr.mxu0 0.0
        %2643 = vmatpush1.msra.mxu0 0.0
        %2644 = vmatprep.subr.mxu0 0.0
        %2645 = vmatpush1.msra.mxu0 0.0
        %2646 = vmatprep.subr.mxu0 0.0
        %2647 = vmatpush1.msra.mxu0 0.0
        %2648 = vmatprep.subr.mxu0 0.0
        %2649 = vmatpush1.msra.mxu0 0.0
        %2650 = vmatprep.subr.mxu0 0.0
        %2651 = vmatpush1.msra.mxu0 0.0
        %2652 = vmatprep.subr.mxu0 0.0
        %2653 = vmatpush1.msra.mxu0 0.0
        %2654 = vmatprep.subr.mxu0 0.0
        %2655 = vmatpush1.msra.mxu0 0.0
        %2656 = vmatprep.subr.mxu0 0.0
        %2657 = vmatpush1.msra.mxu0 0.0
        %2658 = vmatprep.subr.mxu0 0.0
        %2659 = vmatpush1.msra.mxu0 0.0
        %2660 = vmatprep.subr.mxu0 0.0
        %2661 = vmatpush1.msra.mxu0 0.0
        %2662 = vmatprep.subr.mxu0 0.0
        %2663 = vmatpush1.msra.mxu0 0.0
        %2664 = vmatprep.subr.mxu0 0.0
        %2665 = vmatpush1.msra.mxu0 0.0
        %2666 = vmatprep.subr.mxu0 0.0
        %2667 = vmatpush1.msra.mxu0 0.0
        %2668 = vmatprep.subr.mxu0 0.0
        %2669 = vmatpush1.msra.mxu0 0.0
        %2670 = vmatprep.mubr.f32.mxu0 0.0
        %2671 = vmatmul.mubr.f32.gmra.mrb[0].mxu0 %v2486
        %v2672 = vpop.f32.mrb[0].mxu0
        %v2673 = vadd.f32 0.0, %v2672
        %v2674 = vpop.f32.mrb[0].mxu0
        %2675 = vdwg.mxu0
        %v2676 = vadd.f32 %v2483, %v2602
        %v2677 = vxor.u32 %v2676, 2147483648
        %v2678 = vmul.f32 %v2677, 1.442695
        %v2679 = vpow.pop %v2678
        %v2680 = vadd.f32 %v2679, 1.0
        %v2681 = vrcp.pop %v2680
        %v2682 = vmul.f32 1.0, %v2681
        %v2683 = vadd.f32 %v2484, %v2604
        %v2684 = vxor.u32 %v2683, 2147483648
        %v2685 = vmul.f32 %v2684, 1.442695
        %v2686 = vpow.pop %v2685
        %v2687 = vadd.f32 %v2686, 1.0
        %v2688 = vrcp.pop %v2687
        %v2689 = vmul.f32 1.0, %v2688
        %v2690 = vld [vmem:[%s426] sm:$0x1]
        %v2692 = vlaneseq
        %v2693 = vshrl.u32 %v2692, 7
        %v2694 = vsub.s32 0, %v2693
        %v2695 = vrot.slane %v2690, %v2694
        %v2697 = vadd.f32 %v2673, %v2695
        %v2698 = vmul.f32 %v2682, %v2697
        %v2699 = vadd.f32 %v2485, %v2698
        %v2700 = vtanh.pop %v2699
        %v2701 = vsub.f32 1.0, %v2689
        %v2702 = vmul.f32 %v2701, %v2700
        %v2703 = vmul.f32 %v2689, %v2486
        %v2704 = vadd.f32 %v2702, %v2703
        %2705 = vst [vmem:[#allocation2] sm:$0xff] %v2704
        %s2706 = smul.u32 %s2476, 8
        %s2707 = scalar_lea.vmem %s482, %s2706 [#allocation11]
        %2708 = vst [vmem:[%s2707] sm:$0xff] %v2704
        %v2709 = vld [vmem:[#allocation2] sm:$0xff]
        %v2710 = vld [vmem:[%s509] sm:$0xff]
        %v2711 = vld [vmem:[%s509 + $0x8] sm:$0xff]
        %v2712 = vld [vmem:[%s509 + $0x10] sm:$0xff]
        %v2713 = vld [vmem:[%s509 + $0x18] sm:$0xff]
        %v2714 = vld [vmem:[%s509 + $0x20] sm:$0xff]
        %v2715 = vld [vmem:[%s509 + $0x28] sm:$0xff]
        %v2716 = vld [vmem:[%s509 + $0x30] sm:$0xff]
        %v2717 = vld [vmem:[%s509 + $0x38] sm:$0xff]
        %v2718 = vld [vmem:[%s509 + $0x40] sm:$0xff]
        %v2719 = vld [vmem:[%s509 + $0x48] sm:$0xff]
        %v2720 = vld [vmem:[%s509 + $0x50] sm:$0xff]
        %v2721 = vld [vmem:[%s509 + $0x58] sm:$0xff]
        %v2722 = vld [vmem:[%s509 + $0x60] sm:$0xff]
        %v2723 = vld [vmem:[%s509 + $0x68] sm:$0xff]
        %v2724 = vld [vmem:[%s509 + $0x70] sm:$0xff]
        %v2725 = vld [vmem:[%s509 + $0x78] sm:$0xff]
        %2726 = vmatprep.subr.mxu0 0.0
        %2727 = vmatpush1.msra.mxu0 %v2710
        %2728 = vmatprep.subr.mxu0 0.0
        %2729 = vmatpush1.msra.mxu0 %v2711
        %2730 = vmatprep.subr.mxu0 0.0
        %2731 = vmatpush1.msra.mxu0 %v2712
        %2732 = vmatprep.subr.mxu0 0.0
        %2733 = vmatpush1.msra.mxu0 %v2713
        %2734 = vmatprep.subr.mxu0 0.0
        %2735 = vmatpush1.msra.mxu0 %v2714
        %2736 = vmatprep.subr.mxu0 0.0
        %2737 = vmatpush1.msra.mxu0 %v2715
        %2738 = vmatprep.subr.mxu0 0.0
        %2739 = vmatpush1.msra.mxu0 %v2716
        %2740 = vmatprep.subr.mxu0 0.0
        %2741 = vmatpush1.msra.mxu0 %v2717
        %2742 = vmatprep.subr.mxu0 0.0
        %2743 = vmatpush1.msra.mxu0 %v2718
        %2744 = vmatprep.subr.mxu0 0.0
        %2745 = vmatpush1.msra.mxu0 %v2719
        %2746 = vmatprep.subr.mxu0 0.0
        %2747 = vmatpush1.msra.mxu0 %v2720
        %2748 = vmatprep.subr.mxu0 0.0
        %2749 = vmatpush1.msra.mxu0 %v2721
        %2750 = vmatprep.subr.mxu0 0.0
        %2751 = vmatpush1.msra.mxu0 %v2722
        %2752 = vmatprep.subr.mxu0 0.0
        %2753 = vmatpush1.msra.mxu0 %v2723
        %2754 = vmatprep.subr.mxu0 0.0
        %2755 = vmatpush1.msra.mxu0 %v2724
        %2756 = vmatprep.subr.mxu0 0.0
        %2757 = vmatpush1.msra.mxu0 %v2725
        %2758 = vmatprep.subr.mxu0 0.0
        %2759 = vmatpush1.msra.mxu0 0.0
        %2760 = vmatprep.subr.mxu0 0.0
        %2761 = vmatpush1.msra.mxu0 0.0
        %2762 = vmatprep.subr.mxu0 0.0
        %2763 = vmatpush1.msra.mxu0 0.0
        %2764 = vmatprep.subr.mxu0 0.0
        %2765 = vmatpush1.msra.mxu0 0.0
        %2766 = vmatprep.subr.mxu0 0.0
        %2767 = vmatpush1.msra.mxu0 0.0
        %2768 = vmatprep.subr.mxu0 0.0
        %2769 = vmatpush1.msra.mxu0 0.0
        %2770 = vmatprep.subr.mxu0 0.0
        %2771 = vmatpush1.msra.mxu0 0.0
        %2772 = vmatprep.subr.mxu0 0.0
        %2773 = vmatpush1.msra.mxu0 0.0
        %2774 = vmatprep.subr.mxu0 0.0
        %2775 = vmatpush1.msra.mxu0 0.0
        %2776 = vmatprep.subr.mxu0 0.0
        %2777 = vmatpush1.msra.mxu0 0.0
        %2778 = vmatprep.subr.mxu0 0.0
        %2779 = vmatpush1.msra.mxu0 0.0
        %2780 = vmatprep.subr.mxu0 0.0
        %2781 = vmatpush1.msra.mxu0 0.0
        %2782 = vmatprep.subr.mxu0 0.0
        %2783 = vmatpush1.msra.mxu0 0.0
        %2784 = vmatprep.subr.mxu0 0.0
        %2785 = vmatpush1.msra.mxu0 0.0
        %2786 = vmatprep.subr.mxu0 0.0
        %2787 = vmatpush1.msra.mxu0 0.0
        %2788 = vmatprep.subr.mxu0 0.0
        %2789 = vmatpush1.msra.mxu0 0.0
        %2790 = vmatprep.mubr.f32.mxu0 0.0
        %2791 = vmatmul.mubr.f32.gmra.mrb[0].mxu0 %v2709
        %v2792 = vpop.f32.mrb[0].mxu0
        %v2793 = vadd.f32 0.0, %v2792
        %v2794 = vpop.f32.mrb[0].mxu0
        %2795 = vdwg.mxu0
        %vm2796 = vcmask 261120
        %2797 = vst.msk [vmem:[%s519] sm:$0xff] %vm2796, %v2793
        %s2798 = sand.u32 %s226, 1
        %s2799 = sand.u32 %s226, 1
        %s2800 = smul.addr %s2799, 64
        %s2801 = scalar_lea.vmem [#allocation11], %s2800
        %p2802 = scmp.lt.s32.totalorder %s32, 1
        %s2803 = scalar_select %p2802, %s32, 1
        %s2804 = smul.addr %s2803, 8
        %s2805 = scalar_lea.vmem %s7, %s2804
        // Predicated region
        $region65: #{encoder_forward.2} parent=43 // pred_check
          %p2806 = pneg %p236
        $region66: #{encoder_forward.2} parent=43 // pred_check_branch
          %2808 = sbr.rel (%p2806) target = $region68
        $region67: #{encoder_forward.2} parent=43 // pred_region
          %s2809 = ssub.s32 1, %s32
          %s2810 = smul.u32 %s2809, %s33
          %s2811 = ssub.s32 0, %s33
          %s2812 = smul.u32 %s32, %s2811
          %s2813 = sadd.s32 %s2810, %s2812
          %s2814 = smul.u32 8, %s2813
          %s2815 = smul.addr %s2814, 2
          %s2816 = sadd.s32 %s32, %s2815
          %s2817 = smul.addr %s2816, 8
          %s2818 = scalar_lea.vmem %s6, %s2817
          // Predicated region
          $region69: #{encoder_forward.2} parent=67 // pred_check
            _
          $region70: #{encoder_forward.2} parent=67 // pred_check_branch
            %2820 = sbr.rel (0) target = $region72
          $region71: #{encoder_forward.2} parent=67 // pred_region
            // Predicated region
            $region73: #{encoder_forward.2} parent=71 // pred_check
              _
            $region74: #{encoder_forward.2} parent=71 // pred_check_branch
              %2822 = sbr.rel (0) target = $region76
            $region75: #{encoder_forward.2} parent=71 // pred_region
              // Predicated region
              $region88: #{encoder_forward.2} parent=75 // pred_check
                _
              $region89: #{encoder_forward.2} parent=75 // pred_check_branch
                %2851 = sbr.rel (0) target = $region91
              $region90: #{encoder_forward.2} parent=75 // pred_region
                loop: start=0, step=1, limit=1
                $region92: #{encoder_forward.2} parent=90 // loop_pre_header
                  _
                $region93: #{encoder_forward.2} parent=90 // loop_header
                  %s2853 = sphi 0, %s2857
                  %p2854 = scmp.ge.s32.totalorder %s2853, 1
                  %s2858 = sphi %s2801, %s2801
                  %s2859 = sphi %s2818, %s2818
                $region94: #{encoder_forward.2} parent=90 // loop_header_branch
                  %2856 = sbr.rel (%p2854) target = $region98
                $region95: #{encoder_forward.2} parent=90 // loop_body
                  %v2860 = vld [vmem:[%s2858] sm:$0xff]
                  %2861 = vst [vmem:[%s2859] sm:$0xff] %v2860
                  %v2862 = vld [vmem:[%s2858 + $0x8] sm:$0xff]
                  %2863 = vst [vmem:[%s2859 + $0x10] sm:$0xff] %v2862
                  %v2864 = vld [vmem:[%s2858 + $0x10] sm:$0xff]
                  %2865 = vst [vmem:[%s2859 + $0x20] sm:$0xff] %v2864
                  %v2866 = vld [vmem:[%s2858 + $0x18] sm:$0xff]
                  %2867 = vst [vmem:[%s2859 + $0x30] sm:$0xff] %v2866
                  %v2868 = vld [vmem:[%s2858 + $0x20] sm:$0xff]
                  %2869 = vst [vmem:[%s2859 + $0x40] sm:$0xff] %v2868
                  %v2870 = vld [vmem:[%s2858 + $0x28] sm:$0xff]
                  %2871 = vst [vmem:[%s2859 + $0x50] sm:$0xff] %v2870
                  %v2872 = vld [vmem:[%s2858 + $0x30] sm:$0xff]
                  %2873 = vst [vmem:[%s2859 + $0x60] sm:$0xff] %v2872
                  %v2874 = vld [vmem:[%s2858 + $0x38] sm:$0xff]
                  %2875 = vst [vmem:[%s2859 + $0x70] sm:$0xff] %v2874
                $region96: #{encoder_forward.2} parent=90 // loop_footer
                  %s2857 = sadd.s32 1, %s2853
                $region97: #{encoder_forward.2} parent=90 // loop_footer_branch
                  %2852 = sbr.rel target = $region93
                $region98: #{encoder_forward.2} parent=90 // loop_exit
                  _
              $region91: #{encoder_forward.2} parent=75 // pred_fallthru
                _
              // Predicated region
              $region99: #{encoder_forward.2} parent=75 // pred_check
                _
              $region100: #{encoder_forward.2} parent=75 // pred_check_branch
                %2877 = sbr.rel target = $region102
              $region101: #{encoder_forward.2} parent=75 // pred_region
                _
              $region102: #{encoder_forward.2} parent=75 // pred_fallthru
                _
            $region76: #{encoder_forward.2} parent=71 // pred_fallthru
              _
            // Predicated region
            $region77: #{encoder_forward.2} parent=71 // pred_check
              _
            $region78: #{encoder_forward.2} parent=71 // pred_check_branch
              %2824 = sbr.rel target = $region80
            $region79: #{encoder_forward.2} parent=71 // pred_region
              loop: start=0, step=1, limit=1
              $region81: #{encoder_forward.2} parent=79 // loop_pre_header
                _
              $region82: #{encoder_forward.2} parent=79 // loop_header
                %s2827 = sphi 0, %s2831
                %p2828 = scmp.ge.s32.totalorder %s2827, 1
                %s2832 = sphi %s2801, %s2801
                %s2833 = sphi %s2818, %s2818
              $region83: #{encoder_forward.2} parent=79 // loop_header_branch
                %2830 = sbr.rel (%p2828) target = $region87
              $region84: #{encoder_forward.2} parent=79 // loop_body
                %v2834 = vld [vmem:[%s2832] sm:$0xff]
                %2835 = vst [vmem:[%s2833] sm:$0xff] %v2834
                %v2836 = vld [vmem:[%s2832 + $0x8] sm:$0xff]
                %2837 = vst [vmem:[%s2833 + $0x10] sm:$0xff] %v2836
                %v2838 = vld [vmem:[%s2832 + $0x10] sm:$0xff]
                %2839 = vst [vmem:[%s2833 + $0x20] sm:$0xff] %v2838
                %v2840 = vld [vmem:[%s2832 + $0x18] sm:$0xff]
                %2841 = vst [vmem:[%s2833 + $0x30] sm:$0xff] %v2840
                %v2842 = vld [vmem:[%s2832 + $0x20] sm:$0xff]
                %2843 = vst [vmem:[%s2833 + $0x40] sm:$0xff] %v2842
                %v2844 = vld [vmem:[%s2832 + $0x28] sm:$0xff]
                %2845 = vst [vmem:[%s2833 + $0x50] sm:$0xff] %v2844
                %v2846 = vld [vmem:[%s2832 + $0x30] sm:$0xff]
                %2847 = vst [vmem:[%s2833 + $0x60] sm:$0xff] %v2846
                %v2848 = vld [vmem:[%s2832 + $0x38] sm:$0xff]
                %2849 = vst [vmem:[%s2833 + $0x70] sm:$0xff] %v2848
              $region85: #{encoder_forward.2} parent=79 // loop_footer
                %s2831 = sadd.s32 1, %s2827
              $region86: #{encoder_forward.2} parent=79 // loop_footer_branch
                %2826 = sbr.rel target = $region82
              $region87: #{encoder_forward.2} parent=79 // loop_exit
                _
            $region80: #{encoder_forward.2} parent=71 // pred_fallthru
              _
          $region72: #{encoder_forward.2} parent=67 // pred_fallthru
            _
          %2878 = vnop
        $region68: #{encoder_forward.2} parent=43 // pred_fallthru
          _
        // Predicated region
        $region103: #{encoder_forward.2} parent=43 // pred_check
          %p2879 = pneg %p262
        $region104: #{encoder_forward.2} parent=43 // pred_check_branch
          %2881 = sbr.rel (%p2879) target = $region106
        $region105: #{encoder_forward.2} parent=43 // pred_region
          _
        $region106: #{encoder_forward.2} parent=43 // pred_fallthru
          _
      $region44: #{encoder_forward.2} parent=5 // pred_fallthru
        _
      %p2882 = scmp.le.s32.totalorder 2, %s23
      // Predicated region
      $region107: #{encoder_forward.2} parent=5 // pred_check
        %p2883 = pneg %p2882
      $region108: #{encoder_forward.2} parent=5 // pred_check_branch
        %2885 = sbr.rel (%p2883) target = $region110
      $region109: #{encoder_forward.2} parent=5 // pred_region
        %s2886 = ssub.s32 %s23, 2
        // Predicated region
        $region111: #{encoder_forward.2} parent=109 // pred_check
          %p2887 = pneg %p242
        $region112: #{encoder_forward.2} parent=109 // pred_check_branch
          %2889 = sbr.rel (%p2887) target = $region114
        $region113: #{encoder_forward.2} parent=109 // pred_region
          %s2890 = sand.u32 %s227, 1
          %s2891 = sand.u32 %s227, 1
          %s2892 = smul.addr %s2891, 64
          %s2893 = scalar_lea.vmem [#allocation11], %s2892
        $region114: #{encoder_forward.2} parent=109 // pred_fallthru
          _
        // Predicated region
        $region115: #{encoder_forward.2} parent=109 // pred_check
          %p2894 = pneg %p268
        $region116: #{encoder_forward.2} parent=109 // pred_check_branch
          %2896 = sbr.rel (%p2894) target = $region118
        $region117: #{encoder_forward.2} parent=109 // pred_region
          %p2897 = scmp.lt.s32.totalorder %s34, 1
          %s2898 = scalar_select %p2897, %s34, 1
          %s2899 = smul.addr %s2898, 8
          %s2900 = scalar_lea.vmem %s7, %s2899
        $region118: #{encoder_forward.2} parent=109 // pred_fallthru
          _
      $region110: #{encoder_forward.2} parent=5 // pred_fallthru
        _
    $region6: #{encoder_forward.2} parent=1 // loop_footer
      %s27 = sadd.s32 1, %s23
    $region7: #{encoder_forward.2} parent=1 // loop_footer_branch
      %22 = sbr.rel target = $region3
    $region8: #{encoder_forward.2} parent=1 // loop_exit
      _
    %2901 = vsyncpa [#allocation5], 1
    %s2902 = scalar_lea.sflag [#allocation5], 1
    %2903 = vsyncpa %s2902, 1
    %2904 = vsyncpa [#allocation7], 1
    %s2905 = scalar_lea.sflag [#allocation7], 1
    %2906 = vsyncpa %s2905, 1
    %2907 = vsyncpa [#allocation10], 1
    %s2908 = scalar_lea.sflag [#allocation10], 1
    %2909 = vsyncpa %s2908, 1

</llo_original>
